<compile_context>
chip_gen: v6e
topology: v6e:2x2x1
jax: 0.10.0
libtpu: 0.0.40
codegen_flags: <defaults>
</compile_context>

<pallas_src>
import math

import jax
import jax.numpy as jnp
from jax.experimental import pallas as pl
from jax.experimental.pallas import tpu as pltpu


def _round_up(n, m):
    return (n + m - 1) // m * m


# -----------------------------------------------------------------------------
# One-time (init-time) parameter packing: every w2/b/gamma/beta of every block
# of every model goes into ONE 2-D f32 slab at an 8-row-aligned static offset.
# -----------------------------------------------------------------------------
def pack_parallel_conv_models(models, *, eps=1e-5):
    names = list(models.keys())
    placements = []          # (array, row_offset)
    row = 0
    max_cols = 1
    model_cfgs = []
    model_outs = []          # (final_fold, S_out, F_out) per model

    for name in names:
        blocks = models[name]["blocks"]
        cfgs = []
        fold = "row"         # the initial x is reshaped (B_blk*SEQ, EMB): batch on rows
        for blk in blocks:
            p = blk["params"]
            C_out, C_in, K = p["w"].shape
            L_conv = blk["L_conv"]
            if blk["dim"] == "features":
                # y = w2 @ col ; w2[o, k*C_in + c] = w[o, c, k]
                w2 = jnp.transpose(p["w"], (0, 2, 1)).reshape(C_out, K * C_in)
                b2 = p["b"].reshape(C_out, 1)          # column bias
                g2 = p["gamma"].reshape(1, L_conv)     # row gamma (over lanes)
                be2 = p["beta"].reshape(1, L_conv)
                out_fold = "lane"
            else:
                # y = col @ w2 ; w2[k*C_in + c, o] = w[o, c, k]  (length-major)
                w2 = jnp.transpose(p["w"], (2, 1, 0)).reshape(K * C_in, C_out)
                b2 = p["b"].reshape(1, C_out)          # row bias
                g2 = p["gamma"].reshape(L_conv, 1)     # column gamma (over rows)
                be2 = p["beta"].reshape(L_conv, 1)
                out_fold = "row"
            offs = []
            for arr in (w2, b2, g2, be2):
                placements.append((arr, row))
                offs.append((row, tuple(arr.shape)))
                row = _round_up(row + arr.shape[0], 8)   # aligned sublane offsets
                max_cols = max(max_cols, arr.shape[1])
            cfgs.append(dict(
                dim=blk["dim"], K=K, pad=blk["pad"], C_in=C_in, C_out=C_out,
                L_conv=L_conv, pool_seq=blk["pool_seq"], pool_feat=blk["pool_feat"],
                in_fold=fold,
                w_off=offs[0], b_off=offs[1], g_off=offs[2], be_off=offs[3]))
            fold = out_fold
        model_cfgs.append(tuple(cfgs))
        S_out = models[name]["out_size"]["sequence"]
        F_out = models[name]["out_size"]["features"]
        model_outs.append((fold, S_out, F_out))

    total_rows = max(row, 8)
    packed = jnp.zeros((total_rows, max_cols), jnp.float32)
    for arr, r in placements:
        packed = packed.at[r:r + arr.shape[0], 0:arr.shape[1]].set(arr.astype(jnp.float32))

    meta = dict(names=tuple(names), model_cfgs=tuple(model_cfgs),
                model_outs=tuple(model_outs), eps=eps)
    return packed, meta


def _read_param(p_ref, off):
    r, (h, w) = off
    return p_ref[r:r + h, 0:w]      # static slice of the packed-param ref: free


# -----------------------------------------------------------------------------
# In-kernel: fused Conv1d + LayerNorm + ReLU + MaxPool2d for one block, with the
# whole B_blk batch folded into a single MXU matmul.
# -----------------------------------------------------------------------------
def _apply_block(cur, p_ref, col_ref, cfg, B_blk, eps, use_bf16):
    dim, K, pad = cfg["dim"], cfg["K"], cfg["pad"]
    C_in, C_out, L_conv = cfg["C_in"], cfg["C_out"], cfg["L_conv"]
    pr, pc = cfg["pool_seq"], cfg["pool_feat"]
    in_fold = cfg["in_fold"]

    w2 = _read_param(p_ref, cfg["w_off"])
    b2 = _read_param(p_ref, cfg["b_off"])
    g2 = _read_param(p_ref, cfg["g_off"])
    be2 = _read_param(p_ref, cfg["be_off"])
    mm_dtype = jnp.bfloat16 if use_bf16 else jnp.float32

    if dim == "features":
        # Per example: channels = rows (seq-like), conv length = lanes (feat-like).
        if in_fold == "row":                       # cur: (B*C_in, L_in)
            L_in = cur.shape[1]
            ex_slab = lambda b, a, c: cur[b * C_in:(b + 1) * C_in, a:c]
        else:                                      # cur: (C_in, B*L_in)
            L_in = cur.shape[1] // B_blk
            ex_slab = lambda b, a, c: cur[:, b * L_in + a: b * L_in + c]
        rows_u, cols_u = K * C_in, B_blk * L_conv
        for k in range(K):                         # static, small -> unrolled
            s = k - pad
            lo, hi = max(0, -s), min(L_conv, L_in - s)
            for b in range(B_blk):
                if hi > lo:
                    col_ref[k * C_in:(k + 1) * C_in,
                            b * L_conv + lo: b * L_conv + hi] = ex_slab(b, lo + s, hi + s)
                # zero ONLY the pad-boundary lanes the matmul will read as zeros
                if lo > 0:
                    col_ref[k * C_in:(k + 1) * C_in,
                            b * L_conv: b * L_conv + lo] = jnp.zeros((C_in, lo), jnp.float32)
                if hi < L_conv:
                    col_ref[k * C_in:(k + 1) * C_in,
                            b * L_conv + hi:(b + 1) * L_conv] = jnp.zeros(
                                (C_in, L_conv - hi), jnp.float32)
        col = col_ref[0:rows_u, 0:cols_u]
        y = jnp.dot(w2.astype(mm_dtype), col.astype(mm_dtype),
                    preferred_element_type=jnp.float32)          # (C_out, B*L_conv)
        y = y + b2                                               # (C_out, 1)
        y3 = y.reshape(C_out, B_blk, L_conv)                     # segmented LN view
        g3, be3 = g2.reshape(1, 1, L_conv), be2.reshape(1, 1, L_conv)
        ln_axis = 2
    else:
        # dim == 'sequence', length-major: channels = lanes (feat), length = rows (seq).
        if in_fold == "row":                       # cur: (B*L_in, C_in)
            L_in = cur.shape[0] // B_blk
            ex_slab = lambda b, a, c: cur[b * L_in + a: b * L_in + c, :]
        else:                                      # cur: (L_in, B*C_in)
            L_in = cur.shape[0]
            ex_slab = lambda b, a, c: cur[a:c, b * C_in:(b + 1) * C_in]
        rows_u, cols_u = B_blk * L_conv, K * C_in
        for k in range(K):
            s = k - pad
            lo, hi = max(0, -s), min(L_conv, L_in - s)
            for b in range(B_blk):
                if hi > lo:
                    col_ref[b * L_conv + lo: b * L_conv + hi,
                            k * C_in:(k + 1) * C_in] = ex_slab(b, lo + s, hi + s)
                if lo > 0:
                    col_ref[b * L_conv: b * L_conv + lo,
                            k * C_in:(k + 1) * C_in] = jnp.zeros((lo, C_in), jnp.float32)
                if hi < L_conv:
                    col_ref[b * L_conv + hi:(b + 1) * L_conv,
                            k * C_in:(k + 1) * C_in] = jnp.zeros(
                                (L_conv - hi, C_in), jnp.float32)
        col = col_ref[0:rows_u, 0:cols_u]
        y = jnp.dot(col.astype(mm_dtype), w2.astype(mm_dtype),
                    preferred_element_type=jnp.float32)          # (B*L_conv, C_out)
        y = y + b2                                               # (1, C_out)
        y3 = y.reshape(B_blk, L_conv, C_out)
        g3, be3 = g2.reshape(1, L_conv, 1), be2.reshape(1, L_conv, 1)
        ln_axis = 1

    # LayerNorm over L_conv (two-pass, biased variance, like torch).
    inv_n = 1.0 / L_conv
    mean = jnp.sum(y3, axis=ln_axis, keepdims=True) * inv_n
    d = y3 - mean
    var = jnp.sum(d * d, axis=ln_axis, keepdims=True) * inv_n
    y3 = d * jax.lax.rsqrt(var + eps)
    y3 = y3 * g3 + be3
    y3 = jnp.maximum(y3, 0.0)                                    # ReLU

    # MaxPool2d, floor crop, stride = kernel.
    if dim == "features":
        # y3: (C_out, B, L_conv); pool C_out by pool_seq, L_conv by pool_feat.
        Rp = (C_out - pr) // pr + 1
        Cp = (L_conv - pc) // pc + 1
        yc = y3[:Rp * pr, :, :Cp * pc]
        y1 = jnp.max(yc.reshape(Rp * pr, B_blk, Cp, pc), axis=-1)
        out = jnp.max(y1.reshape(Rp, pr, B_blk, Cp), axis=1)     # (Rp, B, Cp)
        return out.reshape(Rp, B_blk * Cp)                       # lane-folded
    else:
        # y3: (B, L_conv, C_out); pool L_conv by pool_seq, C_out by pool_feat.
        Rp = (L_conv - pr) // pr + 1
        Cp = (C_out - pc) // pc + 1
        yc = y3[:, :Rp * pr, :Cp * pc]
        out = jnp.max(yc.reshape(B_blk, Rp, pr, Cp, pc), axis=(2, 4))   # (B, Rp, Cp)
        return out.reshape(B_blk * Rp, Cp)                       # row-folded


def _make_fused_kernel(meta, B_blk, use_bf16):
    model_cfgs = meta["model_cfgs"]
    eps = meta["eps"]
    n_models = len(model_cfgs)

    def kernel(x_ref, p_ref, *refs):
        out_refs = refs[:n_models]
        col_ref = refs[n_models]
        xb = x_ref[...].astype(jnp.float32)                      # (B_blk, SEQ, EMB)
        cur0 = xb.reshape(B_blk * xb.shape[1], xb.shape[2])      # row-folded start
        for mi, cfgs in enumerate(model_cfgs):
            cur = cur0
            for cfg in cfgs:
                cur = _apply_block(cur, p_ref, col_ref, cfg, B_blk, eps, use_bf16)
            out_refs[mi][...] = cur.astype(out_refs[mi].dtype)
    return kernel


# -----------------------------------------------------------------------------
# Forward: ONE pallas_call for the whole ParallelConvModels.
#   n_steps=1  -> whole batch in one grid step (v5e / v6e: single TensorCore).
#   n_steps=2  -> two "parallel" grid steps (v7x: one per TensorCore).
# -----------------------------------------------------------------------------
def parallel_conv_models_pallas(x, packed_params, meta, *, n_steps=1, use_bf16=False):
    B, SEQ, EMB = x.shape
    assert B % n_steps == 0, "batch must divide the number of grid steps"
    B_blk = B // n_steps
    names, model_cfgs, model_outs = meta["names"], meta["model_cfgs"], meta["model_outs"]

    # One max-sized im2col scratch, reused by every block of every model.
    max_r, max_c = 8, 128
    for cfgs in model_cfgs:
        for cfg in cfgs:
            if cfg["dim"] == "features":
                r, c = cfg["K"] * cfg["C_in"], B_blk * cfg["L_conv"]
            else:
                r, c = B_blk * cfg["L_conv"], cfg["K"] * cfg["C_in"]
            max_r, max_c = max(max_r, r), max(max_c, c)

    out_shape, out_specs = [], []
    flops = 0
    transcendentals = 0
    bytes_accessed = x.size * x.dtype.itemsize + packed_params.size * packed_params.dtype.itemsize
    for (fold, S_out, F_out), cfgs in zip(model_outs, model_cfgs):
        if fold == "row":
            rows, cols = B_blk * S_out, F_out
        else:
            rows, cols = S_out, B_blk * F_out
        out_shape.append(jax.ShapeDtypeStruct((n_steps, rows, cols), x.dtype))
        out_specs.append(pl.BlockSpec((None, rows, cols), lambda s: (s, 0, 0)))
        bytes_accessed += n_steps * rows * cols * x.dtype.itemsize
        for cfg in cfgs:
            flops += 2 * B * cfg["C_out"] * cfg["C_in"] * cfg["K"] * cfg["L_conv"]
            transcendentals += B * cfg["C_out"]

    kernel = _make_fused_kernel(meta, B_blk, use_bf16)

    outs = pl.pallas_call(
        kernel,
        out_shape=tuple(out_shape),
        grid=(n_steps,),
        in_specs=[
            pl.BlockSpec((B_blk, SEQ, EMB), lambda s: (s, 0, 0)),
            pl.BlockSpec(packed_params.shape, lambda s: (0, 0)),   # constant params slab
        ],
        out_specs=tuple(out_specs),
        scratch_shapes=[pltpu.VMEM((max_r, max_c), jnp.float32)],
        compiler_params=pltpu.CompilerParams(
            dimension_semantics=("parallel",),
            vmem_limit_bytes=32 * 1024 * 1024,
        ),
        cost_estimate=pl.CostEstimate(flops=int(flops),
                                      transcendentals=int(transcendentals),
                                      bytes_accessed=int(bytes_accessed)),
    )(x, packed_params)

    result = {}
    for name, (fold, S_out, F_out), o in zip(names, model_outs, outs):
        if fold == "row":     # (n_steps, B_blk*S_out, F_out) is already batch-major
            result[name] = o.reshape(B, S_out, F_out)
        else:                 # lane-folded final: tiny wrapper-side untangle
            result[name] = (o.reshape(n_steps, S_out, B_blk, F_out)
                              .transpose(0, 2, 1, 3).reshape(B, S_out, F_out))
    return result


# -----------------------------------------------------------------------------
# Parameter init + ConvModel size bookkeeping (mirrors the PyTorch __init__).
# -----------------------------------------------------------------------------
def init_conv1d_block_params(key, in_channels, out_channels, K, L_conv):
    k1, k2 = jax.random.split(key)
    bound = 1.0 / math.sqrt(in_channels * K)
    return dict(
        w=jax.random.uniform(k1, (out_channels, in_channels, K), jnp.float32, -bound, bound),
        b=jax.random.uniform(k2, (out_channels,), jnp.float32, -bound, bound),
        gamma=jnp.ones((L_conv,), jnp.float32),
        beta=jnp.zeros((L_conv,), jnp.float32),
    )


def build_conv_model(key, blocks_kwargs, sequence_size, embedding_size):
    output_size = {"sequence": sequence_size, "features": embedding_size}
    blocks = []
    for _, kw in blocks_kwargs.items():
        dim = kw["dim"]
        L_conv = output_size[dim] + 2 * kw["conv_padding"] - kw["conv_kernel_size"] + 1
        pool = kw["pool_kernel_size"]
        new_out = {"sequence": kw["out_channels"], "features": kw["out_channels"]}
        for k, v in pool.items():
            src = L_conv if k == dim else new_out[k]
            new_out[k] = math.floor((src - v) / v + 1)
        key, sub = jax.random.split(key)
        params = init_conv1d_block_params(sub, kw["in_channels"], kw["out_channels"],
                                          kw["conv_kernel_size"], L_conv)
        blocks.append(dict(params=params, dim=dim, pad=kw["conv_padding"],
                           K=kw["conv_kernel_size"], L_conv=L_conv,
                           pool_seq=pool["sequence"], pool_feat=pool["features"],
                           return_feature_map=kw["return_feature_map"]))
        output_size = new_out
    return blocks, output_size


# -----------------------------------------------------------------------------
# Pure-JAX torch-faithful reference, for correctness checking.
# -----------------------------------------------------------------------------
def _ref_block(x_nat, blk, eps=1e-5):
    p = blk["params"]
    x = x_nat
    if blk["dim"] == "sequence":
        x = jnp.transpose(x, (0, 2, 1))
    w, b = p["w"], p["b"]
    C_out, C_in, K = w.shape
    pad = blk["pad"]
    xp = jnp.pad(x, ((0, 0), (0, 0), (pad, pad)))
    L_conv = x.shape[-1] + 2 * pad - K + 1
    out = jnp.zeros((x.shape[0], C_out, L_conv), jnp.float32)
    for k in range(K):
        out = out + jnp.einsum("oc,bcl->bol", w[:, :, k], xp[:, :, k:k + L_conv])
    out = out + b[None, :, None]
    mean = out.mean(-1, keepdims=True)
    var = ((out - mean) ** 2).mean(-1, keepdims=True)
    out = (out - mean) / jnp.sqrt(var + eps)
    out = out * p["gamma"][None, None, :] + p["beta"][None, None, :]
    out = jnp.maximum(out, 0.0)
    if blk["dim"] == "features":
        ps_chan, pf_len = blk["pool_seq"], blk["pool_feat"]
    else:
        ps_chan, pf_len = blk["pool_feat"], blk["pool_seq"]
    S_pool = (C_out - ps_chan) // ps_chan + 1
    F_pool = (L_conv - pf_len) // pf_len + 1
    out = out[:, :S_pool * ps_chan, :F_pool * pf_len]
    out = out.reshape(x.shape[0], S_pool, ps_chan, F_pool, pf_len).max(axis=(2, 4))
    if blk["dim"] == "sequence":
        out = jnp.transpose(out, (0, 2, 1))
    return out


def parallel_conv_models_ref(x, models, eps=1e-5):
    # TODO(synk): the LinearBlock-based ffnn head (only built when hidden_layers != [])
    # and intermediate feature-map dict outputs (sum(return_feature_map) > 1) are not
    # instantiated here; configs below use one returned feature map per ConvModel.
    out = {}
    for name, m in models.items():
        cur = x
        for blk in m["blocks"]:
            cur = _ref_block(cur, blk, eps)
        out[name] = cur
    return out


# -----------------------------------------------------------------------------
# Main
# -----------------------------------------------------------------------------
if __name__ == "__main__":
    B, SEQ, EMB = 2, 8, 32

    conv_models_kwargs = {
        "model_a": dict(
            blocks_kwargs={
                "block0": dict(in_channels=SEQ, out_channels=16, conv_kernel_size=3,
                               conv_padding=1,
                               pool_kernel_size={"sequence": 2, "features": 2},
                               dim="features", return_feature_map=False),
                "block1": dict(in_channels=16, out_channels=12, conv_kernel_size=3,
                               conv_padding=1,
                               pool_kernel_size={"sequence": 2, "features": 2},
                               dim="sequence", return_feature_map=True),
            },
            sequence_size=SEQ, embedding_size=EMB),
        "model_b": dict(
            blocks_kwargs={
                "block0": dict(in_channels=EMB, out_channels=16, conv_kernel_size=3,
                               conv_padding=1,
                               pool_kernel_size={"sequence": 2, "features": 2},
                               dim="sequence", return_feature_map=True),
            },
            sequence_size=SEQ, embedding_size=EMB),
        "model_d": dict(
            blocks_kwargs={
                "block0": dict(in_channels=SEQ, out_channels=16, conv_kernel_size=3,
                               conv_padding=1,
                               pool_kernel_size={"sequence": 2, "features": 2},
                               dim="features", return_feature_map=False),
                "block1": dict(in_channels=8, out_channels=10, conv_kernel_size=3,
                               conv_padding=1,
                               pool_kernel_size={"sequence": 2, "features": 2},
                               dim="features", return_feature_map=True),
            },
            sequence_size=SEQ, embedding_size=EMB),
    }

    root = jax.random.PRNGKey(0)
    x_key, p_key = jax.random.split(root)
    x = jax.random.normal(x_key, (B, SEQ, EMB), jnp.float32)

    models = {}
    for name, mkw in conv_models_kwargs.items():
        p_key, sub = jax.random.split(p_key)
        blocks, out_size = build_conv_model(sub, mkw["blocks_kwargs"],
                                            mkw["sequence_size"], mkw["embedding_size"])
        models[name] = dict(blocks=blocks, out_size=out_size)

    # Hoisted once (init-time): param repacking + static metadata.
    packed, meta = pack_parallel_conv_models(models)

    ref = parallel_conv_models_ref(x, models)

    # n_steps=1: single-TensorCore config (v5e/v6e).  n_steps=2: dual-TC config (v7x).
    for n_steps in (1, 2):
        out = parallel_conv_models_pallas(x, packed, meta, n_steps=n_steps)
        out = jax.tree_util.tree_map(jax.block_until_ready, out)
        for name in ref:
            assert out[name].shape == ref[name].shape, (name, n_steps, out[name].shape)
            assert jnp.allclose(out[name], ref[name], rtol=1e-4, atol=1e-4), (name, n_steps)

    print("KERNEL_OK")
</pallas_src>

<mosaic_0001>
module attributes {stable_mosaic.version = 11 : i64} {
  func.func @kernel(%arg0: i32, %arg1: memref<2x8x32xf32, #tpu.memory_space<vmem>>, %arg2: memref<336x32xf32, #tpu.memory_space<vmem>>, %arg3: memref<1x8x6xf32, #tpu.memory_space<vmem>>, %arg4: memref<1x8x8xf32, #tpu.memory_space<vmem>>, %arg5: memref<1x5x16xf32, #tpu.memory_space<vmem>>, %arg6: memref<24x128xf32, #tpu.memory_space<vmem>>) attributes {dimension_semantics = [#tpu.dimension_semantics<parallel>], iteration_bounds = array<i64: 1>, scalar_prefetch = 0 : i64, scratch_operands = 1 : i64, tpu.core_type = #tpu.core_type<tc>, window_params = [{transform_indices = @transform_0, window_bounds = array<i64: 2, 8, 32>}, {pipeline_mode = #tpu.pipeline_mode<synchronous>, transform_indices = @transform_1, window_bounds = array<i64: 336, 32>}, {transform_indices = @transform_2, window_bounds = array<i64: 1, 8, 6>}, {transform_indices = @transform_3, window_bounds = array<i64: 1, 8, 8>}, {transform_indices = @transform_4, window_bounds = array<i64: 1, 5, 16>}]} {
    %c0 = arith.constant 0 : index
    %c0_0 = arith.constant 0 : index
    %c0_1 = arith.constant 0 : index
    %0 = vector.load %arg1[%c0, %c0_0, %c0_1] : memref<2x8x32xf32, #tpu.memory_space<vmem>>, vector<2x8x32xf32>
    %1 = vector.shape_cast %0 : vector<2x8x32xf32> to vector<16x32xf32>
    %c0_2 = arith.constant 0 : index
    %c0_3 = arith.constant 0 : index
    %2 = vector.load %arg2[%c0_2, %c0_3] : memref<336x32xf32, #tpu.memory_space<vmem>>, vector<16x24xf32>
    %c16 = arith.constant 16 : index
    %c0_4 = arith.constant 0 : index
    %3 = vector.load %arg2[%c16, %c0_4] : memref<336x32xf32, #tpu.memory_space<vmem>>, vector<16x1xf32>
    %c32 = arith.constant 32 : index
    %c0_5 = arith.constant 0 : index
    %4 = vector.load %arg2[%c32, %c0_5] : memref<336x32xf32, #tpu.memory_space<vmem>>, vector<1x32xf32>
    %c40 = arith.constant 40 : index
    %c0_6 = arith.constant 0 : index
    %5 = vector.load %arg2[%c40, %c0_6] : memref<336x32xf32, #tpu.memory_space<vmem>>, vector<1x32xf32>
    %6 = vector.extract_strided_slice %1 {offsets = [0, 0], sizes = [8, 31], strides = [1, 1]} : vector<16x32xf32> to vector<8x31xf32>
    %c0_7 = arith.constant 0 : index
    %c1 = arith.constant 1 : index
    %7 = vector.load %arg6[%c0_7, %c1] : memref<24x128xf32, #tpu.memory_space<vmem>>, vector<8x31xf32>
    tpu.vector_store %arg6[%c0_7, %c1], %6 {strides = array<i32>} : memref<24x128xf32, #tpu.memory_space<vmem>>, vector<8x31xf32>,
    %cst = arith.constant 0.000000e+00 : f32
    %8 = vector.broadcast %cst : f32 to vector<8x1xf32>
    %c0_8 = arith.constant 0 : index
    %c0_9 = arith.constant 0 : index
    %9 = vector.load %arg6[%c0_8, %c0_9] : memref<24x128xf32, #tpu.memory_space<vmem>>, vector<8x1xf32>
    tpu.vector_store %arg6[%c0_8, %c0_9], %8 {strides = array<i32>} : memref<24x128xf32, #tpu.memory_space<vmem>>, vector<8x1xf32>,
    %10 = vector.extract_strided_slice %1 {offsets = [8, 0], sizes = [8, 31], strides = [1, 1]} : vector<16x32xf32> to vector<8x31xf32>
    %c0_10 = arith.constant 0 : index
    %c33 = arith.constant 33 : index
    %11 = vector.load %arg6[%c0_10, %c33] : memref<24x128xf32, #tpu.memory_space<vmem>>, vector<8x31xf32>
    tpu.vector_store %arg6[%c0_10, %c33], %10 {strides = array<i32>} : memref<24x128xf32, #tpu.memory_space<vmem>>, vector<8x31xf32>,
    %cst_11 = arith.constant 0.000000e+00 : f32
    %12 = vector.broadcast %cst_11 : f32 to vector<8x1xf32>
    %c0_12 = arith.constant 0 : index
    %c32_13 = arith.constant 32 : index
    %13 = vector.load %arg6[%c0_12, %c32_13] : memref<24x128xf32, #tpu.memory_space<vmem>>, vector<8x1xf32>
    tpu.vector_store %arg6[%c0_12, %c32_13], %12 {strides = array<i32>} : memref<24x128xf32, #tpu.memory_space<vmem>>, vector<8x1xf32>,
    %14 = vector.extract_strided_slice %1 {offsets = [0, 0], sizes = [8, 32], strides = [1, 1]} : vector<16x32xf32> to vector<8x32xf32>
    %c8 = arith.constant 8 : index
    %c0_14 = arith.constant 0 : index
    %15 = vector.load %arg6[%c8, %c0_14] : memref<24x128xf32, #tpu.memory_space<vmem>>, vector<8x32xf32>
    tpu.vector_store %arg6[%c8, %c0_14], %14 {strides = array<i32>} : memref<24x128xf32, #tpu.memory_space<vmem>>, vector<8x32xf32>,
    %16 = vector.extract_strided_slice %1 {offsets = [8, 0], sizes = [8, 32], strides = [1, 1]} : vector<16x32xf32> to vector<8x32xf32>
    %c8_15 = arith.constant 8 : index
    %c32_16 = arith.constant 32 : index
    %17 = vector.load %arg6[%c8_15, %c32_16] : memref<24x128xf32, #tpu.memory_space<vmem>>, vector<8x32xf32>
    tpu.vector_store %arg6[%c8_15, %c32_16], %16 {strides = array<i32>} : memref<24x128xf32, #tpu.memory_space<vmem>>, vector<8x32xf32>,
    %18 = vector.extract_strided_slice %1 {offsets = [0, 1], sizes = [8, 31], strides = [1, 1]} : vector<16x32xf32> to vector<8x31xf32>
    %c16_17 = arith.constant 16 : index
    %c0_18 = arith.constant 0 : index
    %19 = vector.load %arg6[%c16_17, %c0_18] : memref<24x128xf32, #tpu.memory_space<vmem>>, vector<8x31xf32>
    tpu.vector_store %arg6[%c16_17, %c0_18], %18 {strides = array<i32>} : memref<24x128xf32, #tpu.memory_space<vmem>>, vector<8x31xf32>,
    %cst_19 = arith.constant 0.000000e+00 : f32
    %20 = vector.broadcast %cst_19 : f32 to vector<8x1xf32>
    %c16_20 = arith.constant 16 : index
    %c31 = arith.constant 31 : index
    %21 = vector.load %arg6[%c16_20, %c31] : memref<24x128xf32, #tpu.memory_space<vmem>>, vector<8x1xf32>
    tpu.vector_store %arg6[%c16_20, %c31], %20 {strides = array<i32>} : memref<24x128xf32, #tpu.memory_space<vmem>>, vector<8x1xf32>,
    %22 = vector.extract_strided_slice %1 {offsets = [8, 1], sizes = [8, 31], strides = [1, 1]} : vector<16x32xf32> to vector<8x31xf32>
    %c16_21 = arith.constant 16 : index
    %c32_22 = arith.constant 32 : index
    %23 = vector.load %arg6[%c16_21, %c32_22] : memref<24x128xf32, #tpu.memory_space<vmem>>, vector<8x31xf32>
    tpu.vector_store %arg6[%c16_21, %c32_22], %22 {strides = array<i32>} : memref<24x128xf32, #tpu.memory_space<vmem>>, vector<8x31xf32>,
    %cst_23 = arith.constant 0.000000e+00 : f32
    %24 = vector.broadcast %cst_23 : f32 to vector<8x1xf32>
    %c16_24 = arith.constant 16 : index
    %c63 = arith.constant 63 : index
    %25 = vector.load %arg6[%c16_24, %c63] : memref<24x128xf32, #tpu.memory_space<vmem>>, vector<8x1xf32>
    tpu.vector_store %arg6[%c16_24, %c63], %24 {strides = array<i32>} : memref<24x128xf32, #tpu.memory_space<vmem>>, vector<8x1xf32>,
    %c0_25 = arith.constant 0 : index
    %c0_26 = arith.constant 0 : index
    %26 = vector.load %arg6[%c0_25, %c0_26] : memref<24x128xf32, #tpu.memory_space<vmem>>, vector<24x64xf32>
    %cst_27 = arith.constant dense<0.000000e+00> : vector<16x64xf32>
    %27 = tpu.matmul %2, %26, %cst_27 {dimension_numbers = #tpu.dot_dimension_numbers<[1], [0], [0], [1], [0, 0, 1, 1], [], []>} : vector<16x24xf32>, vector<24x64xf32>, vector<16x64xf32> -> vector<16x64xf32>
    %28 = vector.broadcast %3 : vector<16x1xf32> to vector<16x64xf32>
    %29 = arith.addf %27, %28 : vector<16x64xf32>
    %30 = vector.shape_cast %29 : vector<16x64xf32> to vector<16x2x32xf32>
    %31 = vector.shape_cast %4 : vector<1x32xf32> to vector<1x1x32xf32>
    %32 = vector.shape_cast %5 : vector<1x32xf32> to vector<1x1x32xf32>
    %cst_28 = arith.constant dense<0.000000e+00> : vector<16x2xf32>
    %33 = vector.multi_reduction <add>, %30, %cst_28 [2] : vector<16x2x32xf32> to vector<16x2xf32>
    %34 = vector.shape_cast %33 : vector<16x2xf32> to vector<16x2x1xf32>
    %cst_29 = arith.constant 3.125000e-02 : f32
    %35 = vector.broadcast %cst_29 : f32 to vector<16x2x1xf32>
    %36 = arith.mulf %34, %35 : vector<16x2x1xf32>
    %37 = vector.broadcast %36 : vector<16x2x1xf32> to vector<16x2x32xf32>
    %38 = arith.subf %30, %37 : vector<16x2x32xf32>
    %39 = arith.mulf %38, %38 : vector<16x2x32xf32>
    %cst_30 = arith.constant dense<0.000000e+00> : vector<16x2xf32>
    %40 = vector.multi_reduction <add>, %39, %cst_30 [2] : vector<16x2x32xf32> to vector<16x2xf32>
    %41 = vector.shape_cast %40 : vector<16x2xf32> to vector<16x2x1xf32>
    %cst_31 = arith.constant 3.125000e-02 : f32
    %42 = vector.broadcast %cst_31 : f32 to vector<16x2x1xf32>
    %43 = arith.mulf %41, %42 : vector<16x2x1xf32>
    %cst_32 = arith.constant 9.99999974E-6 : f32
    %44 = vector.broadcast %cst_32 : f32 to vector<16x2x1xf32>
    %45 = arith.addf %43, %44 : vector<16x2x1xf32>
    %46 = math.rsqrt %45 : vector<16x2x1xf32>
    %47 = vector.broadcast %46 : vector<16x2x1xf32> to vector<16x2x32xf32>
    %48 = arith.mulf %38, %47 : vector<16x2x32xf32>
    %49 = vector.broadcast %31 : vector<1x1x32xf32> to vector<16x2x32xf32>
    %50 = arith.mulf %48, %49 : vector<16x2x32xf32>
    %51 = vector.broadcast %32 : vector<1x1x32xf32> to vector<16x2x32xf32>
    %52 = arith.addf %50, %51 : vector<16x2x32xf32>
    %cst_33 = arith.constant 0.000000e+00 : f32
    %53 = vector.broadcast %cst_33 : f32 to vector<16x2x32xf32>
    %54 = arith.maximumf %52, %53 : vector<16x2x32xf32>
    %55 = vector.shape_cast %54 : vector<16x2x32xf32> to vector<16x2x16x2xf32>
    %cst_34 = arith.constant dense<0xFF800000> : vector<16x2x16xf32>
    %56 = vector.multi_reduction <maximumf>, %55, %cst_34 [3] : vector<16x2x16x2xf32> to vector<16x2x16xf32>
    %57 = vector.shape_cast %56 : vector<16x2x16xf32> to vector<8x2x2x16xf32>
    %cst_35 = arith.constant dense<0xFF800000> : vector<8x2x16xf32>
    %58 = vector.multi_reduction <maximumf>, %57, %cst_35 [1] : vector<8x2x2x16xf32> to vector<8x2x16xf32>
    %59 = vector.shape_cast %58 : vector<8x2x16xf32> to vector<8x32xf32>
    %c48 = arith.constant 48 : index
    %c0_36 = arith.constant 0 : index
    %60 = vector.load %arg2[%c48, %c0_36] : memref<336x32xf32, #tpu.memory_space<vmem>>, vector<48x12xf32>
    %c96 = arith.constant 96 : index
    %c0_37 = arith.constant 0 : index
    %61 = vector.load %arg2[%c96, %c0_37] : memref<336x32xf32, #tpu.memory_space<vmem>>, vector<1x12xf32>
    %c104 = arith.constant 104 : index
    %c0_38 = arith.constant 0 : index
    %62 = vector.load %arg2[%c104, %c0_38] : memref<336x32xf32, #tpu.memory_space<vmem>>, vector<8x1xf32>
    %c112 = arith.constant 112 : index
    %c0_39 = arith.constant 0 : index
    %63 = vector.load %arg2[%c112, %c0_39] : memref<336x32xf32, #tpu.memory_space<vmem>>, vector<8x1xf32>
    %64 = vector.extract_strided_slice %59 {offsets = [0, 0], sizes = [7, 16], strides = [1, 1]} : vector<8x32xf32> to vector<7x16xf32>
    %c1_40 = arith.constant 1 : index
    %c0_41 = arith.constant 0 : index
    %65 = vector.load %arg6[%c1_40, %c0_41] : memref<24x128xf32, #tpu.memory_space<vmem>>, vector<7x16xf32>
    tpu.vector_store %arg6[%c1_40, %c0_41], %64 {strides = array<i32>} : memref<24x128xf32, #tpu.memory_space<vmem>>, vector<7x16xf32>,
    %cst_42 = arith.constant 0.000000e+00 : f32
    %66 = vector.broadcast %cst_42 : f32 to vector<1x16xf32>
    %c0_43 = arith.constant 0 : index
    %c0_44 = arith.constant 0 : index
    %67 = vector.load %arg6[%c0_43, %c0_44] : memref<24x128xf32, #tpu.memory_space<vmem>>, vector<1x16xf32>
    tpu.vector_store %arg6[%c0_43, %c0_44], %66 {strides = array<i32>} : memref<24x128xf32, #tpu.memory_space<vmem>>, vector<1x16xf32>,
    %68 = vector.extract_strided_slice %59 {offsets = [0, 16], sizes = [7, 16], strides = [1, 1]} : vector<8x32xf32> to vector<7x16xf32>
    %c9 = arith.constant 9 : index
    %c0_45 = arith.constant 0 : index
    %69 = vector.load %arg6[%c9, %c0_45] : memref<24x128xf32, #tpu.memory_space<vmem>>, vector<7x16xf32>
    tpu.vector_store %arg6[%c9, %c0_45], %68 {strides = array<i32>} : memref<24x128xf32, #tpu.memory_space<vmem>>, vector<7x16xf32>,
    %cst_46 = arith.constant 0.000000e+00 : f32
    %70 = vector.broadcast %cst_46 : f32 to vector<1x16xf32>
    %c8_47 = arith.constant 8 : index
    %c0_48 = arith.constant 0 : index
    %71 = vector.load %arg6[%c8_47, %c0_48] : memref<24x128xf32, #tpu.memory_space<vmem>>, vector<1x16xf32>
    tpu.vector_store %arg6[%c8_47, %c0_48], %70 {strides = array<i32>} : memref<24x128xf32, #tpu.memory_space<vmem>>, vector<1x16xf32>,
    %72 = vector.extract_strided_slice %59 {offsets = [0, 0], sizes = [8, 16], strides = [1, 1]} : vector<8x32xf32> to vector<8x16xf32>
    %c0_49 = arith.constant 0 : index
    %c16_50 = arith.constant 16 : index
    %73 = vector.load %arg6[%c0_49, %c16_50] : memref<24x128xf32, #tpu.memory_space<vmem>>, vector<8x16xf32>
    tpu.vector_store %arg6[%c0_49, %c16_50], %72 {strides = array<i32>} : memref<24x128xf32, #tpu.memory_space<vmem>>, vector<8x16xf32>,
    %74 = vector.extract_strided_slice %59 {offsets = [0, 16], sizes = [8, 16], strides = [1, 1]} : vector<8x32xf32> to vector<8x16xf32>
    %c8_51 = arith.constant 8 : index
    %c16_52 = arith.constant 16 : index
    %75 = vector.load %arg6[%c8_51, %c16_52] : memref<24x128xf32, #tpu.memory_space<vmem>>, vector<8x16xf32>
    tpu.vector_store %arg6[%c8_51, %c16_52], %74 {strides = array<i32>} : memref<24x128xf32, #tpu.memory_space<vmem>>, vector<8x16xf32>,
    %76 = vector.extract_strided_slice %59 {offsets = [1, 0], sizes = [7, 16], strides = [1, 1]} : vector<8x32xf32> to vector<7x16xf32>
    %c0_53 = arith.constant 0 : index
    %c32_54 = arith.constant 32 : index
    %77 = vector.load %arg6[%c0_53, %c32_54] : memref<24x128xf32, #tpu.memory_space<vmem>>, vector<7x16xf32>
    tpu.vector_store %arg6[%c0_53, %c32_54], %76 {strides = array<i32>} : memref<24x128xf32, #tpu.memory_space<vmem>>, vector<7x16xf32>,
    %cst_55 = arith.constant 0.000000e+00 : f32
    %78 = vector.broadcast %cst_55 : f32 to vector<1x16xf32>
    %c7 = arith.constant 7 : index
    %c32_56 = arith.constant 32 : index
    %79 = vector.load %arg6[%c7, %c32_56] : memref<24x128xf32, #tpu.memory_space<vmem>>, vector<1x16xf32>
    tpu.vector_store %arg6[%c7, %c32_56], %78 {strides = array<i32>} : memref<24x128xf32, #tpu.memory_space<vmem>>, vector<1x16xf32>,
    %80 = vector.extract_strided_slice %59 {offsets = [1, 16], sizes = [7, 16], strides = [1, 1]} : vector<8x32xf32> to vector<7x16xf32>
    %c8_57 = arith.constant 8 : index
    %c32_58 = arith.constant 32 : index
    %81 = vector.load %arg6[%c8_57, %c32_58] : memref<24x128xf32, #tpu.memory_space<vmem>>, vector<7x16xf32>
    tpu.vector_store %arg6[%c8_57, %c32_58], %80 {strides = array<i32>} : memref<24x128xf32, #tpu.memory_space<vmem>>, vector<7x16xf32>,
    %cst_59 = arith.constant 0.000000e+00 : f32
    %82 = vector.broadcast %cst_59 : f32 to vector<1x16xf32>
    %c15 = arith.constant 15 : index
    %c32_60 = arith.constant 32 : index
    %83 = vector.load %arg6[%c15, %c32_60] : memref<24x128xf32, #tpu.memory_space<vmem>>, vector<1x16xf32>
    tpu.vector_store %arg6[%c15, %c32_60], %82 {strides = array<i32>} : memref<24x128xf32, #tpu.memory_space<vmem>>, vector<1x16xf32>,
    %c0_61 = arith.constant 0 : index
    %c0_62 = arith.constant 0 : index
    %84 = vector.load %arg6[%c0_61, %c0_62] : memref<24x128xf32, #tpu.memory_space<vmem>>, vector<16x48xf32>
    %cst_63 = arith.constant dense<0.000000e+00> : vector<16x12xf32>
    %85 = tpu.matmul %84, %60, %cst_63 {dimension_numbers = #tpu.dot_dimension_numbers<[1], [0], [0], [1], [0, 0, 1, 1], [], []>} : vector<16x48xf32>, vector<48x12xf32>, vector<16x12xf32> -> vector<16x12xf32>
    %86 = vector.broadcast %61 : vector<1x12xf32> to vector<16x12xf32>
    %87 = arith.addf %85, %86 : vector<16x12xf32>
    %88 = vector.shape_cast %87 : vector<16x12xf32> to vector<2x8x12xf32>
    %89 = vector.shape_cast %62 : vector<8x1xf32> to vector<1x8x1xf32>
    %90 = vector.shape_cast %63 : vector<8x1xf32> to vector<1x8x1xf32>
    %cst_64 = arith.constant dense<0.000000e+00> : vector<2x12xf32>
    %91 = vector.multi_reduction <add>, %88, %cst_64 [1] : vector<2x8x12xf32> to vector<2x12xf32>
    %92 = vector.shape_cast %91 : vector<2x12xf32> to vector<2x1x12xf32>
    %cst_65 = arith.constant 1.250000e-01 : f32
    %93 = vector.broadcast %cst_65 : f32 to vector<2x1x12xf32>
    %94 = arith.mulf %92, %93 : vector<2x1x12xf32>
    %95 = vector.broadcast %94 : vector<2x1x12xf32> to vector<2x8x12xf32>
    %96 = arith.subf %88, %95 : vector<2x8x12xf32>
    %97 = arith.mulf %96, %96 : vector<2x8x12xf32>
    %cst_66 = arith.constant dense<0.000000e+00> : vector<2x12xf32>
    %98 = vector.multi_reduction <add>, %97, %cst_66 [1] : vector<2x8x12xf32> to vector<2x12xf32>
    %99 = vector.shape_cast %98 : vector<2x12xf32> to vector<2x1x12xf32>
    %cst_67 = arith.constant 1.250000e-01 : f32
    %100 = vector.broadcast %cst_67 : f32 to vector<2x1x12xf32>
    %101 = arith.mulf %99, %100 : vector<2x1x12xf32>
    %cst_68 = arith.constant 9.99999974E-6 : f32
    %102 = vector.broadcast %cst_68 : f32 to vector<2x1x12xf32>
    %103 = arith.addf %101, %102 : vector<2x1x12xf32>
    %104 = math.rsqrt %103 : vector<2x1x12xf32>
    %105 = vector.broadcast %104 : vector<2x1x12xf32> to vector<2x8x12xf32>
    %106 = arith.mulf %96, %105 : vector<2x8x12xf32>
    %107 = vector.broadcast %89 : vector<1x8x1xf32> to vector<2x8x12xf32>
    %108 = arith.mulf %106, %107 : vector<2x8x12xf32>
    %109 = vector.broadcast %90 : vector<1x8x1xf32> to vector<2x8x12xf32>
    %110 = arith.addf %108, %109 : vector<2x8x12xf32>
    %cst_69 = arith.constant 0.000000e+00 : f32
    %111 = vector.broadcast %cst_69 : f32 to vector<2x8x12xf32>
    %112 = arith.maximumf %110, %111 : vector<2x8x12xf32>
    %113 = vector.shape_cast %112 : vector<2x8x12xf32> to vector<2x4x2x6x2xf32>
    %cst_70 = arith.constant dense<0xFF800000> : vector<2x4x6xf32>
    %114 = vector.multi_reduction <maximumf>, %113, %cst_70 [2, 4] : vector<2x4x2x6x2xf32> to vector<2x4x6xf32>
    %115 = vector.shape_cast %114 : vector<2x4x6xf32> to vector<8x6xf32>
    %c0_71 = arith.constant 0 : index
    %c0_72 = arith.constant 0 : index
    %c0_73 = arith.constant 0 : index
    %116 = vector.load %arg3[%c0_71, %c0_72, %c0_73] : memref<1x8x6xf32, #tpu.memory_space<vmem>>, vector<1x8x6xf32>
    %117 = vector.shape_cast %116 : vector<1x8x6xf32> to vector<8x6xf32>
    %118 = vector.shape_cast %115 : vector<8x6xf32> to vector<1x8x6xf32>
    tpu.vector_store %arg3[%c0_71, %c0_72, %c0_73], %118 {strides = array<i32>} : memref<1x8x6xf32, #tpu.memory_space<vmem>>, vector<1x8x6xf32>,
    %c120 = arith.constant 120 : index
    %c0_74 = arith.constant 0 : index
    %119 = vector.load %arg2[%c120, %c0_74] : memref<336x32xf32, #tpu.memory_space<vmem>>, vector<96x16xf32>
    %c216 = arith.constant 216 : index
    %c0_75 = arith.constant 0 : index
    %120 = vector.load %arg2[%c216, %c0_75] : memref<336x32xf32, #tpu.memory_space<vmem>>, vector<1x16xf32>
    %c224 = arith.constant 224 : index
    %c0_76 = arith.constant 0 : index
    %121 = vector.load %arg2[%c224, %c0_76] : memref<336x32xf32, #tpu.memory_space<vmem>>, vector<8x1xf32>
    %c232 = arith.constant 232 : index
    %c0_77 = arith.constant 0 : index
    %122 = vector.load %arg2[%c232, %c0_77] : memref<336x32xf32, #tpu.memory_space<vmem>>, vector<8x1xf32>
    %123 = vector.extract_strided_slice %1 {offsets = [0, 0], sizes = [7, 32], strides = [1, 1]} : vector<16x32xf32> to vector<7x32xf32>
    %c1_78 = arith.constant 1 : index
    %c0_79 = arith.constant 0 : index
    %124 = vector.load %arg6[%c1_78, %c0_79] : memref<24x128xf32, #tpu.memory_space<vmem>>, vector<7x32xf32>
    tpu.vector_store %arg6[%c1_78, %c0_79], %123 {strides = array<i32>} : memref<24x128xf32, #tpu.memory_space<vmem>>, vector<7x32xf32>,
    %cst_80 = arith.constant 0.000000e+00 : f32
    %125 = vector.broadcast %cst_80 : f32 to vector<1x32xf32>
    %c0_81 = arith.constant 0 : index
    %c0_82 = arith.constant 0 : index
    %126 = vector.load %arg6[%c0_81, %c0_82] : memref<24x128xf32, #tpu.memory_space<vmem>>, vector<1x32xf32>
    tpu.vector_store %arg6[%c0_81, %c0_82], %125 {strides = array<i32>} : memref<24x128xf32, #tpu.memory_space<vmem>>, vector<1x32xf32>,
    %127 = vector.extract_strided_slice %1 {offsets = [8, 0], sizes = [7, 32], strides = [1, 1]} : vector<16x32xf32> to vector<7x32xf32>
    %c9_83 = arith.constant 9 : index
    %c0_84 = arith.constant 0 : index
    %128 = vector.load %arg6[%c9_83, %c0_84] : memref<24x128xf32, #tpu.memory_space<vmem>>, vector<7x32xf32>
    tpu.vector_store %arg6[%c9_83, %c0_84], %127 {strides = array<i32>} : memref<24x128xf32, #tpu.memory_space<vmem>>, vector<7x32xf32>,
    %cst_85 = arith.constant 0.000000e+00 : f32
    %129 = vector.broadcast %cst_85 : f32 to vector<1x32xf32>
    %c8_86 = arith.constant 8 : index
    %c0_87 = arith.constant 0 : index
    %130 = vector.load %arg6[%c8_86, %c0_87] : memref<24x128xf32, #tpu.memory_space<vmem>>, vector<1x32xf32>
    tpu.vector_store %arg6[%c8_86, %c0_87], %129 {strides = array<i32>} : memref<24x128xf32, #tpu.memory_space<vmem>>, vector<1x32xf32>,
    %131 = vector.extract_strided_slice %1 {offsets = [0, 0], sizes = [8, 32], strides = [1, 1]} : vector<16x32xf32> to vector<8x32xf32>
    %c0_88 = arith.constant 0 : index
    %c32_89 = arith.constant 32 : index
    %132 = vector.load %arg6[%c0_88, %c32_89] : memref<24x128xf32, #tpu.memory_space<vmem>>, vector<8x32xf32>
    tpu.vector_store %arg6[%c0_88, %c32_89], %131 {strides = array<i32>} : memref<24x128xf32, #tpu.memory_space<vmem>>, vector<8x32xf32>,
    %133 = vector.extract_strided_slice %1 {offsets = [8, 0], sizes = [8, 32], strides = [1, 1]} : vector<16x32xf32> to vector<8x32xf32>
    %c8_90 = arith.constant 8 : index
    %c32_91 = arith.constant 32 : index
    %134 = vector.load %arg6[%c8_90, %c32_91] : memref<24x128xf32, #tpu.memory_space<vmem>>, vector<8x32xf32>
    tpu.vector_store %arg6[%c8_90, %c32_91], %133 {strides = array<i32>} : memref<24x128xf32, #tpu.memory_space<vmem>>, vector<8x32xf32>,
    %135 = vector.extract_strided_slice %1 {offsets = [1, 0], sizes = [7, 32], strides = [1, 1]} : vector<16x32xf32> to vector<7x32xf32>
    %c0_92 = arith.constant 0 : index
    %c64 = arith.constant 64 : index
    %136 = vector.load %arg6[%c0_92, %c64] : memref<24x128xf32, #tpu.memory_space<vmem>>, vector<7x32xf32>
    tpu.vector_store %arg6[%c0_92, %c64], %135 {strides = array<i32>} : memref<24x128xf32, #tpu.memory_space<vmem>>, vector<7x32xf32>,
    %cst_93 = arith.constant 0.000000e+00 : f32
    %137 = vector.broadcast %cst_93 : f32 to vector<1x32xf32>
    %c7_94 = arith.constant 7 : index
    %c64_95 = arith.constant 64 : index
    %138 = vector.load %arg6[%c7_94, %c64_95] : memref<24x128xf32, #tpu.memory_space<vmem>>, vector<1x32xf32>
    tpu.vector_store %arg6[%c7_94, %c64_95], %137 {strides = array<i32>} : memref<24x128xf32, #tpu.memory_space<vmem>>, vector<1x32xf32>,
    %139 = vector.extract_strided_slice %1 {offsets = [9, 0], sizes = [7, 32], strides = [1, 1]} : vector<16x32xf32> to vector<7x32xf32>
    %c8_96 = arith.constant 8 : index
    %c64_97 = arith.constant 64 : index
    %140 = vector.load %arg6[%c8_96, %c64_97] : memref<24x128xf32, #tpu.memory_space<vmem>>, vector<7x32xf32>
    tpu.vector_store %arg6[%c8_96, %c64_97], %139 {strides = array<i32>} : memref<24x128xf32, #tpu.memory_space<vmem>>, vector<7x32xf32>,
    %cst_98 = arith.constant 0.000000e+00 : f32
    %141 = vector.broadcast %cst_98 : f32 to vector<1x32xf32>
    %c15_99 = arith.constant 15 : index
    %c64_100 = arith.constant 64 : index
    %142 = vector.load %arg6[%c15_99, %c64_100] : memref<24x128xf32, #tpu.memory_space<vmem>>, vector<1x32xf32>
    tpu.vector_store %arg6[%c15_99, %c64_100], %141 {strides = array<i32>} : memref<24x128xf32, #tpu.memory_space<vmem>>, vector<1x32xf32>,
    %c0_101 = arith.constant 0 : index
    %c0_102 = arith.constant 0 : index
    %143 = vector.load %arg6[%c0_101, %c0_102] : memref<24x128xf32, #tpu.memory_space<vmem>>, vector<16x96xf32>
    %cst_103 = arith.constant dense<0.000000e+00> : vector<16x16xf32>
    %144 = tpu.matmul %143, %119, %cst_103 {dimension_numbers = #tpu.dot_dimension_numbers<[1], [0], [0], [1], [0, 0, 1, 1], [], []>} : vector<16x96xf32>, vector<96x16xf32>, vector<16x16xf32> -> vector<16x16xf32>
    %145 = vector.broadcast %120 : vector<1x16xf32> to vector<16x16xf32>
    %146 = arith.addf %144, %145 : vector<16x16xf32>
    %147 = vector.shape_cast %146 : vector<16x16xf32> to vector<2x8x16xf32>
    %148 = vector.shape_cast %121 : vector<8x1xf32> to vector<1x8x1xf32>
    %149 = vector.shape_cast %122 : vector<8x1xf32> to vector<1x8x1xf32>
    %cst_104 = arith.constant dense<0.000000e+00> : vector<2x16xf32>
    %150 = vector.multi_reduction <add>, %147, %cst_104 [1] : vector<2x8x16xf32> to vector<2x16xf32>
    %151 = vector.shape_cast %150 : vector<2x16xf32> to vector<2x1x16xf32>
    %cst_105 = arith.constant 1.250000e-01 : f32
    %152 = vector.broadcast %cst_105 : f32 to vector<2x1x16xf32>
    %153 = arith.mulf %151, %152 : vector<2x1x16xf32>
    %154 = vector.broadcast %153 : vector<2x1x16xf32> to vector<2x8x16xf32>
    %155 = arith.subf %147, %154 : vector<2x8x16xf32>
    %156 = arith.mulf %155, %155 : vector<2x8x16xf32>
    %cst_106 = arith.constant dense<0.000000e+00> : vector<2x16xf32>
    %157 = vector.multi_reduction <add>, %156, %cst_106 [1] : vector<2x8x16xf32> to vector<2x16xf32>
    %158 = vector.shape_cast %157 : vector<2x16xf32> to vector<2x1x16xf32>
    %cst_107 = arith.constant 1.250000e-01 : f32
    %159 = vector.broadcast %cst_107 : f32 to vector<2x1x16xf32>
    %160 = arith.mulf %158, %159 : vector<2x1x16xf32>
    %cst_108 = arith.constant 9.99999974E-6 : f32
    %161 = vector.broadcast %cst_108 : f32 to vector<2x1x16xf32>
    %162 = arith.addf %160, %161 : vector<2x1x16xf32>
    %163 = math.rsqrt %162 : vector<2x1x16xf32>
    %164 = vector.broadcast %163 : vector<2x1x16xf32> to vector<2x8x16xf32>
    %165 = arith.mulf %155, %164 : vector<2x8x16xf32>
    %166 = vector.broadcast %148 : vector<1x8x1xf32> to vector<2x8x16xf32>
    %167 = arith.mulf %165, %166 : vector<2x8x16xf32>
    %168 = vector.broadcast %149 : vector<1x8x1xf32> to vector<2x8x16xf32>
    %169 = arith.addf %167, %168 : vector<2x8x16xf32>
    %cst_109 = arith.constant 0.000000e+00 : f32
    %170 = vector.broadcast %cst_109 : f32 to vector<2x8x16xf32>
    %171 = arith.maximumf %169, %170 : vector<2x8x16xf32>
    %172 = vector.shape_cast %171 : vector<2x8x16xf32> to vector<2x4x2x8x2xf32>
    %cst_110 = arith.constant dense<0xFF800000> : vector<2x4x8xf32>
    %173 = vector.multi_reduction <maximumf>, %172, %cst_110 [2, 4] : vector<2x4x2x8x2xf32> to vector<2x4x8xf32>
    %174 = vector.shape_cast %173 : vector<2x4x8xf32> to vector<8x8xf32>
    %c0_111 = arith.constant 0 : index
    %c0_112 = arith.constant 0 : index
    %c0_113 = arith.constant 0 : index
    %175 = vector.load %arg4[%c0_111, %c0_112, %c0_113] : memref<1x8x8xf32, #tpu.memory_space<vmem>>, vector<1x8x8xf32>
    %176 = vector.shape_cast %175 : vector<1x8x8xf32> to vector<8x8xf32>
    %177 = vector.shape_cast %174 : vector<8x8xf32> to vector<1x8x8xf32>
    tpu.vector_store %arg4[%c0_111, %c0_112, %c0_113], %177 {strides = array<i32>} : memref<1x8x8xf32, #tpu.memory_space<vmem>>, vector<1x8x8xf32>,
    %c240 = arith.constant 240 : index
    %c0_114 = arith.constant 0 : index
    %178 = vector.load %arg2[%c240, %c0_114] : memref<336x32xf32, #tpu.memory_space<vmem>>, vector<16x24xf32>
    %c256 = arith.constant 256 : index
    %c0_115 = arith.constant 0 : index
    %179 = vector.load %arg2[%c256, %c0_115] : memref<336x32xf32, #tpu.memory_space<vmem>>, vector<16x1xf32>
    %c272 = arith.constant 272 : index
    %c0_116 = arith.constant 0 : index
    %180 = vector.load %arg2[%c272, %c0_116] : memref<336x32xf32, #tpu.memory_space<vmem>>, vector<1x32xf32>
    %c280 = arith.constant 280 : index
    %c0_117 = arith.constant 0 : index
    %181 = vector.load %arg2[%c280, %c0_117] : memref<336x32xf32, #tpu.memory_space<vmem>>, vector<1x32xf32>
    %182 = vector.extract_strided_slice %1 {offsets = [0, 0], sizes = [8, 31], strides = [1, 1]} : vector<16x32xf32> to vector<8x31xf32>
    %c0_118 = arith.constant 0 : index
    %c1_119 = arith.constant 1 : index
    %183 = vector.load %arg6[%c0_118, %c1_119] : memref<24x128xf32, #tpu.memory_space<vmem>>, vector<8x31xf32>
    tpu.vector_store %arg6[%c0_118, %c1_119], %182 {strides = array<i32>} : memref<24x128xf32, #tpu.memory_space<vmem>>, vector<8x31xf32>,
    %cst_120 = arith.constant 0.000000e+00 : f32
    %184 = vector.broadcast %cst_120 : f32 to vector<8x1xf32>
    %c0_121 = arith.constant 0 : index
    %c0_122 = arith.constant 0 : index
    %185 = vector.load %arg6[%c0_121, %c0_122] : memref<24x128xf32, #tpu.memory_space<vmem>>, vector<8x1xf32>
    tpu.vector_store %arg6[%c0_121, %c0_122], %184 {strides = array<i32>} : memref<24x128xf32, #tpu.memory_space<vmem>>, vector<8x1xf32>,
    %186 = vector.extract_strided_slice %1 {offsets = [8, 0], sizes = [8, 31], strides = [1, 1]} : vector<16x32xf32> to vector<8x31xf32>
    %c0_123 = arith.constant 0 : index
    %c33_124 = arith.constant 33 : index
    %187 = vector.load %arg6[%c0_123, %c33_124] : memref<24x128xf32, #tpu.memory_space<vmem>>, vector<8x31xf32>
    tpu.vector_store %arg6[%c0_123, %c33_124], %186 {strides = array<i32>} : memref<24x128xf32, #tpu.memory_space<vmem>>, vector<8x31xf32>,
    %cst_125 = arith.constant 0.000000e+00 : f32
    %188 = vector.broadcast %cst_125 : f32 to vector<8x1xf32>
    %c0_126 = arith.constant 0 : index
    %c32_127 = arith.constant 32 : index
    %189 = vector.load %arg6[%c0_126, %c32_127] : memref<24x128xf32, #tpu.memory_space<vmem>>, vector<8x1xf32>
    tpu.vector_store %arg6[%c0_126, %c32_127], %188 {strides = array<i32>} : memref<24x128xf32, #tpu.memory_space<vmem>>, vector<8x1xf32>,
    %190 = vector.extract_strided_slice %1 {offsets = [0, 0], sizes = [8, 32], strides = [1, 1]} : vector<16x32xf32> to vector<8x32xf32>
    %c8_128 = arith.constant 8 : index
    %c0_129 = arith.constant 0 : index
    %191 = vector.load %arg6[%c8_128, %c0_129] : memref<24x128xf32, #tpu.memory_space<vmem>>, vector<8x32xf32>
    tpu.vector_store %arg6[%c8_128, %c0_129], %190 {strides = array<i32>} : memref<24x128xf32, #tpu.memory_space<vmem>>, vector<8x32xf32>,
    %192 = vector.extract_strided_slice %1 {offsets = [8, 0], sizes = [8, 32], strides = [1, 1]} : vector<16x32xf32> to vector<8x32xf32>
    %c8_130 = arith.constant 8 : index
    %c32_131 = arith.constant 32 : index
    %193 = vector.load %arg6[%c8_130, %c32_131] : memref<24x128xf32, #tpu.memory_space<vmem>>, vector<8x32xf32>
    tpu.vector_store %arg6[%c8_130, %c32_131], %192 {strides = array<i32>} : memref<24x128xf32, #tpu.memory_space<vmem>>, vector<8x32xf32>,
    %194 = vector.extract_strided_slice %1 {offsets = [0, 1], sizes = [8, 31], strides = [1, 1]} : vector<16x32xf32> to vector<8x31xf32>
    %c16_132 = arith.constant 16 : index
    %c0_133 = arith.constant 0 : index
    %195 = vector.load %arg6[%c16_132, %c0_133] : memref<24x128xf32, #tpu.memory_space<vmem>>, vector<8x31xf32>
    tpu.vector_store %arg6[%c16_132, %c0_133], %194 {strides = array<i32>} : memref<24x128xf32, #tpu.memory_space<vmem>>, vector<8x31xf32>,
    %cst_134 = arith.constant 0.000000e+00 : f32
    %196 = vector.broadcast %cst_134 : f32 to vector<8x1xf32>
    %c16_135 = arith.constant 16 : index
    %c31_136 = arith.constant 31 : index
    %197 = vector.load %arg6[%c16_135, %c31_136] : memref<24x128xf32, #tpu.memory_space<vmem>>, vector<8x1xf32>
    tpu.vector_store %arg6[%c16_135, %c31_136], %196 {strides = array<i32>} : memref<24x128xf32, #tpu.memory_space<vmem>>, vector<8x1xf32>,
    %198 = vector.extract_strided_slice %1 {offsets = [8, 1], sizes = [8, 31], strides = [1, 1]} : vector<16x32xf32> to vector<8x31xf32>
    %c16_137 = arith.constant 16 : index
    %c32_138 = arith.constant 32 : index
    %199 = vector.load %arg6[%c16_137, %c32_138] : memref<24x128xf32, #tpu.memory_space<vmem>>, vector<8x31xf32>
    tpu.vector_store %arg6[%c16_137, %c32_138], %198 {strides = array<i32>} : memref<24x128xf32, #tpu.memory_space<vmem>>, vector<8x31xf32>,
    %cst_139 = arith.constant 0.000000e+00 : f32
    %200 = vector.broadcast %cst_139 : f32 to vector<8x1xf32>
    %c16_140 = arith.constant 16 : index
    %c63_141 = arith.constant 63 : index
    %201 = vector.load %arg6[%c16_140, %c63_141] : memref<24x128xf32, #tpu.memory_space<vmem>>, vector<8x1xf32>
    tpu.vector_store %arg6[%c16_140, %c63_141], %200 {strides = array<i32>} : memref<24x128xf32, #tpu.memory_space<vmem>>, vector<8x1xf32>,
    %c0_142 = arith.constant 0 : index
    %c0_143 = arith.constant 0 : index
    %202 = vector.load %arg6[%c0_142, %c0_143] : memref<24x128xf32, #tpu.memory_space<vmem>>, vector<24x64xf32>
    %cst_144 = arith.constant dense<0.000000e+00> : vector<16x64xf32>
    %203 = tpu.matmul %178, %202, %cst_144 {dimension_numbers = #tpu.dot_dimension_numbers<[1], [0], [0], [1], [0, 0, 1, 1], [], []>} : vector<16x24xf32>, vector<24x64xf32>, vector<16x64xf32> -> vector<16x64xf32>
    %204 = vector.broadcast %179 : vector<16x1xf32> to vector<16x64xf32>
    %205 = arith.addf %203, %204 : vector<16x64xf32>
    %206 = vector.shape_cast %205 : vector<16x64xf32> to vector<16x2x32xf32>
    %207 = vector.shape_cast %180 : vector<1x32xf32> to vector<1x1x32xf32>
    %208 = vector.shape_cast %181 : vector<1x32xf32> to vector<1x1x32xf32>
    %cst_145 = arith.constant dense<0.000000e+00> : vector<16x2xf32>
    %209 = vector.multi_reduction <add>, %206, %cst_145 [2] : vector<16x2x32xf32> to vector<16x2xf32>
    %210 = vector.shape_cast %209 : vector<16x2xf32> to vector<16x2x1xf32>
    %cst_146 = arith.constant 3.125000e-02 : f32
    %211 = vector.broadcast %cst_146 : f32 to vector<16x2x1xf32>
    %212 = arith.mulf %210, %211 : vector<16x2x1xf32>
    %213 = vector.broadcast %212 : vector<16x2x1xf32> to vector<16x2x32xf32>
    %214 = arith.subf %206, %213 : vector<16x2x32xf32>
    %215 = arith.mulf %214, %214 : vector<16x2x32xf32>
    %cst_147 = arith.constant dense<0.000000e+00> : vector<16x2xf32>
    %216 = vector.multi_reduction <add>, %215, %cst_147 [2] : vector<16x2x32xf32> to vector<16x2xf32>
    %217 = vector.shape_cast %216 : vector<16x2xf32> to vector<16x2x1xf32>
    %cst_148 = arith.constant 3.125000e-02 : f32
    %218 = vector.broadcast %cst_148 : f32 to vector<16x2x1xf32>
    %219 = arith.mulf %217, %218 : vector<16x2x1xf32>
    %cst_149 = arith.constant 9.99999974E-6 : f32
    %220 = vector.broadcast %cst_149 : f32 to vector<16x2x1xf32>
    %221 = arith.addf %219, %220 : vector<16x2x1xf32>
    %222 = math.rsqrt %221 : vector<16x2x1xf32>
    %223 = vector.broadcast %222 : vector<16x2x1xf32> to vector<16x2x32xf32>
    %224 = arith.mulf %214, %223 : vector<16x2x32xf32>
    %225 = vector.broadcast %207 : vector<1x1x32xf32> to vector<16x2x32xf32>
    %226 = arith.mulf %224, %225 : vector<16x2x32xf32>
    %227 = vector.broadcast %208 : vector<1x1x32xf32> to vector<16x2x32xf32>
    %228 = arith.addf %226, %227 : vector<16x2x32xf32>
    %cst_150 = arith.constant 0.000000e+00 : f32
    %229 = vector.broadcast %cst_150 : f32 to vector<16x2x32xf32>
    %230 = arith.maximumf %228, %229 : vector<16x2x32xf32>
    %231 = vector.shape_cast %230 : vector<16x2x32xf32> to vector<16x2x16x2xf32>
    %cst_151 = arith.constant dense<0xFF800000> : vector<16x2x16xf32>
    %232 = vector.multi_reduction <maximumf>, %231, %cst_151 [3] : vector<16x2x16x2xf32> to vector<16x2x16xf32>
    %233 = vector.shape_cast %232 : vector<16x2x16xf32> to vector<8x2x2x16xf32>
    %cst_152 = arith.constant dense<0xFF800000> : vector<8x2x16xf32>
    %234 = vector.multi_reduction <maximumf>, %233, %cst_152 [1] : vector<8x2x2x16xf32> to vector<8x2x16xf32>
    %235 = vector.shape_cast %234 : vector<8x2x16xf32> to vector<8x32xf32>
    %c288 = arith.constant 288 : index
    %c0_153 = arith.constant 0 : index
    %236 = vector.load %arg2[%c288, %c0_153] : memref<336x32xf32, #tpu.memory_space<vmem>>, vector<10x24xf32>
    %c304 = arith.constant 304 : index
    %c0_154 = arith.constant 0 : index
    %237 = vector.load %arg2[%c304, %c0_154] : memref<336x32xf32, #tpu.memory_space<vmem>>, vector<10x1xf32>
    %c320 = arith.constant 320 : index
    %c0_155 = arith.constant 0 : index
    %238 = vector.load %arg2[%c320, %c0_155] : memref<336x32xf32, #tpu.memory_space<vmem>>, vector<1x16xf32>
    %c328 = arith.constant 328 : index
    %c0_156 = arith.constant 0 : index
    %239 = vector.load %arg2[%c328, %c0_156] : memref<336x32xf32, #tpu.memory_space<vmem>>, vector<1x16xf32>
    %240 = vector.extract_strided_slice %235 {offsets = [0, 0], sizes = [8, 15], strides = [1, 1]} : vector<8x32xf32> to vector<8x15xf32>
    %c0_157 = arith.constant 0 : index
    %c1_158 = arith.constant 1 : index
    %241 = vector.load %arg6[%c0_157, %c1_158] : memref<24x128xf32, #tpu.memory_space<vmem>>, vector<8x15xf32>
    tpu.vector_store %arg6[%c0_157, %c1_158], %240 {strides = array<i32>} : memref<24x128xf32, #tpu.memory_space<vmem>>, vector<8x15xf32>,
    %cst_159 = arith.constant 0.000000e+00 : f32
    %242 = vector.broadcast %cst_159 : f32 to vector<8x1xf32>
    %c0_160 = arith.constant 0 : index
    %c0_161 = arith.constant 0 : index
    %243 = vector.load %arg6[%c0_160, %c0_161] : memref<24x128xf32, #tpu.memory_space<vmem>>, vector<8x1xf32>
    tpu.vector_store %arg6[%c0_160, %c0_161], %242 {strides = array<i32>} : memref<24x128xf32, #tpu.memory_space<vmem>>, vector<8x1xf32>,
    %244 = vector.extract_strided_slice %235 {offsets = [0, 16], sizes = [8, 15], strides = [1, 1]} : vector<8x32xf32> to vector<8x15xf32>
    %c0_162 = arith.constant 0 : index
    %c17 = arith.constant 17 : index
    %245 = vector.load %arg6[%c0_162, %c17] : memref<24x128xf32, #tpu.memory_space<vmem>>, vector<8x15xf32>
    tpu.vector_store %arg6[%c0_162, %c17], %244 {strides = array<i32>} : memref<24x128xf32, #tpu.memory_space<vmem>>, vector<8x15xf32>,
    %cst_163 = arith.constant 0.000000e+00 : f32
    %246 = vector.broadcast %cst_163 : f32 to vector<8x1xf32>
    %c0_164 = arith.constant 0 : index
    %c16_165 = arith.constant 16 : index
    %247 = vector.load %arg6[%c0_164, %c16_165] : memref<24x128xf32, #tpu.memory_space<vmem>>, vector<8x1xf32>
    tpu.vector_store %arg6[%c0_164, %c16_165], %246 {strides = array<i32>} : memref<24x128xf32, #tpu.memory_space<vmem>>, vector<8x1xf32>,
    %248 = vector.extract_strided_slice %235 {offsets = [0, 0], sizes = [8, 16], strides = [1, 1]} : vector<8x32xf32> to vector<8x16xf32>
    %c8_166 = arith.constant 8 : index
    %c0_167 = arith.constant 0 : index
    %249 = vector.load %arg6[%c8_166, %c0_167] : memref<24x128xf32, #tpu.memory_space<vmem>>, vector<8x16xf32>
    tpu.vector_store %arg6[%c8_166, %c0_167], %248 {strides = array<i32>} : memref<24x128xf32, #tpu.memory_space<vmem>>, vector<8x16xf32>,
    %250 = vector.extract_strided_slice %235 {offsets = [0, 16], sizes = [8, 16], strides = [1, 1]} : vector<8x32xf32> to vector<8x16xf32>
    %c8_168 = arith.constant 8 : index
    %c16_169 = arith.constant 16 : index
    %251 = vector.load %arg6[%c8_168, %c16_169] : memref<24x128xf32, #tpu.memory_space<vmem>>, vector<8x16xf32>
    tpu.vector_store %arg6[%c8_168, %c16_169], %250 {strides = array<i32>} : memref<24x128xf32, #tpu.memory_space<vmem>>, vector<8x16xf32>,
    %252 = vector.extract_strided_slice %235 {offsets = [0, 1], sizes = [8, 15], strides = [1, 1]} : vector<8x32xf32> to vector<8x15xf32>
    %c16_170 = arith.constant 16 : index
    %c0_171 = arith.constant 0 : index
    %253 = vector.load %arg6[%c16_170, %c0_171] : memref<24x128xf32, #tpu.memory_space<vmem>>, vector<8x15xf32>
    tpu.vector_store %arg6[%c16_170, %c0_171], %252 {strides = array<i32>} : memref<24x128xf32, #tpu.memory_space<vmem>>, vector<8x15xf32>,
    %cst_172 = arith.constant 0.000000e+00 : f32
    %254 = vector.broadcast %cst_172 : f32 to vector<8x1xf32>
    %c16_173 = arith.constant 16 : index
    %c15_174 = arith.constant 15 : index
    %255 = vector.load %arg6[%c16_173, %c15_174] : memref<24x128xf32, #tpu.memory_space<vmem>>, vector<8x1xf32>
    tpu.vector_store %arg6[%c16_173, %c15_174], %254 {strides = array<i32>} : memref<24x128xf32, #tpu.memory_space<vmem>>, vector<8x1xf32>,
    %256 = vector.extract_strided_slice %235 {offsets = [0, 17], sizes = [8, 15], strides = [1, 1]} : vector<8x32xf32> to vector<8x15xf32>
    %c16_175 = arith.constant 16 : index
    %c16_176 = arith.constant 16 : index
    %257 = vector.load %arg6[%c16_175, %c16_176] : memref<24x128xf32, #tpu.memory_space<vmem>>, vector<8x15xf32>
    tpu.vector_store %arg6[%c16_175, %c16_176], %256 {strides = array<i32>} : memref<24x128xf32, #tpu.memory_space<vmem>>, vector<8x15xf32>,
    %cst_177 = arith.constant 0.000000e+00 : f32
    %258 = vector.broadcast %cst_177 : f32 to vector<8x1xf32>
    %c16_178 = arith.constant 16 : index
    %c31_179 = arith.constant 31 : index
    %259 = vector.load %arg6[%c16_178, %c31_179] : memref<24x128xf32, #tpu.memory_space<vmem>>, vector<8x1xf32>
    tpu.vector_store %arg6[%c16_178, %c31_179], %258 {strides = array<i32>} : memref<24x128xf32, #tpu.memory_space<vmem>>, vector<8x1xf32>,
    %c0_180 = arith.constant 0 : index
    %c0_181 = arith.constant 0 : index
    %260 = vector.load %arg6[%c0_180, %c0_181] : memref<24x128xf32, #tpu.memory_space<vmem>>, vector<24x32xf32>
    %cst_182 = arith.constant dense<0.000000e+00> : vector<10x32xf32>
    %261 = tpu.matmul %236, %260, %cst_182 {dimension_numbers = #tpu.dot_dimension_numbers<[1], [0], [0], [1], [0, 0, 1, 1], [], []>} : vector<10x24xf32>, vector<24x32xf32>, vector<10x32xf32> -> vector<10x32xf32>
    %262 = vector.broadcast %237 : vector<10x1xf32> to vector<10x32xf32>
    %263 = arith.addf %261, %262 : vector<10x32xf32>
    %264 = vector.shape_cast %263 : vector<10x32xf32> to vector<10x2x16xf32>
    %265 = vector.shape_cast %238 : vector<1x16xf32> to vector<1x1x16xf32>
    %266 = vector.shape_cast %239 : vector<1x16xf32> to vector<1x1x16xf32>
    %cst_183 = arith.constant dense<0.000000e+00> : vector<10x2xf32>
    %267 = vector.multi_reduction <add>, %264, %cst_183 [2] : vector<10x2x16xf32> to vector<10x2xf32>
    %268 = vector.shape_cast %267 : vector<10x2xf32> to vector<10x2x1xf32>
    %cst_184 = arith.constant 6.250000e-02 : f32
    %269 = vector.broadcast %cst_184 : f32 to vector<10x2x1xf32>
    %270 = arith.mulf %268, %269 : vector<10x2x1xf32>
    %271 = vector.broadcast %270 : vector<10x2x1xf32> to vector<10x2x16xf32>
    %272 = arith.subf %264, %271 : vector<10x2x16xf32>
    %273 = arith.mulf %272, %272 : vector<10x2x16xf32>
    %cst_185 = arith.constant dense<0.000000e+00> : vector<10x2xf32>
    %274 = vector.multi_reduction <add>, %273, %cst_185 [2] : vector<10x2x16xf32> to vector<10x2xf32>
    %275 = vector.shape_cast %274 : vector<10x2xf32> to vector<10x2x1xf32>
    %cst_186 = arith.constant 6.250000e-02 : f32
    %276 = vector.broadcast %cst_186 : f32 to vector<10x2x1xf32>
    %277 = arith.mulf %275, %276 : vector<10x2x1xf32>
    %cst_187 = arith.constant 9.99999974E-6 : f32
    %278 = vector.broadcast %cst_187 : f32 to vector<10x2x1xf32>
    %279 = arith.addf %277, %278 : vector<10x2x1xf32>
    %280 = math.rsqrt %279 : vector<10x2x1xf32>
    %281 = vector.broadcast %280 : vector<10x2x1xf32> to vector<10x2x16xf32>
    %282 = arith.mulf %272, %281 : vector<10x2x16xf32>
    %283 = vector.broadcast %265 : vector<1x1x16xf32> to vector<10x2x16xf32>
    %284 = arith.mulf %282, %283 : vector<10x2x16xf32>
    %285 = vector.broadcast %266 : vector<1x1x16xf32> to vector<10x2x16xf32>
    %286 = arith.addf %284, %285 : vector<10x2x16xf32>
    %cst_188 = arith.constant 0.000000e+00 : f32
    %287 = vector.broadcast %cst_188 : f32 to vector<10x2x16xf32>
    %288 = arith.maximumf %286, %287 : vector<10x2x16xf32>
    %289 = vector.shape_cast %288 : vector<10x2x16xf32> to vector<10x2x8x2xf32>
    %cst_189 = arith.constant dense<0xFF800000> : vector<10x2x8xf32>
    %290 = vector.multi_reduction <maximumf>, %289, %cst_189 [3] : vector<10x2x8x2xf32> to vector<10x2x8xf32>
    %291 = vector.shape_cast %290 : vector<10x2x8xf32> to vector<5x2x2x8xf32>
    %cst_190 = arith.constant dense<0xFF800000> : vector<5x2x8xf32>
    %292 = vector.multi_reduction <maximumf>, %291, %cst_190 [1] : vector<5x2x2x8xf32> to vector<5x2x8xf32>
    %293 = vector.shape_cast %292 : vector<5x2x8xf32> to vector<5x16xf32>
    %c0_191 = arith.constant 0 : index
    %c0_192 = arith.constant 0 : index
    %c0_193 = arith.constant 0 : index
    %294 = vector.load %arg5[%c0_191, %c0_192, %c0_193] : memref<1x5x16xf32, #tpu.memory_space<vmem>>, vector<1x5x16xf32>
    %295 = vector.shape_cast %294 : vector<1x5x16xf32> to vector<5x16xf32>
    %296 = vector.shape_cast %293 : vector<5x16xf32> to vector<1x5x16xf32>
    tpu.vector_store %arg5[%c0_191, %c0_192, %c0_193], %296 {strides = array<i32>} : memref<1x5x16xf32, #tpu.memory_space<vmem>>, vector<1x5x16xf32>,
    return
  }
  func.func @transform_0(%arg0: i32) -> (i32, i32, i32) {
    %c0_i32 = arith.constant 0 : i32
    %c0_i32_0 = arith.constant 0 : i32
    %c0_i32_1 = arith.constant 0 : i32
    return %arg0, %c0_i32, %c0_i32_0 : i32, i32, i32
  }
  func.func @transform_1(%arg0: i32) -> (i32, i32) {
    %c0_i32 = arith.constant 0 : i32
    %c0_i32_0 = arith.constant 0 : i32
    %c0_i32_1 = arith.constant 0 : i32
    return %c0_i32, %c0_i32_0 : i32, i32
  }
  func.func @transform_2(%arg0: i32) -> (i32, i32, i32) {
    %c0_i32 = arith.constant 0 : i32
    %c0_i32_0 = arith.constant 0 : i32
    %c0_i32_1 = arith.constant 0 : i32
    return %arg0, %c0_i32, %c0_i32_0 : i32, i32, i32
  }
  func.func @transform_3(%arg0: i32) -> (i32, i32, i32) {
    %c0_i32 = arith.constant 0 : i32
    %c0_i32_0 = arith.constant 0 : i32
    %c0_i32_1 = arith.constant 0 : i32
    return %arg0, %c0_i32, %c0_i32_0 : i32, i32, i32
  }
  func.func @transform_4(%arg0: i32) -> (i32, i32, i32) {
    %c0_i32 = arith.constant 0 : i32
    %c0_i32_0 = arith.constant 0 : i32
    %c0_i32_1 = arith.constant 0 : i32
    return %arg0, %c0_i32, %c0_i32_0 : i32, i32, i32
  }
}

</mosaic_0001>

<llo_original>
// kernel: tpu_custom_call.1
$region0: #{tpu_custom_call.1}
  #allocation0 [shape = 'u32[]', space=smem, size = 0x4, offset = 0x4, fixed_abs, tag = 'smem constant byte address 0x4 - core index']
  #allocation1 [shape = 'u32[144,128]{1,0:T(1,128)}', space=vmem, size = 0x12000, scoped, tag = 'internal scratch']
  #allocation2 [shape = 'f32[24,128]{1,0:T(8,128)}', space=vmem, size = 0x3000, scoped, tag = 'scratch operand']
  %s0 = inlined_call_operand.vmem [shape: f32[2,8,32], index: 0, kind: input, shape index: {}]
  %s1 = inlined_call_operand.vmem [shape: f32[336,32], index: 1, kind: input, shape index: {}]
  %s2 = inlined_call_operand.vmem [shape: f32[1,8,6], index: 2, kind: output, shape index: {0}]
  %s3 = inlined_call_operand.hbm [shape: f32[1,8,8], index: 3, kind: output, shape index: {1}]
  %s4 = inlined_call_operand.vmem [shape: f32[1,5,16], index: 4, kind: output, shape index: {2}]
  %5 = xla_tuple %s2, %s3, %s4
  %s6 = sld [smem:[#allocation0]]
  $region34: #{tpu_custom_call.1} parent=0
    _
  %s8 = ssub.s32 1, %s6
  %s9 = scalar_select 0, %s8, %s6
  $region1: #{tpu_custom_call.1} parent=0
    #allocation3 [shape = 'u8[4096]{0}', space=vmem, size = 0x1000, scoped, tag = 'output window, operand 1, single buffered']
    #allocation4 [shape = 's32[1]{0}', space=sflag, size = 0x4, scoped, tag = 'scoped memory for tpu_custom_call.1']
    %10 = vsyncpa [#allocation4], 0
    // Predicated region
    $region2: #{tpu_custom_call.1} parent=1 // pred_check
      _
    $region3: #{tpu_custom_call.1} parent=1 // pred_check_branch
      %12 = sbr.rel (0) target = $region5
    $region4: #{tpu_custom_call.1} parent=1 // pred_region
      _
    $region5: #{tpu_custom_call.1} parent=1 // pred_fallthru
      _
    // Predicated region
    $region6: #{tpu_custom_call.1} parent=1 // pred_check
      _
    $region7: #{tpu_custom_call.1} parent=1 // pred_check_branch
      %14 = sbr.rel (0) target = $region9
    $region8: #{tpu_custom_call.1} parent=1 // pred_region
      _
    $region9: #{tpu_custom_call.1} parent=1 // pred_fallthru
      _
    %v15 = vld [vmem:[%s0] sm:$0xff]
    %v16 = vld [vmem:[%s0 + $0x8] sm:$0xff]
    %v17 = vld [vmem:[%s1] sm:$0xff]
    %v18 = vld [vmem:[%s1 + $0x8] sm:$0xff]
    %v19 = vld [vmem:[%s1 + $0x10] sm:$0xff]
    %v20 = vld [vmem:[%s1 + $0x18] sm:$0xff]
    %v21 = vld [vmem:[%s1 + $0x20] sm:$0x1]
    %v22 = vld [vmem:[%s1 + $0x28] sm:$0x1]
    %24 = vrot.lane.b32.xlu0 %v15, 1
    %v25 = vpop.permute.xlu0 %24
    %vm27 = vcmask 261128
    %28 = vst.msk [vmem:[#allocation2] sm:$0xff] %vm27, %v25
    %vm29 = vcmask 7168
    %30 = vst.msk [vmem:[#allocation2] sm:$0xff] %vm29, 0.0
    %32 = vrot.lane.b32.xlu0 %v16, 33
    %v33 = vpop.permute.xlu0 %32
    %vm35 = vcmask 523528
    %36 = vst.msk [vmem:[#allocation2] sm:$0xff] %vm35, %v33
    %vm37 = vcmask 269568
    %38 = vst.msk [vmem:[#allocation2] sm:$0xff] %vm37, 0.0
    %vm39 = vcmask 261120
    %40 = vst.msk [vmem:[#allocation2 + $0x8] sm:$0xff] %vm39, %v15
    %41 = vrot.lane.b32.xlu0 %v16, 32
    %v42 = vpop.permute.xlu0 %41
    %vm44 = vcmask 523520
    %45 = vst.msk [vmem:[#allocation2 + $0x8] sm:$0xff] %vm44, %v42
    %46 = vrot.lane.b32.xlu0 %v15, 127
    %v47 = vpop.permute.xlu0 %46
    %vm49 = vcmask 252928
    %50 = vst.msk [vmem:[#allocation2 + $0x10] sm:$0xff] %vm49, %v47
    %vm51 = vcmask 261368
    %52 = vst.msk [vmem:[#allocation2 + $0x10] sm:$0xff] %vm51, 0.0
    %53 = vrot.lane.b32.xlu0 %v16, 31
    %v54 = vpop.permute.xlu0 %53
    %vm56 = vcmask 515328
    %57 = vst.msk [vmem:[#allocation2 + $0x10] sm:$0xff] %vm56, %v54
    %vm58 = vcmask 523768
    %59 = vst.msk [vmem:[#allocation2 + $0x10] sm:$0xff] %vm58, 0.0
    %v60 = vld [vmem:[#allocation2] sm:$0xff]
    %v61 = vld [vmem:[#allocation2 + $0x8] sm:$0xff]
    %v62 = vld [vmem:[#allocation2 + $0x10] sm:$0xff]
    %64 = vset.pattern.permute.xlu0 0
    %65 = vperm.xlu0 %64, %v19
    %v66 = vpop.permute.xlu0 %65
    %69 = vset.pattern.permute.xlu0 0
    %70 = vperm.xlu0 %69, %v20
    %v71 = vpop.permute.xlu0 %70
    %vm73 = vcmask 195584
    %v75 = vsel %vm73, %v17, 0
    %v78 = vsel %vm73, %v18, 0
    %80 = vmatprep.subr.mxu0 0.0
    %81 = vmatpush1.msra.mxu0 0.0
    %82 = vmatprep.subr.mxu0 0.0
    %83 = vmatpush1.msra.mxu0 0.0
    %84 = vmatprep.subr.mxu0 0.0
    %85 = vmatpush1.msra.mxu0 0.0
    %86 = vmatprep.subr.mxu0 0.0
    %87 = vmatpush1.msra.mxu0 0.0
    %88 = vmatprep.subr.mxu0 0.0
    %89 = vmatpush1.msra.mxu0 0.0
    %90 = vmatprep.subr.mxu0 0.0
    %91 = vmatpush1.msra.mxu0 0.0
    %92 = vmatprep.subr.mxu0 0.0
    %93 = vmatpush1.msra.mxu0 0.0
    %94 = vmatprep.subr.mxu0 0.0
    %95 = vmatpush1.msra.mxu0 0.0
    %96 = vmatprep.subr.mxu0 0.0
    %97 = vmatpush1.msra.mxu0 0.0
    %98 = vmatprep.subr.mxu0 0.0
    %99 = vmatpush1.msra.mxu0 0.0
    %100 = vmatprep.subr.mxu0 0.0
    %101 = vmatpush1.msra.mxu0 0.0
    %102 = vmatprep.subr.mxu0 0.0
    %103 = vmatpush1.msra.mxu0 0.0
    %104 = vmatprep.subr.mxu0 0.0
    %105 = vmatpush1.msra.mxu0 0.0
    %106 = vmatprep.subr.mxu0 0.0
    %107 = vmatpush1.msra.mxu0 %v62
    %108 = vmatprep.subr.mxu0 0.0
    %109 = vmatpush1.msra.mxu0 %v61
    %110 = vmatprep.subr.mxu0 0.0
    %111 = vmatpush1.msra.mxu0 %v60
    %112 = vmatprep.subr.mxu0 0.0
    %113 = vmatpush2.msra.mxu0 0.0
    %114 = vmatprep.subr.mxu0 0.0
    %115 = vmatpush2.msra.mxu0 0.0
    %116 = vmatprep.subr.mxu0 0.0
    %117 = vmatpush2.msra.mxu0 0.0
    %118 = vmatprep.subr.mxu0 0.0
    %119 = vmatpush2.msra.mxu0 0.0
    %120 = vmatprep.subr.mxu0 0.0
    %121 = vmatpush2.msra.mxu0 0.0
    %122 = vmatprep.subr.mxu0 0.0
    %123 = vmatpush2.msra.mxu0 0.0
    %124 = vmatprep.subr.mxu0 0.0
    %125 = vmatpush2.msra.mxu0 0.0
    %126 = vmatprep.subr.mxu0 0.0
    %127 = vmatpush2.msra.mxu0 0.0
    %128 = vmatprep.subr.mxu0 0.0
    %129 = vmatpush2.msra.mxu0 0.0
    %130 = vmatprep.subr.mxu0 0.0
    %131 = vmatpush2.msra.mxu0 0.0
    %132 = vmatprep.subr.mxu0 0.0
    %133 = vmatpush2.msra.mxu0 0.0
    %134 = vmatprep.subr.mxu0 0.0
    %135 = vmatpush2.msra.mxu0 0.0
    %136 = vmatprep.subr.mxu0 0.0
    %137 = vmatpush2.msra.mxu0 0.0
    %138 = vmatprep.subr.mxu0 0.0
    %139 = vmatpush2.msra.mxu0 0.0
    %140 = vmatprep.subr.mxu0 0.0
    %141 = vmatpush2.msra.mxu0 0.0
    %142 = vmatprep.subr.mxu0 0.0
    %143 = vmatpush2.msra.mxu0 0.0
    %144 = vmatprep.mubr.f32.mxu0 0.0
    %145 = vmatmul.mubr.f32.gmra.mxu0 %v75
    %v146 = vpop.f32.mrf.mxu0
    %v147 = vadd.f32 %v66, %v146
    %v148 = vpop.f32.mrf.mxu0
    %149 = vmatprep.mubr.f32.mxu0 0.0
    %150 = vmatmul.mubr.f32.gmra.mxu0 %v78
    %v151 = vpop.f32.mrf.mxu0
    %v152 = vadd.f32 %v71, %v151
    %v153 = vpop.f32.mrf.mxu0
    %154 = vdwg.mxu0
    %157 = vrot.lane.b32.xlu0 %v147, 96
    %v158 = vpop.permute.xlu0 %157
    %159 = vrot.lane.b32.xlu0 %v152, 96
    %v160 = vpop.permute.xlu0 %159
    %v163 = vcombine.high %v147, 0.0
    %v165 = vunpack.c.l.s4 1983009808
    %v166 = vunpack.c.0.s8 %v165
    %v167 = vlaneseq
    %v168 = vshrl.u32 %v167, 7
    %v169 = vsub.s32 %v166, %v168
    %v170 = vrot.slane %v147, %v169
    %v172 = vunpack.c.l.s4 1983009808
    %v173 = vunpack.c.0.s8 %v172
    %v174 = vlaneseq
    %v175 = vshrl.u32 %v174, 7
    %v176 = vsub.s32 %v173, %v175
    %v177 = vrot.slane %v163, %v176
    %v178 = vcombine.high %v158, 0.0
    %v180 = vunpack.c.l.s4 1983009808
    %v181 = vunpack.c.0.s8 %v180
    %v182 = vlaneseq
    %v183 = vshrl.u32 %v182, 7
    %v184 = vsub.s32 %v181, %v183
    %v185 = vrot.slane %v158, %v184
    %v187 = vunpack.c.l.s4 1983009808
    %v188 = vunpack.c.0.s8 %v187
    %v189 = vlaneseq
    %v190 = vshrl.u32 %v189, 7
    %v191 = vsub.s32 %v188, %v190
    %v192 = vrot.slane %v178, %v191
    %v193 = vcombine.low %v170, %v185
    %v194 = vcombine.high %v170, %v185
    %v196 = vunpack.c.l.s4 1934713408
    %v197 = vunpack.c.0.s8 %v196
    %v198 = vlaneseq
    %v199 = vshrl.u32 %v198, 7
    %v200 = vsub.s32 %v197, %v199
    %v201 = vrot.slane %v193, %v200
    %v203 = vunpack.c.l.s4 1934713408
    %v204 = vunpack.c.0.s8 %v203
    %v205 = vlaneseq
    %v206 = vshrl.u32 %v205, 7
    %v207 = vsub.s32 %v204, %v206
    %v208 = vrot.slane %v194, %v207
    %v209 = vcombine.low %v177, %v192
    %v210 = vcombine.high %v177, %v192
    %v212 = vunpack.c.l.s4 1934713408
    %v213 = vunpack.c.0.s8 %v212
    %v214 = vlaneseq
    %v215 = vshrl.u32 %v214, 7
    %v216 = vsub.s32 %v213, %v215
    %v217 = vrot.slane %v209, %v216
    %v219 = vunpack.c.l.s4 1934713408
    %v220 = vunpack.c.0.s8 %v219
    %v221 = vlaneseq
    %v222 = vshrl.u32 %v221, 7
    %v223 = vsub.s32 %v220, %v222
    %v224 = vrot.slane %v210, %v223
    %v225 = vcombine.high %v201, 0.0
    %v226 = vcombine.high %v208, 0.0
    %v227 = vcombine.high %v217, 0.0
    %v228 = vcombine.high %v224, 0.0
    %v229 = vcombine.high %v152, 0.0
    %v231 = vunpack.c.l.s4 1983009808
    %v232 = vunpack.c.0.s8 %v231
    %v233 = vlaneseq
    %v234 = vshrl.u32 %v233, 7
    %v235 = vsub.s32 %v232, %v234
    %v236 = vrot.slane %v152, %v235
    %v238 = vunpack.c.l.s4 1983009808
    %v239 = vunpack.c.0.s8 %v238
    %v240 = vlaneseq
    %v241 = vshrl.u32 %v240, 7
    %v242 = vsub.s32 %v239, %v241
    %v243 = vrot.slane %v229, %v242
    %v244 = vcombine.high %v160, 0.0
    %v246 = vunpack.c.l.s4 1983009808
    %v247 = vunpack.c.0.s8 %v246
    %v248 = vlaneseq
    %v249 = vshrl.u32 %v248, 7
    %v250 = vsub.s32 %v247, %v249
    %v251 = vrot.slane %v160, %v250
    %v253 = vunpack.c.l.s4 1983009808
    %v254 = vunpack.c.0.s8 %v253
    %v255 = vlaneseq
    %v256 = vshrl.u32 %v255, 7
    %v257 = vsub.s32 %v254, %v256
    %v258 = vrot.slane %v244, %v257
    %v259 = vcombine.low %v236, %v251
    %v260 = vcombine.high %v236, %v251
    %v262 = vunpack.c.l.s4 1934713408
    %v263 = vunpack.c.0.s8 %v262
    %v264 = vlaneseq
    %v265 = vshrl.u32 %v264, 7
    %v266 = vsub.s32 %v263, %v265
    %v267 = vrot.slane %v259, %v266
    %v269 = vunpack.c.l.s4 1934713408
    %v270 = vunpack.c.0.s8 %v269
    %v271 = vlaneseq
    %v272 = vshrl.u32 %v271, 7
    %v273 = vsub.s32 %v270, %v272
    %v274 = vrot.slane %v260, %v273
    %v275 = vcombine.low %v243, %v258
    %v276 = vcombine.high %v243, %v258
    %v278 = vunpack.c.l.s4 1934713408
    %v279 = vunpack.c.0.s8 %v278
    %v280 = vlaneseq
    %v281 = vshrl.u32 %v280, 7
    %v282 = vsub.s32 %v279, %v281
    %v283 = vrot.slane %v275, %v282
    %v285 = vunpack.c.l.s4 1934713408
    %v286 = vunpack.c.0.s8 %v285
    %v287 = vlaneseq
    %v288 = vshrl.u32 %v287, 7
    %v289 = vsub.s32 %v286, %v288
    %v290 = vrot.slane %v276, %v289
    %v291 = vcombine.high %v267, 0.0
    %v292 = vcombine.high %v274, 0.0
    %v293 = vcombine.high %v283, 0.0
    %v294 = vcombine.high %v290, 0.0
    %vm295 = vcmask 254976
    %v296 = vsel %vm295, %v201, 0.0
    %297 = vadd.xlane.f32.xlu0 %v296
    %v298 = vpop.xlane.xlu0 %297
    %v299 = vsel %vm295, %v225, 0.0
    %300 = vadd.xlane.f32.xlu0 %v299
    %v301 = vpop.xlane.xlu0 %300
    %v302 = vsel %vm295, %v208, 0.0
    %303 = vadd.xlane.f32.xlu0 %v302
    %v304 = vpop.xlane.xlu0 %303
    %v305 = vsel %vm295, %v226, 0.0
    %306 = vadd.xlane.f32.xlu0 %v305
    %v307 = vpop.xlane.xlu0 %306
    %v308 = vsel %vm295, %v217, 0.0
    %309 = vadd.xlane.f32.xlu0 %v308
    %v310 = vpop.xlane.xlu0 %309
    %v311 = vsel %vm295, %v227, 0.0
    %312 = vadd.xlane.f32.xlu0 %v311
    %v313 = vpop.xlane.xlu0 %312
    %v314 = vsel %vm295, %v224, 0.0
    %315 = vadd.xlane.f32.xlu0 %v314
    %v316 = vpop.xlane.xlu0 %315
    %v317 = vsel %vm295, %v228, 0.0
    %318 = vadd.xlane.f32.xlu0 %v317
    %v319 = vpop.xlane.xlu0 %318
    %v320 = vsel %vm295, %v267, 0.0
    %321 = vadd.xlane.f32.xlu0 %v320
    %v322 = vpop.xlane.xlu0 %321
    %v323 = vsel %vm295, %v291, 0.0
    %324 = vadd.xlane.f32.xlu0 %v323
    %v325 = vpop.xlane.xlu0 %324
    %v326 = vsel %vm295, %v274, 0.0
    %327 = vadd.xlane.f32.xlu0 %v326
    %v328 = vpop.xlane.xlu0 %327
    %v329 = vsel %vm295, %v292, 0.0
    %330 = vadd.xlane.f32.xlu0 %v329
    %v331 = vpop.xlane.xlu0 %330
    %v332 = vsel %vm295, %v283, 0.0
    %333 = vadd.xlane.f32.xlu0 %v332
    %v334 = vpop.xlane.xlu0 %333
    %v335 = vsel %vm295, %v293, 0.0
    %336 = vadd.xlane.f32.xlu0 %v335
    %v337 = vpop.xlane.xlu0 %336
    %v338 = vsel %vm295, %v290, 0.0
    %339 = vadd.xlane.f32.xlu0 %v338
    %v340 = vpop.xlane.xlu0 %339
    %v341 = vsel %vm295, %v294, 0.0
    %342 = vadd.xlane.f32.xlu0 %v341
    %v343 = vpop.xlane.xlu0 %342
    %v344 = vmul.f32 %v298, 0.03125
    %v345 = vmul.f32 %v301, 0.03125
    %v346 = vmul.f32 %v304, 0.03125
    %v347 = vmul.f32 %v307, 0.03125
    %v348 = vmul.f32 %v310, 0.03125
    %v349 = vmul.f32 %v313, 0.03125
    %v350 = vmul.f32 %v316, 0.03125
    %v351 = vmul.f32 %v319, 0.03125
    %v352 = vmul.f32 %v322, 0.03125
    %v353 = vmul.f32 %v325, 0.03125
    %v354 = vmul.f32 %v328, 0.03125
    %v355 = vmul.f32 %v331, 0.03125
    %v356 = vmul.f32 %v334, 0.03125
    %v357 = vmul.f32 %v337, 0.03125
    %v358 = vmul.f32 %v340, 0.03125
    %v359 = vmul.f32 %v343, 0.03125
    %v360 = vsub.f32 %v201, %v344
    %v361 = vsub.f32 %v225, %v345
    %v362 = vsub.f32 %v208, %v346
    %v363 = vsub.f32 %v226, %v347
    %v364 = vsub.f32 %v217, %v348
    %v365 = vsub.f32 %v227, %v349
    %v366 = vsub.f32 %v224, %v350
    %v367 = vsub.f32 %v228, %v351
    %v368 = vsub.f32 %v267, %v352
    %v369 = vsub.f32 %v291, %v353
    %v370 = vsub.f32 %v274, %v354
    %v371 = vsub.f32 %v292, %v355
    %v372 = vsub.f32 %v283, %v356
    %v373 = vsub.f32 %v293, %v357
    %v374 = vsub.f32 %v290, %v358
    %v375 = vsub.f32 %v294, %v359
    %v376 = vmul.f32 %v360, %v360
    %v377 = vmul.f32 %v361, %v361
    %v378 = vmul.f32 %v362, %v362
    %v379 = vmul.f32 %v363, %v363
    %v380 = vmul.f32 %v364, %v364
    %v381 = vmul.f32 %v365, %v365
    %v382 = vmul.f32 %v366, %v366
    %v383 = vmul.f32 %v367, %v367
    %v384 = vmul.f32 %v368, %v368
    %v385 = vmul.f32 %v369, %v369
    %v386 = vmul.f32 %v370, %v370
    %v387 = vmul.f32 %v371, %v371
    %v388 = vmul.f32 %v372, %v372
    %v389 = vmul.f32 %v373, %v373
    %v390 = vmul.f32 %v374, %v374
    %v391 = vmul.f32 %v375, %v375
    %v392 = vsel %vm295, %v376, 0.0
    %393 = vadd.xlane.f32.xlu0 %v392
    %v394 = vpop.xlane.xlu0 %393
    %v395 = vsel %vm295, %v377, 0.0
    %396 = vadd.xlane.f32.xlu0 %v395
    %v397 = vpop.xlane.xlu0 %396
    %v398 = vsel %vm295, %v378, 0.0
    %399 = vadd.xlane.f32.xlu0 %v398
    %v400 = vpop.xlane.xlu0 %399
    %v401 = vsel %vm295, %v379, 0.0
    %402 = vadd.xlane.f32.xlu0 %v401
    %v403 = vpop.xlane.xlu0 %402
    %v404 = vsel %vm295, %v380, 0.0
    %405 = vadd.xlane.f32.xlu0 %v404
    %v406 = vpop.xlane.xlu0 %405
    %v407 = vsel %vm295, %v381, 0.0
    %408 = vadd.xlane.f32.xlu0 %v407
    %v409 = vpop.xlane.xlu0 %408
    %v410 = vsel %vm295, %v382, 0.0
    %411 = vadd.xlane.f32.xlu0 %v410
    %v412 = vpop.xlane.xlu0 %411
    %v413 = vsel %vm295, %v383, 0.0
    %414 = vadd.xlane.f32.xlu0 %v413
    %v415 = vpop.xlane.xlu0 %414
    %v416 = vsel %vm295, %v384, 0.0
    %417 = vadd.xlane.f32.xlu0 %v416
    %v418 = vpop.xlane.xlu0 %417
    %v419 = vsel %vm295, %v385, 0.0
    %420 = vadd.xlane.f32.xlu0 %v419
    %v421 = vpop.xlane.xlu0 %420
    %v422 = vsel %vm295, %v386, 0.0
    %423 = vadd.xlane.f32.xlu0 %v422
    %v424 = vpop.xlane.xlu0 %423
    %v425 = vsel %vm295, %v387, 0.0
    %426 = vadd.xlane.f32.xlu0 %v425
    %v427 = vpop.xlane.xlu0 %426
    %v428 = vsel %vm295, %v388, 0.0
    %429 = vadd.xlane.f32.xlu0 %v428
    %v430 = vpop.xlane.xlu0 %429
    %v431 = vsel %vm295, %v389, 0.0
    %432 = vadd.xlane.f32.xlu0 %v431
    %v433 = vpop.xlane.xlu0 %432
    %v434 = vsel %vm295, %v390, 0.0
    %435 = vadd.xlane.f32.xlu0 %v434
    %v436 = vpop.xlane.xlu0 %435
    %v437 = vsel %vm295, %v391, 0.0
    %438 = vadd.xlane.f32.xlu0 %v437
    %v439 = vpop.xlane.xlu0 %438
    %v440 = vmul.f32 %v394, 0.03125
    %v441 = vmul.f32 %v397, 0.03125
    %v442 = vmul.f32 %v400, 0.03125
    %v443 = vmul.f32 %v403, 0.03125
    %v444 = vmul.f32 %v406, 0.03125
    %v445 = vmul.f32 %v409, 0.03125
    %v446 = vmul.f32 %v412, 0.03125
    %v447 = vmul.f32 %v415, 0.03125
    %v448 = vmul.f32 %v418, 0.03125
    %v449 = vmul.f32 %v421, 0.03125
    %v450 = vmul.f32 %v424, 0.03125
    %v451 = vmul.f32 %v427, 0.03125
    %v452 = vmul.f32 %v430, 0.03125
    %v453 = vmul.f32 %v433, 0.03125
    %v454 = vmul.f32 %v436, 0.03125
    %v455 = vmul.f32 %v439, 0.03125
    %v456 = vadd.f32 %v440, 1e-05
    %v457 = vadd.f32 %v441, 1e-05
    %v458 = vadd.f32 %v442, 1e-05
    %v459 = vadd.f32 %v443, 1e-05
    %v460 = vadd.f32 %v444, 1e-05
    %v461 = vadd.f32 %v445, 1e-05
    %v462 = vadd.f32 %v446, 1e-05
    %v463 = vadd.f32 %v447, 1e-05
    %v464 = vadd.f32 %v448, 1e-05
    %v465 = vadd.f32 %v449, 1e-05
    %v466 = vadd.f32 %v450, 1e-05
    %v467 = vadd.f32 %v451, 1e-05
    %v468 = vadd.f32 %v452, 1e-05
    %v469 = vadd.f32 %v453, 1e-05
    %v470 = vadd.f32 %v454, 1e-05
    %v471 = vadd.f32 %v455, 1e-05
    %v472 = vrsqrt.pop %v456
    %v473 = vrsqrt.pop %v457
    %v474 = vrsqrt.pop %v458
    %v475 = vrsqrt.pop %v459
    %v476 = vrsqrt.pop %v460
    %v477 = vrsqrt.pop %v461
    %v478 = vrsqrt.pop %v462
    %v479 = vrsqrt.pop %v463
    %v480 = vrsqrt.pop %v464
    %v481 = vrsqrt.pop %v465
    %v482 = vrsqrt.pop %v466
    %v483 = vrsqrt.pop %v467
    %v484 = vrsqrt.pop %v468
    %v485 = vrsqrt.pop %v469
    %v486 = vrsqrt.pop %v470
    %v487 = vrsqrt.pop %v471
    %v488 = vmul.f32 %v360, %v472
    %v489 = vmul.f32 %v361, %v473
    %v490 = vmul.f32 %v362, %v474
    %v491 = vmul.f32 %v363, %v475
    %v492 = vmul.f32 %v364, %v476
    %v493 = vmul.f32 %v365, %v477
    %v494 = vmul.f32 %v366, %v478
    %v495 = vmul.f32 %v367, %v479
    %v496 = vmul.f32 %v368, %v480
    %v497 = vmul.f32 %v369, %v481
    %v498 = vmul.f32 %v370, %v482
    %v499 = vmul.f32 %v371, %v483
    %v500 = vmul.f32 %v372, %v484
    %v501 = vmul.f32 %v373, %v485
    %v502 = vmul.f32 %v374, %v486
    %v503 = vmul.f32 %v375, %v487
    %v504 = vlaneseq
    %v505 = vshrl.u32 %v504, 7
    %v506 = vsub.s32 0, %v505
    %v507 = vrot.slane %v21, %v506
    %v508 = vmul.f32 %v488, %v507
    %v509 = vmul.f32 %v489, %v507
    %v510 = vmul.f32 %v490, %v507
    %v511 = vmul.f32 %v491, %v507
    %v512 = vmul.f32 %v492, %v507
    %v513 = vmul.f32 %v493, %v507
    %v514 = vmul.f32 %v494, %v507
    %v515 = vmul.f32 %v495, %v507
    %v516 = vmul.f32 %v496, %v507
    %v517 = vmul.f32 %v497, %v507
    %v518 = vmul.f32 %v498, %v507
    %v519 = vmul.f32 %v499, %v507
    %v520 = vmul.f32 %v500, %v507
    %v521 = vmul.f32 %v501, %v507
    %v522 = vmul.f32 %v502, %v507
    %v523 = vmul.f32 %v503, %v507
    %v524 = vlaneseq
    %v525 = vshrl.u32 %v524, 7
    %v526 = vsub.s32 0, %v525
    %v527 = vrot.slane %v22, %v526
    %v528 = vadd.f32 %v508, %v527
    %v529 = vadd.f32 %v509, %v527
    %v530 = vadd.f32 %v510, %v527
    %v531 = vadd.f32 %v511, %v527
    %v532 = vadd.f32 %v512, %v527
    %v533 = vadd.f32 %v513, %v527
    %v534 = vadd.f32 %v514, %v527
    %v535 = vadd.f32 %v515, %v527
    %v536 = vadd.f32 %v516, %v527
    %v537 = vadd.f32 %v517, %v527
    %v538 = vadd.f32 %v518, %v527
    %v539 = vadd.f32 %v519, %v527
    %v540 = vadd.f32 %v520, %v527
    %v541 = vadd.f32 %v521, %v527
    %v542 = vadd.f32 %v522, %v527
    %v543 = vadd.f32 %v523, %v527
    %v544 = vmax.f32 %v528, 0.0
    %v545 = vmax.f32 %v529, 0.0
    %v546 = vmax.f32 %v530, 0.0
    %v547 = vmax.f32 %v531, 0.0
    %v548 = vmax.f32 %v532, 0.0
    %v549 = vmax.f32 %v533, 0.0
    %v550 = vmax.f32 %v534, 0.0
    %v551 = vmax.f32 %v535, 0.0
    %v552 = vmax.f32 %v536, 0.0
    %v553 = vmax.f32 %v537, 0.0
    %v554 = vmax.f32 %v538, 0.0
    %v555 = vmax.f32 %v539, 0.0
    %v556 = vmax.f32 %v540, 0.0
    %v557 = vmax.f32 %v541, 0.0
    %v558 = vmax.f32 %v542, 0.0
    %v559 = vmax.f32 %v543, 0.0
    %576 = vrot.lane.b32.xlu0 %v544, 126
    %v577 = vpop.permute.xlu0 %576
    %578 = vrot.lane.b32.xlu0 %v545, 126
    %v579 = vpop.permute.xlu0 %578
    %580 = vrot.lane.b32.xlu0 %v546, 126
    %v581 = vpop.permute.xlu0 %580
    %582 = vrot.lane.b32.xlu0 %v547, 126
    %v583 = vpop.permute.xlu0 %582
    %584 = vrot.lane.b32.xlu0 %v548, 126
    %v585 = vpop.permute.xlu0 %584
    %586 = vrot.lane.b32.xlu0 %v549, 126
    %v587 = vpop.permute.xlu0 %586
    %588 = vrot.lane.b32.xlu0 %v550, 126
    %v589 = vpop.permute.xlu0 %588
    %590 = vrot.lane.b32.xlu0 %v551, 126
    %v591 = vpop.permute.xlu0 %590
    %592 = vrot.lane.b32.xlu0 %v552, 126
    %v593 = vpop.permute.xlu0 %592
    %594 = vrot.lane.b32.xlu0 %v553, 126
    %v595 = vpop.permute.xlu0 %594
    %596 = vrot.lane.b32.xlu0 %v554, 126
    %v597 = vpop.permute.xlu0 %596
    %598 = vrot.lane.b32.xlu0 %v555, 126
    %v599 = vpop.permute.xlu0 %598
    %600 = vrot.lane.b32.xlu0 %v556, 126
    %v601 = vpop.permute.xlu0 %600
    %602 = vrot.lane.b32.xlu0 %v557, 126
    %v603 = vpop.permute.xlu0 %602
    %604 = vrot.lane.b32.xlu0 %v558, 126
    %v605 = vpop.permute.xlu0 %604
    %606 = vrot.lane.b32.xlu0 %v559, 126
    %v607 = vpop.permute.xlu0 %606
    %624 = vrot.lane.b32.xlu0 %v544, 124
    %v625 = vpop.permute.xlu0 %624
    %626 = vrot.lane.b32.xlu0 %v545, 124
    %v627 = vpop.permute.xlu0 %626
    %628 = vrot.lane.b32.xlu0 %v546, 124
    %v629 = vpop.permute.xlu0 %628
    %630 = vrot.lane.b32.xlu0 %v547, 124
    %v631 = vpop.permute.xlu0 %630
    %632 = vrot.lane.b32.xlu0 %v548, 124
    %v633 = vpop.permute.xlu0 %632
    %634 = vrot.lane.b32.xlu0 %v549, 124
    %v635 = vpop.permute.xlu0 %634
    %636 = vrot.lane.b32.xlu0 %v550, 124
    %v637 = vpop.permute.xlu0 %636
    %638 = vrot.lane.b32.xlu0 %v551, 124
    %v639 = vpop.permute.xlu0 %638
    %640 = vrot.lane.b32.xlu0 %v552, 124
    %v641 = vpop.permute.xlu0 %640
    %642 = vrot.lane.b32.xlu0 %v553, 124
    %v643 = vpop.permute.xlu0 %642
    %644 = vrot.lane.b32.xlu0 %v554, 124
    %v645 = vpop.permute.xlu0 %644
    %646 = vrot.lane.b32.xlu0 %v555, 124
    %v647 = vpop.permute.xlu0 %646
    %648 = vrot.lane.b32.xlu0 %v556, 124
    %v649 = vpop.permute.xlu0 %648
    %650 = vrot.lane.b32.xlu0 %v557, 124
    %v651 = vpop.permute.xlu0 %650
    %652 = vrot.lane.b32.xlu0 %v558, 124
    %v653 = vpop.permute.xlu0 %652
    %654 = vrot.lane.b32.xlu0 %v559, 124
    %v655 = vpop.permute.xlu0 %654
    %672 = vrot.lane.b32.xlu0 %v544, 122
    %v673 = vpop.permute.xlu0 %672
    %674 = vrot.lane.b32.xlu0 %v545, 122
    %v675 = vpop.permute.xlu0 %674
    %676 = vrot.lane.b32.xlu0 %v546, 122
    %v677 = vpop.permute.xlu0 %676
    %678 = vrot.lane.b32.xlu0 %v547, 122
    %v679 = vpop.permute.xlu0 %678
    %680 = vrot.lane.b32.xlu0 %v548, 122
    %v681 = vpop.permute.xlu0 %680
    %682 = vrot.lane.b32.xlu0 %v549, 122
    %v683 = vpop.permute.xlu0 %682
    %684 = vrot.lane.b32.xlu0 %v550, 122
    %v685 = vpop.permute.xlu0 %684
    %686 = vrot.lane.b32.xlu0 %v551, 122
    %v687 = vpop.permute.xlu0 %686
    %688 = vrot.lane.b32.xlu0 %v552, 122
    %v689 = vpop.permute.xlu0 %688
    %690 = vrot.lane.b32.xlu0 %v553, 122
    %v691 = vpop.permute.xlu0 %690
    %692 = vrot.lane.b32.xlu0 %v554, 122
    %v693 = vpop.permute.xlu0 %692
    %694 = vrot.lane.b32.xlu0 %v555, 122
    %v695 = vpop.permute.xlu0 %694
    %696 = vrot.lane.b32.xlu0 %v556, 122
    %v697 = vpop.permute.xlu0 %696
    %698 = vrot.lane.b32.xlu0 %v557, 122
    %v699 = vpop.permute.xlu0 %698
    %700 = vrot.lane.b32.xlu0 %v558, 122
    %v701 = vpop.permute.xlu0 %700
    %702 = vrot.lane.b32.xlu0 %v559, 122
    %v703 = vpop.permute.xlu0 %702
    %720 = vrot.lane.b32.xlu0 %v544, 120
    %v721 = vpop.permute.xlu0 %720
    %722 = vrot.lane.b32.xlu0 %v545, 120
    %v723 = vpop.permute.xlu0 %722
    %724 = vrot.lane.b32.xlu0 %v546, 120
    %v725 = vpop.permute.xlu0 %724
    %726 = vrot.lane.b32.xlu0 %v547, 120
    %v727 = vpop.permute.xlu0 %726
    %728 = vrot.lane.b32.xlu0 %v548, 120
    %v729 = vpop.permute.xlu0 %728
    %730 = vrot.lane.b32.xlu0 %v549, 120
    %v731 = vpop.permute.xlu0 %730
    %732 = vrot.lane.b32.xlu0 %v550, 120
    %v733 = vpop.permute.xlu0 %732
    %734 = vrot.lane.b32.xlu0 %v551, 120
    %v735 = vpop.permute.xlu0 %734
    %736 = vrot.lane.b32.xlu0 %v552, 120
    %v737 = vpop.permute.xlu0 %736
    %738 = vrot.lane.b32.xlu0 %v553, 120
    %v739 = vpop.permute.xlu0 %738
    %740 = vrot.lane.b32.xlu0 %v554, 120
    %v741 = vpop.permute.xlu0 %740
    %742 = vrot.lane.b32.xlu0 %v555, 120
    %v743 = vpop.permute.xlu0 %742
    %744 = vrot.lane.b32.xlu0 %v556, 120
    %v745 = vpop.permute.xlu0 %744
    %746 = vrot.lane.b32.xlu0 %v557, 120
    %v747 = vpop.permute.xlu0 %746
    %748 = vrot.lane.b32.xlu0 %v558, 120
    %v749 = vpop.permute.xlu0 %748
    %750 = vrot.lane.b32.xlu0 %v559, 120
    %v751 = vpop.permute.xlu0 %750
    %768 = vrot.lane.b32.xlu0 %v544, 118
    %v769 = vpop.permute.xlu0 %768
    %770 = vrot.lane.b32.xlu0 %v545, 118
    %v771 = vpop.permute.xlu0 %770
    %772 = vrot.lane.b32.xlu0 %v546, 118
    %v773 = vpop.permute.xlu0 %772
    %774 = vrot.lane.b32.xlu0 %v547, 118
    %v775 = vpop.permute.xlu0 %774
    %776 = vrot.lane.b32.xlu0 %v548, 118
    %v777 = vpop.permute.xlu0 %776
    %778 = vrot.lane.b32.xlu0 %v549, 118
    %v779 = vpop.permute.xlu0 %778
    %780 = vrot.lane.b32.xlu0 %v550, 118
    %v781 = vpop.permute.xlu0 %780
    %782 = vrot.lane.b32.xlu0 %v551, 118
    %v783 = vpop.permute.xlu0 %782
    %784 = vrot.lane.b32.xlu0 %v552, 118
    %v785 = vpop.permute.xlu0 %784
    %786 = vrot.lane.b32.xlu0 %v553, 118
    %v787 = vpop.permute.xlu0 %786
    %788 = vrot.lane.b32.xlu0 %v554, 118
    %v789 = vpop.permute.xlu0 %788
    %790 = vrot.lane.b32.xlu0 %v555, 118
    %v791 = vpop.permute.xlu0 %790
    %792 = vrot.lane.b32.xlu0 %v556, 118
    %v793 = vpop.permute.xlu0 %792
    %794 = vrot.lane.b32.xlu0 %v557, 118
    %v795 = vpop.permute.xlu0 %794
    %796 = vrot.lane.b32.xlu0 %v558, 118
    %v797 = vpop.permute.xlu0 %796
    %798 = vrot.lane.b32.xlu0 %v559, 118
    %v799 = vpop.permute.xlu0 %798
    %816 = vrot.lane.b32.xlu0 %v544, 116
    %v817 = vpop.permute.xlu0 %816
    %818 = vrot.lane.b32.xlu0 %v545, 116
    %v819 = vpop.permute.xlu0 %818
    %820 = vrot.lane.b32.xlu0 %v546, 116
    %v821 = vpop.permute.xlu0 %820
    %822 = vrot.lane.b32.xlu0 %v547, 116
    %v823 = vpop.permute.xlu0 %822
    %824 = vrot.lane.b32.xlu0 %v548, 116
    %v825 = vpop.permute.xlu0 %824
    %826 = vrot.lane.b32.xlu0 %v549, 116
    %v827 = vpop.permute.xlu0 %826
    %828 = vrot.lane.b32.xlu0 %v550, 116
    %v829 = vpop.permute.xlu0 %828
    %830 = vrot.lane.b32.xlu0 %v551, 116
    %v831 = vpop.permute.xlu0 %830
    %832 = vrot.lane.b32.xlu0 %v552, 116
    %v833 = vpop.permute.xlu0 %832
    %834 = vrot.lane.b32.xlu0 %v553, 116
    %v835 = vpop.permute.xlu0 %834
    %836 = vrot.lane.b32.xlu0 %v554, 116
    %v837 = vpop.permute.xlu0 %836
    %838 = vrot.lane.b32.xlu0 %v555, 116
    %v839 = vpop.permute.xlu0 %838
    %840 = vrot.lane.b32.xlu0 %v556, 116
    %v841 = vpop.permute.xlu0 %840
    %842 = vrot.lane.b32.xlu0 %v557, 116
    %v843 = vpop.permute.xlu0 %842
    %844 = vrot.lane.b32.xlu0 %v558, 116
    %v845 = vpop.permute.xlu0 %844
    %846 = vrot.lane.b32.xlu0 %v559, 116
    %v847 = vpop.permute.xlu0 %846
    %864 = vrot.lane.b32.xlu0 %v544, 114
    %v865 = vpop.permute.xlu0 %864
    %866 = vrot.lane.b32.xlu0 %v545, 114
    %v867 = vpop.permute.xlu0 %866
    %868 = vrot.lane.b32.xlu0 %v546, 114
    %v869 = vpop.permute.xlu0 %868
    %870 = vrot.lane.b32.xlu0 %v547, 114
    %v871 = vpop.permute.xlu0 %870
    %872 = vrot.lane.b32.xlu0 %v548, 114
    %v873 = vpop.permute.xlu0 %872
    %874 = vrot.lane.b32.xlu0 %v549, 114
    %v875 = vpop.permute.xlu0 %874
    %876 = vrot.lane.b32.xlu0 %v550, 114
    %v877 = vpop.permute.xlu0 %876
    %878 = vrot.lane.b32.xlu0 %v551, 114
    %v879 = vpop.permute.xlu0 %878
    %880 = vrot.lane.b32.xlu0 %v552, 114
    %v881 = vpop.permute.xlu0 %880
    %882 = vrot.lane.b32.xlu0 %v553, 114
    %v883 = vpop.permute.xlu0 %882
    %884 = vrot.lane.b32.xlu0 %v554, 114
    %v885 = vpop.permute.xlu0 %884
    %886 = vrot.lane.b32.xlu0 %v555, 114
    %v887 = vpop.permute.xlu0 %886
    %888 = vrot.lane.b32.xlu0 %v556, 114
    %v889 = vpop.permute.xlu0 %888
    %890 = vrot.lane.b32.xlu0 %v557, 114
    %v891 = vpop.permute.xlu0 %890
    %892 = vrot.lane.b32.xlu0 %v558, 114
    %v893 = vpop.permute.xlu0 %892
    %894 = vrot.lane.b32.xlu0 %v559, 114
    %v895 = vpop.permute.xlu0 %894
    %912 = vrot.lane.b32.xlu0 %v544, 112
    %v913 = vpop.permute.xlu0 %912
    %914 = vrot.lane.b32.xlu0 %v545, 112
    %v915 = vpop.permute.xlu0 %914
    %916 = vrot.lane.b32.xlu0 %v546, 112
    %v917 = vpop.permute.xlu0 %916
    %918 = vrot.lane.b32.xlu0 %v547, 112
    %v919 = vpop.permute.xlu0 %918
    %920 = vrot.lane.b32.xlu0 %v548, 112
    %v921 = vpop.permute.xlu0 %920
    %922 = vrot.lane.b32.xlu0 %v549, 112
    %v923 = vpop.permute.xlu0 %922
    %924 = vrot.lane.b32.xlu0 %v550, 112
    %v925 = vpop.permute.xlu0 %924
    %926 = vrot.lane.b32.xlu0 %v551, 112
    %v927 = vpop.permute.xlu0 %926
    %928 = vrot.lane.b32.xlu0 %v552, 112
    %v929 = vpop.permute.xlu0 %928
    %930 = vrot.lane.b32.xlu0 %v553, 112
    %v931 = vpop.permute.xlu0 %930
    %932 = vrot.lane.b32.xlu0 %v554, 112
    %v933 = vpop.permute.xlu0 %932
    %934 = vrot.lane.b32.xlu0 %v555, 112
    %v935 = vpop.permute.xlu0 %934
    %936 = vrot.lane.b32.xlu0 %v556, 112
    %v937 = vpop.permute.xlu0 %936
    %938 = vrot.lane.b32.xlu0 %v557, 112
    %v939 = vpop.permute.xlu0 %938
    %940 = vrot.lane.b32.xlu0 %v558, 112
    %v941 = vpop.permute.xlu0 %940
    %942 = vrot.lane.b32.xlu0 %v559, 112
    %v943 = vpop.permute.xlu0 %942
    %960 = vrot.lane.b32.xlu0 %v544, 110
    %v961 = vpop.permute.xlu0 %960
    %962 = vrot.lane.b32.xlu0 %v545, 110
    %v963 = vpop.permute.xlu0 %962
    %964 = vrot.lane.b32.xlu0 %v546, 110
    %v965 = vpop.permute.xlu0 %964
    %966 = vrot.lane.b32.xlu0 %v547, 110
    %v967 = vpop.permute.xlu0 %966
    %968 = vrot.lane.b32.xlu0 %v548, 110
    %v969 = vpop.permute.xlu0 %968
    %970 = vrot.lane.b32.xlu0 %v549, 110
    %v971 = vpop.permute.xlu0 %970
    %972 = vrot.lane.b32.xlu0 %v550, 110
    %v973 = vpop.permute.xlu0 %972
    %974 = vrot.lane.b32.xlu0 %v551, 110
    %v975 = vpop.permute.xlu0 %974
    %976 = vrot.lane.b32.xlu0 %v552, 110
    %v977 = vpop.permute.xlu0 %976
    %978 = vrot.lane.b32.xlu0 %v553, 110
    %v979 = vpop.permute.xlu0 %978
    %980 = vrot.lane.b32.xlu0 %v554, 110
    %v981 = vpop.permute.xlu0 %980
    %982 = vrot.lane.b32.xlu0 %v555, 110
    %v983 = vpop.permute.xlu0 %982
    %984 = vrot.lane.b32.xlu0 %v556, 110
    %v985 = vpop.permute.xlu0 %984
    %986 = vrot.lane.b32.xlu0 %v557, 110
    %v987 = vpop.permute.xlu0 %986
    %988 = vrot.lane.b32.xlu0 %v558, 110
    %v989 = vpop.permute.xlu0 %988
    %990 = vrot.lane.b32.xlu0 %v559, 110
    %v991 = vpop.permute.xlu0 %990
    %1008 = vrot.lane.b32.xlu0 %v544, 108
    %v1009 = vpop.permute.xlu0 %1008
    %1010 = vrot.lane.b32.xlu0 %v545, 108
    %v1011 = vpop.permute.xlu0 %1010
    %1012 = vrot.lane.b32.xlu0 %v546, 108
    %v1013 = vpop.permute.xlu0 %1012
    %1014 = vrot.lane.b32.xlu0 %v547, 108
    %v1015 = vpop.permute.xlu0 %1014
    %1016 = vrot.lane.b32.xlu0 %v548, 108
    %v1017 = vpop.permute.xlu0 %1016
    %1018 = vrot.lane.b32.xlu0 %v549, 108
    %v1019 = vpop.permute.xlu0 %1018
    %1020 = vrot.lane.b32.xlu0 %v550, 108
    %v1021 = vpop.permute.xlu0 %1020
    %1022 = vrot.lane.b32.xlu0 %v551, 108
    %v1023 = vpop.permute.xlu0 %1022
    %1024 = vrot.lane.b32.xlu0 %v552, 108
    %v1025 = vpop.permute.xlu0 %1024
    %1026 = vrot.lane.b32.xlu0 %v553, 108
    %v1027 = vpop.permute.xlu0 %1026
    %1028 = vrot.lane.b32.xlu0 %v554, 108
    %v1029 = vpop.permute.xlu0 %1028
    %1030 = vrot.lane.b32.xlu0 %v555, 108
    %v1031 = vpop.permute.xlu0 %1030
    %1032 = vrot.lane.b32.xlu0 %v556, 108
    %v1033 = vpop.permute.xlu0 %1032
    %1034 = vrot.lane.b32.xlu0 %v557, 108
    %v1035 = vpop.permute.xlu0 %1034
    %1036 = vrot.lane.b32.xlu0 %v558, 108
    %v1037 = vpop.permute.xlu0 %1036
    %1038 = vrot.lane.b32.xlu0 %v559, 108
    %v1039 = vpop.permute.xlu0 %1038
    %1056 = vrot.lane.b32.xlu0 %v544, 106
    %v1057 = vpop.permute.xlu0 %1056
    %1058 = vrot.lane.b32.xlu0 %v545, 106
    %v1059 = vpop.permute.xlu0 %1058
    %1060 = vrot.lane.b32.xlu0 %v546, 106
    %v1061 = vpop.permute.xlu0 %1060
    %1062 = vrot.lane.b32.xlu0 %v547, 106
    %v1063 = vpop.permute.xlu0 %1062
    %1064 = vrot.lane.b32.xlu0 %v548, 106
    %v1065 = vpop.permute.xlu0 %1064
    %1066 = vrot.lane.b32.xlu0 %v549, 106
    %v1067 = vpop.permute.xlu0 %1066
    %1068 = vrot.lane.b32.xlu0 %v550, 106
    %v1069 = vpop.permute.xlu0 %1068
    %1070 = vrot.lane.b32.xlu0 %v551, 106
    %v1071 = vpop.permute.xlu0 %1070
    %1072 = vrot.lane.b32.xlu0 %v552, 106
    %v1073 = vpop.permute.xlu0 %1072
    %1074 = vrot.lane.b32.xlu0 %v553, 106
    %v1075 = vpop.permute.xlu0 %1074
    %1076 = vrot.lane.b32.xlu0 %v554, 106
    %v1077 = vpop.permute.xlu0 %1076
    %1078 = vrot.lane.b32.xlu0 %v555, 106
    %v1079 = vpop.permute.xlu0 %1078
    %1080 = vrot.lane.b32.xlu0 %v556, 106
    %v1081 = vpop.permute.xlu0 %1080
    %1082 = vrot.lane.b32.xlu0 %v557, 106
    %v1083 = vpop.permute.xlu0 %1082
    %1084 = vrot.lane.b32.xlu0 %v558, 106
    %v1085 = vpop.permute.xlu0 %1084
    %1086 = vrot.lane.b32.xlu0 %v559, 106
    %v1087 = vpop.permute.xlu0 %1086
    %1104 = vrot.lane.b32.xlu0 %v544, 104
    %v1105 = vpop.permute.xlu0 %1104
    %1106 = vrot.lane.b32.xlu0 %v545, 104
    %v1107 = vpop.permute.xlu0 %1106
    %1108 = vrot.lane.b32.xlu0 %v546, 104
    %v1109 = vpop.permute.xlu0 %1108
    %1110 = vrot.lane.b32.xlu0 %v547, 104
    %v1111 = vpop.permute.xlu0 %1110
    %1112 = vrot.lane.b32.xlu0 %v548, 104
    %v1113 = vpop.permute.xlu0 %1112
    %1114 = vrot.lane.b32.xlu0 %v549, 104
    %v1115 = vpop.permute.xlu0 %1114
    %1116 = vrot.lane.b32.xlu0 %v550, 104
    %v1117 = vpop.permute.xlu0 %1116
    %1118 = vrot.lane.b32.xlu0 %v551, 104
    %v1119 = vpop.permute.xlu0 %1118
    %1120 = vrot.lane.b32.xlu0 %v552, 104
    %v1121 = vpop.permute.xlu0 %1120
    %1122 = vrot.lane.b32.xlu0 %v553, 104
    %v1123 = vpop.permute.xlu0 %1122
    %1124 = vrot.lane.b32.xlu0 %v554, 104
    %v1125 = vpop.permute.xlu0 %1124
    %1126 = vrot.lane.b32.xlu0 %v555, 104
    %v1127 = vpop.permute.xlu0 %1126
    %1128 = vrot.lane.b32.xlu0 %v556, 104
    %v1129 = vpop.permute.xlu0 %1128
    %1130 = vrot.lane.b32.xlu0 %v557, 104
    %v1131 = vpop.permute.xlu0 %1130
    %1132 = vrot.lane.b32.xlu0 %v558, 104
    %v1133 = vpop.permute.xlu0 %1132
    %1134 = vrot.lane.b32.xlu0 %v559, 104
    %v1135 = vpop.permute.xlu0 %1134
    %1152 = vrot.lane.b32.xlu0 %v544, 102
    %v1153 = vpop.permute.xlu0 %1152
    %1154 = vrot.lane.b32.xlu0 %v545, 102
    %v1155 = vpop.permute.xlu0 %1154
    %1156 = vrot.lane.b32.xlu0 %v546, 102
    %v1157 = vpop.permute.xlu0 %1156
    %1158 = vrot.lane.b32.xlu0 %v547, 102
    %v1159 = vpop.permute.xlu0 %1158
    %1160 = vrot.lane.b32.xlu0 %v548, 102
    %v1161 = vpop.permute.xlu0 %1160
    %1162 = vrot.lane.b32.xlu0 %v549, 102
    %v1163 = vpop.permute.xlu0 %1162
    %1164 = vrot.lane.b32.xlu0 %v550, 102
    %v1165 = vpop.permute.xlu0 %1164
    %1166 = vrot.lane.b32.xlu0 %v551, 102
    %v1167 = vpop.permute.xlu0 %1166
    %1168 = vrot.lane.b32.xlu0 %v552, 102
    %v1169 = vpop.permute.xlu0 %1168
    %1170 = vrot.lane.b32.xlu0 %v553, 102
    %v1171 = vpop.permute.xlu0 %1170
    %1172 = vrot.lane.b32.xlu0 %v554, 102
    %v1173 = vpop.permute.xlu0 %1172
    %1174 = vrot.lane.b32.xlu0 %v555, 102
    %v1175 = vpop.permute.xlu0 %1174
    %1176 = vrot.lane.b32.xlu0 %v556, 102
    %v1177 = vpop.permute.xlu0 %1176
    %1178 = vrot.lane.b32.xlu0 %v557, 102
    %v1179 = vpop.permute.xlu0 %1178
    %1180 = vrot.lane.b32.xlu0 %v558, 102
    %v1181 = vpop.permute.xlu0 %1180
    %1182 = vrot.lane.b32.xlu0 %v559, 102
    %v1183 = vpop.permute.xlu0 %1182
    %1200 = vrot.lane.b32.xlu0 %v544, 100
    %v1201 = vpop.permute.xlu0 %1200
    %1202 = vrot.lane.b32.xlu0 %v545, 100
    %v1203 = vpop.permute.xlu0 %1202
    %1204 = vrot.lane.b32.xlu0 %v546, 100
    %v1205 = vpop.permute.xlu0 %1204
    %1206 = vrot.lane.b32.xlu0 %v547, 100
    %v1207 = vpop.permute.xlu0 %1206
    %1208 = vrot.lane.b32.xlu0 %v548, 100
    %v1209 = vpop.permute.xlu0 %1208
    %1210 = vrot.lane.b32.xlu0 %v549, 100
    %v1211 = vpop.permute.xlu0 %1210
    %1212 = vrot.lane.b32.xlu0 %v550, 100
    %v1213 = vpop.permute.xlu0 %1212
    %1214 = vrot.lane.b32.xlu0 %v551, 100
    %v1215 = vpop.permute.xlu0 %1214
    %1216 = vrot.lane.b32.xlu0 %v552, 100
    %v1217 = vpop.permute.xlu0 %1216
    %1218 = vrot.lane.b32.xlu0 %v553, 100
    %v1219 = vpop.permute.xlu0 %1218
    %1220 = vrot.lane.b32.xlu0 %v554, 100
    %v1221 = vpop.permute.xlu0 %1220
    %1222 = vrot.lane.b32.xlu0 %v555, 100
    %v1223 = vpop.permute.xlu0 %1222
    %1224 = vrot.lane.b32.xlu0 %v556, 100
    %v1225 = vpop.permute.xlu0 %1224
    %1226 = vrot.lane.b32.xlu0 %v557, 100
    %v1227 = vpop.permute.xlu0 %1226
    %1228 = vrot.lane.b32.xlu0 %v558, 100
    %v1229 = vpop.permute.xlu0 %1228
    %1230 = vrot.lane.b32.xlu0 %v559, 100
    %v1231 = vpop.permute.xlu0 %1230
    %1248 = vrot.lane.b32.xlu0 %v544, 98
    %v1249 = vpop.permute.xlu0 %1248
    %1250 = vrot.lane.b32.xlu0 %v545, 98
    %v1251 = vpop.permute.xlu0 %1250
    %1252 = vrot.lane.b32.xlu0 %v546, 98
    %v1253 = vpop.permute.xlu0 %1252
    %1254 = vrot.lane.b32.xlu0 %v547, 98
    %v1255 = vpop.permute.xlu0 %1254
    %1256 = vrot.lane.b32.xlu0 %v548, 98
    %v1257 = vpop.permute.xlu0 %1256
    %1258 = vrot.lane.b32.xlu0 %v549, 98
    %v1259 = vpop.permute.xlu0 %1258
    %1260 = vrot.lane.b32.xlu0 %v550, 98
    %v1261 = vpop.permute.xlu0 %1260
    %1262 = vrot.lane.b32.xlu0 %v551, 98
    %v1263 = vpop.permute.xlu0 %1262
    %1264 = vrot.lane.b32.xlu0 %v552, 98
    %v1265 = vpop.permute.xlu0 %1264
    %1266 = vrot.lane.b32.xlu0 %v553, 98
    %v1267 = vpop.permute.xlu0 %1266
    %1268 = vrot.lane.b32.xlu0 %v554, 98
    %v1269 = vpop.permute.xlu0 %1268
    %1270 = vrot.lane.b32.xlu0 %v555, 98
    %v1271 = vpop.permute.xlu0 %1270
    %1272 = vrot.lane.b32.xlu0 %v556, 98
    %v1273 = vpop.permute.xlu0 %1272
    %1274 = vrot.lane.b32.xlu0 %v557, 98
    %v1275 = vpop.permute.xlu0 %1274
    %1276 = vrot.lane.b32.xlu0 %v558, 98
    %v1277 = vpop.permute.xlu0 %1276
    %1278 = vrot.lane.b32.xlu0 %v559, 98
    %v1279 = vpop.permute.xlu0 %1278
    %v1296 = vcombine.low %v544, %v625
    %v1298 = vunpack.c.l.s4 1983009808
    %v1299 = vunpack.c.0.s8 %v1298
    %v1300 = vlaneseq
    %v1301 = vshrl.u32 %v1300, 7
    %v1302 = vsub.s32 %v1299, %v1301
    %v1303 = vrot.slane %v1296, %v1302
    %v1304 = vcombine.low %v577, %v673
    %v1306 = vunpack.c.l.s4 1983009808
    %v1307 = vunpack.c.0.s8 %v1306
    %v1308 = vlaneseq
    %v1309 = vshrl.u32 %v1308, 7
    %v1310 = vsub.s32 %v1307, %v1309
    %v1311 = vrot.slane %v1304, %v1310
    %v1312 = vcombine.low %v721, %v817
    %v1314 = vunpack.c.l.s4 1983009808
    %v1315 = vunpack.c.0.s8 %v1314
    %v1316 = vlaneseq
    %v1317 = vshrl.u32 %v1316, 7
    %v1318 = vsub.s32 %v1315, %v1317
    %v1319 = vrot.slane %v1312, %v1318
    %v1320 = vcombine.low %v769, %v865
    %v1322 = vunpack.c.l.s4 1983009808
    %v1323 = vunpack.c.0.s8 %v1322
    %v1324 = vlaneseq
    %v1325 = vshrl.u32 %v1324, 7
    %v1326 = vsub.s32 %v1323, %v1325
    %v1327 = vrot.slane %v1320, %v1326
    %v1328 = vcombine.low %v1303, %v1311
    %v1330 = vunpack.c.l.s4 1934713408
    %v1331 = vunpack.c.0.s8 %v1330
    %v1332 = vlaneseq
    %v1333 = vshrl.u32 %v1332, 7
    %v1334 = vsub.s32 %v1331, %v1333
    %v1335 = vrot.slane %v1328, %v1334
    %v1336 = vcombine.low %v1319, %v1327
    %v1338 = vunpack.c.l.s4 1934713408
    %v1339 = vunpack.c.0.s8 %v1338
    %v1340 = vlaneseq
    %v1341 = vshrl.u32 %v1340, 7
    %v1342 = vsub.s32 %v1339, %v1341
    %v1343 = vrot.slane %v1336, %v1342
    %v1344 = vcombine.low %v1335, %v1343
    %v1345 = vcombine.high %v1335, %v1343
    %v1346 = vcombine.low %v913, %v1009
    %v1348 = vunpack.c.l.s4 1983009808
    %v1349 = vunpack.c.0.s8 %v1348
    %v1350 = vlaneseq
    %v1351 = vshrl.u32 %v1350, 7
    %v1352 = vsub.s32 %v1349, %v1351
    %v1353 = vrot.slane %v1346, %v1352
    %v1354 = vcombine.low %v961, %v1057
    %v1356 = vunpack.c.l.s4 1983009808
    %v1357 = vunpack.c.0.s8 %v1356
    %v1358 = vlaneseq
    %v1359 = vshrl.u32 %v1358, 7
    %v1360 = vsub.s32 %v1357, %v1359
    %v1361 = vrot.slane %v1354, %v1360
    %v1362 = vcombine.low %v1105, %v1201
    %v1364 = vunpack.c.l.s4 1983009808
    %v1365 = vunpack.c.0.s8 %v1364
    %v1366 = vlaneseq
    %v1367 = vshrl.u32 %v1366, 7
    %v1368 = vsub.s32 %v1365, %v1367
    %v1369 = vrot.slane %v1362, %v1368
    %v1370 = vcombine.low %v1153, %v1249
    %v1372 = vunpack.c.l.s4 1983009808
    %v1373 = vunpack.c.0.s8 %v1372
    %v1374 = vlaneseq
    %v1375 = vshrl.u32 %v1374, 7
    %v1376 = vsub.s32 %v1373, %v1375
    %v1377 = vrot.slane %v1370, %v1376
    %v1378 = vcombine.low %v1353, %v1361
    %v1380 = vunpack.c.l.s4 1934713408
    %v1381 = vunpack.c.0.s8 %v1380
    %v1382 = vlaneseq
    %v1383 = vshrl.u32 %v1382, 7
    %v1384 = vsub.s32 %v1381, %v1383
    %v1385 = vrot.slane %v1378, %v1384
    %v1386 = vcombine.low %v1369, %v1377
    %v1388 = vunpack.c.l.s4 1934713408
    %v1389 = vunpack.c.0.s8 %v1388
    %v1390 = vlaneseq
    %v1391 = vshrl.u32 %v1390, 7
    %v1392 = vsub.s32 %v1389, %v1391
    %v1393 = vrot.slane %v1386, %v1392
    %v1394 = vcombine.low %v1385, %v1393
    %v1395 = vcombine.high %v1385, %v1393
    %v1396 = vcombine.low %v545, %v627
    %v1398 = vunpack.c.l.s4 1983009808
    %v1399 = vunpack.c.0.s8 %v1398
    %v1400 = vlaneseq
    %v1401 = vshrl.u32 %v1400, 7
    %v1402 = vsub.s32 %v1399, %v1401
    %v1403 = vrot.slane %v1396, %v1402
    %v1404 = vcombine.low %v579, %v675
    %v1406 = vunpack.c.l.s4 1983009808
    %v1407 = vunpack.c.0.s8 %v1406
    %v1408 = vlaneseq
    %v1409 = vshrl.u32 %v1408, 7
    %v1410 = vsub.s32 %v1407, %v1409
    %v1411 = vrot.slane %v1404, %v1410
    %v1412 = vcombine.low %v723, %v819
    %v1414 = vunpack.c.l.s4 1983009808
    %v1415 = vunpack.c.0.s8 %v1414
    %v1416 = vlaneseq
    %v1417 = vshrl.u32 %v1416, 7
    %v1418 = vsub.s32 %v1415, %v1417
    %v1419 = vrot.slane %v1412, %v1418
    %v1420 = vcombine.low %v771, %v867
    %v1422 = vunpack.c.l.s4 1983009808
    %v1423 = vunpack.c.0.s8 %v1422
    %v1424 = vlaneseq
    %v1425 = vshrl.u32 %v1424, 7
    %v1426 = vsub.s32 %v1423, %v1425
    %v1427 = vrot.slane %v1420, %v1426
    %v1428 = vcombine.low %v1403, %v1411
    %v1430 = vunpack.c.l.s4 1934713408
    %v1431 = vunpack.c.0.s8 %v1430
    %v1432 = vlaneseq
    %v1433 = vshrl.u32 %v1432, 7
    %v1434 = vsub.s32 %v1431, %v1433
    %v1435 = vrot.slane %v1428, %v1434
    %v1436 = vcombine.low %v1419, %v1427
    %v1438 = vunpack.c.l.s4 1934713408
    %v1439 = vunpack.c.0.s8 %v1438
    %v1440 = vlaneseq
    %v1441 = vshrl.u32 %v1440, 7
    %v1442 = vsub.s32 %v1439, %v1441
    %v1443 = vrot.slane %v1436, %v1442
    %v1444 = vcombine.low %v1435, %v1443
    %v1445 = vcombine.high %v1435, %v1443
    %v1446 = vcombine.low %v915, %v1011
    %v1448 = vunpack.c.l.s4 1983009808
    %v1449 = vunpack.c.0.s8 %v1448
    %v1450 = vlaneseq
    %v1451 = vshrl.u32 %v1450, 7
    %v1452 = vsub.s32 %v1449, %v1451
    %v1453 = vrot.slane %v1446, %v1452
    %v1454 = vcombine.low %v963, %v1059
    %v1456 = vunpack.c.l.s4 1983009808
    %v1457 = vunpack.c.0.s8 %v1456
    %v1458 = vlaneseq
    %v1459 = vshrl.u32 %v1458, 7
    %v1460 = vsub.s32 %v1457, %v1459
    %v1461 = vrot.slane %v1454, %v1460
    %v1462 = vcombine.low %v1107, %v1203
    %v1464 = vunpack.c.l.s4 1983009808
    %v1465 = vunpack.c.0.s8 %v1464
    %v1466 = vlaneseq
    %v1467 = vshrl.u32 %v1466, 7
    %v1468 = vsub.s32 %v1465, %v1467
    %v1469 = vrot.slane %v1462, %v1468
    %v1470 = vcombine.low %v1155, %v1251
    %v1472 = vunpack.c.l.s4 1983009808
    %v1473 = vunpack.c.0.s8 %v1472
    %v1474 = vlaneseq
    %v1475 = vshrl.u32 %v1474, 7
    %v1476 = vsub.s32 %v1473, %v1475
    %v1477 = vrot.slane %v1470, %v1476
    %v1478 = vcombine.low %v1453, %v1461
    %v1480 = vunpack.c.l.s4 1934713408
    %v1481 = vunpack.c.0.s8 %v1480
    %v1482 = vlaneseq
    %v1483 = vshrl.u32 %v1482, 7
    %v1484 = vsub.s32 %v1481, %v1483
    %v1485 = vrot.slane %v1478, %v1484
    %v1486 = vcombine.low %v1469, %v1477
    %v1488 = vunpack.c.l.s4 1934713408
    %v1489 = vunpack.c.0.s8 %v1488
    %v1490 = vlaneseq
    %v1491 = vshrl.u32 %v1490, 7
    %v1492 = vsub.s32 %v1489, %v1491
    %v1493 = vrot.slane %v1486, %v1492
    %v1494 = vcombine.low %v1485, %v1493
    %v1495 = vcombine.high %v1485, %v1493
    %v1496 = vcombine.low %v546, %v629
    %v1498 = vunpack.c.l.s4 1983009808
    %v1499 = vunpack.c.0.s8 %v1498
    %v1500 = vlaneseq
    %v1501 = vshrl.u32 %v1500, 7
    %v1502 = vsub.s32 %v1499, %v1501
    %v1503 = vrot.slane %v1496, %v1502
    %v1504 = vcombine.low %v581, %v677
    %v1506 = vunpack.c.l.s4 1983009808
    %v1507 = vunpack.c.0.s8 %v1506
    %v1508 = vlaneseq
    %v1509 = vshrl.u32 %v1508, 7
    %v1510 = vsub.s32 %v1507, %v1509
    %v1511 = vrot.slane %v1504, %v1510
    %v1512 = vcombine.low %v725, %v821
    %v1514 = vunpack.c.l.s4 1983009808
    %v1515 = vunpack.c.0.s8 %v1514
    %v1516 = vlaneseq
    %v1517 = vshrl.u32 %v1516, 7
    %v1518 = vsub.s32 %v1515, %v1517
    %v1519 = vrot.slane %v1512, %v1518
    %v1520 = vcombine.low %v773, %v869
    %v1522 = vunpack.c.l.s4 1983009808
    %v1523 = vunpack.c.0.s8 %v1522
    %v1524 = vlaneseq
    %v1525 = vshrl.u32 %v1524, 7
    %v1526 = vsub.s32 %v1523, %v1525
    %v1527 = vrot.slane %v1520, %v1526
    %v1528 = vcombine.low %v1503, %v1511
    %v1530 = vunpack.c.l.s4 1934713408
    %v1531 = vunpack.c.0.s8 %v1530
    %v1532 = vlaneseq
    %v1533 = vshrl.u32 %v1532, 7
    %v1534 = vsub.s32 %v1531, %v1533
    %v1535 = vrot.slane %v1528, %v1534
    %v1536 = vcombine.low %v1519, %v1527
    %v1538 = vunpack.c.l.s4 1934713408
    %v1539 = vunpack.c.0.s8 %v1538
    %v1540 = vlaneseq
    %v1541 = vshrl.u32 %v1540, 7
    %v1542 = vsub.s32 %v1539, %v1541
    %v1543 = vrot.slane %v1536, %v1542
    %v1544 = vcombine.low %v1535, %v1543
    %v1545 = vcombine.high %v1535, %v1543
    %v1546 = vcombine.low %v917, %v1013
    %v1548 = vunpack.c.l.s4 1983009808
    %v1549 = vunpack.c.0.s8 %v1548
    %v1550 = vlaneseq
    %v1551 = vshrl.u32 %v1550, 7
    %v1552 = vsub.s32 %v1549, %v1551
    %v1553 = vrot.slane %v1546, %v1552
    %v1554 = vcombine.low %v965, %v1061
    %v1556 = vunpack.c.l.s4 1983009808
    %v1557 = vunpack.c.0.s8 %v1556
    %v1558 = vlaneseq
    %v1559 = vshrl.u32 %v1558, 7
    %v1560 = vsub.s32 %v1557, %v1559
    %v1561 = vrot.slane %v1554, %v1560
    %v1562 = vcombine.low %v1109, %v1205
    %v1564 = vunpack.c.l.s4 1983009808
    %v1565 = vunpack.c.0.s8 %v1564
    %v1566 = vlaneseq
    %v1567 = vshrl.u32 %v1566, 7
    %v1568 = vsub.s32 %v1565, %v1567
    %v1569 = vrot.slane %v1562, %v1568
    %v1570 = vcombine.low %v1157, %v1253
    %v1572 = vunpack.c.l.s4 1983009808
    %v1573 = vunpack.c.0.s8 %v1572
    %v1574 = vlaneseq
    %v1575 = vshrl.u32 %v1574, 7
    %v1576 = vsub.s32 %v1573, %v1575
    %v1577 = vrot.slane %v1570, %v1576
    %v1578 = vcombine.low %v1553, %v1561
    %v1580 = vunpack.c.l.s4 1934713408
    %v1581 = vunpack.c.0.s8 %v1580
    %v1582 = vlaneseq
    %v1583 = vshrl.u32 %v1582, 7
    %v1584 = vsub.s32 %v1581, %v1583
    %v1585 = vrot.slane %v1578, %v1584
    %v1586 = vcombine.low %v1569, %v1577
    %v1588 = vunpack.c.l.s4 1934713408
    %v1589 = vunpack.c.0.s8 %v1588
    %v1590 = vlaneseq
    %v1591 = vshrl.u32 %v1590, 7
    %v1592 = vsub.s32 %v1589, %v1591
    %v1593 = vrot.slane %v1586, %v1592
    %v1594 = vcombine.low %v1585, %v1593
    %v1595 = vcombine.high %v1585, %v1593
    %v1596 = vcombine.low %v547, %v631
    %v1598 = vunpack.c.l.s4 1983009808
    %v1599 = vunpack.c.0.s8 %v1598
    %v1600 = vlaneseq
    %v1601 = vshrl.u32 %v1600, 7
    %v1602 = vsub.s32 %v1599, %v1601
    %v1603 = vrot.slane %v1596, %v1602
    %v1604 = vcombine.low %v583, %v679
    %v1606 = vunpack.c.l.s4 1983009808
    %v1607 = vunpack.c.0.s8 %v1606
    %v1608 = vlaneseq
    %v1609 = vshrl.u32 %v1608, 7
    %v1610 = vsub.s32 %v1607, %v1609
    %v1611 = vrot.slane %v1604, %v1610
    %v1612 = vcombine.low %v727, %v823
    %v1614 = vunpack.c.l.s4 1983009808
    %v1615 = vunpack.c.0.s8 %v1614
    %v1616 = vlaneseq
    %v1617 = vshrl.u32 %v1616, 7
    %v1618 = vsub.s32 %v1615, %v1617
    %v1619 = vrot.slane %v1612, %v1618
    %v1620 = vcombine.low %v775, %v871
    %v1622 = vunpack.c.l.s4 1983009808
    %v1623 = vunpack.c.0.s8 %v1622
    %v1624 = vlaneseq
    %v1625 = vshrl.u32 %v1624, 7
    %v1626 = vsub.s32 %v1623, %v1625
    %v1627 = vrot.slane %v1620, %v1626
    %v1628 = vcombine.low %v1603, %v1611
    %v1630 = vunpack.c.l.s4 1934713408
    %v1631 = vunpack.c.0.s8 %v1630
    %v1632 = vlaneseq
    %v1633 = vshrl.u32 %v1632, 7
    %v1634 = vsub.s32 %v1631, %v1633
    %v1635 = vrot.slane %v1628, %v1634
    %v1636 = vcombine.low %v1619, %v1627
    %v1638 = vunpack.c.l.s4 1934713408
    %v1639 = vunpack.c.0.s8 %v1638
    %v1640 = vlaneseq
    %v1641 = vshrl.u32 %v1640, 7
    %v1642 = vsub.s32 %v1639, %v1641
    %v1643 = vrot.slane %v1636, %v1642
    %v1644 = vcombine.low %v1635, %v1643
    %v1645 = vcombine.high %v1635, %v1643
    %v1646 = vcombine.low %v919, %v1015
    %v1648 = vunpack.c.l.s4 1983009808
    %v1649 = vunpack.c.0.s8 %v1648
    %v1650 = vlaneseq
    %v1651 = vshrl.u32 %v1650, 7
    %v1652 = vsub.s32 %v1649, %v1651
    %v1653 = vrot.slane %v1646, %v1652
    %v1654 = vcombine.low %v967, %v1063
    %v1656 = vunpack.c.l.s4 1983009808
    %v1657 = vunpack.c.0.s8 %v1656
    %v1658 = vlaneseq
    %v1659 = vshrl.u32 %v1658, 7
    %v1660 = vsub.s32 %v1657, %v1659
    %v1661 = vrot.slane %v1654, %v1660
    %v1662 = vcombine.low %v1111, %v1207
    %v1664 = vunpack.c.l.s4 1983009808
    %v1665 = vunpack.c.0.s8 %v1664
    %v1666 = vlaneseq
    %v1667 = vshrl.u32 %v1666, 7
    %v1668 = vsub.s32 %v1665, %v1667
    %v1669 = vrot.slane %v1662, %v1668
    %v1670 = vcombine.low %v1159, %v1255
    %v1672 = vunpack.c.l.s4 1983009808
    %v1673 = vunpack.c.0.s8 %v1672
    %v1674 = vlaneseq
    %v1675 = vshrl.u32 %v1674, 7
    %v1676 = vsub.s32 %v1673, %v1675
    %v1677 = vrot.slane %v1670, %v1676
    %v1678 = vcombine.low %v1653, %v1661
    %v1680 = vunpack.c.l.s4 1934713408
    %v1681 = vunpack.c.0.s8 %v1680
    %v1682 = vlaneseq
    %v1683 = vshrl.u32 %v1682, 7
    %v1684 = vsub.s32 %v1681, %v1683
    %v1685 = vrot.slane %v1678, %v1684
    %v1686 = vcombine.low %v1669, %v1677
    %v1688 = vunpack.c.l.s4 1934713408
    %v1689 = vunpack.c.0.s8 %v1688
    %v1690 = vlaneseq
    %v1691 = vshrl.u32 %v1690, 7
    %v1692 = vsub.s32 %v1689, %v1691
    %v1693 = vrot.slane %v1686, %v1692
    %v1694 = vcombine.low %v1685, %v1693
    %v1695 = vcombine.high %v1685, %v1693
    %v1696 = vcombine.low %v548, %v633
    %v1698 = vunpack.c.l.s4 1983009808
    %v1699 = vunpack.c.0.s8 %v1698
    %v1700 = vlaneseq
    %v1701 = vshrl.u32 %v1700, 7
    %v1702 = vsub.s32 %v1699, %v1701
    %v1703 = vrot.slane %v1696, %v1702
    %v1704 = vcombine.low %v585, %v681
    %v1706 = vunpack.c.l.s4 1983009808
    %v1707 = vunpack.c.0.s8 %v1706
    %v1708 = vlaneseq
    %v1709 = vshrl.u32 %v1708, 7
    %v1710 = vsub.s32 %v1707, %v1709
    %v1711 = vrot.slane %v1704, %v1710
    %v1712 = vcombine.low %v729, %v825
    %v1714 = vunpack.c.l.s4 1983009808
    %v1715 = vunpack.c.0.s8 %v1714
    %v1716 = vlaneseq
    %v1717 = vshrl.u32 %v1716, 7
    %v1718 = vsub.s32 %v1715, %v1717
    %v1719 = vrot.slane %v1712, %v1718
    %v1720 = vcombine.low %v777, %v873
    %v1722 = vunpack.c.l.s4 1983009808
    %v1723 = vunpack.c.0.s8 %v1722
    %v1724 = vlaneseq
    %v1725 = vshrl.u32 %v1724, 7
    %v1726 = vsub.s32 %v1723, %v1725
    %v1727 = vrot.slane %v1720, %v1726
    %v1728 = vcombine.low %v1703, %v1711
    %v1730 = vunpack.c.l.s4 1934713408
    %v1731 = vunpack.c.0.s8 %v1730
    %v1732 = vlaneseq
    %v1733 = vshrl.u32 %v1732, 7
    %v1734 = vsub.s32 %v1731, %v1733
    %v1735 = vrot.slane %v1728, %v1734
    %v1736 = vcombine.low %v1719, %v1727
    %v1738 = vunpack.c.l.s4 1934713408
    %v1739 = vunpack.c.0.s8 %v1738
    %v1740 = vlaneseq
    %v1741 = vshrl.u32 %v1740, 7
    %v1742 = vsub.s32 %v1739, %v1741
    %v1743 = vrot.slane %v1736, %v1742
    %v1744 = vcombine.low %v1735, %v1743
    %v1745 = vcombine.high %v1735, %v1743
    %v1746 = vcombine.low %v921, %v1017
    %v1748 = vunpack.c.l.s4 1983009808
    %v1749 = vunpack.c.0.s8 %v1748
    %v1750 = vlaneseq
    %v1751 = vshrl.u32 %v1750, 7
    %v1752 = vsub.s32 %v1749, %v1751
    %v1753 = vrot.slane %v1746, %v1752
    %v1754 = vcombine.low %v969, %v1065
    %v1756 = vunpack.c.l.s4 1983009808
    %v1757 = vunpack.c.0.s8 %v1756
    %v1758 = vlaneseq
    %v1759 = vshrl.u32 %v1758, 7
    %v1760 = vsub.s32 %v1757, %v1759
    %v1761 = vrot.slane %v1754, %v1760
    %v1762 = vcombine.low %v1113, %v1209
    %v1764 = vunpack.c.l.s4 1983009808
    %v1765 = vunpack.c.0.s8 %v1764
    %v1766 = vlaneseq
    %v1767 = vshrl.u32 %v1766, 7
    %v1768 = vsub.s32 %v1765, %v1767
    %v1769 = vrot.slane %v1762, %v1768
    %v1770 = vcombine.low %v1161, %v1257
    %v1772 = vunpack.c.l.s4 1983009808
    %v1773 = vunpack.c.0.s8 %v1772
    %v1774 = vlaneseq
    %v1775 = vshrl.u32 %v1774, 7
    %v1776 = vsub.s32 %v1773, %v1775
    %v1777 = vrot.slane %v1770, %v1776
    %v1778 = vcombine.low %v1753, %v1761
    %v1780 = vunpack.c.l.s4 1934713408
    %v1781 = vunpack.c.0.s8 %v1780
    %v1782 = vlaneseq
    %v1783 = vshrl.u32 %v1782, 7
    %v1784 = vsub.s32 %v1781, %v1783
    %v1785 = vrot.slane %v1778, %v1784
    %v1786 = vcombine.low %v1769, %v1777
    %v1788 = vunpack.c.l.s4 1934713408
    %v1789 = vunpack.c.0.s8 %v1788
    %v1790 = vlaneseq
    %v1791 = vshrl.u32 %v1790, 7
    %v1792 = vsub.s32 %v1789, %v1791
    %v1793 = vrot.slane %v1786, %v1792
    %v1794 = vcombine.low %v1785, %v1793
    %v1795 = vcombine.high %v1785, %v1793
    %v1796 = vcombine.low %v549, %v635
    %v1798 = vunpack.c.l.s4 1983009808
    %v1799 = vunpack.c.0.s8 %v1798
    %v1800 = vlaneseq
    %v1801 = vshrl.u32 %v1800, 7
    %v1802 = vsub.s32 %v1799, %v1801
    %v1803 = vrot.slane %v1796, %v1802
    %v1804 = vcombine.low %v587, %v683
    %v1806 = vunpack.c.l.s4 1983009808
    %v1807 = vunpack.c.0.s8 %v1806
    %v1808 = vlaneseq
    %v1809 = vshrl.u32 %v1808, 7
    %v1810 = vsub.s32 %v1807, %v1809
    %v1811 = vrot.slane %v1804, %v1810
    %v1812 = vcombine.low %v731, %v827
    %v1814 = vunpack.c.l.s4 1983009808
    %v1815 = vunpack.c.0.s8 %v1814
    %v1816 = vlaneseq
    %v1817 = vshrl.u32 %v1816, 7
    %v1818 = vsub.s32 %v1815, %v1817
    %v1819 = vrot.slane %v1812, %v1818
    %v1820 = vcombine.low %v779, %v875
    %v1822 = vunpack.c.l.s4 1983009808
    %v1823 = vunpack.c.0.s8 %v1822
    %v1824 = vlaneseq
    %v1825 = vshrl.u32 %v1824, 7
    %v1826 = vsub.s32 %v1823, %v1825
    %v1827 = vrot.slane %v1820, %v1826
    %v1828 = vcombine.low %v1803, %v1811
    %v1830 = vunpack.c.l.s4 1934713408
    %v1831 = vunpack.c.0.s8 %v1830
    %v1832 = vlaneseq
    %v1833 = vshrl.u32 %v1832, 7
    %v1834 = vsub.s32 %v1831, %v1833
    %v1835 = vrot.slane %v1828, %v1834
    %v1836 = vcombine.low %v1819, %v1827
    %v1838 = vunpack.c.l.s4 1934713408
    %v1839 = vunpack.c.0.s8 %v1838
    %v1840 = vlaneseq
    %v1841 = vshrl.u32 %v1840, 7
    %v1842 = vsub.s32 %v1839, %v1841
    %v1843 = vrot.slane %v1836, %v1842
    %v1844 = vcombine.low %v1835, %v1843
    %v1845 = vcombine.high %v1835, %v1843
    %v1846 = vcombine.low %v923, %v1019
    %v1848 = vunpack.c.l.s4 1983009808
    %v1849 = vunpack.c.0.s8 %v1848
    %v1850 = vlaneseq
    %v1851 = vshrl.u32 %v1850, 7
    %v1852 = vsub.s32 %v1849, %v1851
    %v1853 = vrot.slane %v1846, %v1852
    %v1854 = vcombine.low %v971, %v1067
    %v1856 = vunpack.c.l.s4 1983009808
    %v1857 = vunpack.c.0.s8 %v1856
    %v1858 = vlaneseq
    %v1859 = vshrl.u32 %v1858, 7
    %v1860 = vsub.s32 %v1857, %v1859
    %v1861 = vrot.slane %v1854, %v1860
    %v1862 = vcombine.low %v1115, %v1211
    %v1864 = vunpack.c.l.s4 1983009808
    %v1865 = vunpack.c.0.s8 %v1864
    %v1866 = vlaneseq
    %v1867 = vshrl.u32 %v1866, 7
    %v1868 = vsub.s32 %v1865, %v1867
    %v1869 = vrot.slane %v1862, %v1868
    %v1870 = vcombine.low %v1163, %v1259
    %v1872 = vunpack.c.l.s4 1983009808
    %v1873 = vunpack.c.0.s8 %v1872
    %v1874 = vlaneseq
    %v1875 = vshrl.u32 %v1874, 7
    %v1876 = vsub.s32 %v1873, %v1875
    %v1877 = vrot.slane %v1870, %v1876
    %v1878 = vcombine.low %v1853, %v1861
    %v1880 = vunpack.c.l.s4 1934713408
    %v1881 = vunpack.c.0.s8 %v1880
    %v1882 = vlaneseq
    %v1883 = vshrl.u32 %v1882, 7
    %v1884 = vsub.s32 %v1881, %v1883
    %v1885 = vrot.slane %v1878, %v1884
    %v1886 = vcombine.low %v1869, %v1877
    %v1888 = vunpack.c.l.s4 1934713408
    %v1889 = vunpack.c.0.s8 %v1888
    %v1890 = vlaneseq
    %v1891 = vshrl.u32 %v1890, 7
    %v1892 = vsub.s32 %v1889, %v1891
    %v1893 = vrot.slane %v1886, %v1892
    %v1894 = vcombine.low %v1885, %v1893
    %v1895 = vcombine.high %v1885, %v1893
    %v1896 = vcombine.low %v550, %v637
    %v1898 = vunpack.c.l.s4 1983009808
    %v1899 = vunpack.c.0.s8 %v1898
    %v1900 = vlaneseq
    %v1901 = vshrl.u32 %v1900, 7
    %v1902 = vsub.s32 %v1899, %v1901
    %v1903 = vrot.slane %v1896, %v1902
    %v1904 = vcombine.low %v589, %v685
    %v1906 = vunpack.c.l.s4 1983009808
    %v1907 = vunpack.c.0.s8 %v1906
    %v1908 = vlaneseq
    %v1909 = vshrl.u32 %v1908, 7
    %v1910 = vsub.s32 %v1907, %v1909
    %v1911 = vrot.slane %v1904, %v1910
    %v1912 = vcombine.low %v733, %v829
    %v1914 = vunpack.c.l.s4 1983009808
    %v1915 = vunpack.c.0.s8 %v1914
    %v1916 = vlaneseq
    %v1917 = vshrl.u32 %v1916, 7
    %v1918 = vsub.s32 %v1915, %v1917
    %v1919 = vrot.slane %v1912, %v1918
    %v1920 = vcombine.low %v781, %v877
    %v1922 = vunpack.c.l.s4 1983009808
    %v1923 = vunpack.c.0.s8 %v1922
    %v1924 = vlaneseq
    %v1925 = vshrl.u32 %v1924, 7
    %v1926 = vsub.s32 %v1923, %v1925
    %v1927 = vrot.slane %v1920, %v1926
    %v1928 = vcombine.low %v1903, %v1911
    %v1930 = vunpack.c.l.s4 1934713408
    %v1931 = vunpack.c.0.s8 %v1930
    %v1932 = vlaneseq
    %v1933 = vshrl.u32 %v1932, 7
    %v1934 = vsub.s32 %v1931, %v1933
    %v1935 = vrot.slane %v1928, %v1934
    %v1936 = vcombine.low %v1919, %v1927
    %v1938 = vunpack.c.l.s4 1934713408
    %v1939 = vunpack.c.0.s8 %v1938
    %v1940 = vlaneseq
    %v1941 = vshrl.u32 %v1940, 7
    %v1942 = vsub.s32 %v1939, %v1941
    %v1943 = vrot.slane %v1936, %v1942
    %v1944 = vcombine.low %v1935, %v1943
    %v1945 = vcombine.high %v1935, %v1943
    %v1946 = vcombine.low %v925, %v1021
    %v1948 = vunpack.c.l.s4 1983009808
    %v1949 = vunpack.c.0.s8 %v1948
    %v1950 = vlaneseq
    %v1951 = vshrl.u32 %v1950, 7
    %v1952 = vsub.s32 %v1949, %v1951
    %v1953 = vrot.slane %v1946, %v1952
    %v1954 = vcombine.low %v973, %v1069
    %v1956 = vunpack.c.l.s4 1983009808
    %v1957 = vunpack.c.0.s8 %v1956
    %v1958 = vlaneseq
    %v1959 = vshrl.u32 %v1958, 7
    %v1960 = vsub.s32 %v1957, %v1959
    %v1961 = vrot.slane %v1954, %v1960
    %v1962 = vcombine.low %v1117, %v1213
    %v1964 = vunpack.c.l.s4 1983009808
    %v1965 = vunpack.c.0.s8 %v1964
    %v1966 = vlaneseq
    %v1967 = vshrl.u32 %v1966, 7
    %v1968 = vsub.s32 %v1965, %v1967
    %v1969 = vrot.slane %v1962, %v1968
    %v1970 = vcombine.low %v1165, %v1261
    %v1972 = vunpack.c.l.s4 1983009808
    %v1973 = vunpack.c.0.s8 %v1972
    %v1974 = vlaneseq
    %v1975 = vshrl.u32 %v1974, 7
    %v1976 = vsub.s32 %v1973, %v1975
    %v1977 = vrot.slane %v1970, %v1976
    %v1978 = vcombine.low %v1953, %v1961
    %v1980 = vunpack.c.l.s4 1934713408
    %v1981 = vunpack.c.0.s8 %v1980
    %v1982 = vlaneseq
    %v1983 = vshrl.u32 %v1982, 7
    %v1984 = vsub.s32 %v1981, %v1983
    %v1985 = vrot.slane %v1978, %v1984
    %v1986 = vcombine.low %v1969, %v1977
    %v1988 = vunpack.c.l.s4 1934713408
    %v1989 = vunpack.c.0.s8 %v1988
    %v1990 = vlaneseq
    %v1991 = vshrl.u32 %v1990, 7
    %v1992 = vsub.s32 %v1989, %v1991
    %v1993 = vrot.slane %v1986, %v1992
    %v1994 = vcombine.low %v1985, %v1993
    %v1995 = vcombine.high %v1985, %v1993
    %v1996 = vcombine.low %v551, %v639
    %v1998 = vunpack.c.l.s4 1983009808
    %v1999 = vunpack.c.0.s8 %v1998
    %v2000 = vlaneseq
    %v2001 = vshrl.u32 %v2000, 7
    %v2002 = vsub.s32 %v1999, %v2001
    %v2003 = vrot.slane %v1996, %v2002
    %v2004 = vcombine.low %v591, %v687
    %v2006 = vunpack.c.l.s4 1983009808
    %v2007 = vunpack.c.0.s8 %v2006
    %v2008 = vlaneseq
    %v2009 = vshrl.u32 %v2008, 7
    %v2010 = vsub.s32 %v2007, %v2009
    %v2011 = vrot.slane %v2004, %v2010
    %v2012 = vcombine.low %v735, %v831
    %v2014 = vunpack.c.l.s4 1983009808
    %v2015 = vunpack.c.0.s8 %v2014
    %v2016 = vlaneseq
    %v2017 = vshrl.u32 %v2016, 7
    %v2018 = vsub.s32 %v2015, %v2017
    %v2019 = vrot.slane %v2012, %v2018
    %v2020 = vcombine.low %v783, %v879
    %v2022 = vunpack.c.l.s4 1983009808
    %v2023 = vunpack.c.0.s8 %v2022
    %v2024 = vlaneseq
    %v2025 = vshrl.u32 %v2024, 7
    %v2026 = vsub.s32 %v2023, %v2025
    %v2027 = vrot.slane %v2020, %v2026
    %v2028 = vcombine.low %v2003, %v2011
    %v2030 = vunpack.c.l.s4 1934713408
    %v2031 = vunpack.c.0.s8 %v2030
    %v2032 = vlaneseq
    %v2033 = vshrl.u32 %v2032, 7
    %v2034 = vsub.s32 %v2031, %v2033
    %v2035 = vrot.slane %v2028, %v2034
    %v2036 = vcombine.low %v2019, %v2027
    %v2038 = vunpack.c.l.s4 1934713408
    %v2039 = vunpack.c.0.s8 %v2038
    %v2040 = vlaneseq
    %v2041 = vshrl.u32 %v2040, 7
    %v2042 = vsub.s32 %v2039, %v2041
    %v2043 = vrot.slane %v2036, %v2042
    %v2044 = vcombine.low %v2035, %v2043
    %v2045 = vcombine.high %v2035, %v2043
    %v2046 = vcombine.low %v927, %v1023
    %v2048 = vunpack.c.l.s4 1983009808
    %v2049 = vunpack.c.0.s8 %v2048
    %v2050 = vlaneseq
    %v2051 = vshrl.u32 %v2050, 7
    %v2052 = vsub.s32 %v2049, %v2051
    %v2053 = vrot.slane %v2046, %v2052
    %v2054 = vcombine.low %v975, %v1071
    %v2056 = vunpack.c.l.s4 1983009808
    %v2057 = vunpack.c.0.s8 %v2056
    %v2058 = vlaneseq
    %v2059 = vshrl.u32 %v2058, 7
    %v2060 = vsub.s32 %v2057, %v2059
    %v2061 = vrot.slane %v2054, %v2060
    %v2062 = vcombine.low %v1119, %v1215
    %v2064 = vunpack.c.l.s4 1983009808
    %v2065 = vunpack.c.0.s8 %v2064
    %v2066 = vlaneseq
    %v2067 = vshrl.u32 %v2066, 7
    %v2068 = vsub.s32 %v2065, %v2067
    %v2069 = vrot.slane %v2062, %v2068
    %v2070 = vcombine.low %v1167, %v1263
    %v2072 = vunpack.c.l.s4 1983009808
    %v2073 = vunpack.c.0.s8 %v2072
    %v2074 = vlaneseq
    %v2075 = vshrl.u32 %v2074, 7
    %v2076 = vsub.s32 %v2073, %v2075
    %v2077 = vrot.slane %v2070, %v2076
    %v2078 = vcombine.low %v2053, %v2061
    %v2080 = vunpack.c.l.s4 1934713408
    %v2081 = vunpack.c.0.s8 %v2080
    %v2082 = vlaneseq
    %v2083 = vshrl.u32 %v2082, 7
    %v2084 = vsub.s32 %v2081, %v2083
    %v2085 = vrot.slane %v2078, %v2084
    %v2086 = vcombine.low %v2069, %v2077
    %v2088 = vunpack.c.l.s4 1934713408
    %v2089 = vunpack.c.0.s8 %v2088
    %v2090 = vlaneseq
    %v2091 = vshrl.u32 %v2090, 7
    %v2092 = vsub.s32 %v2089, %v2091
    %v2093 = vrot.slane %v2086, %v2092
    %v2094 = vcombine.low %v2085, %v2093
    %v2095 = vcombine.high %v2085, %v2093
    %v2096 = vcombine.low %v552, %v641
    %v2098 = vunpack.c.l.s4 1983009808
    %v2099 = vunpack.c.0.s8 %v2098
    %v2100 = vlaneseq
    %v2101 = vshrl.u32 %v2100, 7
    %v2102 = vsub.s32 %v2099, %v2101
    %v2103 = vrot.slane %v2096, %v2102
    %v2104 = vcombine.low %v593, %v689
    %v2106 = vunpack.c.l.s4 1983009808
    %v2107 = vunpack.c.0.s8 %v2106
    %v2108 = vlaneseq
    %v2109 = vshrl.u32 %v2108, 7
    %v2110 = vsub.s32 %v2107, %v2109
    %v2111 = vrot.slane %v2104, %v2110
    %v2112 = vcombine.low %v737, %v833
    %v2114 = vunpack.c.l.s4 1983009808
    %v2115 = vunpack.c.0.s8 %v2114
    %v2116 = vlaneseq
    %v2117 = vshrl.u32 %v2116, 7
    %v2118 = vsub.s32 %v2115, %v2117
    %v2119 = vrot.slane %v2112, %v2118
    %v2120 = vcombine.low %v785, %v881
    %v2122 = vunpack.c.l.s4 1983009808
    %v2123 = vunpack.c.0.s8 %v2122
    %v2124 = vlaneseq
    %v2125 = vshrl.u32 %v2124, 7
    %v2126 = vsub.s32 %v2123, %v2125
    %v2127 = vrot.slane %v2120, %v2126
    %v2128 = vcombine.low %v2103, %v2111
    %v2130 = vunpack.c.l.s4 1934713408
    %v2131 = vunpack.c.0.s8 %v2130
    %v2132 = vlaneseq
    %v2133 = vshrl.u32 %v2132, 7
    %v2134 = vsub.s32 %v2131, %v2133
    %v2135 = vrot.slane %v2128, %v2134
    %v2136 = vcombine.low %v2119, %v2127
    %v2138 = vunpack.c.l.s4 1934713408
    %v2139 = vunpack.c.0.s8 %v2138
    %v2140 = vlaneseq
    %v2141 = vshrl.u32 %v2140, 7
    %v2142 = vsub.s32 %v2139, %v2141
    %v2143 = vrot.slane %v2136, %v2142
    %v2144 = vcombine.low %v2135, %v2143
    %v2145 = vcombine.high %v2135, %v2143
    %v2146 = vcombine.low %v929, %v1025
    %v2148 = vunpack.c.l.s4 1983009808
    %v2149 = vunpack.c.0.s8 %v2148
    %v2150 = vlaneseq
    %v2151 = vshrl.u32 %v2150, 7
    %v2152 = vsub.s32 %v2149, %v2151
    %v2153 = vrot.slane %v2146, %v2152
    %v2154 = vcombine.low %v977, %v1073
    %v2156 = vunpack.c.l.s4 1983009808
    %v2157 = vunpack.c.0.s8 %v2156
    %v2158 = vlaneseq
    %v2159 = vshrl.u32 %v2158, 7
    %v2160 = vsub.s32 %v2157, %v2159
    %v2161 = vrot.slane %v2154, %v2160
    %v2162 = vcombine.low %v1121, %v1217
    %v2164 = vunpack.c.l.s4 1983009808
    %v2165 = vunpack.c.0.s8 %v2164
    %v2166 = vlaneseq
    %v2167 = vshrl.u32 %v2166, 7
    %v2168 = vsub.s32 %v2165, %v2167
    %v2169 = vrot.slane %v2162, %v2168
    %v2170 = vcombine.low %v1169, %v1265
    %v2172 = vunpack.c.l.s4 1983009808
    %v2173 = vunpack.c.0.s8 %v2172
    %v2174 = vlaneseq
    %v2175 = vshrl.u32 %v2174, 7
    %v2176 = vsub.s32 %v2173, %v2175
    %v2177 = vrot.slane %v2170, %v2176
    %v2178 = vcombine.low %v2153, %v2161
    %v2180 = vunpack.c.l.s4 1934713408
    %v2181 = vunpack.c.0.s8 %v2180
    %v2182 = vlaneseq
    %v2183 = vshrl.u32 %v2182, 7
    %v2184 = vsub.s32 %v2181, %v2183
    %v2185 = vrot.slane %v2178, %v2184
    %v2186 = vcombine.low %v2169, %v2177
    %v2188 = vunpack.c.l.s4 1934713408
    %v2189 = vunpack.c.0.s8 %v2188
    %v2190 = vlaneseq
    %v2191 = vshrl.u32 %v2190, 7
    %v2192 = vsub.s32 %v2189, %v2191
    %v2193 = vrot.slane %v2186, %v2192
    %v2194 = vcombine.low %v2185, %v2193
    %v2195 = vcombine.high %v2185, %v2193
    %v2196 = vcombine.low %v553, %v643
    %v2198 = vunpack.c.l.s4 1983009808
    %v2199 = vunpack.c.0.s8 %v2198
    %v2200 = vlaneseq
    %v2201 = vshrl.u32 %v2200, 7
    %v2202 = vsub.s32 %v2199, %v2201
    %v2203 = vrot.slane %v2196, %v2202
    %v2204 = vcombine.low %v595, %v691
    %v2206 = vunpack.c.l.s4 1983009808
    %v2207 = vunpack.c.0.s8 %v2206
    %v2208 = vlaneseq
    %v2209 = vshrl.u32 %v2208, 7
    %v2210 = vsub.s32 %v2207, %v2209
    %v2211 = vrot.slane %v2204, %v2210
    %v2212 = vcombine.low %v739, %v835
    %v2214 = vunpack.c.l.s4 1983009808
    %v2215 = vunpack.c.0.s8 %v2214
    %v2216 = vlaneseq
    %v2217 = vshrl.u32 %v2216, 7
    %v2218 = vsub.s32 %v2215, %v2217
    %v2219 = vrot.slane %v2212, %v2218
    %v2220 = vcombine.low %v787, %v883
    %v2222 = vunpack.c.l.s4 1983009808
    %v2223 = vunpack.c.0.s8 %v2222
    %v2224 = vlaneseq
    %v2225 = vshrl.u32 %v2224, 7
    %v2226 = vsub.s32 %v2223, %v2225
    %v2227 = vrot.slane %v2220, %v2226
    %v2228 = vcombine.low %v2203, %v2211
    %v2230 = vunpack.c.l.s4 1934713408
    %v2231 = vunpack.c.0.s8 %v2230
    %v2232 = vlaneseq
    %v2233 = vshrl.u32 %v2232, 7
    %v2234 = vsub.s32 %v2231, %v2233
    %v2235 = vrot.slane %v2228, %v2234
    %v2236 = vcombine.low %v2219, %v2227
    %v2238 = vunpack.c.l.s4 1934713408
    %v2239 = vunpack.c.0.s8 %v2238
    %v2240 = vlaneseq
    %v2241 = vshrl.u32 %v2240, 7
    %v2242 = vsub.s32 %v2239, %v2241
    %v2243 = vrot.slane %v2236, %v2242
    %v2244 = vcombine.low %v2235, %v2243
    %v2245 = vcombine.high %v2235, %v2243
    %v2246 = vcombine.low %v931, %v1027
    %v2248 = vunpack.c.l.s4 1983009808
    %v2249 = vunpack.c.0.s8 %v2248
    %v2250 = vlaneseq
    %v2251 = vshrl.u32 %v2250, 7
    %v2252 = vsub.s32 %v2249, %v2251
    %v2253 = vrot.slane %v2246, %v2252
    %v2254 = vcombine.low %v979, %v1075
    %v2256 = vunpack.c.l.s4 1983009808
    %v2257 = vunpack.c.0.s8 %v2256
    %v2258 = vlaneseq
    %v2259 = vshrl.u32 %v2258, 7
    %v2260 = vsub.s32 %v2257, %v2259
    %v2261 = vrot.slane %v2254, %v2260
    %v2262 = vcombine.low %v1123, %v1219
    %v2264 = vunpack.c.l.s4 1983009808
    %v2265 = vunpack.c.0.s8 %v2264
    %v2266 = vlaneseq
    %v2267 = vshrl.u32 %v2266, 7
    %v2268 = vsub.s32 %v2265, %v2267
    %v2269 = vrot.slane %v2262, %v2268
    %v2270 = vcombine.low %v1171, %v1267
    %v2272 = vunpack.c.l.s4 1983009808
    %v2273 = vunpack.c.0.s8 %v2272
    %v2274 = vlaneseq
    %v2275 = vshrl.u32 %v2274, 7
    %v2276 = vsub.s32 %v2273, %v2275
    %v2277 = vrot.slane %v2270, %v2276
    %v2278 = vcombine.low %v2253, %v2261
    %v2280 = vunpack.c.l.s4 1934713408
    %v2281 = vunpack.c.0.s8 %v2280
    %v2282 = vlaneseq
    %v2283 = vshrl.u32 %v2282, 7
    %v2284 = vsub.s32 %v2281, %v2283
    %v2285 = vrot.slane %v2278, %v2284
    %v2286 = vcombine.low %v2269, %v2277
    %v2288 = vunpack.c.l.s4 1934713408
    %v2289 = vunpack.c.0.s8 %v2288
    %v2290 = vlaneseq
    %v2291 = vshrl.u32 %v2290, 7
    %v2292 = vsub.s32 %v2289, %v2291
    %v2293 = vrot.slane %v2286, %v2292
    %v2294 = vcombine.low %v2285, %v2293
    %v2295 = vcombine.high %v2285, %v2293
    %v2296 = vcombine.low %v554, %v645
    %v2298 = vunpack.c.l.s4 1983009808
    %v2299 = vunpack.c.0.s8 %v2298
    %v2300 = vlaneseq
    %v2301 = vshrl.u32 %v2300, 7
    %v2302 = vsub.s32 %v2299, %v2301
    %v2303 = vrot.slane %v2296, %v2302
    %v2304 = vcombine.low %v597, %v693
    %v2306 = vunpack.c.l.s4 1983009808
    %v2307 = vunpack.c.0.s8 %v2306
    %v2308 = vlaneseq
    %v2309 = vshrl.u32 %v2308, 7
    %v2310 = vsub.s32 %v2307, %v2309
    %v2311 = vrot.slane %v2304, %v2310
    %v2312 = vcombine.low %v741, %v837
    %v2314 = vunpack.c.l.s4 1983009808
    %v2315 = vunpack.c.0.s8 %v2314
    %v2316 = vlaneseq
    %v2317 = vshrl.u32 %v2316, 7
    %v2318 = vsub.s32 %v2315, %v2317
    %v2319 = vrot.slane %v2312, %v2318
    %v2320 = vcombine.low %v789, %v885
    %v2322 = vunpack.c.l.s4 1983009808
    %v2323 = vunpack.c.0.s8 %v2322
    %v2324 = vlaneseq
    %v2325 = vshrl.u32 %v2324, 7
    %v2326 = vsub.s32 %v2323, %v2325
    %v2327 = vrot.slane %v2320, %v2326
    %v2328 = vcombine.low %v2303, %v2311
    %v2330 = vunpack.c.l.s4 1934713408
    %v2331 = vunpack.c.0.s8 %v2330
    %v2332 = vlaneseq
    %v2333 = vshrl.u32 %v2332, 7
    %v2334 = vsub.s32 %v2331, %v2333
    %v2335 = vrot.slane %v2328, %v2334
    %v2336 = vcombine.low %v2319, %v2327
    %v2338 = vunpack.c.l.s4 1934713408
    %v2339 = vunpack.c.0.s8 %v2338
    %v2340 = vlaneseq
    %v2341 = vshrl.u32 %v2340, 7
    %v2342 = vsub.s32 %v2339, %v2341
    %v2343 = vrot.slane %v2336, %v2342
    %v2344 = vcombine.low %v2335, %v2343
    %v2345 = vcombine.high %v2335, %v2343
    %v2346 = vcombine.low %v933, %v1029
    %v2348 = vunpack.c.l.s4 1983009808
    %v2349 = vunpack.c.0.s8 %v2348
    %v2350 = vlaneseq
    %v2351 = vshrl.u32 %v2350, 7
    %v2352 = vsub.s32 %v2349, %v2351
    %v2353 = vrot.slane %v2346, %v2352
    %v2354 = vcombine.low %v981, %v1077
    %v2356 = vunpack.c.l.s4 1983009808
    %v2357 = vunpack.c.0.s8 %v2356
    %v2358 = vlaneseq
    %v2359 = vshrl.u32 %v2358, 7
    %v2360 = vsub.s32 %v2357, %v2359
    %v2361 = vrot.slane %v2354, %v2360
    %v2362 = vcombine.low %v1125, %v1221
    %v2364 = vunpack.c.l.s4 1983009808
    %v2365 = vunpack.c.0.s8 %v2364
    %v2366 = vlaneseq
    %v2367 = vshrl.u32 %v2366, 7
    %v2368 = vsub.s32 %v2365, %v2367
    %v2369 = vrot.slane %v2362, %v2368
    %v2370 = vcombine.low %v1173, %v1269
    %v2372 = vunpack.c.l.s4 1983009808
    %v2373 = vunpack.c.0.s8 %v2372
    %v2374 = vlaneseq
    %v2375 = vshrl.u32 %v2374, 7
    %v2376 = vsub.s32 %v2373, %v2375
    %v2377 = vrot.slane %v2370, %v2376
    %v2378 = vcombine.low %v2353, %v2361
    %v2380 = vunpack.c.l.s4 1934713408
    %v2381 = vunpack.c.0.s8 %v2380
    %v2382 = vlaneseq
    %v2383 = vshrl.u32 %v2382, 7
    %v2384 = vsub.s32 %v2381, %v2383
    %v2385 = vrot.slane %v2378, %v2384
    %v2386 = vcombine.low %v2369, %v2377
    %v2388 = vunpack.c.l.s4 1934713408
    %v2389 = vunpack.c.0.s8 %v2388
    %v2390 = vlaneseq
    %v2391 = vshrl.u32 %v2390, 7
    %v2392 = vsub.s32 %v2389, %v2391
    %v2393 = vrot.slane %v2386, %v2392
    %v2394 = vcombine.low %v2385, %v2393
    %v2395 = vcombine.high %v2385, %v2393
    %v2396 = vcombine.low %v555, %v647
    %v2398 = vunpack.c.l.s4 1983009808
    %v2399 = vunpack.c.0.s8 %v2398
    %v2400 = vlaneseq
    %v2401 = vshrl.u32 %v2400, 7
    %v2402 = vsub.s32 %v2399, %v2401
    %v2403 = vrot.slane %v2396, %v2402
    %v2404 = vcombine.low %v599, %v695
    %v2406 = vunpack.c.l.s4 1983009808
    %v2407 = vunpack.c.0.s8 %v2406
    %v2408 = vlaneseq
    %v2409 = vshrl.u32 %v2408, 7
    %v2410 = vsub.s32 %v2407, %v2409
    %v2411 = vrot.slane %v2404, %v2410
    %v2412 = vcombine.low %v743, %v839
    %v2414 = vunpack.c.l.s4 1983009808
    %v2415 = vunpack.c.0.s8 %v2414
    %v2416 = vlaneseq
    %v2417 = vshrl.u32 %v2416, 7
    %v2418 = vsub.s32 %v2415, %v2417
    %v2419 = vrot.slane %v2412, %v2418
    %v2420 = vcombine.low %v791, %v887
    %v2422 = vunpack.c.l.s4 1983009808
    %v2423 = vunpack.c.0.s8 %v2422
    %v2424 = vlaneseq
    %v2425 = vshrl.u32 %v2424, 7
    %v2426 = vsub.s32 %v2423, %v2425
    %v2427 = vrot.slane %v2420, %v2426
    %v2428 = vcombine.low %v2403, %v2411
    %v2430 = vunpack.c.l.s4 1934713408
    %v2431 = vunpack.c.0.s8 %v2430
    %v2432 = vlaneseq
    %v2433 = vshrl.u32 %v2432, 7
    %v2434 = vsub.s32 %v2431, %v2433
    %v2435 = vrot.slane %v2428, %v2434
    %v2436 = vcombine.low %v2419, %v2427
    %v2438 = vunpack.c.l.s4 1934713408
    %v2439 = vunpack.c.0.s8 %v2438
    %v2440 = vlaneseq
    %v2441 = vshrl.u32 %v2440, 7
    %v2442 = vsub.s32 %v2439, %v2441
    %v2443 = vrot.slane %v2436, %v2442
    %v2444 = vcombine.low %v2435, %v2443
    %v2445 = vcombine.high %v2435, %v2443
    %v2446 = vcombine.low %v935, %v1031
    %v2448 = vunpack.c.l.s4 1983009808
    %v2449 = vunpack.c.0.s8 %v2448
    %v2450 = vlaneseq
    %v2451 = vshrl.u32 %v2450, 7
    %v2452 = vsub.s32 %v2449, %v2451
    %v2453 = vrot.slane %v2446, %v2452
    %v2454 = vcombine.low %v983, %v1079
    %v2456 = vunpack.c.l.s4 1983009808
    %v2457 = vunpack.c.0.s8 %v2456
    %v2458 = vlaneseq
    %v2459 = vshrl.u32 %v2458, 7
    %v2460 = vsub.s32 %v2457, %v2459
    %v2461 = vrot.slane %v2454, %v2460
    %v2462 = vcombine.low %v1127, %v1223
    %v2464 = vunpack.c.l.s4 1983009808
    %v2465 = vunpack.c.0.s8 %v2464
    %v2466 = vlaneseq
    %v2467 = vshrl.u32 %v2466, 7
    %v2468 = vsub.s32 %v2465, %v2467
    %v2469 = vrot.slane %v2462, %v2468
    %v2470 = vcombine.low %v1175, %v1271
    %v2472 = vunpack.c.l.s4 1983009808
    %v2473 = vunpack.c.0.s8 %v2472
    %v2474 = vlaneseq
    %v2475 = vshrl.u32 %v2474, 7
    %v2476 = vsub.s32 %v2473, %v2475
    %v2477 = vrot.slane %v2470, %v2476
    %v2478 = vcombine.low %v2453, %v2461
    %v2480 = vunpack.c.l.s4 1934713408
    %v2481 = vunpack.c.0.s8 %v2480
    %v2482 = vlaneseq
    %v2483 = vshrl.u32 %v2482, 7
    %v2484 = vsub.s32 %v2481, %v2483
    %v2485 = vrot.slane %v2478, %v2484
    %v2486 = vcombine.low %v2469, %v2477
    %v2488 = vunpack.c.l.s4 1934713408
    %v2489 = vunpack.c.0.s8 %v2488
    %v2490 = vlaneseq
    %v2491 = vshrl.u32 %v2490, 7
    %v2492 = vsub.s32 %v2489, %v2491
    %v2493 = vrot.slane %v2486, %v2492
    %v2494 = vcombine.low %v2485, %v2493
    %v2495 = vcombine.high %v2485, %v2493
    %v2496 = vcombine.low %v556, %v649
    %v2498 = vunpack.c.l.s4 1983009808
    %v2499 = vunpack.c.0.s8 %v2498
    %v2500 = vlaneseq
    %v2501 = vshrl.u32 %v2500, 7
    %v2502 = vsub.s32 %v2499, %v2501
    %v2503 = vrot.slane %v2496, %v2502
    %v2504 = vcombine.low %v601, %v697
    %v2506 = vunpack.c.l.s4 1983009808
    %v2507 = vunpack.c.0.s8 %v2506
    %v2508 = vlaneseq
    %v2509 = vshrl.u32 %v2508, 7
    %v2510 = vsub.s32 %v2507, %v2509
    %v2511 = vrot.slane %v2504, %v2510
    %v2512 = vcombine.low %v745, %v841
    %v2514 = vunpack.c.l.s4 1983009808
    %v2515 = vunpack.c.0.s8 %v2514
    %v2516 = vlaneseq
    %v2517 = vshrl.u32 %v2516, 7
    %v2518 = vsub.s32 %v2515, %v2517
    %v2519 = vrot.slane %v2512, %v2518
    %v2520 = vcombine.low %v793, %v889
    %v2522 = vunpack.c.l.s4 1983009808
    %v2523 = vunpack.c.0.s8 %v2522
    %v2524 = vlaneseq
    %v2525 = vshrl.u32 %v2524, 7
    %v2526 = vsub.s32 %v2523, %v2525
    %v2527 = vrot.slane %v2520, %v2526
    %v2528 = vcombine.low %v2503, %v2511
    %v2530 = vunpack.c.l.s4 1934713408
    %v2531 = vunpack.c.0.s8 %v2530
    %v2532 = vlaneseq
    %v2533 = vshrl.u32 %v2532, 7
    %v2534 = vsub.s32 %v2531, %v2533
    %v2535 = vrot.slane %v2528, %v2534
    %v2536 = vcombine.low %v2519, %v2527
    %v2538 = vunpack.c.l.s4 1934713408
    %v2539 = vunpack.c.0.s8 %v2538
    %v2540 = vlaneseq
    %v2541 = vshrl.u32 %v2540, 7
    %v2542 = vsub.s32 %v2539, %v2541
    %v2543 = vrot.slane %v2536, %v2542
    %v2544 = vcombine.low %v2535, %v2543
    %v2545 = vcombine.high %v2535, %v2543
    %v2546 = vcombine.low %v937, %v1033
    %v2548 = vunpack.c.l.s4 1983009808
    %v2549 = vunpack.c.0.s8 %v2548
    %v2550 = vlaneseq
    %v2551 = vshrl.u32 %v2550, 7
    %v2552 = vsub.s32 %v2549, %v2551
    %v2553 = vrot.slane %v2546, %v2552
    %v2554 = vcombine.low %v985, %v1081
    %v2556 = vunpack.c.l.s4 1983009808
    %v2557 = vunpack.c.0.s8 %v2556
    %v2558 = vlaneseq
    %v2559 = vshrl.u32 %v2558, 7
    %v2560 = vsub.s32 %v2557, %v2559
    %v2561 = vrot.slane %v2554, %v2560
    %v2562 = vcombine.low %v1129, %v1225
    %v2564 = vunpack.c.l.s4 1983009808
    %v2565 = vunpack.c.0.s8 %v2564
    %v2566 = vlaneseq
    %v2567 = vshrl.u32 %v2566, 7
    %v2568 = vsub.s32 %v2565, %v2567
    %v2569 = vrot.slane %v2562, %v2568
    %v2570 = vcombine.low %v1177, %v1273
    %v2572 = vunpack.c.l.s4 1983009808
    %v2573 = vunpack.c.0.s8 %v2572
    %v2574 = vlaneseq
    %v2575 = vshrl.u32 %v2574, 7
    %v2576 = vsub.s32 %v2573, %v2575
    %v2577 = vrot.slane %v2570, %v2576
    %v2578 = vcombine.low %v2553, %v2561
    %v2580 = vunpack.c.l.s4 1934713408
    %v2581 = vunpack.c.0.s8 %v2580
    %v2582 = vlaneseq
    %v2583 = vshrl.u32 %v2582, 7
    %v2584 = vsub.s32 %v2581, %v2583
    %v2585 = vrot.slane %v2578, %v2584
    %v2586 = vcombine.low %v2569, %v2577
    %v2588 = vunpack.c.l.s4 1934713408
    %v2589 = vunpack.c.0.s8 %v2588
    %v2590 = vlaneseq
    %v2591 = vshrl.u32 %v2590, 7
    %v2592 = vsub.s32 %v2589, %v2591
    %v2593 = vrot.slane %v2586, %v2592
    %v2594 = vcombine.low %v2585, %v2593
    %v2595 = vcombine.high %v2585, %v2593
    %v2596 = vcombine.low %v557, %v651
    %v2598 = vunpack.c.l.s4 1983009808
    %v2599 = vunpack.c.0.s8 %v2598
    %v2600 = vlaneseq
    %v2601 = vshrl.u32 %v2600, 7
    %v2602 = vsub.s32 %v2599, %v2601
    %v2603 = vrot.slane %v2596, %v2602
    %v2604 = vcombine.low %v603, %v699
    %v2606 = vunpack.c.l.s4 1983009808
    %v2607 = vunpack.c.0.s8 %v2606
    %v2608 = vlaneseq
    %v2609 = vshrl.u32 %v2608, 7
    %v2610 = vsub.s32 %v2607, %v2609
    %v2611 = vrot.slane %v2604, %v2610
    %v2612 = vcombine.low %v747, %v843
    %v2614 = vunpack.c.l.s4 1983009808
    %v2615 = vunpack.c.0.s8 %v2614
    %v2616 = vlaneseq
    %v2617 = vshrl.u32 %v2616, 7
    %v2618 = vsub.s32 %v2615, %v2617
    %v2619 = vrot.slane %v2612, %v2618
    %v2620 = vcombine.low %v795, %v891
    %v2622 = vunpack.c.l.s4 1983009808
    %v2623 = vunpack.c.0.s8 %v2622
    %v2624 = vlaneseq
    %v2625 = vshrl.u32 %v2624, 7
    %v2626 = vsub.s32 %v2623, %v2625
    %v2627 = vrot.slane %v2620, %v2626
    %v2628 = vcombine.low %v2603, %v2611
    %v2630 = vunpack.c.l.s4 1934713408
    %v2631 = vunpack.c.0.s8 %v2630
    %v2632 = vlaneseq
    %v2633 = vshrl.u32 %v2632, 7
    %v2634 = vsub.s32 %v2631, %v2633
    %v2635 = vrot.slane %v2628, %v2634
    %v2636 = vcombine.low %v2619, %v2627
    %v2638 = vunpack.c.l.s4 1934713408
    %v2639 = vunpack.c.0.s8 %v2638
    %v2640 = vlaneseq
    %v2641 = vshrl.u32 %v2640, 7
    %v2642 = vsub.s32 %v2639, %v2641
    %v2643 = vrot.slane %v2636, %v2642
    %v2644 = vcombine.low %v2635, %v2643
    %v2645 = vcombine.high %v2635, %v2643
    %v2646 = vcombine.low %v939, %v1035
    %v2648 = vunpack.c.l.s4 1983009808
    %v2649 = vunpack.c.0.s8 %v2648
    %v2650 = vlaneseq
    %v2651 = vshrl.u32 %v2650, 7
    %v2652 = vsub.s32 %v2649, %v2651
    %v2653 = vrot.slane %v2646, %v2652
    %v2654 = vcombine.low %v987, %v1083
    %v2656 = vunpack.c.l.s4 1983009808
    %v2657 = vunpack.c.0.s8 %v2656
    %v2658 = vlaneseq
    %v2659 = vshrl.u32 %v2658, 7
    %v2660 = vsub.s32 %v2657, %v2659
    %v2661 = vrot.slane %v2654, %v2660
    %v2662 = vcombine.low %v1131, %v1227
    %v2664 = vunpack.c.l.s4 1983009808
    %v2665 = vunpack.c.0.s8 %v2664
    %v2666 = vlaneseq
    %v2667 = vshrl.u32 %v2666, 7
    %v2668 = vsub.s32 %v2665, %v2667
    %v2669 = vrot.slane %v2662, %v2668
    %v2670 = vcombine.low %v1179, %v1275
    %v2672 = vunpack.c.l.s4 1983009808
    %v2673 = vunpack.c.0.s8 %v2672
    %v2674 = vlaneseq
    %v2675 = vshrl.u32 %v2674, 7
    %v2676 = vsub.s32 %v2673, %v2675
    %v2677 = vrot.slane %v2670, %v2676
    %v2678 = vcombine.low %v2653, %v2661
    %v2680 = vunpack.c.l.s4 1934713408
    %v2681 = vunpack.c.0.s8 %v2680
    %v2682 = vlaneseq
    %v2683 = vshrl.u32 %v2682, 7
    %v2684 = vsub.s32 %v2681, %v2683
    %v2685 = vrot.slane %v2678, %v2684
    %v2686 = vcombine.low %v2669, %v2677
    %v2688 = vunpack.c.l.s4 1934713408
    %v2689 = vunpack.c.0.s8 %v2688
    %v2690 = vlaneseq
    %v2691 = vshrl.u32 %v2690, 7
    %v2692 = vsub.s32 %v2689, %v2691
    %v2693 = vrot.slane %v2686, %v2692
    %v2694 = vcombine.low %v2685, %v2693
    %v2695 = vcombine.high %v2685, %v2693
    %v2696 = vcombine.low %v558, %v653
    %v2698 = vunpack.c.l.s4 1983009808
    %v2699 = vunpack.c.0.s8 %v2698
    %v2700 = vlaneseq
    %v2701 = vshrl.u32 %v2700, 7
    %v2702 = vsub.s32 %v2699, %v2701
    %v2703 = vrot.slane %v2696, %v2702
    %v2704 = vcombine.low %v605, %v701
    %v2706 = vunpack.c.l.s4 1983009808
    %v2707 = vunpack.c.0.s8 %v2706
    %v2708 = vlaneseq
    %v2709 = vshrl.u32 %v2708, 7
    %v2710 = vsub.s32 %v2707, %v2709
    %v2711 = vrot.slane %v2704, %v2710
    %v2712 = vcombine.low %v749, %v845
    %v2714 = vunpack.c.l.s4 1983009808
    %v2715 = vunpack.c.0.s8 %v2714
    %v2716 = vlaneseq
    %v2717 = vshrl.u32 %v2716, 7
    %v2718 = vsub.s32 %v2715, %v2717
    %v2719 = vrot.slane %v2712, %v2718
    %v2720 = vcombine.low %v797, %v893
    %v2722 = vunpack.c.l.s4 1983009808
    %v2723 = vunpack.c.0.s8 %v2722
    %v2724 = vlaneseq
    %v2725 = vshrl.u32 %v2724, 7
    %v2726 = vsub.s32 %v2723, %v2725
    %v2727 = vrot.slane %v2720, %v2726
    %v2728 = vcombine.low %v2703, %v2711
    %v2730 = vunpack.c.l.s4 1934713408
    %v2731 = vunpack.c.0.s8 %v2730
    %v2732 = vlaneseq
    %v2733 = vshrl.u32 %v2732, 7
    %v2734 = vsub.s32 %v2731, %v2733
    %v2735 = vrot.slane %v2728, %v2734
    %v2736 = vcombine.low %v2719, %v2727
    %v2738 = vunpack.c.l.s4 1934713408
    %v2739 = vunpack.c.0.s8 %v2738
    %v2740 = vlaneseq
    %v2741 = vshrl.u32 %v2740, 7
    %v2742 = vsub.s32 %v2739, %v2741
    %v2743 = vrot.slane %v2736, %v2742
    %v2744 = vcombine.low %v2735, %v2743
    %v2745 = vcombine.high %v2735, %v2743
    %v2746 = vcombine.low %v941, %v1037
    %v2748 = vunpack.c.l.s4 1983009808
    %v2749 = vunpack.c.0.s8 %v2748
    %v2750 = vlaneseq
    %v2751 = vshrl.u32 %v2750, 7
    %v2752 = vsub.s32 %v2749, %v2751
    %v2753 = vrot.slane %v2746, %v2752
    %v2754 = vcombine.low %v989, %v1085
    %v2756 = vunpack.c.l.s4 1983009808
    %v2757 = vunpack.c.0.s8 %v2756
    %v2758 = vlaneseq
    %v2759 = vshrl.u32 %v2758, 7
    %v2760 = vsub.s32 %v2757, %v2759
    %v2761 = vrot.slane %v2754, %v2760
    %v2762 = vcombine.low %v1133, %v1229
    %v2764 = vunpack.c.l.s4 1983009808
    %v2765 = vunpack.c.0.s8 %v2764
    %v2766 = vlaneseq
    %v2767 = vshrl.u32 %v2766, 7
    %v2768 = vsub.s32 %v2765, %v2767
    %v2769 = vrot.slane %v2762, %v2768
    %v2770 = vcombine.low %v1181, %v1277
    %v2772 = vunpack.c.l.s4 1983009808
    %v2773 = vunpack.c.0.s8 %v2772
    %v2774 = vlaneseq
    %v2775 = vshrl.u32 %v2774, 7
    %v2776 = vsub.s32 %v2773, %v2775
    %v2777 = vrot.slane %v2770, %v2776
    %v2778 = vcombine.low %v2753, %v2761
    %v2780 = vunpack.c.l.s4 1934713408
    %v2781 = vunpack.c.0.s8 %v2780
    %v2782 = vlaneseq
    %v2783 = vshrl.u32 %v2782, 7
    %v2784 = vsub.s32 %v2781, %v2783
    %v2785 = vrot.slane %v2778, %v2784
    %v2786 = vcombine.low %v2769, %v2777
    %v2788 = vunpack.c.l.s4 1934713408
    %v2789 = vunpack.c.0.s8 %v2788
    %v2790 = vlaneseq
    %v2791 = vshrl.u32 %v2790, 7
    %v2792 = vsub.s32 %v2789, %v2791
    %v2793 = vrot.slane %v2786, %v2792
    %v2794 = vcombine.low %v2785, %v2793
    %v2795 = vcombine.high %v2785, %v2793
    %v2796 = vcombine.low %v559, %v655
    %v2798 = vunpack.c.l.s4 1983009808
    %v2799 = vunpack.c.0.s8 %v2798
    %v2800 = vlaneseq
    %v2801 = vshrl.u32 %v2800, 7
    %v2802 = vsub.s32 %v2799, %v2801
    %v2803 = vrot.slane %v2796, %v2802
    %v2804 = vcombine.low %v607, %v703
    %v2806 = vunpack.c.l.s4 1983009808
    %v2807 = vunpack.c.0.s8 %v2806
    %v2808 = vlaneseq
    %v2809 = vshrl.u32 %v2808, 7
    %v2810 = vsub.s32 %v2807, %v2809
    %v2811 = vrot.slane %v2804, %v2810
    %v2812 = vcombine.low %v751, %v847
    %v2814 = vunpack.c.l.s4 1983009808
    %v2815 = vunpack.c.0.s8 %v2814
    %v2816 = vlaneseq
    %v2817 = vshrl.u32 %v2816, 7
    %v2818 = vsub.s32 %v2815, %v2817
    %v2819 = vrot.slane %v2812, %v2818
    %v2820 = vcombine.low %v799, %v895
    %v2822 = vunpack.c.l.s4 1983009808
    %v2823 = vunpack.c.0.s8 %v2822
    %v2824 = vlaneseq
    %v2825 = vshrl.u32 %v2824, 7
    %v2826 = vsub.s32 %v2823, %v2825
    %v2827 = vrot.slane %v2820, %v2826
    %v2828 = vcombine.low %v2803, %v2811
    %v2830 = vunpack.c.l.s4 1934713408
    %v2831 = vunpack.c.0.s8 %v2830
    %v2832 = vlaneseq
    %v2833 = vshrl.u32 %v2832, 7
    %v2834 = vsub.s32 %v2831, %v2833
    %v2835 = vrot.slane %v2828, %v2834
    %v2836 = vcombine.low %v2819, %v2827
    %v2838 = vunpack.c.l.s4 1934713408
    %v2839 = vunpack.c.0.s8 %v2838
    %v2840 = vlaneseq
    %v2841 = vshrl.u32 %v2840, 7
    %v2842 = vsub.s32 %v2839, %v2841
    %v2843 = vrot.slane %v2836, %v2842
    %v2844 = vcombine.low %v2835, %v2843
    %v2845 = vcombine.high %v2835, %v2843
    %v2846 = vcombine.low %v943, %v1039
    %v2848 = vunpack.c.l.s4 1983009808
    %v2849 = vunpack.c.0.s8 %v2848
    %v2850 = vlaneseq
    %v2851 = vshrl.u32 %v2850, 7
    %v2852 = vsub.s32 %v2849, %v2851
    %v2853 = vrot.slane %v2846, %v2852
    %v2854 = vcombine.low %v991, %v1087
    %v2856 = vunpack.c.l.s4 1983009808
    %v2857 = vunpack.c.0.s8 %v2856
    %v2858 = vlaneseq
    %v2859 = vshrl.u32 %v2858, 7
    %v2860 = vsub.s32 %v2857, %v2859
    %v2861 = vrot.slane %v2854, %v2860
    %v2862 = vcombine.low %v1135, %v1231
    %v2864 = vunpack.c.l.s4 1983009808
    %v2865 = vunpack.c.0.s8 %v2864
    %v2866 = vlaneseq
    %v2867 = vshrl.u32 %v2866, 7
    %v2868 = vsub.s32 %v2865, %v2867
    %v2869 = vrot.slane %v2862, %v2868
    %v2870 = vcombine.low %v1183, %v1279
    %v2872 = vunpack.c.l.s4 1983009808
    %v2873 = vunpack.c.0.s8 %v2872
    %v2874 = vlaneseq
    %v2875 = vshrl.u32 %v2874, 7
    %v2876 = vsub.s32 %v2873, %v2875
    %v2877 = vrot.slane %v2870, %v2876
    %v2878 = vcombine.low %v2853, %v2861
    %v2880 = vunpack.c.l.s4 1934713408
    %v2881 = vunpack.c.0.s8 %v2880
    %v2882 = vlaneseq
    %v2883 = vshrl.u32 %v2882, 7
    %v2884 = vsub.s32 %v2881, %v2883
    %v2885 = vrot.slane %v2878, %v2884
    %v2886 = vcombine.low %v2869, %v2877
    %v2888 = vunpack.c.l.s4 1934713408
    %v2889 = vunpack.c.0.s8 %v2888
    %v2890 = vlaneseq
    %v2891 = vshrl.u32 %v2890, 7
    %v2892 = vsub.s32 %v2889, %v2891
    %v2893 = vrot.slane %v2886, %v2892
    %v2894 = vcombine.low %v2885, %v2893
    %v2895 = vcombine.high %v2885, %v2893
    %vm2896 = vcmask 15360
    %v2897 = vsel %vm2896, %v1344, -inf
    %2898 = vmax.xlane.f32.xlu0 %v2897
    %v2899 = vpop.xlane.xlu0 %2898
    %v2900 = vsel %vm2896, %v1394, -inf
    %2901 = vmax.xlane.f32.xlu0 %v2900
    %v2902 = vpop.xlane.xlu0 %2901
    %v2903 = vsel %vm2896, %v1345, -inf
    %2904 = vmax.xlane.f32.xlu0 %v2903
    %v2905 = vpop.xlane.xlu0 %2904
    %v2906 = vsel %vm2896, %v1395, -inf
    %2907 = vmax.xlane.f32.xlu0 %v2906
    %v2908 = vpop.xlane.xlu0 %2907
    %v2909 = vsel %vm2896, %v1444, -inf
    %2910 = vmax.xlane.f32.xlu0 %v2909
    %v2911 = vpop.xlane.xlu0 %2910
    %v2912 = vsel %vm2896, %v1494, -inf
    %2913 = vmax.xlane.f32.xlu0 %v2912
    %v2914 = vpop.xlane.xlu0 %2913
    %v2915 = vsel %vm2896, %v1445, -inf
    %2916 = vmax.xlane.f32.xlu0 %v2915
    %v2917 = vpop.xlane.xlu0 %2916
    %v2918 = vsel %vm2896, %v1495, -inf
    %2919 = vmax.xlane.f32.xlu0 %v2918
    %v2920 = vpop.xlane.xlu0 %2919
    %v2921 = vsel %vm2896, %v1544, -inf
    %2922 = vmax.xlane.f32.xlu0 %v2921
    %v2923 = vpop.xlane.xlu0 %2922
    %v2924 = vsel %vm2896, %v1594, -inf
    %2925 = vmax.xlane.f32.xlu0 %v2924
    %v2926 = vpop.xlane.xlu0 %2925
    %v2927 = vsel %vm2896, %v1545, -inf
    %2928 = vmax.xlane.f32.xlu0 %v2927
    %v2929 = vpop.xlane.xlu0 %2928
    %v2930 = vsel %vm2896, %v1595, -inf
    %2931 = vmax.xlane.f32.xlu0 %v2930
    %v2932 = vpop.xlane.xlu0 %2931
    %v2933 = vsel %vm2896, %v1644, -inf
    %2934 = vmax.xlane.f32.xlu0 %v2933
    %v2935 = vpop.xlane.xlu0 %2934
    %v2936 = vsel %vm2896, %v1694, -inf
    %2937 = vmax.xlane.f32.xlu0 %v2936
    %v2938 = vpop.xlane.xlu0 %2937
    %v2939 = vsel %vm2896, %v1645, -inf
    %2940 = vmax.xlane.f32.xlu0 %v2939
    %v2941 = vpop.xlane.xlu0 %2940
    %v2942 = vsel %vm2896, %v1695, -inf
    %2943 = vmax.xlane.f32.xlu0 %v2942
    %v2944 = vpop.xlane.xlu0 %2943
    %v2945 = vsel %vm2896, %v1744, -inf
    %2946 = vmax.xlane.f32.xlu0 %v2945
    %v2947 = vpop.xlane.xlu0 %2946
    %v2948 = vsel %vm2896, %v1794, -inf
    %2949 = vmax.xlane.f32.xlu0 %v2948
    %v2950 = vpop.xlane.xlu0 %2949
    %v2951 = vsel %vm2896, %v1745, -inf
    %2952 = vmax.xlane.f32.xlu0 %v2951
    %v2953 = vpop.xlane.xlu0 %2952
    %v2954 = vsel %vm2896, %v1795, -inf
    %2955 = vmax.xlane.f32.xlu0 %v2954
    %v2956 = vpop.xlane.xlu0 %2955
    %v2957 = vsel %vm2896, %v1844, -inf
    %2958 = vmax.xlane.f32.xlu0 %v2957
    %v2959 = vpop.xlane.xlu0 %2958
    %v2960 = vsel %vm2896, %v1894, -inf
    %2961 = vmax.xlane.f32.xlu0 %v2960
    %v2962 = vpop.xlane.xlu0 %2961
    %v2963 = vsel %vm2896, %v1845, -inf
    %2964 = vmax.xlane.f32.xlu0 %v2963
    %v2965 = vpop.xlane.xlu0 %2964
    %v2966 = vsel %vm2896, %v1895, -inf
    %2967 = vmax.xlane.f32.xlu0 %v2966
    %v2968 = vpop.xlane.xlu0 %2967
    %v2969 = vsel %vm2896, %v1944, -inf
    %2970 = vmax.xlane.f32.xlu0 %v2969
    %v2971 = vpop.xlane.xlu0 %2970
    %v2972 = vsel %vm2896, %v1994, -inf
    %2973 = vmax.xlane.f32.xlu0 %v2972
    %v2974 = vpop.xlane.xlu0 %2973
    %v2975 = vsel %vm2896, %v1945, -inf
    %2976 = vmax.xlane.f32.xlu0 %v2975
    %v2977 = vpop.xlane.xlu0 %2976
    %v2978 = vsel %vm2896, %v1995, -inf
    %2979 = vmax.xlane.f32.xlu0 %v2978
    %v2980 = vpop.xlane.xlu0 %2979
    %v2981 = vsel %vm2896, %v2044, -inf
    %2982 = vmax.xlane.f32.xlu0 %v2981
    %v2983 = vpop.xlane.xlu0 %2982
    %v2984 = vsel %vm2896, %v2094, -inf
    %2985 = vmax.xlane.f32.xlu0 %v2984
    %v2986 = vpop.xlane.xlu0 %2985
    %v2987 = vsel %vm2896, %v2045, -inf
    %2988 = vmax.xlane.f32.xlu0 %v2987
    %v2989 = vpop.xlane.xlu0 %2988
    %v2990 = vsel %vm2896, %v2095, -inf
    %2991 = vmax.xlane.f32.xlu0 %v2990
    %v2992 = vpop.xlane.xlu0 %2991
    %v2993 = vsel %vm2896, %v2144, -inf
    %2994 = vmax.xlane.f32.xlu0 %v2993
    %v2995 = vpop.xlane.xlu0 %2994
    %v2996 = vsel %vm2896, %v2194, -inf
    %2997 = vmax.xlane.f32.xlu0 %v2996
    %v2998 = vpop.xlane.xlu0 %2997
    %v2999 = vsel %vm2896, %v2145, -inf
    %3000 = vmax.xlane.f32.xlu0 %v2999
    %v3001 = vpop.xlane.xlu0 %3000
    %v3002 = vsel %vm2896, %v2195, -inf
    %3003 = vmax.xlane.f32.xlu0 %v3002
    %v3004 = vpop.xlane.xlu0 %3003
    %v3005 = vsel %vm2896, %v2244, -inf
    %3006 = vmax.xlane.f32.xlu0 %v3005
    %v3007 = vpop.xlane.xlu0 %3006
    %v3008 = vsel %vm2896, %v2294, -inf
    %3009 = vmax.xlane.f32.xlu0 %v3008
    %v3010 = vpop.xlane.xlu0 %3009
    %v3011 = vsel %vm2896, %v2245, -inf
    %3012 = vmax.xlane.f32.xlu0 %v3011
    %v3013 = vpop.xlane.xlu0 %3012
    %v3014 = vsel %vm2896, %v2295, -inf
    %3015 = vmax.xlane.f32.xlu0 %v3014
    %v3016 = vpop.xlane.xlu0 %3015
    %v3017 = vsel %vm2896, %v2344, -inf
    %3018 = vmax.xlane.f32.xlu0 %v3017
    %v3019 = vpop.xlane.xlu0 %3018
    %v3020 = vsel %vm2896, %v2394, -inf
    %3021 = vmax.xlane.f32.xlu0 %v3020
    %v3022 = vpop.xlane.xlu0 %3021
    %v3023 = vsel %vm2896, %v2345, -inf
    %3024 = vmax.xlane.f32.xlu0 %v3023
    %v3025 = vpop.xlane.xlu0 %3024
    %v3026 = vsel %vm2896, %v2395, -inf
    %3027 = vmax.xlane.f32.xlu0 %v3026
    %v3028 = vpop.xlane.xlu0 %3027
    %v3029 = vsel %vm2896, %v2444, -inf
    %3030 = vmax.xlane.f32.xlu0 %v3029
    %v3031 = vpop.xlane.xlu0 %3030
    %v3032 = vsel %vm2896, %v2494, -inf
    %3033 = vmax.xlane.f32.xlu0 %v3032
    %v3034 = vpop.xlane.xlu0 %3033
    %v3035 = vsel %vm2896, %v2445, -inf
    %3036 = vmax.xlane.f32.xlu0 %v3035
    %v3037 = vpop.xlane.xlu0 %3036
    %v3038 = vsel %vm2896, %v2495, -inf
    %3039 = vmax.xlane.f32.xlu0 %v3038
    %v3040 = vpop.xlane.xlu0 %3039
    %v3041 = vsel %vm2896, %v2544, -inf
    %3042 = vmax.xlane.f32.xlu0 %v3041
    %v3043 = vpop.xlane.xlu0 %3042
    %v3044 = vsel %vm2896, %v2594, -inf
    %3045 = vmax.xlane.f32.xlu0 %v3044
    %v3046 = vpop.xlane.xlu0 %3045
    %v3047 = vsel %vm2896, %v2545, -inf
    %3048 = vmax.xlane.f32.xlu0 %v3047
    %v3049 = vpop.xlane.xlu0 %3048
    %v3050 = vsel %vm2896, %v2595, -inf
    %3051 = vmax.xlane.f32.xlu0 %v3050
    %v3052 = vpop.xlane.xlu0 %3051
    %v3053 = vsel %vm2896, %v2644, -inf
    %3054 = vmax.xlane.f32.xlu0 %v3053
    %v3055 = vpop.xlane.xlu0 %3054
    %v3056 = vsel %vm2896, %v2694, -inf
    %3057 = vmax.xlane.f32.xlu0 %v3056
    %v3058 = vpop.xlane.xlu0 %3057
    %v3059 = vsel %vm2896, %v2645, -inf
    %3060 = vmax.xlane.f32.xlu0 %v3059
    %v3061 = vpop.xlane.xlu0 %3060
    %v3062 = vsel %vm2896, %v2695, -inf
    %3063 = vmax.xlane.f32.xlu0 %v3062
    %v3064 = vpop.xlane.xlu0 %3063
    %v3065 = vsel %vm2896, %v2744, -inf
    %3066 = vmax.xlane.f32.xlu0 %v3065
    %v3067 = vpop.xlane.xlu0 %3066
    %v3068 = vsel %vm2896, %v2794, -inf
    %3069 = vmax.xlane.f32.xlu0 %v3068
    %v3070 = vpop.xlane.xlu0 %3069
    %v3071 = vsel %vm2896, %v2745, -inf
    %3072 = vmax.xlane.f32.xlu0 %v3071
    %v3073 = vpop.xlane.xlu0 %3072
    %v3074 = vsel %vm2896, %v2795, -inf
    %3075 = vmax.xlane.f32.xlu0 %v3074
    %v3076 = vpop.xlane.xlu0 %3075
    %v3077 = vsel %vm2896, %v2844, -inf
    %3078 = vmax.xlane.f32.xlu0 %v3077
    %v3079 = vpop.xlane.xlu0 %3078
    %v3080 = vsel %vm2896, %v2894, -inf
    %3081 = vmax.xlane.f32.xlu0 %v3080
    %v3082 = vpop.xlane.xlu0 %3081
    %v3083 = vsel %vm2896, %v2845, -inf
    %3084 = vmax.xlane.f32.xlu0 %v3083
    %v3085 = vpop.xlane.xlu0 %3084
    %v3086 = vsel %vm2896, %v2895, -inf
    %3087 = vmax.xlane.f32.xlu0 %v3086
    %v3088 = vpop.xlane.xlu0 %3087
    %v3089 = vmax.f32 %v2899, %v2911
    %v3090 = vmax.f32 %v2902, %v2914
    %v3091 = vmax.f32 %v2905, %v2917
    %v3092 = vmax.f32 %v2908, %v2920
    %v3093 = vmax.f32 %v2923, %v2935
    %v3094 = vmax.f32 %v2926, %v2938
    %v3095 = vmax.f32 %v2929, %v2941
    %v3096 = vmax.f32 %v2932, %v2944
    %v3097 = vmax.f32 %v2947, %v2959
    %v3098 = vmax.f32 %v2950, %v2962
    %v3099 = vmax.f32 %v2953, %v2965
    %v3100 = vmax.f32 %v2956, %v2968
    %v3101 = vmax.f32 %v2971, %v2983
    %v3102 = vmax.f32 %v2974, %v2986
    %v3103 = vmax.f32 %v2977, %v2989
    %v3104 = vmax.f32 %v2980, %v2992
    %v3105 = vmax.f32 %v2995, %v3007
    %v3106 = vmax.f32 %v2998, %v3010
    %v3107 = vmax.f32 %v3001, %v3013
    %v3108 = vmax.f32 %v3004, %v3016
    %v3109 = vmax.f32 %v3019, %v3031
    %v3110 = vmax.f32 %v3022, %v3034
    %v3111 = vmax.f32 %v3025, %v3037
    %v3112 = vmax.f32 %v3028, %v3040
    %v3113 = vmax.f32 %v3043, %v3055
    %v3114 = vmax.f32 %v3046, %v3058
    %v3115 = vmax.f32 %v3049, %v3061
    %v3116 = vmax.f32 %v3052, %v3064
    %v3117 = vmax.f32 %v3067, %v3079
    %v3118 = vmax.f32 %v3070, %v3082
    %v3119 = vmax.f32 %v3073, %v3085
    %v3120 = vmax.f32 %v3076, %v3088
    %v3153 = vlaneseq
    %v3154 = vand.u32 %v3153, 127
    %v3155 = vlaneseq
    %v3156 = vshrl.u32 %v3155, 7
    %v3157 = vsub.s32 %v3154, %v3156
    %v3158 = vrot.slane %v3089, %v3157
    %v3159 = vadd.s32 %v3154, 4294967288
    %v3160 = vlaneseq
    %v3161 = vshrl.u32 %v3160, 7
    %v3162 = vsub.s32 %v3159, %v3161
    %v3163 = vrot.slane %v3090, %v3162
    %vm3164 = vcmask 130112
    %v3165 = vsel %vm3164, %v3163, %v3158
    %v3166 = vlaneseq
    %v3167 = vshrl.u32 %v3166, 7
    %v3168 = vsub.s32 %v3154, %v3167
    %v3169 = vrot.slane %v3091, %v3168
    %v3170 = vlaneseq
    %v3171 = vshrl.u32 %v3170, 7
    %v3172 = vsub.s32 %v3159, %v3171
    %v3173 = vrot.slane %v3092, %v3172
    %v3174 = vsel %vm3164, %v3173, %v3169
    %v3175 = vlaneseq
    %v3176 = vshrl.u32 %v3175, 7
    %v3177 = vsub.s32 %v3154, %v3176
    %v3178 = vrot.slane %v3093, %v3177
    %v3179 = vlaneseq
    %v3180 = vshrl.u32 %v3179, 7
    %v3181 = vsub.s32 %v3159, %v3180
    %v3182 = vrot.slane %v3094, %v3181
    %v3183 = vsel %vm3164, %v3182, %v3178
    %v3184 = vlaneseq
    %v3185 = vshrl.u32 %v3184, 7
    %v3186 = vsub.s32 %v3154, %v3185
    %v3187 = vrot.slane %v3095, %v3186
    %v3188 = vlaneseq
    %v3189 = vshrl.u32 %v3188, 7
    %v3190 = vsub.s32 %v3159, %v3189
    %v3191 = vrot.slane %v3096, %v3190
    %v3192 = vsel %vm3164, %v3191, %v3187
    %v3193 = vlaneseq
    %v3194 = vshrl.u32 %v3193, 7
    %v3195 = vsub.s32 %v3154, %v3194
    %v3196 = vrot.slane %v3097, %v3195
    %v3197 = vlaneseq
    %v3198 = vshrl.u32 %v3197, 7
    %v3199 = vsub.s32 %v3159, %v3198
    %v3200 = vrot.slane %v3098, %v3199
    %v3201 = vsel %vm3164, %v3200, %v3196
    %v3202 = vlaneseq
    %v3203 = vshrl.u32 %v3202, 7
    %v3204 = vsub.s32 %v3154, %v3203
    %v3205 = vrot.slane %v3099, %v3204
    %v3206 = vlaneseq
    %v3207 = vshrl.u32 %v3206, 7
    %v3208 = vsub.s32 %v3159, %v3207
    %v3209 = vrot.slane %v3100, %v3208
    %v3210 = vsel %vm3164, %v3209, %v3205
    %v3211 = vlaneseq
    %v3212 = vshrl.u32 %v3211, 7
    %v3213 = vsub.s32 %v3154, %v3212
    %v3214 = vrot.slane %v3101, %v3213
    %v3215 = vlaneseq
    %v3216 = vshrl.u32 %v3215, 7
    %v3217 = vsub.s32 %v3159, %v3216
    %v3218 = vrot.slane %v3102, %v3217
    %v3219 = vsel %vm3164, %v3218, %v3214
    %v3220 = vlaneseq
    %v3221 = vshrl.u32 %v3220, 7
    %v3222 = vsub.s32 %v3154, %v3221
    %v3223 = vrot.slane %v3103, %v3222
    %v3224 = vlaneseq
    %v3225 = vshrl.u32 %v3224, 7
    %v3226 = vsub.s32 %v3159, %v3225
    %v3227 = vrot.slane %v3104, %v3226
    %v3228 = vsel %vm3164, %v3227, %v3223
    %v3229 = vlaneseq
    %v3230 = vshrl.u32 %v3229, 7
    %v3231 = vsub.s32 %v3154, %v3230
    %v3232 = vrot.slane %v3105, %v3231
    %v3233 = vlaneseq
    %v3234 = vshrl.u32 %v3233, 7
    %v3235 = vsub.s32 %v3159, %v3234
    %v3236 = vrot.slane %v3106, %v3235
    %v3237 = vsel %vm3164, %v3236, %v3232
    %v3238 = vlaneseq
    %v3239 = vshrl.u32 %v3238, 7
    %v3240 = vsub.s32 %v3154, %v3239
    %v3241 = vrot.slane %v3107, %v3240
    %v3242 = vlaneseq
    %v3243 = vshrl.u32 %v3242, 7
    %v3244 = vsub.s32 %v3159, %v3243
    %v3245 = vrot.slane %v3108, %v3244
    %v3246 = vsel %vm3164, %v3245, %v3241
    %v3247 = vlaneseq
    %v3248 = vshrl.u32 %v3247, 7
    %v3249 = vsub.s32 %v3154, %v3248
    %v3250 = vrot.slane %v3109, %v3249
    %v3251 = vlaneseq
    %v3252 = vshrl.u32 %v3251, 7
    %v3253 = vsub.s32 %v3159, %v3252
    %v3254 = vrot.slane %v3110, %v3253
    %v3255 = vsel %vm3164, %v3254, %v3250
    %v3256 = vlaneseq
    %v3257 = vshrl.u32 %v3256, 7
    %v3258 = vsub.s32 %v3154, %v3257
    %v3259 = vrot.slane %v3111, %v3258
    %v3260 = vlaneseq
    %v3261 = vshrl.u32 %v3260, 7
    %v3262 = vsub.s32 %v3159, %v3261
    %v3263 = vrot.slane %v3112, %v3262
    %v3264 = vsel %vm3164, %v3263, %v3259
    %v3265 = vlaneseq
    %v3266 = vshrl.u32 %v3265, 7
    %v3267 = vsub.s32 %v3154, %v3266
    %v3268 = vrot.slane %v3113, %v3267
    %v3269 = vlaneseq
    %v3270 = vshrl.u32 %v3269, 7
    %v3271 = vsub.s32 %v3159, %v3270
    %v3272 = vrot.slane %v3114, %v3271
    %v3273 = vsel %vm3164, %v3272, %v3268
    %v3274 = vlaneseq
    %v3275 = vshrl.u32 %v3274, 7
    %v3276 = vsub.s32 %v3154, %v3275
    %v3277 = vrot.slane %v3115, %v3276
    %v3278 = vlaneseq
    %v3279 = vshrl.u32 %v3278, 7
    %v3280 = vsub.s32 %v3159, %v3279
    %v3281 = vrot.slane %v3116, %v3280
    %v3282 = vsel %vm3164, %v3281, %v3277
    %v3283 = vlaneseq
    %v3284 = vshrl.u32 %v3283, 7
    %v3285 = vsub.s32 %v3154, %v3284
    %v3286 = vrot.slane %v3117, %v3285
    %v3287 = vlaneseq
    %v3288 = vshrl.u32 %v3287, 7
    %v3289 = vsub.s32 %v3159, %v3288
    %v3290 = vrot.slane %v3118, %v3289
    %v3291 = vsel %vm3164, %v3290, %v3286
    %v3292 = vlaneseq
    %v3293 = vshrl.u32 %v3292, 7
    %v3294 = vsub.s32 %v3154, %v3293
    %v3295 = vrot.slane %v3119, %v3294
    %v3296 = vlaneseq
    %v3297 = vshrl.u32 %v3296, 7
    %v3298 = vsub.s32 %v3159, %v3297
    %v3299 = vrot.slane %v3120, %v3298
    %v3300 = vsel %vm3164, %v3299, %v3295
    %vm3301 = vcmask 1041409
    %v3302 = vsel %vm3301, %v3174, %v3165
    %v3303 = vsel %vm3301, %v3192, %v3183
    %v3304 = vsel %vm3301, %v3210, %v3201
    %v3305 = vsel %vm3301, %v3228, %v3219
    %v3306 = vsel %vm3301, %v3246, %v3237
    %v3307 = vsel %vm3301, %v3264, %v3255
    %v3308 = vsel %vm3301, %v3282, %v3273
    %v3309 = vsel %vm3301, %v3300, %v3291
    %v3318 = vcombine.low %v3302, %v3304
    %v3320 = vunpack.c.l.s4 1983009808
    %v3321 = vunpack.c.0.s8 %v3320
    %v3322 = vlaneseq
    %v3323 = vshrl.u32 %v3322, 7
    %v3324 = vsub.s32 %v3321, %v3323
    %v3325 = vrot.slane %v3318, %v3324
    %v3326 = vcombine.low %v3303, %v3305
    %v3328 = vunpack.c.l.s4 1983009808
    %v3329 = vunpack.c.0.s8 %v3328
    %v3330 = vlaneseq
    %v3331 = vshrl.u32 %v3330, 7
    %v3332 = vsub.s32 %v3329, %v3331
    %v3333 = vrot.slane %v3326, %v3332
    %v3334 = vcombine.low %v3306, %v3308
    %v3336 = vunpack.c.l.s4 1983009808
    %v3337 = vunpack.c.0.s8 %v3336
    %v3338 = vlaneseq
    %v3339 = vshrl.u32 %v3338, 7
    %v3340 = vsub.s32 %v3337, %v3339
    %v3341 = vrot.slane %v3334, %v3340
    %v3342 = vcombine.low %v3307, %v3309
    %v3344 = vunpack.c.l.s4 1983009808
    %v3345 = vunpack.c.0.s8 %v3344
    %v3346 = vlaneseq
    %v3347 = vshrl.u32 %v3346, 7
    %v3348 = vsub.s32 %v3345, %v3347
    %v3349 = vrot.slane %v3342, %v3348
    %v3350 = vcombine.low %v3325, %v3333
    %v3352 = vunpack.c.l.s4 1934713408
    %v3353 = vunpack.c.0.s8 %v3352
    %v3354 = vlaneseq
    %v3355 = vshrl.u32 %v3354, 7
    %v3356 = vsub.s32 %v3353, %v3355
    %v3357 = vrot.slane %v3350, %v3356
    %v3358 = vcombine.low %v3341, %v3349
    %v3360 = vunpack.c.l.s4 1934713408
    %v3361 = vunpack.c.0.s8 %v3360
    %v3362 = vlaneseq
    %v3363 = vshrl.u32 %v3362, 7
    %v3364 = vsub.s32 %v3361, %v3363
    %v3365 = vrot.slane %v3358, %v3364
    %v3366 = vcombine.low %v3357, %v3365
    %v3367 = vcombine.high %v3357, %v3365
    %3369 = vrot.lane.b32.xlu0 %v3367, 16
    %v3370 = vpop.permute.xlu0 %3369
    %vm3372 = vcmask 130048
    %v3373 = vsel %vm3372, %v3366, %v3370
    %v3374 = vld [vmem:[%s1 + $0x30] sm:$0xff]
    %v3375 = vld [vmem:[%s1 + $0x38] sm:$0xff]
    %v3376 = vld [vmem:[%s1 + $0x40] sm:$0xff]
    %v3377 = vld [vmem:[%s1 + $0x48] sm:$0xff]
    %v3378 = vld [vmem:[%s1 + $0x50] sm:$0xff]
    %v3379 = vld [vmem:[%s1 + $0x58] sm:$0xff]
    %v3380 = vld [vmem:[%s1 + $0x60] sm:$0x1]
    %v3381 = vld [vmem:[%s1 + $0x68] sm:$0xff]
    %v3382 = vld [vmem:[%s1 + $0x70] sm:$0xff]
    %vm3383 = vcmask 129024
    %3384 = vst.msk [vmem:[#allocation2 + $0x1] sm:$0x7f] %vm3383, %v3373
    %vm3385 = vcmask 122880
    %3386 = vst.msk [vmem:[#allocation2] sm:$0x1] %vm3385, 0.0
    %3388 = vrot.lane.b32.xlu0 %v3373, 112
    %v3389 = vpop.permute.xlu0 %3388
    %3391 = vst.msk [vmem:[#allocation2 + $0x9] sm:$0x7f] %vm3383, %v3389
    %3392 = vst.msk [vmem:[#allocation2 + $0x8] sm:$0x1] %vm3385, 0.0
    %3393 = vrot.lane.b32.xlu0 %v3373, 16
    %v3394 = vpop.permute.xlu0 %3393
    %vm3396 = vcmask 261248
    %3397 = vst.msk [vmem:[#allocation2] sm:$0xff] %vm3396, %v3394
    %3398 = vst.msk [vmem:[#allocation2 + $0x8] sm:$0xff] %vm3396, %v3373
    %3399 = vrot.lane.b32.xlu0 %v3373, 32
    %v3400 = vpop.permute.xlu0 %3399
    %vm3402 = vcmask 392449
    %3403 = vst.msk [vmem:[#allocation2 - $0x1] sm:$0xfe] %vm3402, %v3400
    %vm3404 = vcmask 385280
    %3405 = vst.msk [vmem:[#allocation2 + $0x7] sm:$0x1] %vm3404, 0.0
    %3406 = vst.msk [vmem:[#allocation2 + $0x7] sm:$0xfe] %vm3402, %v3394
    %3407 = vst.msk [vmem:[#allocation2 + $0xf] sm:$0x1] %vm3404, 0.0
    %v3408 = vld [vmem:[#allocation2] sm:$0xff]
    %v3409 = vld [vmem:[#allocation2 + $0x8] sm:$0xff]
    %v3410 = vlaneseq
    %v3411 = vshrl.u32 %v3410, 7
    %v3412 = vsub.s32 0, %v3411
    %v3413 = vrot.slane %v3380, %v3412
    %vm3414 = vcmask 392192
    %v3416 = vsel %vm3414, %v3408, 0
    %v3419 = vsel %vm3414, %v3409, 0
    %3421 = vmatprep.subr.mxu0 0.0
    %3422 = vmatpush1.msra.mxu0 0.0
    %3423 = vmatprep.subr.mxu0 0.0
    %3424 = vmatpush1.msra.mxu0 0.0
    %3425 = vmatprep.subr.mxu0 0.0
    %3426 = vmatpush1.msra.mxu0 0.0
    %3427 = vmatprep.subr.mxu0 0.0
    %3428 = vmatpush1.msra.mxu0 0.0
    %3429 = vmatprep.subr.mxu0 0.0
    %3430 = vmatpush1.msra.mxu0 0.0
    %3431 = vmatprep.subr.mxu0 0.0
    %3432 = vmatpush1.msra.mxu0 0.0
    %3433 = vmatprep.subr.mxu0 0.0
    %3434 = vmatpush1.msra.mxu0 0.0
    %3435 = vmatprep.subr.mxu0 0.0
    %3436 = vmatpush1.msra.mxu0 0.0
    %3437 = vmatprep.subr.mxu0 0.0
    %3438 = vmatpush1.msra.mxu0 0.0
    %3439 = vmatprep.subr.mxu0 0.0
    %3440 = vmatpush1.msra.mxu0 0.0
    %3441 = vmatprep.subr.mxu0 0.0
    %3442 = vmatpush1.msra.mxu0 %v3379
    %3443 = vmatprep.subr.mxu0 0.0
    %3444 = vmatpush1.msra.mxu0 %v3378
    %3445 = vmatprep.subr.mxu0 0.0
    %3446 = vmatpush1.msra.mxu0 %v3377
    %3447 = vmatprep.subr.mxu0 0.0
    %3448 = vmatpush1.msra.mxu0 %v3376
    %3449 = vmatprep.subr.mxu0 0.0
    %3450 = vmatpush1.msra.mxu0 %v3375
    %3451 = vmatprep.subr.mxu0 0.0
    %3452 = vmatpush1.msra.mxu0 %v3374
    %3453 = vmatprep.subr.mxu0 0.0
    %3454 = vmatpush2.msra.mxu0 0.0
    %3455 = vmatprep.subr.mxu0 0.0
    %3456 = vmatpush2.msra.mxu0 0.0
    %3457 = vmatprep.subr.mxu0 0.0
    %3458 = vmatpush2.msra.mxu0 0.0
    %3459 = vmatprep.subr.mxu0 0.0
    %3460 = vmatpush2.msra.mxu0 0.0
    %3461 = vmatprep.subr.mxu0 0.0
    %3462 = vmatpush2.msra.mxu0 0.0
    %3463 = vmatprep.subr.mxu0 0.0
    %3464 = vmatpush2.msra.mxu0 0.0
    %3465 = vmatprep.subr.mxu0 0.0
    %3466 = vmatpush2.msra.mxu0 0.0
    %3467 = vmatprep.subr.mxu0 0.0
    %3468 = vmatpush2.msra.mxu0 0.0
    %3469 = vmatprep.subr.mxu0 0.0
    %3470 = vmatpush2.msra.mxu0 0.0
    %3471 = vmatprep.subr.mxu0 0.0
    %3472 = vmatpush2.msra.mxu0 0.0
    %3473 = vmatprep.subr.mxu0 0.0
    %3474 = vmatpush2.msra.mxu0 0.0
    %3475 = vmatprep.subr.mxu0 0.0
    %3476 = vmatpush2.msra.mxu0 0.0
    %3477 = vmatprep.subr.mxu0 0.0
    %3478 = vmatpush2.msra.mxu0 0.0
    %3479 = vmatprep.subr.mxu0 0.0
    %3480 = vmatpush2.msra.mxu0 0.0
    %3481 = vmatprep.subr.mxu0 0.0
    %3482 = vmatpush2.msra.mxu0 0.0
    %3483 = vmatprep.subr.mxu0 0.0
    %3484 = vmatpush2.msra.mxu0 0.0
    %3485 = vmatprep.mubr.f32.mxu0 0.0
    %3486 = vmatmul.mubr.f32.gmra.mxu0 %v3416
    %v3487 = vpop.f32.mrf.mxu0
    %v3488 = vadd.f32 %v3413, %v3487
    %v3489 = vpop.f32.mrf.mxu0
    %3490 = vmatprep.mubr.f32.mxu0 0.0
    %3491 = vmatmul.mubr.f32.gmra.mxu0 %v3419
    %v3492 = vpop.f32.mrf.mxu0
    %v3493 = vadd.f32 %v3413, %v3492
    %v3494 = vpop.f32.mrf.mxu0
    %3495 = vdwg.mxu0
    %vm3496 = vcmask 97280
    %v3497 = vsel %vm3496, %v3488, 0.0
    %v3498 = vrot.slane %v3497, 4
    %v3499 = vadd.f32 %v3497, %v3498
    %v3500 = vrot.slane %v3499, 2
    %v3501 = vadd.f32 %v3499, %v3500
    %v3502 = vrot.slane %v3501, 1
    %v3503 = vadd.f32 %v3501, %v3502
    %v3504 = vsel %vm3496, %v3493, 0.0
    %v3505 = vrot.slane %v3504, 4
    %v3506 = vadd.f32 %v3504, %v3505
    %v3507 = vrot.slane %v3506, 2
    %v3508 = vadd.f32 %v3506, %v3507
    %v3509 = vrot.slane %v3508, 1
    %v3510 = vadd.f32 %v3508, %v3509
    %v3511 = vmul.f32 %v3503, 0.125
    %v3512 = vmul.f32 %v3510, 0.125
    %v3513 = vsub.f32 %v3488, %v3511
    %v3514 = vsub.f32 %v3493, %v3512
    %v3515 = vmul.f32 %v3513, %v3513
    %v3516 = vmul.f32 %v3514, %v3514
    %v3517 = vsel %vm3496, %v3515, 0.0
    %v3518 = vrot.slane %v3517, 4
    %v3519 = vadd.f32 %v3517, %v3518
    %v3520 = vrot.slane %v3519, 2
    %v3521 = vadd.f32 %v3519, %v3520
    %v3522 = vrot.slane %v3521, 1
    %v3523 = vadd.f32 %v3521, %v3522
    %v3524 = vsel %vm3496, %v3516, 0.0
    %v3525 = vrot.slane %v3524, 4
    %v3526 = vadd.f32 %v3524, %v3525
    %v3527 = vrot.slane %v3526, 2
    %v3528 = vadd.f32 %v3526, %v3527
    %v3529 = vrot.slane %v3528, 1
    %v3530 = vadd.f32 %v3528, %v3529
    %v3531 = vmul.f32 %v3523, 0.125
    %v3532 = vmul.f32 %v3530, 0.125
    %v3533 = vadd.f32 %v3531, 1e-05
    %v3534 = vadd.f32 %v3532, 1e-05
    %v3535 = vrsqrt.pop %v3533
    %v3536 = vrsqrt.pop %v3534
    %v3537 = vmul.f32 %v3513, %v3535
    %v3538 = vmul.f32 %v3514, %v3536
    %3540 = vset.pattern.permute.xlu0 0
    %3541 = vperm.xlu0 %3540, %v3381
    %v3542 = vpop.permute.xlu0 %3541
    %v3544 = vmul.f32 %v3537, %v3542
    %v3545 = vmul.f32 %v3538, %v3542
    %3547 = vset.pattern.permute.xlu0 0
    %3548 = vperm.xlu0 %3547, %v3382
    %v3549 = vpop.permute.xlu0 %3548
    %v3551 = vadd.f32 %v3544, %v3549
    %v3552 = vadd.f32 %v3545, %v3549
    %v3553 = vmax.f32 %v3551, 0.0
    %v3554 = vmax.f32 %v3552, 0.0
    %3557 = vrot.lane.b32.xlu0 %v3553, 126
    %v3558 = vpop.permute.xlu0 %3557
    %3559 = vrot.lane.b32.xlu0 %v3554, 126
    %v3560 = vpop.permute.xlu0 %3559
    %3563 = vrot.lane.b32.xlu0 %v3553, 124
    %v3564 = vpop.permute.xlu0 %3563
    %3565 = vrot.lane.b32.xlu0 %v3554, 124
    %v3566 = vpop.permute.xlu0 %3565
    %3569 = vrot.lane.b32.xlu0 %v3553, 122
    %v3570 = vpop.permute.xlu0 %3569
    %3571 = vrot.lane.b32.xlu0 %v3554, 122
    %v3572 = vpop.permute.xlu0 %3571
    %3575 = vrot.lane.b32.xlu0 %v3553, 120
    %v3576 = vpop.permute.xlu0 %3575
    %3577 = vrot.lane.b32.xlu0 %v3554, 120
    %v3578 = vpop.permute.xlu0 %3577
    %3581 = vrot.lane.b32.xlu0 %v3553, 118
    %v3582 = vpop.permute.xlu0 %3581
    %3583 = vrot.lane.b32.xlu0 %v3554, 118
    %v3584 = vpop.permute.xlu0 %3583
    %v3587 = vcombine.low %v3553, %v3564
    %v3588 = vcombine.high %v3553, %v3564
    %v3590 = vunpack.c.l.s4 1983009808
    %v3591 = vunpack.c.0.s8 %v3590
    %v3592 = vlaneseq
    %v3593 = vshrl.u32 %v3592, 7
    %v3594 = vsub.s32 %v3591, %v3593
    %v3595 = vrot.slane %v3587, %v3594
    %v3597 = vunpack.c.l.s4 1983009808
    %v3598 = vunpack.c.0.s8 %v3597
    %v3599 = vlaneseq
    %v3600 = vshrl.u32 %v3599, 7
    %v3601 = vsub.s32 %v3598, %v3600
    %v3602 = vrot.slane %v3588, %v3601
    %v3603 = vcombine.low %v3558, %v3570
    %v3604 = vcombine.high %v3558, %v3570
    %v3606 = vunpack.c.l.s4 1983009808
    %v3607 = vunpack.c.0.s8 %v3606
    %v3608 = vlaneseq
    %v3609 = vshrl.u32 %v3608, 7
    %v3610 = vsub.s32 %v3607, %v3609
    %v3611 = vrot.slane %v3603, %v3610
    %v3613 = vunpack.c.l.s4 1983009808
    %v3614 = vunpack.c.0.s8 %v3613
    %v3615 = vlaneseq
    %v3616 = vshrl.u32 %v3615, 7
    %v3617 = vsub.s32 %v3614, %v3616
    %v3618 = vrot.slane %v3604, %v3617
    %v3619 = vcombine.high %v3576, 0.0
    %v3621 = vunpack.c.l.s4 1983009808
    %v3622 = vunpack.c.0.s8 %v3621
    %v3623 = vlaneseq
    %v3624 = vshrl.u32 %v3623, 7
    %v3625 = vsub.s32 %v3622, %v3624
    %v3626 = vrot.slane %v3576, %v3625
    %v3628 = vunpack.c.l.s4 1983009808
    %v3629 = vunpack.c.0.s8 %v3628
    %v3630 = vlaneseq
    %v3631 = vshrl.u32 %v3630, 7
    %v3632 = vsub.s32 %v3629, %v3631
    %v3633 = vrot.slane %v3619, %v3632
    %v3634 = vcombine.high %v3582, 0.0
    %v3636 = vunpack.c.l.s4 1983009808
    %v3637 = vunpack.c.0.s8 %v3636
    %v3638 = vlaneseq
    %v3639 = vshrl.u32 %v3638, 7
    %v3640 = vsub.s32 %v3637, %v3639
    %v3641 = vrot.slane %v3582, %v3640
    %v3643 = vunpack.c.l.s4 1983009808
    %v3644 = vunpack.c.0.s8 %v3643
    %v3645 = vlaneseq
    %v3646 = vshrl.u32 %v3645, 7
    %v3647 = vsub.s32 %v3644, %v3646
    %v3648 = vrot.slane %v3634, %v3647
    %v3649 = vcombine.low %v3595, %v3611
    %v3650 = vcombine.high %v3595, %v3611
    %v3652 = vunpack.c.l.s4 1934713408
    %v3653 = vunpack.c.0.s8 %v3652
    %v3654 = vlaneseq
    %v3655 = vshrl.u32 %v3654, 7
    %v3656 = vsub.s32 %v3653, %v3655
    %v3657 = vrot.slane %v3649, %v3656
    %v3659 = vunpack.c.l.s4 1934713408
    %v3660 = vunpack.c.0.s8 %v3659
    %v3661 = vlaneseq
    %v3662 = vshrl.u32 %v3661, 7
    %v3663 = vsub.s32 %v3660, %v3662
    %v3664 = vrot.slane %v3650, %v3663
    %v3665 = vcombine.low %v3602, %v3618
    %v3666 = vcombine.high %v3602, %v3618
    %v3668 = vunpack.c.l.s4 1934713408
    %v3669 = vunpack.c.0.s8 %v3668
    %v3670 = vlaneseq
    %v3671 = vshrl.u32 %v3670, 7
    %v3672 = vsub.s32 %v3669, %v3671
    %v3673 = vrot.slane %v3665, %v3672
    %v3675 = vunpack.c.l.s4 1934713408
    %v3676 = vunpack.c.0.s8 %v3675
    %v3677 = vlaneseq
    %v3678 = vshrl.u32 %v3677, 7
    %v3679 = vsub.s32 %v3676, %v3678
    %v3680 = vrot.slane %v3666, %v3679
    %v3681 = vcombine.low %v3626, %v3641
    %v3682 = vcombine.high %v3626, %v3641
    %v3684 = vunpack.c.l.s4 1934713408
    %v3685 = vunpack.c.0.s8 %v3684
    %v3686 = vlaneseq
    %v3687 = vshrl.u32 %v3686, 7
    %v3688 = vsub.s32 %v3685, %v3687
    %v3689 = vrot.slane %v3681, %v3688
    %v3691 = vunpack.c.l.s4 1934713408
    %v3692 = vunpack.c.0.s8 %v3691
    %v3693 = vlaneseq
    %v3694 = vshrl.u32 %v3693, 7
    %v3695 = vsub.s32 %v3692, %v3694
    %v3696 = vrot.slane %v3682, %v3695
    %v3697 = vcombine.low %v3633, %v3648
    %v3698 = vcombine.high %v3633, %v3648
    %v3700 = vunpack.c.l.s4 1934713408
    %v3701 = vunpack.c.0.s8 %v3700
    %v3702 = vlaneseq
    %v3703 = vshrl.u32 %v3702, 7
    %v3704 = vsub.s32 %v3701, %v3703
    %v3705 = vrot.slane %v3697, %v3704
    %v3707 = vunpack.c.l.s4 1934713408
    %v3708 = vunpack.c.0.s8 %v3707
    %v3709 = vlaneseq
    %v3710 = vshrl.u32 %v3709, 7
    %v3711 = vsub.s32 %v3708, %v3710
    %v3712 = vrot.slane %v3698, %v3711
    %v3713 = vcombine.low %v3657, %v3689
    %v3714 = vcombine.high %v3657, %v3689
    %v3715 = vcombine.low %v3664, %v3696
    %v3716 = vcombine.high %v3664, %v3696
    %v3717 = vcombine.low %v3673, %v3705
    %v3718 = vcombine.high %v3673, %v3705
    %v3719 = vcombine.low %v3680, %v3712
    %v3720 = vcombine.high %v3680, %v3712
    %v3721 = vcombine.low %v3554, %v3566
    %v3722 = vcombine.high %v3554, %v3566
    %v3724 = vunpack.c.l.s4 1983009808
    %v3725 = vunpack.c.0.s8 %v3724
    %v3726 = vlaneseq
    %v3727 = vshrl.u32 %v3726, 7
    %v3728 = vsub.s32 %v3725, %v3727
    %v3729 = vrot.slane %v3721, %v3728
    %v3731 = vunpack.c.l.s4 1983009808
    %v3732 = vunpack.c.0.s8 %v3731
    %v3733 = vlaneseq
    %v3734 = vshrl.u32 %v3733, 7
    %v3735 = vsub.s32 %v3732, %v3734
    %v3736 = vrot.slane %v3722, %v3735
    %v3737 = vcombine.low %v3560, %v3572
    %v3738 = vcombine.high %v3560, %v3572
    %v3740 = vunpack.c.l.s4 1983009808
    %v3741 = vunpack.c.0.s8 %v3740
    %v3742 = vlaneseq
    %v3743 = vshrl.u32 %v3742, 7
    %v3744 = vsub.s32 %v3741, %v3743
    %v3745 = vrot.slane %v3737, %v3744
    %v3747 = vunpack.c.l.s4 1983009808
    %v3748 = vunpack.c.0.s8 %v3747
    %v3749 = vlaneseq
    %v3750 = vshrl.u32 %v3749, 7
    %v3751 = vsub.s32 %v3748, %v3750
    %v3752 = vrot.slane %v3738, %v3751
    %v3753 = vcombine.high %v3578, 0.0
    %v3755 = vunpack.c.l.s4 1983009808
    %v3756 = vunpack.c.0.s8 %v3755
    %v3757 = vlaneseq
    %v3758 = vshrl.u32 %v3757, 7
    %v3759 = vsub.s32 %v3756, %v3758
    %v3760 = vrot.slane %v3578, %v3759
    %v3762 = vunpack.c.l.s4 1983009808
    %v3763 = vunpack.c.0.s8 %v3762
    %v3764 = vlaneseq
    %v3765 = vshrl.u32 %v3764, 7
    %v3766 = vsub.s32 %v3763, %v3765
    %v3767 = vrot.slane %v3753, %v3766
    %v3768 = vcombine.high %v3584, 0.0
    %v3770 = vunpack.c.l.s4 1983009808
    %v3771 = vunpack.c.0.s8 %v3770
    %v3772 = vlaneseq
    %v3773 = vshrl.u32 %v3772, 7
    %v3774 = vsub.s32 %v3771, %v3773
    %v3775 = vrot.slane %v3584, %v3774
    %v3777 = vunpack.c.l.s4 1983009808
    %v3778 = vunpack.c.0.s8 %v3777
    %v3779 = vlaneseq
    %v3780 = vshrl.u32 %v3779, 7
    %v3781 = vsub.s32 %v3778, %v3780
    %v3782 = vrot.slane %v3768, %v3781
    %v3783 = vcombine.low %v3729, %v3745
    %v3784 = vcombine.high %v3729, %v3745
    %v3786 = vunpack.c.l.s4 1934713408
    %v3787 = vunpack.c.0.s8 %v3786
    %v3788 = vlaneseq
    %v3789 = vshrl.u32 %v3788, 7
    %v3790 = vsub.s32 %v3787, %v3789
    %v3791 = vrot.slane %v3783, %v3790
    %v3793 = vunpack.c.l.s4 1934713408
    %v3794 = vunpack.c.0.s8 %v3793
    %v3795 = vlaneseq
    %v3796 = vshrl.u32 %v3795, 7
    %v3797 = vsub.s32 %v3794, %v3796
    %v3798 = vrot.slane %v3784, %v3797
    %v3799 = vcombine.low %v3736, %v3752
    %v3800 = vcombine.high %v3736, %v3752
    %v3802 = vunpack.c.l.s4 1934713408
    %v3803 = vunpack.c.0.s8 %v3802
    %v3804 = vlaneseq
    %v3805 = vshrl.u32 %v3804, 7
    %v3806 = vsub.s32 %v3803, %v3805
    %v3807 = vrot.slane %v3799, %v3806
    %v3809 = vunpack.c.l.s4 1934713408
    %v3810 = vunpack.c.0.s8 %v3809
    %v3811 = vlaneseq
    %v3812 = vshrl.u32 %v3811, 7
    %v3813 = vsub.s32 %v3810, %v3812
    %v3814 = vrot.slane %v3800, %v3813
    %v3815 = vcombine.low %v3760, %v3775
    %v3816 = vcombine.high %v3760, %v3775
    %v3818 = vunpack.c.l.s4 1934713408
    %v3819 = vunpack.c.0.s8 %v3818
    %v3820 = vlaneseq
    %v3821 = vshrl.u32 %v3820, 7
    %v3822 = vsub.s32 %v3819, %v3821
    %v3823 = vrot.slane %v3815, %v3822
    %v3825 = vunpack.c.l.s4 1934713408
    %v3826 = vunpack.c.0.s8 %v3825
    %v3827 = vlaneseq
    %v3828 = vshrl.u32 %v3827, 7
    %v3829 = vsub.s32 %v3826, %v3828
    %v3830 = vrot.slane %v3816, %v3829
    %v3831 = vcombine.low %v3767, %v3782
    %v3832 = vcombine.high %v3767, %v3782
    %v3834 = vunpack.c.l.s4 1934713408
    %v3835 = vunpack.c.0.s8 %v3834
    %v3836 = vlaneseq
    %v3837 = vshrl.u32 %v3836, 7
    %v3838 = vsub.s32 %v3835, %v3837
    %v3839 = vrot.slane %v3831, %v3838
    %v3841 = vunpack.c.l.s4 1934713408
    %v3842 = vunpack.c.0.s8 %v3841
    %v3843 = vlaneseq
    %v3844 = vshrl.u32 %v3843, 7
    %v3845 = vsub.s32 %v3842, %v3844
    %v3846 = vrot.slane %v3832, %v3845
    %v3847 = vcombine.low %v3791, %v3823
    %v3848 = vcombine.high %v3791, %v3823
    %v3849 = vcombine.low %v3798, %v3830
    %v3850 = vcombine.high %v3798, %v3830
    %v3851 = vcombine.low %v3807, %v3839
    %v3852 = vcombine.high %v3807, %v3839
    %v3853 = vcombine.low %v3814, %v3846
    %v3854 = vcombine.high %v3814, %v3846
    %vm3855 = vcmask 13312
    %v3856 = vsel %vm3855, %v3713, -inf
    %v3857 = vsel %vm3855, %v3714, -inf
    %v3858 = vmax.f32 %v3856, %v3857
    %3859 = vmax.xlane.f32.xlu0 %v3858
    %v3860 = vpop.xlane.xlu0 %3859
    %v3861 = vsel %vm3855, %v3715, -inf
    %v3862 = vsel %vm3855, %v3716, -inf
    %v3863 = vmax.f32 %v3861, %v3862
    %3864 = vmax.xlane.f32.xlu0 %v3863
    %v3865 = vpop.xlane.xlu0 %3864
    %v3866 = vsel %vm3855, %v3717, -inf
    %v3867 = vsel %vm3855, %v3718, -inf
    %v3868 = vmax.f32 %v3866, %v3867
    %3869 = vmax.xlane.f32.xlu0 %v3868
    %v3870 = vpop.xlane.xlu0 %3869
    %v3871 = vsel %vm3855, %v3719, -inf
    %v3872 = vsel %vm3855, %v3720, -inf
    %v3873 = vmax.f32 %v3871, %v3872
    %3874 = vmax.xlane.f32.xlu0 %v3873
    %v3875 = vpop.xlane.xlu0 %3874
    %v3876 = vsel %vm3855, %v3847, -inf
    %v3877 = vsel %vm3855, %v3848, -inf
    %v3878 = vmax.f32 %v3876, %v3877
    %3879 = vmax.xlane.f32.xlu0 %v3878
    %v3880 = vpop.xlane.xlu0 %3879
    %v3881 = vsel %vm3855, %v3849, -inf
    %v3882 = vsel %vm3855, %v3850, -inf
    %v3883 = vmax.f32 %v3881, %v3882
    %3884 = vmax.xlane.f32.xlu0 %v3883
    %v3885 = vpop.xlane.xlu0 %3884
    %v3886 = vsel %vm3855, %v3851, -inf
    %v3887 = vsel %vm3855, %v3852, -inf
    %v3888 = vmax.f32 %v3886, %v3887
    %3889 = vmax.xlane.f32.xlu0 %v3888
    %v3890 = vpop.xlane.xlu0 %3889
    %v3891 = vsel %vm3855, %v3853, -inf
    %v3892 = vsel %vm3855, %v3854, -inf
    %v3893 = vmax.f32 %v3891, %v3892
    %3894 = vmax.xlane.f32.xlu0 %v3893
    %v3895 = vpop.xlane.xlu0 %3894
    %v3904 = vlaneseq
    %v3905 = vshrl.u32 %v3904, 7
    %v3906 = vsub.s32 %v3154, %v3905
    %v3907 = vrot.slane %v3860, %v3906
    %v3908 = vlaneseq
    %v3909 = vshrl.u32 %v3908, 7
    %v3910 = vsub.s32 %v3154, %v3909
    %v3911 = vrot.slane %v3865, %v3910
    %v3912 = vlaneseq
    %v3913 = vshrl.u32 %v3912, 7
    %v3914 = vsub.s32 %v3154, %v3913
    %v3915 = vrot.slane %v3870, %v3914
    %v3916 = vlaneseq
    %v3917 = vshrl.u32 %v3916, 7
    %v3918 = vsub.s32 %v3154, %v3917
    %v3919 = vrot.slane %v3875, %v3918
    %v3920 = vlaneseq
    %v3921 = vshrl.u32 %v3920, 7
    %v3922 = vsub.s32 %v3154, %v3921
    %v3923 = vrot.slane %v3880, %v3922
    %v3924 = vlaneseq
    %v3925 = vshrl.u32 %v3924, 7
    %v3926 = vsub.s32 %v3154, %v3925
    %v3927 = vrot.slane %v3885, %v3926
    %v3928 = vlaneseq
    %v3929 = vshrl.u32 %v3928, 7
    %v3930 = vsub.s32 %v3154, %v3929
    %v3931 = vrot.slane %v3890, %v3930
    %v3932 = vlaneseq
    %v3933 = vshrl.u32 %v3932, 7
    %v3934 = vsub.s32 %v3154, %v3933
    %v3935 = vrot.slane %v3895, %v3934
    %v3936 = vsel %vm3301, %v3911, %v3907
    %vm3937 = vcmask 1042434
    %v3938 = vsel %vm3937, %v3915, %v3936
    %vm3939 = vcmask 1043459
    %v3940 = vsel %vm3939, %v3919, %v3938
    %vm3941 = vcmask 1044484
    %v3942 = vsel %vm3941, %v3923, %v3940
    %vm3943 = vcmask 1045509
    %v3944 = vsel %vm3943, %v3927, %v3942
    %vm3945 = vcmask 1046534
    %v3946 = vsel %vm3945, %v3931, %v3944
    %vm3947 = vcmask 1047559
    %v3948 = vsel %vm3947, %v3935, %v3946
    %vm3950 = vcmask 48128
    %3951 = vst.msk [vmem:[%s2] sm:$0xff] %vm3950, %v3948
    %v3952 = vld [vmem:[%s1 + $0x78] sm:$0xff]
    %v3953 = vld [vmem:[%s1 + $0x80] sm:$0xff]
    %v3954 = vld [vmem:[%s1 + $0x88] sm:$0xff]
    %v3955 = vld [vmem:[%s1 + $0x90] sm:$0xff]
    %v3956 = vld [vmem:[%s1 + $0x98] sm:$0xff]
    %v3957 = vld [vmem:[%s1 + $0xa0] sm:$0xff]
    %v3958 = vld [vmem:[%s1 + $0xa8] sm:$0xff]
    %v3959 = vld [vmem:[%s1 + $0xb0] sm:$0xff]
    %v3960 = vld [vmem:[%s1 + $0xb8] sm:$0xff]
    %v3961 = vld [vmem:[%s1 + $0xc0] sm:$0xff]
    %v3962 = vld [vmem:[%s1 + $0xc8] sm:$0xff]
    %v3963 = vld [vmem:[%s1 + $0xd0] sm:$0xff]
    %v3964 = vld [vmem:[%s1 + $0xd8] sm:$0x1]
    %v3965 = vld [vmem:[%s1 + $0xe0] sm:$0xff]
    %v3966 = vld [vmem:[%s1 + $0xe8] sm:$0xff]
    %vm3967 = vcmask 260096
    %3968 = vst.msk [vmem:[#allocation2 + $0x1] sm:$0x7f] %vm3967, %v15
    %vm3969 = vcmask 253952
    %3970 = vst.msk [vmem:[#allocation2] sm:$0x1] %vm3969, 0.0
    %3971 = vst.msk [vmem:[#allocation2 + $0x9] sm:$0x7f] %vm3967, %v16
    %3972 = vst.msk [vmem:[#allocation2 + $0x8] sm:$0x1] %vm3969, 0.0
    %3973 = vrot.lane.b32.xlu0 %v15, 32
    %v3974 = vpop.permute.xlu0 %3973
    %3976 = vst.msk [vmem:[#allocation2] sm:$0xff] %vm44, %v3974
    %3977 = vst.msk [vmem:[#allocation2 + $0x8] sm:$0xff] %vm44, %v42
    %3978 = vrot.lane.b32.xlu0 %v15, 64
    %v3979 = vpop.permute.xlu0 %3978
    %vm3981 = vcmask 785921
    %3982 = vst.msk [vmem:[#allocation2 - $0x1] sm:$0xfe] %vm3981, %v3979
    %vm3983 = vcmask 778752
    %3984 = vst.msk [vmem:[#allocation2 + $0x7] sm:$0x1] %vm3983, 0.0
    %3985 = vrot.lane.b32.xlu0 %v16, 64
    %v3986 = vpop.permute.xlu0 %3985
    %3988 = vst.msk [vmem:[#allocation2 + $0x7] sm:$0xfe] %vm3981, %v3986
    %3989 = vst.msk [vmem:[#allocation2 + $0xf] sm:$0x1] %vm3983, 0.0
    %v3990 = vld [vmem:[#allocation2] sm:$0xff]
    %v3991 = vld [vmem:[#allocation2 + $0x8] sm:$0xff]
    %v3992 = vlaneseq
    %v3993 = vshrl.u32 %v3992, 7
    %v3994 = vsub.s32 0, %v3993
    %v3995 = vrot.slane %v3964, %v3994
    %vm3996 = vcmask 785408
    %v3998 = vsel %vm3996, %v3990, 0
    %v4001 = vsel %vm3996, %v3991, 0
    %4003 = vmatprep.subr.mxu0 0.0
    %4004 = vmatpush1.msra.mxu0 0.0
    %4005 = vmatprep.subr.mxu0 0.0
    %4006 = vmatpush1.msra.mxu0 0.0
    %4007 = vmatprep.subr.mxu0 0.0
    %4008 = vmatpush1.msra.mxu0 0.0
    %4009 = vmatprep.subr.mxu0 0.0
    %4010 = vmatpush1.msra.mxu0 0.0
    %4011 = vmatprep.subr.mxu0 0.0
    %4012 = vmatpush1.msra.mxu0 %v3963
    %4013 = vmatprep.subr.mxu0 0.0
    %4014 = vmatpush1.msra.mxu0 %v3962
    %4015 = vmatprep.subr.mxu0 0.0
    %4016 = vmatpush1.msra.mxu0 %v3961
    %4017 = vmatprep.subr.mxu0 0.0
    %4018 = vmatpush1.msra.mxu0 %v3960
    %4019 = vmatprep.subr.mxu0 0.0
    %4020 = vmatpush1.msra.mxu0 %v3959
    %4021 = vmatprep.subr.mxu0 0.0
    %4022 = vmatpush1.msra.mxu0 %v3958
    %4023 = vmatprep.subr.mxu0 0.0
    %4024 = vmatpush1.msra.mxu0 %v3957
    %4025 = vmatprep.subr.mxu0 0.0
    %4026 = vmatpush1.msra.mxu0 %v3956
    %4027 = vmatprep.subr.mxu0 0.0
    %4028 = vmatpush1.msra.mxu0 %v3955
    %4029 = vmatprep.subr.mxu0 0.0
    %4030 = vmatpush1.msra.mxu0 %v3954
    %4031 = vmatprep.subr.mxu0 0.0
    %4032 = vmatpush1.msra.mxu0 %v3953
    %4033 = vmatprep.subr.mxu0 0.0
    %4034 = vmatpush1.msra.mxu0 %v3952
    %4035 = vmatprep.subr.mxu0 0.0
    %4036 = vmatpush2.msra.mxu0 0.0
    %4037 = vmatprep.subr.mxu0 0.0
    %4038 = vmatpush2.msra.mxu0 0.0
    %4039 = vmatprep.subr.mxu0 0.0
    %4040 = vmatpush2.msra.mxu0 0.0
    %4041 = vmatprep.subr.mxu0 0.0
    %4042 = vmatpush2.msra.mxu0 0.0
    %4043 = vmatprep.subr.mxu0 0.0
    %4044 = vmatpush2.msra.mxu0 0.0
    %4045 = vmatprep.subr.mxu0 0.0
    %4046 = vmatpush2.msra.mxu0 0.0
    %4047 = vmatprep.subr.mxu0 0.0
    %4048 = vmatpush2.msra.mxu0 0.0
    %4049 = vmatprep.subr.mxu0 0.0
    %4050 = vmatpush2.msra.mxu0 0.0
    %4051 = vmatprep.subr.mxu0 0.0
    %4052 = vmatpush2.msra.mxu0 0.0
    %4053 = vmatprep.subr.mxu0 0.0
    %4054 = vmatpush2.msra.mxu0 0.0
    %4055 = vmatprep.subr.mxu0 0.0
    %4056 = vmatpush2.msra.mxu0 0.0
    %4057 = vmatprep.subr.mxu0 0.0
    %4058 = vmatpush2.msra.mxu0 0.0
    %4059 = vmatprep.subr.mxu0 0.0
    %4060 = vmatpush2.msra.mxu0 0.0
    %4061 = vmatprep.subr.mxu0 0.0
    %4062 = vmatpush2.msra.mxu0 0.0
    %4063 = vmatprep.subr.mxu0 0.0
    %4064 = vmatpush2.msra.mxu0 0.0
    %4065 = vmatprep.subr.mxu0 0.0
    %4066 = vmatpush2.msra.mxu0 0.0
    %4067 = vmatprep.mubr.f32.mxu0 0.0
    %4068 = vmatmul.mubr.f32.gmra.mxu0 %v3998
    %v4069 = vpop.f32.mrf.mxu0
    %v4070 = vadd.f32 %v3995, %v4069
    %v4071 = vpop.f32.mrf.mxu0
    %4072 = vmatprep.mubr.f32.mxu0 0.0
    %4073 = vmatmul.mubr.f32.gmra.mxu0 %v4001
    %v4074 = vpop.f32.mrf.mxu0
    %v4075 = vadd.f32 %v3995, %v4074
    %v4076 = vpop.f32.mrf.mxu0
    %4077 = vdwg.mxu0
    %v4078 = vsel %vm3372, %v4070, 0.0
    %v4079 = vrot.slane %v4078, 4
    %v4080 = vadd.f32 %v4078, %v4079
    %v4081 = vrot.slane %v4080, 2
    %v4082 = vadd.f32 %v4080, %v4081
    %v4083 = vrot.slane %v4082, 1
    %v4084 = vadd.f32 %v4082, %v4083
    %v4085 = vsel %vm3372, %v4075, 0.0
    %v4086 = vrot.slane %v4085, 4
    %v4087 = vadd.f32 %v4085, %v4086
    %v4088 = vrot.slane %v4087, 2
    %v4089 = vadd.f32 %v4087, %v4088
    %v4090 = vrot.slane %v4089, 1
    %v4091 = vadd.f32 %v4089, %v4090
    %v4092 = vmul.f32 %v4084, 0.125
    %v4093 = vmul.f32 %v4091, 0.125
    %v4094 = vsub.f32 %v4070, %v4092
    %v4095 = vsub.f32 %v4075, %v4093
    %v4096 = vmul.f32 %v4094, %v4094
    %v4097 = vmul.f32 %v4095, %v4095
    %v4098 = vsel %vm3372, %v4096, 0.0
    %v4099 = vrot.slane %v4098, 4
    %v4100 = vadd.f32 %v4098, %v4099
    %v4101 = vrot.slane %v4100, 2
    %v4102 = vadd.f32 %v4100, %v4101
    %v4103 = vrot.slane %v4102, 1
    %v4104 = vadd.f32 %v4102, %v4103
    %v4105 = vsel %vm3372, %v4097, 0.0
    %v4106 = vrot.slane %v4105, 4
    %v4107 = vadd.f32 %v4105, %v4106
    %v4108 = vrot.slane %v4107, 2
    %v4109 = vadd.f32 %v4107, %v4108
    %v4110 = vrot.slane %v4109, 1
    %v4111 = vadd.f32 %v4109, %v4110
    %v4112 = vmul.f32 %v4104, 0.125
    %v4113 = vmul.f32 %v4111, 0.125
    %v4114 = vadd.f32 %v4112, 1e-05
    %v4115 = vadd.f32 %v4113, 1e-05
    %v4116 = vrsqrt.pop %v4114
    %v4117 = vrsqrt.pop %v4115
    %v4118 = vmul.f32 %v4094, %v4116
    %v4119 = vmul.f32 %v4095, %v4117
    %4121 = vset.pattern.permute.xlu0 0
    %4122 = vperm.xlu0 %4121, %v3965
    %v4123 = vpop.permute.xlu0 %4122
    %v4125 = vmul.f32 %v4118, %v4123
    %v4126 = vmul.f32 %v4119, %v4123
    %4128 = vset.pattern.permute.xlu0 0
    %4129 = vperm.xlu0 %4128, %v3966
    %v4130 = vpop.permute.xlu0 %4129
    %v4132 = vadd.f32 %v4125, %v4130
    %v4133 = vadd.f32 %v4126, %v4130
    %v4134 = vmax.f32 %v4132, 0.0
    %v4135 = vmax.f32 %v4133, 0.0
    %4138 = vrot.lane.b32.xlu0 %v4134, 126
    %v4139 = vpop.permute.xlu0 %4138
    %4140 = vrot.lane.b32.xlu0 %v4135, 126
    %v4141 = vpop.permute.xlu0 %4140
    %4144 = vrot.lane.b32.xlu0 %v4134, 124
    %v4145 = vpop.permute.xlu0 %4144
    %4146 = vrot.lane.b32.xlu0 %v4135, 124
    %v4147 = vpop.permute.xlu0 %4146
    %4150 = vrot.lane.b32.xlu0 %v4134, 122
    %v4151 = vpop.permute.xlu0 %4150
    %4152 = vrot.lane.b32.xlu0 %v4135, 122
    %v4153 = vpop.permute.xlu0 %4152
    %4156 = vrot.lane.b32.xlu0 %v4134, 120
    %v4157 = vpop.permute.xlu0 %4156
    %4158 = vrot.lane.b32.xlu0 %v4135, 120
    %v4159 = vpop.permute.xlu0 %4158
    %4162 = vrot.lane.b32.xlu0 %v4134, 118
    %v4163 = vpop.permute.xlu0 %4162
    %4164 = vrot.lane.b32.xlu0 %v4135, 118
    %v4165 = vpop.permute.xlu0 %4164
    %4168 = vrot.lane.b32.xlu0 %v4134, 116
    %v4169 = vpop.permute.xlu0 %4168
    %4170 = vrot.lane.b32.xlu0 %v4135, 116
    %v4171 = vpop.permute.xlu0 %4170
    %4174 = vrot.lane.b32.xlu0 %v4134, 114
    %v4175 = vpop.permute.xlu0 %4174
    %4176 = vrot.lane.b32.xlu0 %v4135, 114
    %v4177 = vpop.permute.xlu0 %4176
    %v4180 = vcombine.low %v4134, %v4145
    %v4181 = vcombine.high %v4134, %v4145
    %v4183 = vunpack.c.l.s4 1983009808
    %v4184 = vunpack.c.0.s8 %v4183
    %v4185 = vlaneseq
    %v4186 = vshrl.u32 %v4185, 7
    %v4187 = vsub.s32 %v4184, %v4186
    %v4188 = vrot.slane %v4180, %v4187
    %v4190 = vunpack.c.l.s4 1983009808
    %v4191 = vunpack.c.0.s8 %v4190
    %v4192 = vlaneseq
    %v4193 = vshrl.u32 %v4192, 7
    %v4194 = vsub.s32 %v4191, %v4193
    %v4195 = vrot.slane %v4181, %v4194
    %v4196 = vcombine.low %v4139, %v4151
    %v4197 = vcombine.high %v4139, %v4151
    %v4199 = vunpack.c.l.s4 1983009808
    %v4200 = vunpack.c.0.s8 %v4199
    %v4201 = vlaneseq
    %v4202 = vshrl.u32 %v4201, 7
    %v4203 = vsub.s32 %v4200, %v4202
    %v4204 = vrot.slane %v4196, %v4203
    %v4206 = vunpack.c.l.s4 1983009808
    %v4207 = vunpack.c.0.s8 %v4206
    %v4208 = vlaneseq
    %v4209 = vshrl.u32 %v4208, 7
    %v4210 = vsub.s32 %v4207, %v4209
    %v4211 = vrot.slane %v4197, %v4210
    %v4212 = vcombine.low %v4157, %v4169
    %v4213 = vcombine.high %v4157, %v4169
    %v4215 = vunpack.c.l.s4 1983009808
    %v4216 = vunpack.c.0.s8 %v4215
    %v4217 = vlaneseq
    %v4218 = vshrl.u32 %v4217, 7
    %v4219 = vsub.s32 %v4216, %v4218
    %v4220 = vrot.slane %v4212, %v4219
    %v4222 = vunpack.c.l.s4 1983009808
    %v4223 = vunpack.c.0.s8 %v4222
    %v4224 = vlaneseq
    %v4225 = vshrl.u32 %v4224, 7
    %v4226 = vsub.s32 %v4223, %v4225
    %v4227 = vrot.slane %v4213, %v4226
    %v4228 = vcombine.low %v4163, %v4175
    %v4229 = vcombine.high %v4163, %v4175
    %v4231 = vunpack.c.l.s4 1983009808
    %v4232 = vunpack.c.0.s8 %v4231
    %v4233 = vlaneseq
    %v4234 = vshrl.u32 %v4233, 7
    %v4235 = vsub.s32 %v4232, %v4234
    %v4236 = vrot.slane %v4228, %v4235
    %v4238 = vunpack.c.l.s4 1983009808
    %v4239 = vunpack.c.0.s8 %v4238
    %v4240 = vlaneseq
    %v4241 = vshrl.u32 %v4240, 7
    %v4242 = vsub.s32 %v4239, %v4241
    %v4243 = vrot.slane %v4229, %v4242
    %v4244 = vcombine.low %v4188, %v4204
    %v4245 = vcombine.high %v4188, %v4204
    %v4247 = vunpack.c.l.s4 1934713408
    %v4248 = vunpack.c.0.s8 %v4247
    %v4249 = vlaneseq
    %v4250 = vshrl.u32 %v4249, 7
    %v4251 = vsub.s32 %v4248, %v4250
    %v4252 = vrot.slane %v4244, %v4251
    %v4254 = vunpack.c.l.s4 1934713408
    %v4255 = vunpack.c.0.s8 %v4254
    %v4256 = vlaneseq
    %v4257 = vshrl.u32 %v4256, 7
    %v4258 = vsub.s32 %v4255, %v4257
    %v4259 = vrot.slane %v4245, %v4258
    %v4260 = vcombine.low %v4195, %v4211
    %v4261 = vcombine.high %v4195, %v4211
    %v4263 = vunpack.c.l.s4 1934713408
    %v4264 = vunpack.c.0.s8 %v4263
    %v4265 = vlaneseq
    %v4266 = vshrl.u32 %v4265, 7
    %v4267 = vsub.s32 %v4264, %v4266
    %v4268 = vrot.slane %v4260, %v4267
    %v4270 = vunpack.c.l.s4 1934713408
    %v4271 = vunpack.c.0.s8 %v4270
    %v4272 = vlaneseq
    %v4273 = vshrl.u32 %v4272, 7
    %v4274 = vsub.s32 %v4271, %v4273
    %v4275 = vrot.slane %v4261, %v4274
    %v4276 = vcombine.low %v4220, %v4236
    %v4277 = vcombine.high %v4220, %v4236
    %v4279 = vunpack.c.l.s4 1934713408
    %v4280 = vunpack.c.0.s8 %v4279
    %v4281 = vlaneseq
    %v4282 = vshrl.u32 %v4281, 7
    %v4283 = vsub.s32 %v4280, %v4282
    %v4284 = vrot.slane %v4276, %v4283
    %v4286 = vunpack.c.l.s4 1934713408
    %v4287 = vunpack.c.0.s8 %v4286
    %v4288 = vlaneseq
    %v4289 = vshrl.u32 %v4288, 7
    %v4290 = vsub.s32 %v4287, %v4289
    %v4291 = vrot.slane %v4277, %v4290
    %v4292 = vcombine.low %v4227, %v4243
    %v4293 = vcombine.high %v4227, %v4243
    %v4295 = vunpack.c.l.s4 1934713408
    %v4296 = vunpack.c.0.s8 %v4295
    %v4297 = vlaneseq
    %v4298 = vshrl.u32 %v4297, 7
    %v4299 = vsub.s32 %v4296, %v4298
    %v4300 = vrot.slane %v4292, %v4299
    %v4302 = vunpack.c.l.s4 1934713408
    %v4303 = vunpack.c.0.s8 %v4302
    %v4304 = vlaneseq
    %v4305 = vshrl.u32 %v4304, 7
    %v4306 = vsub.s32 %v4303, %v4305
    %v4307 = vrot.slane %v4293, %v4306
    %v4308 = vcombine.low %v4252, %v4284
    %v4309 = vcombine.high %v4252, %v4284
    %v4310 = vcombine.low %v4259, %v4291
    %v4311 = vcombine.high %v4259, %v4291
    %v4312 = vcombine.low %v4268, %v4300
    %v4313 = vcombine.high %v4268, %v4300
    %v4314 = vcombine.low %v4275, %v4307
    %v4315 = vcombine.high %v4275, %v4307
    %v4316 = vcombine.low %v4135, %v4147
    %v4317 = vcombine.high %v4135, %v4147
    %v4319 = vunpack.c.l.s4 1983009808
    %v4320 = vunpack.c.0.s8 %v4319
    %v4321 = vlaneseq
    %v4322 = vshrl.u32 %v4321, 7
    %v4323 = vsub.s32 %v4320, %v4322
    %v4324 = vrot.slane %v4316, %v4323
    %v4326 = vunpack.c.l.s4 1983009808
    %v4327 = vunpack.c.0.s8 %v4326
    %v4328 = vlaneseq
    %v4329 = vshrl.u32 %v4328, 7
    %v4330 = vsub.s32 %v4327, %v4329
    %v4331 = vrot.slane %v4317, %v4330
    %v4332 = vcombine.low %v4141, %v4153
    %v4333 = vcombine.high %v4141, %v4153
    %v4335 = vunpack.c.l.s4 1983009808
    %v4336 = vunpack.c.0.s8 %v4335
    %v4337 = vlaneseq
    %v4338 = vshrl.u32 %v4337, 7
    %v4339 = vsub.s32 %v4336, %v4338
    %v4340 = vrot.slane %v4332, %v4339
    %v4342 = vunpack.c.l.s4 1983009808
    %v4343 = vunpack.c.0.s8 %v4342
    %v4344 = vlaneseq
    %v4345 = vshrl.u32 %v4344, 7
    %v4346 = vsub.s32 %v4343, %v4345
    %v4347 = vrot.slane %v4333, %v4346
    %v4348 = vcombine.low %v4159, %v4171
    %v4349 = vcombine.high %v4159, %v4171
    %v4351 = vunpack.c.l.s4 1983009808
    %v4352 = vunpack.c.0.s8 %v4351
    %v4353 = vlaneseq
    %v4354 = vshrl.u32 %v4353, 7
    %v4355 = vsub.s32 %v4352, %v4354
    %v4356 = vrot.slane %v4348, %v4355
    %v4358 = vunpack.c.l.s4 1983009808
    %v4359 = vunpack.c.0.s8 %v4358
    %v4360 = vlaneseq
    %v4361 = vshrl.u32 %v4360, 7
    %v4362 = vsub.s32 %v4359, %v4361
    %v4363 = vrot.slane %v4349, %v4362
    %v4364 = vcombine.low %v4165, %v4177
    %v4365 = vcombine.high %v4165, %v4177
    %v4367 = vunpack.c.l.s4 1983009808
    %v4368 = vunpack.c.0.s8 %v4367
    %v4369 = vlaneseq
    %v4370 = vshrl.u32 %v4369, 7
    %v4371 = vsub.s32 %v4368, %v4370
    %v4372 = vrot.slane %v4364, %v4371
    %v4374 = vunpack.c.l.s4 1983009808
    %v4375 = vunpack.c.0.s8 %v4374
    %v4376 = vlaneseq
    %v4377 = vshrl.u32 %v4376, 7
    %v4378 = vsub.s32 %v4375, %v4377
    %v4379 = vrot.slane %v4365, %v4378
    %v4380 = vcombine.low %v4324, %v4340
    %v4381 = vcombine.high %v4324, %v4340
    %v4383 = vunpack.c.l.s4 1934713408
    %v4384 = vunpack.c.0.s8 %v4383
    %v4385 = vlaneseq
    %v4386 = vshrl.u32 %v4385, 7
    %v4387 = vsub.s32 %v4384, %v4386
    %v4388 = vrot.slane %v4380, %v4387
    %v4390 = vunpack.c.l.s4 1934713408
    %v4391 = vunpack.c.0.s8 %v4390
    %v4392 = vlaneseq
    %v4393 = vshrl.u32 %v4392, 7
    %v4394 = vsub.s32 %v4391, %v4393
    %v4395 = vrot.slane %v4381, %v4394
    %v4396 = vcombine.low %v4331, %v4347
    %v4397 = vcombine.high %v4331, %v4347
    %v4399 = vunpack.c.l.s4 1934713408
    %v4400 = vunpack.c.0.s8 %v4399
    %v4401 = vlaneseq
    %v4402 = vshrl.u32 %v4401, 7
    %v4403 = vsub.s32 %v4400, %v4402
    %v4404 = vrot.slane %v4396, %v4403
    %v4406 = vunpack.c.l.s4 1934713408
    %v4407 = vunpack.c.0.s8 %v4406
    %v4408 = vlaneseq
    %v4409 = vshrl.u32 %v4408, 7
    %v4410 = vsub.s32 %v4407, %v4409
    %v4411 = vrot.slane %v4397, %v4410
    %v4412 = vcombine.low %v4356, %v4372
    %v4413 = vcombine.high %v4356, %v4372
    %v4415 = vunpack.c.l.s4 1934713408
    %v4416 = vunpack.c.0.s8 %v4415
    %v4417 = vlaneseq
    %v4418 = vshrl.u32 %v4417, 7
    %v4419 = vsub.s32 %v4416, %v4418
    %v4420 = vrot.slane %v4412, %v4419
    %v4422 = vunpack.c.l.s4 1934713408
    %v4423 = vunpack.c.0.s8 %v4422
    %v4424 = vlaneseq
    %v4425 = vshrl.u32 %v4424, 7
    %v4426 = vsub.s32 %v4423, %v4425
    %v4427 = vrot.slane %v4413, %v4426
    %v4428 = vcombine.low %v4363, %v4379
    %v4429 = vcombine.high %v4363, %v4379
    %v4431 = vunpack.c.l.s4 1934713408
    %v4432 = vunpack.c.0.s8 %v4431
    %v4433 = vlaneseq
    %v4434 = vshrl.u32 %v4433, 7
    %v4435 = vsub.s32 %v4432, %v4434
    %v4436 = vrot.slane %v4428, %v4435
    %v4438 = vunpack.c.l.s4 1934713408
    %v4439 = vunpack.c.0.s8 %v4438
    %v4440 = vlaneseq
    %v4441 = vshrl.u32 %v4440, 7
    %v4442 = vsub.s32 %v4439, %v4441
    %v4443 = vrot.slane %v4429, %v4442
    %v4444 = vcombine.low %v4388, %v4420
    %v4445 = vcombine.high %v4388, %v4420
    %v4446 = vcombine.low %v4395, %v4427
    %v4447 = vcombine.high %v4395, %v4427
    %v4448 = vcombine.low %v4404, %v4436
    %v4449 = vcombine.high %v4404, %v4436
    %v4450 = vcombine.low %v4411, %v4443
    %v4451 = vcombine.high %v4411, %v4443
    %v4452 = vsel %vm2896, %v4308, -inf
    %v4453 = vsel %vm2896, %v4309, -inf
    %v4454 = vmax.f32 %v4452, %v4453
    %4455 = vmax.xlane.f32.xlu0 %v4454
    %v4456 = vpop.xlane.xlu0 %4455
    %v4457 = vsel %vm2896, %v4310, -inf
    %v4458 = vsel %vm2896, %v4311, -inf
    %v4459 = vmax.f32 %v4457, %v4458
    %4460 = vmax.xlane.f32.xlu0 %v4459
    %v4461 = vpop.xlane.xlu0 %4460
    %v4462 = vsel %vm2896, %v4312, -inf
    %v4463 = vsel %vm2896, %v4313, -inf
    %v4464 = vmax.f32 %v4462, %v4463
    %4465 = vmax.xlane.f32.xlu0 %v4464
    %v4466 = vpop.xlane.xlu0 %4465
    %v4467 = vsel %vm2896, %v4314, -inf
    %v4468 = vsel %vm2896, %v4315, -inf
    %v4469 = vmax.f32 %v4467, %v4468
    %4470 = vmax.xlane.f32.xlu0 %v4469
    %v4471 = vpop.xlane.xlu0 %4470
    %v4472 = vsel %vm2896, %v4444, -inf
    %v4473 = vsel %vm2896, %v4445, -inf
    %v4474 = vmax.f32 %v4472, %v4473
    %4475 = vmax.xlane.f32.xlu0 %v4474
    %v4476 = vpop.xlane.xlu0 %4475
    %v4477 = vsel %vm2896, %v4446, -inf
    %v4478 = vsel %vm2896, %v4447, -inf
    %v4479 = vmax.f32 %v4477, %v4478
    %4480 = vmax.xlane.f32.xlu0 %v4479
    %v4481 = vpop.xlane.xlu0 %4480
    %v4482 = vsel %vm2896, %v4448, -inf
    %v4483 = vsel %vm2896, %v4449, -inf
    %v4484 = vmax.f32 %v4482, %v4483
    %4485 = vmax.xlane.f32.xlu0 %v4484
    %v4486 = vpop.xlane.xlu0 %4485
    %v4487 = vsel %vm2896, %v4450, -inf
    %v4488 = vsel %vm2896, %v4451, -inf
    %v4489 = vmax.f32 %v4487, %v4488
    %4490 = vmax.xlane.f32.xlu0 %v4489
    %v4491 = vpop.xlane.xlu0 %4490
    %v4500 = vlaneseq
    %v4501 = vshrl.u32 %v4500, 7
    %v4502 = vsub.s32 %v3154, %v4501
    %v4503 = vrot.slane %v4456, %v4502
    %v4504 = vlaneseq
    %v4505 = vshrl.u32 %v4504, 7
    %v4506 = vsub.s32 %v3154, %v4505
    %v4507 = vrot.slane %v4461, %v4506
    %v4508 = vlaneseq
    %v4509 = vshrl.u32 %v4508, 7
    %v4510 = vsub.s32 %v3154, %v4509
    %v4511 = vrot.slane %v4466, %v4510
    %v4512 = vlaneseq
    %v4513 = vshrl.u32 %v4512, 7
    %v4514 = vsub.s32 %v3154, %v4513
    %v4515 = vrot.slane %v4471, %v4514
    %v4516 = vlaneseq
    %v4517 = vshrl.u32 %v4516, 7
    %v4518 = vsub.s32 %v3154, %v4517
    %v4519 = vrot.slane %v4476, %v4518
    %v4520 = vlaneseq
    %v4521 = vshrl.u32 %v4520, 7
    %v4522 = vsub.s32 %v3154, %v4521
    %v4523 = vrot.slane %v4481, %v4522
    %v4524 = vlaneseq
    %v4525 = vshrl.u32 %v4524, 7
    %v4526 = vsub.s32 %v3154, %v4525
    %v4527 = vrot.slane %v4486, %v4526
    %v4528 = vlaneseq
    %v4529 = vshrl.u32 %v4528, 7
    %v4530 = vsub.s32 %v3154, %v4529
    %v4531 = vrot.slane %v4491, %v4530
    %v4532 = vsel %vm3301, %v4507, %v4503
    %v4533 = vsel %vm3937, %v4511, %v4532
    %v4534 = vsel %vm3939, %v4515, %v4533
    %v4535 = vsel %vm3941, %v4519, %v4534
    %v4536 = vsel %vm3943, %v4523, %v4535
    %v4537 = vsel %vm3945, %v4527, %v4536
    %v4538 = vsel %vm3947, %v4531, %v4537
    %vm4540 = vcmask 64512
    %4541 = vst.msk [vmem:[#allocation3] sm:$0xff] %vm4540, %v4538
    %v4542 = vld [vmem:[%s1 + $0xf0] sm:$0xff]
    %v4543 = vld [vmem:[%s1 + $0xf8] sm:$0xff]
    %v4544 = vld [vmem:[%s1 + $0x100] sm:$0xff]
    %v4545 = vld [vmem:[%s1 + $0x108] sm:$0xff]
    %v4546 = vld [vmem:[%s1 + $0x110] sm:$0x1]
    %v4547 = vld [vmem:[%s1 + $0x118] sm:$0x1]
    %4548 = vst.msk [vmem:[#allocation2] sm:$0xff] %vm27, %v25
    %4549 = vst.msk [vmem:[#allocation2] sm:$0xff] %vm29, 0.0
    %4550 = vst.msk [vmem:[#allocation2] sm:$0xff] %vm35, %v33
    %4551 = vst.msk [vmem:[#allocation2] sm:$0xff] %vm37, 0.0
    %4552 = vst.msk [vmem:[#allocation2 + $0x8] sm:$0xff] %vm39, %v15
    %4553 = vst.msk [vmem:[#allocation2 + $0x8] sm:$0xff] %vm44, %v42
    %4554 = vst.msk [vmem:[#allocation2 + $0x10] sm:$0xff] %vm49, %v47
    %4555 = vst.msk [vmem:[#allocation2 + $0x10] sm:$0xff] %vm51, 0.0
    %4556 = vst.msk [vmem:[#allocation2 + $0x10] sm:$0xff] %vm56, %v54
    %4557 = vst.msk [vmem:[#allocation2 + $0x10] sm:$0xff] %vm58, 0.0
    %v4558 = vld [vmem:[#allocation2] sm:$0xff]
    %v4559 = vld [vmem:[#allocation2 + $0x8] sm:$0xff]
    %v4560 = vld [vmem:[#allocation2 + $0x10] sm:$0xff]
    %4562 = vset.pattern.permute.xlu0 0
    %4563 = vperm.xlu0 %4562, %v4544
    %v4564 = vpop.permute.xlu0 %4563
    %4567 = vset.pattern.permute.xlu0 0
    %4568 = vperm.xlu0 %4567, %v4545
    %v4569 = vpop.permute.xlu0 %4568
    %v4572 = vsel %vm73, %v4542, 0
    %v4575 = vsel %vm73, %v4543, 0
    %4577 = vmatprep.subr.mxu0 0.0
    %4578 = vmatpush1.msra.mxu0 0.0
    %4579 = vmatprep.subr.mxu0 0.0
    %4580 = vmatpush1.msra.mxu0 0.0
    %4581 = vmatprep.subr.mxu0 0.0
    %4582 = vmatpush1.msra.mxu0 0.0
    %4583 = vmatprep.subr.mxu0 0.0
    %4584 = vmatpush1.msra.mxu0 0.0
    %4585 = vmatprep.subr.mxu0 0.0
    %4586 = vmatpush1.msra.mxu0 0.0
    %4587 = vmatprep.subr.mxu0 0.0
    %4588 = vmatpush1.msra.mxu0 0.0
    %4589 = vmatprep.subr.mxu0 0.0
    %4590 = vmatpush1.msra.mxu0 0.0
    %4591 = vmatprep.subr.mxu0 0.0
    %4592 = vmatpush1.msra.mxu0 0.0
    %4593 = vmatprep.subr.mxu0 0.0
    %4594 = vmatpush1.msra.mxu0 0.0
    %4595 = vmatprep.subr.mxu0 0.0
    %4596 = vmatpush1.msra.mxu0 0.0
    %4597 = vmatprep.subr.mxu0 0.0
    %4598 = vmatpush1.msra.mxu0 0.0
    %4599 = vmatprep.subr.mxu0 0.0
    %4600 = vmatpush1.msra.mxu0 0.0
    %4601 = vmatprep.subr.mxu0 0.0
    %4602 = vmatpush1.msra.mxu0 0.0
    %4603 = vmatprep.subr.mxu0 0.0
    %4604 = vmatpush1.msra.mxu0 %v4560
    %4605 = vmatprep.subr.mxu0 0.0
    %4606 = vmatpush1.msra.mxu0 %v4559
    %4607 = vmatprep.subr.mxu0 0.0
    %4608 = vmatpush1.msra.mxu0 %v4558
    %4609 = vmatprep.subr.mxu0 0.0
    %4610 = vmatpush2.msra.mxu0 0.0
    %4611 = vmatprep.subr.mxu0 0.0
    %4612 = vmatpush2.msra.mxu0 0.0
    %4613 = vmatprep.subr.mxu0 0.0
    %4614 = vmatpush2.msra.mxu0 0.0
    %4615 = vmatprep.subr.mxu0 0.0
    %4616 = vmatpush2.msra.mxu0 0.0
    %4617 = vmatprep.subr.mxu0 0.0
    %4618 = vmatpush2.msra.mxu0 0.0
    %4619 = vmatprep.subr.mxu0 0.0
    %4620 = vmatpush2.msra.mxu0 0.0
    %4621 = vmatprep.subr.mxu0 0.0
    %4622 = vmatpush2.msra.mxu0 0.0
    %4623 = vmatprep.subr.mxu0 0.0
    %4624 = vmatpush2.msra.mxu0 0.0
    %4625 = vmatprep.subr.mxu0 0.0
    %4626 = vmatpush2.msra.mxu0 0.0
    %4627 = vmatprep.subr.mxu0 0.0
    %4628 = vmatpush2.msra.mxu0 0.0
    %4629 = vmatprep.subr.mxu0 0.0
    %4630 = vmatpush2.msra.mxu0 0.0
    %4631 = vmatprep.subr.mxu0 0.0
    %4632 = vmatpush2.msra.mxu0 0.0
    %4633 = vmatprep.subr.mxu0 0.0
    %4634 = vmatpush2.msra.mxu0 0.0
    %4635 = vmatprep.subr.mxu0 0.0
    %4636 = vmatpush2.msra.mxu0 0.0
    %4637 = vmatprep.subr.mxu0 0.0
    %4638 = vmatpush2.msra.mxu0 0.0
    %4639 = vmatprep.subr.mxu0 0.0
    %4640 = vmatpush2.msra.mxu0 0.0
    %4641 = vmatprep.mubr.f32.mxu0 0.0
    %4642 = vmatmul.mubr.f32.gmra.mxu0 %v4572
    %v4643 = vpop.f32.mrf.mxu0
    %v4644 = vadd.f32 %v4564, %v4643
    %v4645 = vpop.f32.mrf.mxu0
    %4646 = vmatprep.mubr.f32.mxu0 0.0
    %4647 = vmatmul.mubr.f32.gmra.mxu0 %v4575
    %v4648 = vpop.f32.mrf.mxu0
    %v4649 = vadd.f32 %v4569, %v4648
    %v4650 = vpop.f32.mrf.mxu0
    %4651 = vdwg.mxu0
    %4654 = vrot.lane.b32.xlu0 %v4644, 96
    %v4655 = vpop.permute.xlu0 %4654
    %4656 = vrot.lane.b32.xlu0 %v4649, 96
    %v4657 = vpop.permute.xlu0 %4656
    %v4660 = vcombine.high %v4644, 0.0
    %v4662 = vunpack.c.l.s4 1983009808
    %v4663 = vunpack.c.0.s8 %v4662
    %v4664 = vlaneseq
    %v4665 = vshrl.u32 %v4664, 7
    %v4666 = vsub.s32 %v4663, %v4665
    %v4667 = vrot.slane %v4644, %v4666
    %v4669 = vunpack.c.l.s4 1983009808
    %v4670 = vunpack.c.0.s8 %v4669
    %v4671 = vlaneseq
    %v4672 = vshrl.u32 %v4671, 7
    %v4673 = vsub.s32 %v4670, %v4672
    %v4674 = vrot.slane %v4660, %v4673
    %v4675 = vcombine.high %v4655, 0.0
    %v4677 = vunpack.c.l.s4 1983009808
    %v4678 = vunpack.c.0.s8 %v4677
    %v4679 = vlaneseq
    %v4680 = vshrl.u32 %v4679, 7
    %v4681 = vsub.s32 %v4678, %v4680
    %v4682 = vrot.slane %v4655, %v4681
    %v4684 = vunpack.c.l.s4 1983009808
    %v4685 = vunpack.c.0.s8 %v4684
    %v4686 = vlaneseq
    %v4687 = vshrl.u32 %v4686, 7
    %v4688 = vsub.s32 %v4685, %v4687
    %v4689 = vrot.slane %v4675, %v4688
    %v4690 = vcombine.low %v4667, %v4682
    %v4691 = vcombine.high %v4667, %v4682
    %v4693 = vunpack.c.l.s4 1934713408
    %v4694 = vunpack.c.0.s8 %v4693
    %v4695 = vlaneseq
    %v4696 = vshrl.u32 %v4695, 7
    %v4697 = vsub.s32 %v4694, %v4696
    %v4698 = vrot.slane %v4690, %v4697
    %v4700 = vunpack.c.l.s4 1934713408
    %v4701 = vunpack.c.0.s8 %v4700
    %v4702 = vlaneseq
    %v4703 = vshrl.u32 %v4702, 7
    %v4704 = vsub.s32 %v4701, %v4703
    %v4705 = vrot.slane %v4691, %v4704
    %v4706 = vcombine.low %v4674, %v4689
    %v4707 = vcombine.high %v4674, %v4689
    %v4709 = vunpack.c.l.s4 1934713408
    %v4710 = vunpack.c.0.s8 %v4709
    %v4711 = vlaneseq
    %v4712 = vshrl.u32 %v4711, 7
    %v4713 = vsub.s32 %v4710, %v4712
    %v4714 = vrot.slane %v4706, %v4713
    %v4716 = vunpack.c.l.s4 1934713408
    %v4717 = vunpack.c.0.s8 %v4716
    %v4718 = vlaneseq
    %v4719 = vshrl.u32 %v4718, 7
    %v4720 = vsub.s32 %v4717, %v4719
    %v4721 = vrot.slane %v4707, %v4720
    %v4722 = vcombine.high %v4698, 0.0
    %v4723 = vcombine.high %v4705, 0.0
    %v4724 = vcombine.high %v4714, 0.0
    %v4725 = vcombine.high %v4721, 0.0
    %v4726 = vcombine.high %v4649, 0.0
    %v4728 = vunpack.c.l.s4 1983009808
    %v4729 = vunpack.c.0.s8 %v4728
    %v4730 = vlaneseq
    %v4731 = vshrl.u32 %v4730, 7
    %v4732 = vsub.s32 %v4729, %v4731
    %v4733 = vrot.slane %v4649, %v4732
    %v4735 = vunpack.c.l.s4 1983009808
    %v4736 = vunpack.c.0.s8 %v4735
    %v4737 = vlaneseq
    %v4738 = vshrl.u32 %v4737, 7
    %v4739 = vsub.s32 %v4736, %v4738
    %v4740 = vrot.slane %v4726, %v4739
    %v4741 = vcombine.high %v4657, 0.0
    %v4743 = vunpack.c.l.s4 1983009808
    %v4744 = vunpack.c.0.s8 %v4743
    %v4745 = vlaneseq
    %v4746 = vshrl.u32 %v4745, 7
    %v4747 = vsub.s32 %v4744, %v4746
    %v4748 = vrot.slane %v4657, %v4747
    %v4750 = vunpack.c.l.s4 1983009808
    %v4751 = vunpack.c.0.s8 %v4750
    %v4752 = vlaneseq
    %v4753 = vshrl.u32 %v4752, 7
    %v4754 = vsub.s32 %v4751, %v4753
    %v4755 = vrot.slane %v4741, %v4754
    %v4756 = vcombine.low %v4733, %v4748
    %v4757 = vcombine.high %v4733, %v4748
    %v4759 = vunpack.c.l.s4 1934713408
    %v4760 = vunpack.c.0.s8 %v4759
    %v4761 = vlaneseq
    %v4762 = vshrl.u32 %v4761, 7
    %v4763 = vsub.s32 %v4760, %v4762
    %v4764 = vrot.slane %v4756, %v4763
    %v4766 = vunpack.c.l.s4 1934713408
    %v4767 = vunpack.c.0.s8 %v4766
    %v4768 = vlaneseq
    %v4769 = vshrl.u32 %v4768, 7
    %v4770 = vsub.s32 %v4767, %v4769
    %v4771 = vrot.slane %v4757, %v4770
    %v4772 = vcombine.low %v4740, %v4755
    %v4773 = vcombine.high %v4740, %v4755
    %v4775 = vunpack.c.l.s4 1934713408
    %v4776 = vunpack.c.0.s8 %v4775
    %v4777 = vlaneseq
    %v4778 = vshrl.u32 %v4777, 7
    %v4779 = vsub.s32 %v4776, %v4778
    %v4780 = vrot.slane %v4772, %v4779
    %v4782 = vunpack.c.l.s4 1934713408
    %v4783 = vunpack.c.0.s8 %v4782
    %v4784 = vlaneseq
    %v4785 = vshrl.u32 %v4784, 7
    %v4786 = vsub.s32 %v4783, %v4785
    %v4787 = vrot.slane %v4773, %v4786
    %v4788 = vcombine.high %v4764, 0.0
    %v4789 = vcombine.high %v4771, 0.0
    %v4790 = vcombine.high %v4780, 0.0
    %v4791 = vcombine.high %v4787, 0.0
    %v4792 = vsel %vm295, %v4698, 0.0
    %4793 = vadd.xlane.f32.xlu0 %v4792
    %v4794 = vpop.xlane.xlu0 %4793
    %v4795 = vsel %vm295, %v4722, 0.0
    %4796 = vadd.xlane.f32.xlu0 %v4795
    %v4797 = vpop.xlane.xlu0 %4796
    %v4798 = vsel %vm295, %v4705, 0.0
    %4799 = vadd.xlane.f32.xlu0 %v4798
    %v4800 = vpop.xlane.xlu0 %4799
    %v4801 = vsel %vm295, %v4723, 0.0
    %4802 = vadd.xlane.f32.xlu0 %v4801
    %v4803 = vpop.xlane.xlu0 %4802
    %v4804 = vsel %vm295, %v4714, 0.0
    %4805 = vadd.xlane.f32.xlu0 %v4804
    %v4806 = vpop.xlane.xlu0 %4805
    %v4807 = vsel %vm295, %v4724, 0.0
    %4808 = vadd.xlane.f32.xlu0 %v4807
    %v4809 = vpop.xlane.xlu0 %4808
    %v4810 = vsel %vm295, %v4721, 0.0
    %4811 = vadd.xlane.f32.xlu0 %v4810
    %v4812 = vpop.xlane.xlu0 %4811
    %v4813 = vsel %vm295, %v4725, 0.0
    %4814 = vadd.xlane.f32.xlu0 %v4813
    %v4815 = vpop.xlane.xlu0 %4814
    %v4816 = vsel %vm295, %v4764, 0.0
    %4817 = vadd.xlane.f32.xlu0 %v4816
    %v4818 = vpop.xlane.xlu0 %4817
    %v4819 = vsel %vm295, %v4788, 0.0
    %4820 = vadd.xlane.f32.xlu0 %v4819
    %v4821 = vpop.xlane.xlu0 %4820
    %v4822 = vsel %vm295, %v4771, 0.0
    %4823 = vadd.xlane.f32.xlu0 %v4822
    %v4824 = vpop.xlane.xlu0 %4823
    %v4825 = vsel %vm295, %v4789, 0.0
    %4826 = vadd.xlane.f32.xlu0 %v4825
    %v4827 = vpop.xlane.xlu0 %4826
    %v4828 = vsel %vm295, %v4780, 0.0
    %4829 = vadd.xlane.f32.xlu0 %v4828
    %v4830 = vpop.xlane.xlu0 %4829
    %v4831 = vsel %vm295, %v4790, 0.0
    %4832 = vadd.xlane.f32.xlu0 %v4831
    %v4833 = vpop.xlane.xlu0 %4832
    %v4834 = vsel %vm295, %v4787, 0.0
    %4835 = vadd.xlane.f32.xlu0 %v4834
    %v4836 = vpop.xlane.xlu0 %4835
    %v4837 = vsel %vm295, %v4791, 0.0
    %4838 = vadd.xlane.f32.xlu0 %v4837
    %v4839 = vpop.xlane.xlu0 %4838
    %v4840 = vmul.f32 %v4794, 0.03125
    %v4841 = vmul.f32 %v4797, 0.03125
    %v4842 = vmul.f32 %v4800, 0.03125
    %v4843 = vmul.f32 %v4803, 0.03125
    %v4844 = vmul.f32 %v4806, 0.03125
    %v4845 = vmul.f32 %v4809, 0.03125
    %v4846 = vmul.f32 %v4812, 0.03125
    %v4847 = vmul.f32 %v4815, 0.03125
    %v4848 = vmul.f32 %v4818, 0.03125
    %v4849 = vmul.f32 %v4821, 0.03125
    %v4850 = vmul.f32 %v4824, 0.03125
    %v4851 = vmul.f32 %v4827, 0.03125
    %v4852 = vmul.f32 %v4830, 0.03125
    %v4853 = vmul.f32 %v4833, 0.03125
    %v4854 = vmul.f32 %v4836, 0.03125
    %v4855 = vmul.f32 %v4839, 0.03125
    %v4856 = vsub.f32 %v4698, %v4840
    %v4857 = vsub.f32 %v4722, %v4841
    %v4858 = vsub.f32 %v4705, %v4842
    %v4859 = vsub.f32 %v4723, %v4843
    %v4860 = vsub.f32 %v4714, %v4844
    %v4861 = vsub.f32 %v4724, %v4845
    %v4862 = vsub.f32 %v4721, %v4846
    %v4863 = vsub.f32 %v4725, %v4847
    %v4864 = vsub.f32 %v4764, %v4848
    %v4865 = vsub.f32 %v4788, %v4849
    %v4866 = vsub.f32 %v4771, %v4850
    %v4867 = vsub.f32 %v4789, %v4851
    %v4868 = vsub.f32 %v4780, %v4852
    %v4869 = vsub.f32 %v4790, %v4853
    %v4870 = vsub.f32 %v4787, %v4854
    %v4871 = vsub.f32 %v4791, %v4855
    %v4872 = vmul.f32 %v4856, %v4856
    %v4873 = vmul.f32 %v4857, %v4857
    %v4874 = vmul.f32 %v4858, %v4858
    %v4875 = vmul.f32 %v4859, %v4859
    %v4876 = vmul.f32 %v4860, %v4860
    %v4877 = vmul.f32 %v4861, %v4861
    %v4878 = vmul.f32 %v4862, %v4862
    %v4879 = vmul.f32 %v4863, %v4863
    %v4880 = vmul.f32 %v4864, %v4864
    %v4881 = vmul.f32 %v4865, %v4865
    %v4882 = vmul.f32 %v4866, %v4866
    %v4883 = vmul.f32 %v4867, %v4867
    %v4884 = vmul.f32 %v4868, %v4868
    %v4885 = vmul.f32 %v4869, %v4869
    %v4886 = vmul.f32 %v4870, %v4870
    %v4887 = vmul.f32 %v4871, %v4871
    %v4888 = vsel %vm295, %v4872, 0.0
    %4889 = vadd.xlane.f32.xlu0 %v4888
    %v4890 = vpop.xlane.xlu0 %4889
    %v4891 = vsel %vm295, %v4873, 0.0
    %4892 = vadd.xlane.f32.xlu0 %v4891
    %v4893 = vpop.xlane.xlu0 %4892
    %v4894 = vsel %vm295, %v4874, 0.0
    %4895 = vadd.xlane.f32.xlu0 %v4894
    %v4896 = vpop.xlane.xlu0 %4895
    %v4897 = vsel %vm295, %v4875, 0.0
    %4898 = vadd.xlane.f32.xlu0 %v4897
    %v4899 = vpop.xlane.xlu0 %4898
    %v4900 = vsel %vm295, %v4876, 0.0
    %4901 = vadd.xlane.f32.xlu0 %v4900
    %v4902 = vpop.xlane.xlu0 %4901
    %v4903 = vsel %vm295, %v4877, 0.0
    %4904 = vadd.xlane.f32.xlu0 %v4903
    %v4905 = vpop.xlane.xlu0 %4904
    %v4906 = vsel %vm295, %v4878, 0.0
    %4907 = vadd.xlane.f32.xlu0 %v4906
    %v4908 = vpop.xlane.xlu0 %4907
    %v4909 = vsel %vm295, %v4879, 0.0
    %4910 = vadd.xlane.f32.xlu0 %v4909
    %v4911 = vpop.xlane.xlu0 %4910
    %v4912 = vsel %vm295, %v4880, 0.0
    %4913 = vadd.xlane.f32.xlu0 %v4912
    %v4914 = vpop.xlane.xlu0 %4913
    %v4915 = vsel %vm295, %v4881, 0.0
    %4916 = vadd.xlane.f32.xlu0 %v4915
    %v4917 = vpop.xlane.xlu0 %4916
    %v4918 = vsel %vm295, %v4882, 0.0
    %4919 = vadd.xlane.f32.xlu0 %v4918
    %v4920 = vpop.xlane.xlu0 %4919
    %v4921 = vsel %vm295, %v4883, 0.0
    %4922 = vadd.xlane.f32.xlu0 %v4921
    %v4923 = vpop.xlane.xlu0 %4922
    %v4924 = vsel %vm295, %v4884, 0.0
    %4925 = vadd.xlane.f32.xlu0 %v4924
    %v4926 = vpop.xlane.xlu0 %4925
    %v4927 = vsel %vm295, %v4885, 0.0
    %4928 = vadd.xlane.f32.xlu0 %v4927
    %v4929 = vpop.xlane.xlu0 %4928
    %v4930 = vsel %vm295, %v4886, 0.0
    %4931 = vadd.xlane.f32.xlu0 %v4930
    %v4932 = vpop.xlane.xlu0 %4931
    %v4933 = vsel %vm295, %v4887, 0.0
    %4934 = vadd.xlane.f32.xlu0 %v4933
    %v4935 = vpop.xlane.xlu0 %4934
    %v4936 = vmul.f32 %v4890, 0.03125
    %v4937 = vmul.f32 %v4893, 0.03125
    %v4938 = vmul.f32 %v4896, 0.03125
    %v4939 = vmul.f32 %v4899, 0.03125
    %v4940 = vmul.f32 %v4902, 0.03125
    %v4941 = vmul.f32 %v4905, 0.03125
    %v4942 = vmul.f32 %v4908, 0.03125
    %v4943 = vmul.f32 %v4911, 0.03125
    %v4944 = vmul.f32 %v4914, 0.03125
    %v4945 = vmul.f32 %v4917, 0.03125
    %v4946 = vmul.f32 %v4920, 0.03125
    %v4947 = vmul.f32 %v4923, 0.03125
    %v4948 = vmul.f32 %v4926, 0.03125
    %v4949 = vmul.f32 %v4929, 0.03125
    %v4950 = vmul.f32 %v4932, 0.03125
    %v4951 = vmul.f32 %v4935, 0.03125
    %v4952 = vadd.f32 %v4936, 1e-05
    %v4953 = vadd.f32 %v4937, 1e-05
    %v4954 = vadd.f32 %v4938, 1e-05
    %v4955 = vadd.f32 %v4939, 1e-05
    %v4956 = vadd.f32 %v4940, 1e-05
    %v4957 = vadd.f32 %v4941, 1e-05
    %v4958 = vadd.f32 %v4942, 1e-05
    %v4959 = vadd.f32 %v4943, 1e-05
    %v4960 = vadd.f32 %v4944, 1e-05
    %v4961 = vadd.f32 %v4945, 1e-05
    %v4962 = vadd.f32 %v4946, 1e-05
    %v4963 = vadd.f32 %v4947, 1e-05
    %v4964 = vadd.f32 %v4948, 1e-05
    %v4965 = vadd.f32 %v4949, 1e-05
    %v4966 = vadd.f32 %v4950, 1e-05
    %v4967 = vadd.f32 %v4951, 1e-05
    %v4968 = vrsqrt.pop %v4952
    %v4969 = vrsqrt.pop %v4953
    %v4970 = vrsqrt.pop %v4954
    %v4971 = vrsqrt.pop %v4955
    %v4972 = vrsqrt.pop %v4956
    %v4973 = vrsqrt.pop %v4957
    %v4974 = vrsqrt.pop %v4958
    %v4975 = vrsqrt.pop %v4959
    %v4976 = vrsqrt.pop %v4960
    %v4977 = vrsqrt.pop %v4961
    %v4978 = vrsqrt.pop %v4962
    %v4979 = vrsqrt.pop %v4963
    %v4980 = vrsqrt.pop %v4964
    %v4981 = vrsqrt.pop %v4965
    %v4982 = vrsqrt.pop %v4966
    %v4983 = vrsqrt.pop %v4967
    %v4984 = vmul.f32 %v4856, %v4968
    %v4985 = vmul.f32 %v4857, %v4969
    %v4986 = vmul.f32 %v4858, %v4970
    %v4987 = vmul.f32 %v4859, %v4971
    %v4988 = vmul.f32 %v4860, %v4972
    %v4989 = vmul.f32 %v4861, %v4973
    %v4990 = vmul.f32 %v4862, %v4974
    %v4991 = vmul.f32 %v4863, %v4975
    %v4992 = vmul.f32 %v4864, %v4976
    %v4993 = vmul.f32 %v4865, %v4977
    %v4994 = vmul.f32 %v4866, %v4978
    %v4995 = vmul.f32 %v4867, %v4979
    %v4996 = vmul.f32 %v4868, %v4980
    %v4997 = vmul.f32 %v4869, %v4981
    %v4998 = vmul.f32 %v4870, %v4982
    %v4999 = vmul.f32 %v4871, %v4983
    %v5000 = vlaneseq
    %v5001 = vshrl.u32 %v5000, 7
    %v5002 = vsub.s32 0, %v5001
    %v5003 = vrot.slane %v4546, %v5002
    %v5004 = vmul.f32 %v4984, %v5003
    %v5005 = vmul.f32 %v4985, %v5003
    %v5006 = vmul.f32 %v4986, %v5003
    %v5007 = vmul.f32 %v4987, %v5003
    %v5008 = vmul.f32 %v4988, %v5003
    %v5009 = vmul.f32 %v4989, %v5003
    %v5010 = vmul.f32 %v4990, %v5003
    %v5011 = vmul.f32 %v4991, %v5003
    %v5012 = vmul.f32 %v4992, %v5003
    %v5013 = vmul.f32 %v4993, %v5003
    %v5014 = vmul.f32 %v4994, %v5003
    %v5015 = vmul.f32 %v4995, %v5003
    %v5016 = vmul.f32 %v4996, %v5003
    %v5017 = vmul.f32 %v4997, %v5003
    %v5018 = vmul.f32 %v4998, %v5003
    %v5019 = vmul.f32 %v4999, %v5003
    %v5020 = vlaneseq
    %v5021 = vshrl.u32 %v5020, 7
    %v5022 = vsub.s32 0, %v5021
    %v5023 = vrot.slane %v4547, %v5022
    %v5024 = vadd.f32 %v5004, %v5023
    %v5025 = vadd.f32 %v5005, %v5023
    %v5026 = vadd.f32 %v5006, %v5023
    %v5027 = vadd.f32 %v5007, %v5023
    %v5028 = vadd.f32 %v5008, %v5023
    %v5029 = vadd.f32 %v5009, %v5023
    %v5030 = vadd.f32 %v5010, %v5023
    %v5031 = vadd.f32 %v5011, %v5023
    %v5032 = vadd.f32 %v5012, %v5023
    %v5033 = vadd.f32 %v5013, %v5023
    %v5034 = vadd.f32 %v5014, %v5023
    %v5035 = vadd.f32 %v5015, %v5023
    %v5036 = vadd.f32 %v5016, %v5023
    %v5037 = vadd.f32 %v5017, %v5023
    %v5038 = vadd.f32 %v5018, %v5023
    %v5039 = vadd.f32 %v5019, %v5023
    %v5040 = vmax.f32 %v5024, 0.0
    %v5041 = vmax.f32 %v5025, 0.0
    %v5042 = vmax.f32 %v5026, 0.0
    %v5043 = vmax.f32 %v5027, 0.0
    %v5044 = vmax.f32 %v5028, 0.0
    %v5045 = vmax.f32 %v5029, 0.0
    %v5046 = vmax.f32 %v5030, 0.0
    %v5047 = vmax.f32 %v5031, 0.0
    %v5048 = vmax.f32 %v5032, 0.0
    %v5049 = vmax.f32 %v5033, 0.0
    %v5050 = vmax.f32 %v5034, 0.0
    %v5051 = vmax.f32 %v5035, 0.0
    %v5052 = vmax.f32 %v5036, 0.0
    %v5053 = vmax.f32 %v5037, 0.0
    %v5054 = vmax.f32 %v5038, 0.0
    %v5055 = vmax.f32 %v5039, 0.0
    %5072 = vrot.lane.b32.xlu0 %v5040, 126
    %v5073 = vpop.permute.xlu0 %5072
    %5074 = vrot.lane.b32.xlu0 %v5041, 126
    %v5075 = vpop.permute.xlu0 %5074
    %5076 = vrot.lane.b32.xlu0 %v5042, 126
    %v5077 = vpop.permute.xlu0 %5076
    %5078 = vrot.lane.b32.xlu0 %v5043, 126
    %v5079 = vpop.permute.xlu0 %5078
    %5080 = vrot.lane.b32.xlu0 %v5044, 126
    %v5081 = vpop.permute.xlu0 %5080
    %5082 = vrot.lane.b32.xlu0 %v5045, 126
    %v5083 = vpop.permute.xlu0 %5082
    %5084 = vrot.lane.b32.xlu0 %v5046, 126
    %v5085 = vpop.permute.xlu0 %5084
    %5086 = vrot.lane.b32.xlu0 %v5047, 126
    %v5087 = vpop.permute.xlu0 %5086
    %5088 = vrot.lane.b32.xlu0 %v5048, 126
    %v5089 = vpop.permute.xlu0 %5088
    %5090 = vrot.lane.b32.xlu0 %v5049, 126
    %v5091 = vpop.permute.xlu0 %5090
    %5092 = vrot.lane.b32.xlu0 %v5050, 126
    %v5093 = vpop.permute.xlu0 %5092
    %5094 = vrot.lane.b32.xlu0 %v5051, 126
    %v5095 = vpop.permute.xlu0 %5094
    %5096 = vrot.lane.b32.xlu0 %v5052, 126
    %v5097 = vpop.permute.xlu0 %5096
    %5098 = vrot.lane.b32.xlu0 %v5053, 126
    %v5099 = vpop.permute.xlu0 %5098
    %5100 = vrot.lane.b32.xlu0 %v5054, 126
    %v5101 = vpop.permute.xlu0 %5100
    %5102 = vrot.lane.b32.xlu0 %v5055, 126
    %v5103 = vpop.permute.xlu0 %5102
    %5120 = vrot.lane.b32.xlu0 %v5040, 124
    %v5121 = vpop.permute.xlu0 %5120
    %5122 = vrot.lane.b32.xlu0 %v5041, 124
    %v5123 = vpop.permute.xlu0 %5122
    %5124 = vrot.lane.b32.xlu0 %v5042, 124
    %v5125 = vpop.permute.xlu0 %5124
    %5126 = vrot.lane.b32.xlu0 %v5043, 124
    %v5127 = vpop.permute.xlu0 %5126
    %5128 = vrot.lane.b32.xlu0 %v5044, 124
    %v5129 = vpop.permute.xlu0 %5128
    %5130 = vrot.lane.b32.xlu0 %v5045, 124
    %v5131 = vpop.permute.xlu0 %5130
    %5132 = vrot.lane.b32.xlu0 %v5046, 124
    %v5133 = vpop.permute.xlu0 %5132
    %5134 = vrot.lane.b32.xlu0 %v5047, 124
    %v5135 = vpop.permute.xlu0 %5134
    %5136 = vrot.lane.b32.xlu0 %v5048, 124
    %v5137 = vpop.permute.xlu0 %5136
    %5138 = vrot.lane.b32.xlu0 %v5049, 124
    %v5139 = vpop.permute.xlu0 %5138
    %5140 = vrot.lane.b32.xlu0 %v5050, 124
    %v5141 = vpop.permute.xlu0 %5140
    %5142 = vrot.lane.b32.xlu0 %v5051, 124
    %v5143 = vpop.permute.xlu0 %5142
    %5144 = vrot.lane.b32.xlu0 %v5052, 124
    %v5145 = vpop.permute.xlu0 %5144
    %5146 = vrot.lane.b32.xlu0 %v5053, 124
    %v5147 = vpop.permute.xlu0 %5146
    %5148 = vrot.lane.b32.xlu0 %v5054, 124
    %v5149 = vpop.permute.xlu0 %5148
    %5150 = vrot.lane.b32.xlu0 %v5055, 124
    %v5151 = vpop.permute.xlu0 %5150
    %5168 = vrot.lane.b32.xlu0 %v5040, 122
    %v5169 = vpop.permute.xlu0 %5168
    %5170 = vrot.lane.b32.xlu0 %v5041, 122
    %v5171 = vpop.permute.xlu0 %5170
    %5172 = vrot.lane.b32.xlu0 %v5042, 122
    %v5173 = vpop.permute.xlu0 %5172
    %5174 = vrot.lane.b32.xlu0 %v5043, 122
    %v5175 = vpop.permute.xlu0 %5174
    %5176 = vrot.lane.b32.xlu0 %v5044, 122
    %v5177 = vpop.permute.xlu0 %5176
    %5178 = vrot.lane.b32.xlu0 %v5045, 122
    %v5179 = vpop.permute.xlu0 %5178
    %5180 = vrot.lane.b32.xlu0 %v5046, 122
    %v5181 = vpop.permute.xlu0 %5180
    %5182 = vrot.lane.b32.xlu0 %v5047, 122
    %v5183 = vpop.permute.xlu0 %5182
    %5184 = vrot.lane.b32.xlu0 %v5048, 122
    %v5185 = vpop.permute.xlu0 %5184
    %5186 = vrot.lane.b32.xlu0 %v5049, 122
    %v5187 = vpop.permute.xlu0 %5186
    %5188 = vrot.lane.b32.xlu0 %v5050, 122
    %v5189 = vpop.permute.xlu0 %5188
    %5190 = vrot.lane.b32.xlu0 %v5051, 122
    %v5191 = vpop.permute.xlu0 %5190
    %5192 = vrot.lane.b32.xlu0 %v5052, 122
    %v5193 = vpop.permute.xlu0 %5192
    %5194 = vrot.lane.b32.xlu0 %v5053, 122
    %v5195 = vpop.permute.xlu0 %5194
    %5196 = vrot.lane.b32.xlu0 %v5054, 122
    %v5197 = vpop.permute.xlu0 %5196
    %5198 = vrot.lane.b32.xlu0 %v5055, 122
    %v5199 = vpop.permute.xlu0 %5198
    %5216 = vrot.lane.b32.xlu0 %v5040, 120
    %v5217 = vpop.permute.xlu0 %5216
    %5218 = vrot.lane.b32.xlu0 %v5041, 120
    %v5219 = vpop.permute.xlu0 %5218
    %5220 = vrot.lane.b32.xlu0 %v5042, 120
    %v5221 = vpop.permute.xlu0 %5220
    %5222 = vrot.lane.b32.xlu0 %v5043, 120
    %v5223 = vpop.permute.xlu0 %5222
    %5224 = vrot.lane.b32.xlu0 %v5044, 120
    %v5225 = vpop.permute.xlu0 %5224
    %5226 = vrot.lane.b32.xlu0 %v5045, 120
    %v5227 = vpop.permute.xlu0 %5226
    %5228 = vrot.lane.b32.xlu0 %v5046, 120
    %v5229 = vpop.permute.xlu0 %5228
    %5230 = vrot.lane.b32.xlu0 %v5047, 120
    %v5231 = vpop.permute.xlu0 %5230
    %5232 = vrot.lane.b32.xlu0 %v5048, 120
    %v5233 = vpop.permute.xlu0 %5232
    %5234 = vrot.lane.b32.xlu0 %v5049, 120
    %v5235 = vpop.permute.xlu0 %5234
    %5236 = vrot.lane.b32.xlu0 %v5050, 120
    %v5237 = vpop.permute.xlu0 %5236
    %5238 = vrot.lane.b32.xlu0 %v5051, 120
    %v5239 = vpop.permute.xlu0 %5238
    %5240 = vrot.lane.b32.xlu0 %v5052, 120
    %v5241 = vpop.permute.xlu0 %5240
    %5242 = vrot.lane.b32.xlu0 %v5053, 120
    %v5243 = vpop.permute.xlu0 %5242
    %5244 = vrot.lane.b32.xlu0 %v5054, 120
    %v5245 = vpop.permute.xlu0 %5244
    %5246 = vrot.lane.b32.xlu0 %v5055, 120
    %v5247 = vpop.permute.xlu0 %5246
    %5264 = vrot.lane.b32.xlu0 %v5040, 118
    %v5265 = vpop.permute.xlu0 %5264
    %5266 = vrot.lane.b32.xlu0 %v5041, 118
    %v5267 = vpop.permute.xlu0 %5266
    %5268 = vrot.lane.b32.xlu0 %v5042, 118
    %v5269 = vpop.permute.xlu0 %5268
    %5270 = vrot.lane.b32.xlu0 %v5043, 118
    %v5271 = vpop.permute.xlu0 %5270
    %5272 = vrot.lane.b32.xlu0 %v5044, 118
    %v5273 = vpop.permute.xlu0 %5272
    %5274 = vrot.lane.b32.xlu0 %v5045, 118
    %v5275 = vpop.permute.xlu0 %5274
    %5276 = vrot.lane.b32.xlu0 %v5046, 118
    %v5277 = vpop.permute.xlu0 %5276
    %5278 = vrot.lane.b32.xlu0 %v5047, 118
    %v5279 = vpop.permute.xlu0 %5278
    %5280 = vrot.lane.b32.xlu0 %v5048, 118
    %v5281 = vpop.permute.xlu0 %5280
    %5282 = vrot.lane.b32.xlu0 %v5049, 118
    %v5283 = vpop.permute.xlu0 %5282
    %5284 = vrot.lane.b32.xlu0 %v5050, 118
    %v5285 = vpop.permute.xlu0 %5284
    %5286 = vrot.lane.b32.xlu0 %v5051, 118
    %v5287 = vpop.permute.xlu0 %5286
    %5288 = vrot.lane.b32.xlu0 %v5052, 118
    %v5289 = vpop.permute.xlu0 %5288
    %5290 = vrot.lane.b32.xlu0 %v5053, 118
    %v5291 = vpop.permute.xlu0 %5290
    %5292 = vrot.lane.b32.xlu0 %v5054, 118
    %v5293 = vpop.permute.xlu0 %5292
    %5294 = vrot.lane.b32.xlu0 %v5055, 118
    %v5295 = vpop.permute.xlu0 %5294
    %5312 = vrot.lane.b32.xlu0 %v5040, 116
    %v5313 = vpop.permute.xlu0 %5312
    %5314 = vrot.lane.b32.xlu0 %v5041, 116
    %v5315 = vpop.permute.xlu0 %5314
    %5316 = vrot.lane.b32.xlu0 %v5042, 116
    %v5317 = vpop.permute.xlu0 %5316
    %5318 = vrot.lane.b32.xlu0 %v5043, 116
    %v5319 = vpop.permute.xlu0 %5318
    %5320 = vrot.lane.b32.xlu0 %v5044, 116
    %v5321 = vpop.permute.xlu0 %5320
    %5322 = vrot.lane.b32.xlu0 %v5045, 116
    %v5323 = vpop.permute.xlu0 %5322
    %5324 = vrot.lane.b32.xlu0 %v5046, 116
    %v5325 = vpop.permute.xlu0 %5324
    %5326 = vrot.lane.b32.xlu0 %v5047, 116
    %v5327 = vpop.permute.xlu0 %5326
    %5328 = vrot.lane.b32.xlu0 %v5048, 116
    %v5329 = vpop.permute.xlu0 %5328
    %5330 = vrot.lane.b32.xlu0 %v5049, 116
    %v5331 = vpop.permute.xlu0 %5330
    %5332 = vrot.lane.b32.xlu0 %v5050, 116
    %v5333 = vpop.permute.xlu0 %5332
    %5334 = vrot.lane.b32.xlu0 %v5051, 116
    %v5335 = vpop.permute.xlu0 %5334
    %5336 = vrot.lane.b32.xlu0 %v5052, 116
    %v5337 = vpop.permute.xlu0 %5336
    %5338 = vrot.lane.b32.xlu0 %v5053, 116
    %v5339 = vpop.permute.xlu0 %5338
    %5340 = vrot.lane.b32.xlu0 %v5054, 116
    %v5341 = vpop.permute.xlu0 %5340
    %5342 = vrot.lane.b32.xlu0 %v5055, 116
    %v5343 = vpop.permute.xlu0 %5342
    %5360 = vrot.lane.b32.xlu0 %v5040, 114
    %v5361 = vpop.permute.xlu0 %5360
    %5362 = vrot.lane.b32.xlu0 %v5041, 114
    %v5363 = vpop.permute.xlu0 %5362
    %5364 = vrot.lane.b32.xlu0 %v5042, 114
    %v5365 = vpop.permute.xlu0 %5364
    %5366 = vrot.lane.b32.xlu0 %v5043, 114
    %v5367 = vpop.permute.xlu0 %5366
    %5368 = vrot.lane.b32.xlu0 %v5044, 114
    %v5369 = vpop.permute.xlu0 %5368
    %5370 = vrot.lane.b32.xlu0 %v5045, 114
    %v5371 = vpop.permute.xlu0 %5370
    %5372 = vrot.lane.b32.xlu0 %v5046, 114
    %v5373 = vpop.permute.xlu0 %5372
    %5374 = vrot.lane.b32.xlu0 %v5047, 114
    %v5375 = vpop.permute.xlu0 %5374
    %5376 = vrot.lane.b32.xlu0 %v5048, 114
    %v5377 = vpop.permute.xlu0 %5376
    %5378 = vrot.lane.b32.xlu0 %v5049, 114
    %v5379 = vpop.permute.xlu0 %5378
    %5380 = vrot.lane.b32.xlu0 %v5050, 114
    %v5381 = vpop.permute.xlu0 %5380
    %5382 = vrot.lane.b32.xlu0 %v5051, 114
    %v5383 = vpop.permute.xlu0 %5382
    %5384 = vrot.lane.b32.xlu0 %v5052, 114
    %v5385 = vpop.permute.xlu0 %5384
    %5386 = vrot.lane.b32.xlu0 %v5053, 114
    %v5387 = vpop.permute.xlu0 %5386
    %5388 = vrot.lane.b32.xlu0 %v5054, 114
    %v5389 = vpop.permute.xlu0 %5388
    %5390 = vrot.lane.b32.xlu0 %v5055, 114
    %v5391 = vpop.permute.xlu0 %5390
    %5408 = vrot.lane.b32.xlu0 %v5040, 112
    %v5409 = vpop.permute.xlu0 %5408
    %5410 = vrot.lane.b32.xlu0 %v5041, 112
    %v5411 = vpop.permute.xlu0 %5410
    %5412 = vrot.lane.b32.xlu0 %v5042, 112
    %v5413 = vpop.permute.xlu0 %5412
    %5414 = vrot.lane.b32.xlu0 %v5043, 112
    %v5415 = vpop.permute.xlu0 %5414
    %5416 = vrot.lane.b32.xlu0 %v5044, 112
    %v5417 = vpop.permute.xlu0 %5416
    %5418 = vrot.lane.b32.xlu0 %v5045, 112
    %v5419 = vpop.permute.xlu0 %5418
    %5420 = vrot.lane.b32.xlu0 %v5046, 112
    %v5421 = vpop.permute.xlu0 %5420
    %5422 = vrot.lane.b32.xlu0 %v5047, 112
    %v5423 = vpop.permute.xlu0 %5422
    %5424 = vrot.lane.b32.xlu0 %v5048, 112
    %v5425 = vpop.permute.xlu0 %5424
    %5426 = vrot.lane.b32.xlu0 %v5049, 112
    %v5427 = vpop.permute.xlu0 %5426
    %5428 = vrot.lane.b32.xlu0 %v5050, 112
    %v5429 = vpop.permute.xlu0 %5428
    %5430 = vrot.lane.b32.xlu0 %v5051, 112
    %v5431 = vpop.permute.xlu0 %5430
    %5432 = vrot.lane.b32.xlu0 %v5052, 112
    %v5433 = vpop.permute.xlu0 %5432
    %5434 = vrot.lane.b32.xlu0 %v5053, 112
    %v5435 = vpop.permute.xlu0 %5434
    %5436 = vrot.lane.b32.xlu0 %v5054, 112
    %v5437 = vpop.permute.xlu0 %5436
    %5438 = vrot.lane.b32.xlu0 %v5055, 112
    %v5439 = vpop.permute.xlu0 %5438
    %5456 = vrot.lane.b32.xlu0 %v5040, 110
    %v5457 = vpop.permute.xlu0 %5456
    %5458 = vrot.lane.b32.xlu0 %v5041, 110
    %v5459 = vpop.permute.xlu0 %5458
    %5460 = vrot.lane.b32.xlu0 %v5042, 110
    %v5461 = vpop.permute.xlu0 %5460
    %5462 = vrot.lane.b32.xlu0 %v5043, 110
    %v5463 = vpop.permute.xlu0 %5462
    %5464 = vrot.lane.b32.xlu0 %v5044, 110
    %v5465 = vpop.permute.xlu0 %5464
    %5466 = vrot.lane.b32.xlu0 %v5045, 110
    %v5467 = vpop.permute.xlu0 %5466
    %5468 = vrot.lane.b32.xlu0 %v5046, 110
    %v5469 = vpop.permute.xlu0 %5468
    %5470 = vrot.lane.b32.xlu0 %v5047, 110
    %v5471 = vpop.permute.xlu0 %5470
    %5472 = vrot.lane.b32.xlu0 %v5048, 110
    %v5473 = vpop.permute.xlu0 %5472
    %5474 = vrot.lane.b32.xlu0 %v5049, 110
    %v5475 = vpop.permute.xlu0 %5474
    %5476 = vrot.lane.b32.xlu0 %v5050, 110
    %v5477 = vpop.permute.xlu0 %5476
    %5478 = vrot.lane.b32.xlu0 %v5051, 110
    %v5479 = vpop.permute.xlu0 %5478
    %5480 = vrot.lane.b32.xlu0 %v5052, 110
    %v5481 = vpop.permute.xlu0 %5480
    %5482 = vrot.lane.b32.xlu0 %v5053, 110
    %v5483 = vpop.permute.xlu0 %5482
    %5484 = vrot.lane.b32.xlu0 %v5054, 110
    %v5485 = vpop.permute.xlu0 %5484
    %5486 = vrot.lane.b32.xlu0 %v5055, 110
    %v5487 = vpop.permute.xlu0 %5486
    %5504 = vrot.lane.b32.xlu0 %v5040, 108
    %v5505 = vpop.permute.xlu0 %5504
    %5506 = vrot.lane.b32.xlu0 %v5041, 108
    %v5507 = vpop.permute.xlu0 %5506
    %5508 = vrot.lane.b32.xlu0 %v5042, 108
    %v5509 = vpop.permute.xlu0 %5508
    %5510 = vrot.lane.b32.xlu0 %v5043, 108
    %v5511 = vpop.permute.xlu0 %5510
    %5512 = vrot.lane.b32.xlu0 %v5044, 108
    %v5513 = vpop.permute.xlu0 %5512
    %5514 = vrot.lane.b32.xlu0 %v5045, 108
    %v5515 = vpop.permute.xlu0 %5514
    %5516 = vrot.lane.b32.xlu0 %v5046, 108
    %v5517 = vpop.permute.xlu0 %5516
    %5518 = vrot.lane.b32.xlu0 %v5047, 108
    %v5519 = vpop.permute.xlu0 %5518
    %5520 = vrot.lane.b32.xlu0 %v5048, 108
    %v5521 = vpop.permute.xlu0 %5520
    %5522 = vrot.lane.b32.xlu0 %v5049, 108
    %v5523 = vpop.permute.xlu0 %5522
    %5524 = vrot.lane.b32.xlu0 %v5050, 108
    %v5525 = vpop.permute.xlu0 %5524
    %5526 = vrot.lane.b32.xlu0 %v5051, 108
    %v5527 = vpop.permute.xlu0 %5526
    %5528 = vrot.lane.b32.xlu0 %v5052, 108
    %v5529 = vpop.permute.xlu0 %5528
    %5530 = vrot.lane.b32.xlu0 %v5053, 108
    %v5531 = vpop.permute.xlu0 %5530
    %5532 = vrot.lane.b32.xlu0 %v5054, 108
    %v5533 = vpop.permute.xlu0 %5532
    %5534 = vrot.lane.b32.xlu0 %v5055, 108
    %v5535 = vpop.permute.xlu0 %5534
    %5552 = vrot.lane.b32.xlu0 %v5040, 106
    %v5553 = vpop.permute.xlu0 %5552
    %5554 = vrot.lane.b32.xlu0 %v5041, 106
    %v5555 = vpop.permute.xlu0 %5554
    %5556 = vrot.lane.b32.xlu0 %v5042, 106
    %v5557 = vpop.permute.xlu0 %5556
    %5558 = vrot.lane.b32.xlu0 %v5043, 106
    %v5559 = vpop.permute.xlu0 %5558
    %5560 = vrot.lane.b32.xlu0 %v5044, 106
    %v5561 = vpop.permute.xlu0 %5560
    %5562 = vrot.lane.b32.xlu0 %v5045, 106
    %v5563 = vpop.permute.xlu0 %5562
    %5564 = vrot.lane.b32.xlu0 %v5046, 106
    %v5565 = vpop.permute.xlu0 %5564
    %5566 = vrot.lane.b32.xlu0 %v5047, 106
    %v5567 = vpop.permute.xlu0 %5566
    %5568 = vrot.lane.b32.xlu0 %v5048, 106
    %v5569 = vpop.permute.xlu0 %5568
    %5570 = vrot.lane.b32.xlu0 %v5049, 106
    %v5571 = vpop.permute.xlu0 %5570
    %5572 = vrot.lane.b32.xlu0 %v5050, 106
    %v5573 = vpop.permute.xlu0 %5572
    %5574 = vrot.lane.b32.xlu0 %v5051, 106
    %v5575 = vpop.permute.xlu0 %5574
    %5576 = vrot.lane.b32.xlu0 %v5052, 106
    %v5577 = vpop.permute.xlu0 %5576
    %5578 = vrot.lane.b32.xlu0 %v5053, 106
    %v5579 = vpop.permute.xlu0 %5578
    %5580 = vrot.lane.b32.xlu0 %v5054, 106
    %v5581 = vpop.permute.xlu0 %5580
    %5582 = vrot.lane.b32.xlu0 %v5055, 106
    %v5583 = vpop.permute.xlu0 %5582
    %5600 = vrot.lane.b32.xlu0 %v5040, 104
    %v5601 = vpop.permute.xlu0 %5600
    %5602 = vrot.lane.b32.xlu0 %v5041, 104
    %v5603 = vpop.permute.xlu0 %5602
    %5604 = vrot.lane.b32.xlu0 %v5042, 104
    %v5605 = vpop.permute.xlu0 %5604
    %5606 = vrot.lane.b32.xlu0 %v5043, 104
    %v5607 = vpop.permute.xlu0 %5606
    %5608 = vrot.lane.b32.xlu0 %v5044, 104
    %v5609 = vpop.permute.xlu0 %5608
    %5610 = vrot.lane.b32.xlu0 %v5045, 104
    %v5611 = vpop.permute.xlu0 %5610
    %5612 = vrot.lane.b32.xlu0 %v5046, 104
    %v5613 = vpop.permute.xlu0 %5612
    %5614 = vrot.lane.b32.xlu0 %v5047, 104
    %v5615 = vpop.permute.xlu0 %5614
    %5616 = vrot.lane.b32.xlu0 %v5048, 104
    %v5617 = vpop.permute.xlu0 %5616
    %5618 = vrot.lane.b32.xlu0 %v5049, 104
    %v5619 = vpop.permute.xlu0 %5618
    %5620 = vrot.lane.b32.xlu0 %v5050, 104
    %v5621 = vpop.permute.xlu0 %5620
    %5622 = vrot.lane.b32.xlu0 %v5051, 104
    %v5623 = vpop.permute.xlu0 %5622
    %5624 = vrot.lane.b32.xlu0 %v5052, 104
    %v5625 = vpop.permute.xlu0 %5624
    %5626 = vrot.lane.b32.xlu0 %v5053, 104
    %v5627 = vpop.permute.xlu0 %5626
    %5628 = vrot.lane.b32.xlu0 %v5054, 104
    %v5629 = vpop.permute.xlu0 %5628
    %5630 = vrot.lane.b32.xlu0 %v5055, 104
    %v5631 = vpop.permute.xlu0 %5630
    %5648 = vrot.lane.b32.xlu0 %v5040, 102
    %v5649 = vpop.permute.xlu0 %5648
    %5650 = vrot.lane.b32.xlu0 %v5041, 102
    %v5651 = vpop.permute.xlu0 %5650
    %5652 = vrot.lane.b32.xlu0 %v5042, 102
    %v5653 = vpop.permute.xlu0 %5652
    %5654 = vrot.lane.b32.xlu0 %v5043, 102
    %v5655 = vpop.permute.xlu0 %5654
    %5656 = vrot.lane.b32.xlu0 %v5044, 102
    %v5657 = vpop.permute.xlu0 %5656
    %5658 = vrot.lane.b32.xlu0 %v5045, 102
    %v5659 = vpop.permute.xlu0 %5658
    %5660 = vrot.lane.b32.xlu0 %v5046, 102
    %v5661 = vpop.permute.xlu0 %5660
    %5662 = vrot.lane.b32.xlu0 %v5047, 102
    %v5663 = vpop.permute.xlu0 %5662
    %5664 = vrot.lane.b32.xlu0 %v5048, 102
    %v5665 = vpop.permute.xlu0 %5664
    %5666 = vrot.lane.b32.xlu0 %v5049, 102
    %v5667 = vpop.permute.xlu0 %5666
    %5668 = vrot.lane.b32.xlu0 %v5050, 102
    %v5669 = vpop.permute.xlu0 %5668
    %5670 = vrot.lane.b32.xlu0 %v5051, 102
    %v5671 = vpop.permute.xlu0 %5670
    %5672 = vrot.lane.b32.xlu0 %v5052, 102
    %v5673 = vpop.permute.xlu0 %5672
    %5674 = vrot.lane.b32.xlu0 %v5053, 102
    %v5675 = vpop.permute.xlu0 %5674
    %5676 = vrot.lane.b32.xlu0 %v5054, 102
    %v5677 = vpop.permute.xlu0 %5676
    %5678 = vrot.lane.b32.xlu0 %v5055, 102
    %v5679 = vpop.permute.xlu0 %5678
    %5696 = vrot.lane.b32.xlu0 %v5040, 100
    %v5697 = vpop.permute.xlu0 %5696
    %5698 = vrot.lane.b32.xlu0 %v5041, 100
    %v5699 = vpop.permute.xlu0 %5698
    %5700 = vrot.lane.b32.xlu0 %v5042, 100
    %v5701 = vpop.permute.xlu0 %5700
    %5702 = vrot.lane.b32.xlu0 %v5043, 100
    %v5703 = vpop.permute.xlu0 %5702
    %5704 = vrot.lane.b32.xlu0 %v5044, 100
    %v5705 = vpop.permute.xlu0 %5704
    %5706 = vrot.lane.b32.xlu0 %v5045, 100
    %v5707 = vpop.permute.xlu0 %5706
    %5708 = vrot.lane.b32.xlu0 %v5046, 100
    %v5709 = vpop.permute.xlu0 %5708
    %5710 = vrot.lane.b32.xlu0 %v5047, 100
    %v5711 = vpop.permute.xlu0 %5710
    %5712 = vrot.lane.b32.xlu0 %v5048, 100
    %v5713 = vpop.permute.xlu0 %5712
    %5714 = vrot.lane.b32.xlu0 %v5049, 100
    %v5715 = vpop.permute.xlu0 %5714
    %5716 = vrot.lane.b32.xlu0 %v5050, 100
    %v5717 = vpop.permute.xlu0 %5716
    %5718 = vrot.lane.b32.xlu0 %v5051, 100
    %v5719 = vpop.permute.xlu0 %5718
    %5720 = vrot.lane.b32.xlu0 %v5052, 100
    %v5721 = vpop.permute.xlu0 %5720
    %5722 = vrot.lane.b32.xlu0 %v5053, 100
    %v5723 = vpop.permute.xlu0 %5722
    %5724 = vrot.lane.b32.xlu0 %v5054, 100
    %v5725 = vpop.permute.xlu0 %5724
    %5726 = vrot.lane.b32.xlu0 %v5055, 100
    %v5727 = vpop.permute.xlu0 %5726
    %5744 = vrot.lane.b32.xlu0 %v5040, 98
    %v5745 = vpop.permute.xlu0 %5744
    %5746 = vrot.lane.b32.xlu0 %v5041, 98
    %v5747 = vpop.permute.xlu0 %5746
    %5748 = vrot.lane.b32.xlu0 %v5042, 98
    %v5749 = vpop.permute.xlu0 %5748
    %5750 = vrot.lane.b32.xlu0 %v5043, 98
    %v5751 = vpop.permute.xlu0 %5750
    %5752 = vrot.lane.b32.xlu0 %v5044, 98
    %v5753 = vpop.permute.xlu0 %5752
    %5754 = vrot.lane.b32.xlu0 %v5045, 98
    %v5755 = vpop.permute.xlu0 %5754
    %5756 = vrot.lane.b32.xlu0 %v5046, 98
    %v5757 = vpop.permute.xlu0 %5756
    %5758 = vrot.lane.b32.xlu0 %v5047, 98
    %v5759 = vpop.permute.xlu0 %5758
    %5760 = vrot.lane.b32.xlu0 %v5048, 98
    %v5761 = vpop.permute.xlu0 %5760
    %5762 = vrot.lane.b32.xlu0 %v5049, 98
    %v5763 = vpop.permute.xlu0 %5762
    %5764 = vrot.lane.b32.xlu0 %v5050, 98
    %v5765 = vpop.permute.xlu0 %5764
    %5766 = vrot.lane.b32.xlu0 %v5051, 98
    %v5767 = vpop.permute.xlu0 %5766
    %5768 = vrot.lane.b32.xlu0 %v5052, 98
    %v5769 = vpop.permute.xlu0 %5768
    %5770 = vrot.lane.b32.xlu0 %v5053, 98
    %v5771 = vpop.permute.xlu0 %5770
    %5772 = vrot.lane.b32.xlu0 %v5054, 98
    %v5773 = vpop.permute.xlu0 %5772
    %5774 = vrot.lane.b32.xlu0 %v5055, 98
    %v5775 = vpop.permute.xlu0 %5774
    %v5792 = vcombine.low %v5040, %v5121
    %v5794 = vunpack.c.l.s4 1983009808
    %v5795 = vunpack.c.0.s8 %v5794
    %v5796 = vlaneseq
    %v5797 = vshrl.u32 %v5796, 7
    %v5798 = vsub.s32 %v5795, %v5797
    %v5799 = vrot.slane %v5792, %v5798
    %v5800 = vcombine.low %v5073, %v5169
    %v5802 = vunpack.c.l.s4 1983009808
    %v5803 = vunpack.c.0.s8 %v5802
    %v5804 = vlaneseq
    %v5805 = vshrl.u32 %v5804, 7
    %v5806 = vsub.s32 %v5803, %v5805
    %v5807 = vrot.slane %v5800, %v5806
    %v5808 = vcombine.low %v5217, %v5313
    %v5810 = vunpack.c.l.s4 1983009808
    %v5811 = vunpack.c.0.s8 %v5810
    %v5812 = vlaneseq
    %v5813 = vshrl.u32 %v5812, 7
    %v5814 = vsub.s32 %v5811, %v5813
    %v5815 = vrot.slane %v5808, %v5814
    %v5816 = vcombine.low %v5265, %v5361
    %v5818 = vunpack.c.l.s4 1983009808
    %v5819 = vunpack.c.0.s8 %v5818
    %v5820 = vlaneseq
    %v5821 = vshrl.u32 %v5820, 7
    %v5822 = vsub.s32 %v5819, %v5821
    %v5823 = vrot.slane %v5816, %v5822
    %v5824 = vcombine.low %v5799, %v5807
    %v5826 = vunpack.c.l.s4 1934713408
    %v5827 = vunpack.c.0.s8 %v5826
    %v5828 = vlaneseq
    %v5829 = vshrl.u32 %v5828, 7
    %v5830 = vsub.s32 %v5827, %v5829
    %v5831 = vrot.slane %v5824, %v5830
    %v5832 = vcombine.low %v5815, %v5823
    %v5834 = vunpack.c.l.s4 1934713408
    %v5835 = vunpack.c.0.s8 %v5834
    %v5836 = vlaneseq
    %v5837 = vshrl.u32 %v5836, 7
    %v5838 = vsub.s32 %v5835, %v5837
    %v5839 = vrot.slane %v5832, %v5838
    %v5840 = vcombine.low %v5831, %v5839
    %v5841 = vcombine.high %v5831, %v5839
    %v5842 = vcombine.low %v5409, %v5505
    %v5844 = vunpack.c.l.s4 1983009808
    %v5845 = vunpack.c.0.s8 %v5844
    %v5846 = vlaneseq
    %v5847 = vshrl.u32 %v5846, 7
    %v5848 = vsub.s32 %v5845, %v5847
    %v5849 = vrot.slane %v5842, %v5848
    %v5850 = vcombine.low %v5457, %v5553
    %v5852 = vunpack.c.l.s4 1983009808
    %v5853 = vunpack.c.0.s8 %v5852
    %v5854 = vlaneseq
    %v5855 = vshrl.u32 %v5854, 7
    %v5856 = vsub.s32 %v5853, %v5855
    %v5857 = vrot.slane %v5850, %v5856
    %v5858 = vcombine.low %v5601, %v5697
    %v5860 = vunpack.c.l.s4 1983009808
    %v5861 = vunpack.c.0.s8 %v5860
    %v5862 = vlaneseq
    %v5863 = vshrl.u32 %v5862, 7
    %v5864 = vsub.s32 %v5861, %v5863
    %v5865 = vrot.slane %v5858, %v5864
    %v5866 = vcombine.low %v5649, %v5745
    %v5868 = vunpack.c.l.s4 1983009808
    %v5869 = vunpack.c.0.s8 %v5868
    %v5870 = vlaneseq
    %v5871 = vshrl.u32 %v5870, 7
    %v5872 = vsub.s32 %v5869, %v5871
    %v5873 = vrot.slane %v5866, %v5872
    %v5874 = vcombine.low %v5849, %v5857
    %v5876 = vunpack.c.l.s4 1934713408
    %v5877 = vunpack.c.0.s8 %v5876
    %v5878 = vlaneseq
    %v5879 = vshrl.u32 %v5878, 7
    %v5880 = vsub.s32 %v5877, %v5879
    %v5881 = vrot.slane %v5874, %v5880
    %v5882 = vcombine.low %v5865, %v5873
    %v5884 = vunpack.c.l.s4 1934713408
    %v5885 = vunpack.c.0.s8 %v5884
    %v5886 = vlaneseq
    %v5887 = vshrl.u32 %v5886, 7
    %v5888 = vsub.s32 %v5885, %v5887
    %v5889 = vrot.slane %v5882, %v5888
    %v5890 = vcombine.low %v5881, %v5889
    %v5891 = vcombine.high %v5881, %v5889
    %v5892 = vcombine.low %v5041, %v5123
    %v5894 = vunpack.c.l.s4 1983009808
    %v5895 = vunpack.c.0.s8 %v5894
    %v5896 = vlaneseq
    %v5897 = vshrl.u32 %v5896, 7
    %v5898 = vsub.s32 %v5895, %v5897
    %v5899 = vrot.slane %v5892, %v5898
    %v5900 = vcombine.low %v5075, %v5171
    %v5902 = vunpack.c.l.s4 1983009808
    %v5903 = vunpack.c.0.s8 %v5902
    %v5904 = vlaneseq
    %v5905 = vshrl.u32 %v5904, 7
    %v5906 = vsub.s32 %v5903, %v5905
    %v5907 = vrot.slane %v5900, %v5906
    %v5908 = vcombine.low %v5219, %v5315
    %v5910 = vunpack.c.l.s4 1983009808
    %v5911 = vunpack.c.0.s8 %v5910
    %v5912 = vlaneseq
    %v5913 = vshrl.u32 %v5912, 7
    %v5914 = vsub.s32 %v5911, %v5913
    %v5915 = vrot.slane %v5908, %v5914
    %v5916 = vcombine.low %v5267, %v5363
    %v5918 = vunpack.c.l.s4 1983009808
    %v5919 = vunpack.c.0.s8 %v5918
    %v5920 = vlaneseq
    %v5921 = vshrl.u32 %v5920, 7
    %v5922 = vsub.s32 %v5919, %v5921
    %v5923 = vrot.slane %v5916, %v5922
    %v5924 = vcombine.low %v5899, %v5907
    %v5926 = vunpack.c.l.s4 1934713408
    %v5927 = vunpack.c.0.s8 %v5926
    %v5928 = vlaneseq
    %v5929 = vshrl.u32 %v5928, 7
    %v5930 = vsub.s32 %v5927, %v5929
    %v5931 = vrot.slane %v5924, %v5930
    %v5932 = vcombine.low %v5915, %v5923
    %v5934 = vunpack.c.l.s4 1934713408
    %v5935 = vunpack.c.0.s8 %v5934
    %v5936 = vlaneseq
    %v5937 = vshrl.u32 %v5936, 7
    %v5938 = vsub.s32 %v5935, %v5937
    %v5939 = vrot.slane %v5932, %v5938
    %v5940 = vcombine.low %v5931, %v5939
    %v5941 = vcombine.high %v5931, %v5939
    %v5942 = vcombine.low %v5411, %v5507
    %v5944 = vunpack.c.l.s4 1983009808
    %v5945 = vunpack.c.0.s8 %v5944
    %v5946 = vlaneseq
    %v5947 = vshrl.u32 %v5946, 7
    %v5948 = vsub.s32 %v5945, %v5947
    %v5949 = vrot.slane %v5942, %v5948
    %v5950 = vcombine.low %v5459, %v5555
    %v5952 = vunpack.c.l.s4 1983009808
    %v5953 = vunpack.c.0.s8 %v5952
    %v5954 = vlaneseq
    %v5955 = vshrl.u32 %v5954, 7
    %v5956 = vsub.s32 %v5953, %v5955
    %v5957 = vrot.slane %v5950, %v5956
    %v5958 = vcombine.low %v5603, %v5699
    %v5960 = vunpack.c.l.s4 1983009808
    %v5961 = vunpack.c.0.s8 %v5960
    %v5962 = vlaneseq
    %v5963 = vshrl.u32 %v5962, 7
    %v5964 = vsub.s32 %v5961, %v5963
    %v5965 = vrot.slane %v5958, %v5964
    %v5966 = vcombine.low %v5651, %v5747
    %v5968 = vunpack.c.l.s4 1983009808
    %v5969 = vunpack.c.0.s8 %v5968
    %v5970 = vlaneseq
    %v5971 = vshrl.u32 %v5970, 7
    %v5972 = vsub.s32 %v5969, %v5971
    %v5973 = vrot.slane %v5966, %v5972
    %v5974 = vcombine.low %v5949, %v5957
    %v5976 = vunpack.c.l.s4 1934713408
    %v5977 = vunpack.c.0.s8 %v5976
    %v5978 = vlaneseq
    %v5979 = vshrl.u32 %v5978, 7
    %v5980 = vsub.s32 %v5977, %v5979
    %v5981 = vrot.slane %v5974, %v5980
    %v5982 = vcombine.low %v5965, %v5973
    %v5984 = vunpack.c.l.s4 1934713408
    %v5985 = vunpack.c.0.s8 %v5984
    %v5986 = vlaneseq
    %v5987 = vshrl.u32 %v5986, 7
    %v5988 = vsub.s32 %v5985, %v5987
    %v5989 = vrot.slane %v5982, %v5988
    %v5990 = vcombine.low %v5981, %v5989
    %v5991 = vcombine.high %v5981, %v5989
    %v5992 = vcombine.low %v5042, %v5125
    %v5994 = vunpack.c.l.s4 1983009808
    %v5995 = vunpack.c.0.s8 %v5994
    %v5996 = vlaneseq
    %v5997 = vshrl.u32 %v5996, 7
    %v5998 = vsub.s32 %v5995, %v5997
    %v5999 = vrot.slane %v5992, %v5998
    %v6000 = vcombine.low %v5077, %v5173
    %v6002 = vunpack.c.l.s4 1983009808
    %v6003 = vunpack.c.0.s8 %v6002
    %v6004 = vlaneseq
    %v6005 = vshrl.u32 %v6004, 7
    %v6006 = vsub.s32 %v6003, %v6005
    %v6007 = vrot.slane %v6000, %v6006
    %v6008 = vcombine.low %v5221, %v5317
    %v6010 = vunpack.c.l.s4 1983009808
    %v6011 = vunpack.c.0.s8 %v6010
    %v6012 = vlaneseq
    %v6013 = vshrl.u32 %v6012, 7
    %v6014 = vsub.s32 %v6011, %v6013
    %v6015 = vrot.slane %v6008, %v6014
    %v6016 = vcombine.low %v5269, %v5365
    %v6018 = vunpack.c.l.s4 1983009808
    %v6019 = vunpack.c.0.s8 %v6018
    %v6020 = vlaneseq
    %v6021 = vshrl.u32 %v6020, 7
    %v6022 = vsub.s32 %v6019, %v6021
    %v6023 = vrot.slane %v6016, %v6022
    %v6024 = vcombine.low %v5999, %v6007
    %v6026 = vunpack.c.l.s4 1934713408
    %v6027 = vunpack.c.0.s8 %v6026
    %v6028 = vlaneseq
    %v6029 = vshrl.u32 %v6028, 7
    %v6030 = vsub.s32 %v6027, %v6029
    %v6031 = vrot.slane %v6024, %v6030
    %v6032 = vcombine.low %v6015, %v6023
    %v6034 = vunpack.c.l.s4 1934713408
    %v6035 = vunpack.c.0.s8 %v6034
    %v6036 = vlaneseq
    %v6037 = vshrl.u32 %v6036, 7
    %v6038 = vsub.s32 %v6035, %v6037
    %v6039 = vrot.slane %v6032, %v6038
    %v6040 = vcombine.low %v6031, %v6039
    %v6041 = vcombine.high %v6031, %v6039
    %v6042 = vcombine.low %v5413, %v5509
    %v6044 = vunpack.c.l.s4 1983009808
    %v6045 = vunpack.c.0.s8 %v6044
    %v6046 = vlaneseq
    %v6047 = vshrl.u32 %v6046, 7
    %v6048 = vsub.s32 %v6045, %v6047
    %v6049 = vrot.slane %v6042, %v6048
    %v6050 = vcombine.low %v5461, %v5557
    %v6052 = vunpack.c.l.s4 1983009808
    %v6053 = vunpack.c.0.s8 %v6052
    %v6054 = vlaneseq
    %v6055 = vshrl.u32 %v6054, 7
    %v6056 = vsub.s32 %v6053, %v6055
    %v6057 = vrot.slane %v6050, %v6056
    %v6058 = vcombine.low %v5605, %v5701
    %v6060 = vunpack.c.l.s4 1983009808
    %v6061 = vunpack.c.0.s8 %v6060
    %v6062 = vlaneseq
    %v6063 = vshrl.u32 %v6062, 7
    %v6064 = vsub.s32 %v6061, %v6063
    %v6065 = vrot.slane %v6058, %v6064
    %v6066 = vcombine.low %v5653, %v5749
    %v6068 = vunpack.c.l.s4 1983009808
    %v6069 = vunpack.c.0.s8 %v6068
    %v6070 = vlaneseq
    %v6071 = vshrl.u32 %v6070, 7
    %v6072 = vsub.s32 %v6069, %v6071
    %v6073 = vrot.slane %v6066, %v6072
    %v6074 = vcombine.low %v6049, %v6057
    %v6076 = vunpack.c.l.s4 1934713408
    %v6077 = vunpack.c.0.s8 %v6076
    %v6078 = vlaneseq
    %v6079 = vshrl.u32 %v6078, 7
    %v6080 = vsub.s32 %v6077, %v6079
    %v6081 = vrot.slane %v6074, %v6080
    %v6082 = vcombine.low %v6065, %v6073
    %v6084 = vunpack.c.l.s4 1934713408
    %v6085 = vunpack.c.0.s8 %v6084
    %v6086 = vlaneseq
    %v6087 = vshrl.u32 %v6086, 7
    %v6088 = vsub.s32 %v6085, %v6087
    %v6089 = vrot.slane %v6082, %v6088
    %v6090 = vcombine.low %v6081, %v6089
    %v6091 = vcombine.high %v6081, %v6089
    %v6092 = vcombine.low %v5043, %v5127
    %v6094 = vunpack.c.l.s4 1983009808
    %v6095 = vunpack.c.0.s8 %v6094
    %v6096 = vlaneseq
    %v6097 = vshrl.u32 %v6096, 7
    %v6098 = vsub.s32 %v6095, %v6097
    %v6099 = vrot.slane %v6092, %v6098
    %v6100 = vcombine.low %v5079, %v5175
    %v6102 = vunpack.c.l.s4 1983009808
    %v6103 = vunpack.c.0.s8 %v6102
    %v6104 = vlaneseq
    %v6105 = vshrl.u32 %v6104, 7
    %v6106 = vsub.s32 %v6103, %v6105
    %v6107 = vrot.slane %v6100, %v6106
    %v6108 = vcombine.low %v5223, %v5319
    %v6110 = vunpack.c.l.s4 1983009808
    %v6111 = vunpack.c.0.s8 %v6110
    %v6112 = vlaneseq
    %v6113 = vshrl.u32 %v6112, 7
    %v6114 = vsub.s32 %v6111, %v6113
    %v6115 = vrot.slane %v6108, %v6114
    %v6116 = vcombine.low %v5271, %v5367
    %v6118 = vunpack.c.l.s4 1983009808
    %v6119 = vunpack.c.0.s8 %v6118
    %v6120 = vlaneseq
    %v6121 = vshrl.u32 %v6120, 7
    %v6122 = vsub.s32 %v6119, %v6121
    %v6123 = vrot.slane %v6116, %v6122
    %v6124 = vcombine.low %v6099, %v6107
    %v6126 = vunpack.c.l.s4 1934713408
    %v6127 = vunpack.c.0.s8 %v6126
    %v6128 = vlaneseq
    %v6129 = vshrl.u32 %v6128, 7
    %v6130 = vsub.s32 %v6127, %v6129
    %v6131 = vrot.slane %v6124, %v6130
    %v6132 = vcombine.low %v6115, %v6123
    %v6134 = vunpack.c.l.s4 1934713408
    %v6135 = vunpack.c.0.s8 %v6134
    %v6136 = vlaneseq
    %v6137 = vshrl.u32 %v6136, 7
    %v6138 = vsub.s32 %v6135, %v6137
    %v6139 = vrot.slane %v6132, %v6138
    %v6140 = vcombine.low %v6131, %v6139
    %v6141 = vcombine.high %v6131, %v6139
    %v6142 = vcombine.low %v5415, %v5511
    %v6144 = vunpack.c.l.s4 1983009808
    %v6145 = vunpack.c.0.s8 %v6144
    %v6146 = vlaneseq
    %v6147 = vshrl.u32 %v6146, 7
    %v6148 = vsub.s32 %v6145, %v6147
    %v6149 = vrot.slane %v6142, %v6148
    %v6150 = vcombine.low %v5463, %v5559
    %v6152 = vunpack.c.l.s4 1983009808
    %v6153 = vunpack.c.0.s8 %v6152
    %v6154 = vlaneseq
    %v6155 = vshrl.u32 %v6154, 7
    %v6156 = vsub.s32 %v6153, %v6155
    %v6157 = vrot.slane %v6150, %v6156
    %v6158 = vcombine.low %v5607, %v5703
    %v6160 = vunpack.c.l.s4 1983009808
    %v6161 = vunpack.c.0.s8 %v6160
    %v6162 = vlaneseq
    %v6163 = vshrl.u32 %v6162, 7
    %v6164 = vsub.s32 %v6161, %v6163
    %v6165 = vrot.slane %v6158, %v6164
    %v6166 = vcombine.low %v5655, %v5751
    %v6168 = vunpack.c.l.s4 1983009808
    %v6169 = vunpack.c.0.s8 %v6168
    %v6170 = vlaneseq
    %v6171 = vshrl.u32 %v6170, 7
    %v6172 = vsub.s32 %v6169, %v6171
    %v6173 = vrot.slane %v6166, %v6172
    %v6174 = vcombine.low %v6149, %v6157
    %v6176 = vunpack.c.l.s4 1934713408
    %v6177 = vunpack.c.0.s8 %v6176
    %v6178 = vlaneseq
    %v6179 = vshrl.u32 %v6178, 7
    %v6180 = vsub.s32 %v6177, %v6179
    %v6181 = vrot.slane %v6174, %v6180
    %v6182 = vcombine.low %v6165, %v6173
    %v6184 = vunpack.c.l.s4 1934713408
    %v6185 = vunpack.c.0.s8 %v6184
    %v6186 = vlaneseq
    %v6187 = vshrl.u32 %v6186, 7
    %v6188 = vsub.s32 %v6185, %v6187
    %v6189 = vrot.slane %v6182, %v6188
    %v6190 = vcombine.low %v6181, %v6189
    %v6191 = vcombine.high %v6181, %v6189
    %v6192 = vcombine.low %v5044, %v5129
    %v6194 = vunpack.c.l.s4 1983009808
    %v6195 = vunpack.c.0.s8 %v6194
    %v6196 = vlaneseq
    %v6197 = vshrl.u32 %v6196, 7
    %v6198 = vsub.s32 %v6195, %v6197
    %v6199 = vrot.slane %v6192, %v6198
    %v6200 = vcombine.low %v5081, %v5177
    %v6202 = vunpack.c.l.s4 1983009808
    %v6203 = vunpack.c.0.s8 %v6202
    %v6204 = vlaneseq
    %v6205 = vshrl.u32 %v6204, 7
    %v6206 = vsub.s32 %v6203, %v6205
    %v6207 = vrot.slane %v6200, %v6206
    %v6208 = vcombine.low %v5225, %v5321
    %v6210 = vunpack.c.l.s4 1983009808
    %v6211 = vunpack.c.0.s8 %v6210
    %v6212 = vlaneseq
    %v6213 = vshrl.u32 %v6212, 7
    %v6214 = vsub.s32 %v6211, %v6213
    %v6215 = vrot.slane %v6208, %v6214
    %v6216 = vcombine.low %v5273, %v5369
    %v6218 = vunpack.c.l.s4 1983009808
    %v6219 = vunpack.c.0.s8 %v6218
    %v6220 = vlaneseq
    %v6221 = vshrl.u32 %v6220, 7
    %v6222 = vsub.s32 %v6219, %v6221
    %v6223 = vrot.slane %v6216, %v6222
    %v6224 = vcombine.low %v6199, %v6207
    %v6226 = vunpack.c.l.s4 1934713408
    %v6227 = vunpack.c.0.s8 %v6226
    %v6228 = vlaneseq
    %v6229 = vshrl.u32 %v6228, 7
    %v6230 = vsub.s32 %v6227, %v6229
    %v6231 = vrot.slane %v6224, %v6230
    %v6232 = vcombine.low %v6215, %v6223
    %v6234 = vunpack.c.l.s4 1934713408
    %v6235 = vunpack.c.0.s8 %v6234
    %v6236 = vlaneseq
    %v6237 = vshrl.u32 %v6236, 7
    %v6238 = vsub.s32 %v6235, %v6237
    %v6239 = vrot.slane %v6232, %v6238
    %v6240 = vcombine.low %v6231, %v6239
    %v6241 = vcombine.high %v6231, %v6239
    %v6242 = vcombine.low %v5417, %v5513
    %v6244 = vunpack.c.l.s4 1983009808
    %v6245 = vunpack.c.0.s8 %v6244
    %v6246 = vlaneseq
    %v6247 = vshrl.u32 %v6246, 7
    %v6248 = vsub.s32 %v6245, %v6247
    %v6249 = vrot.slane %v6242, %v6248
    %v6250 = vcombine.low %v5465, %v5561
    %v6252 = vunpack.c.l.s4 1983009808
    %v6253 = vunpack.c.0.s8 %v6252
    %v6254 = vlaneseq
    %v6255 = vshrl.u32 %v6254, 7
    %v6256 = vsub.s32 %v6253, %v6255
    %v6257 = vrot.slane %v6250, %v6256
    %v6258 = vcombine.low %v5609, %v5705
    %v6260 = vunpack.c.l.s4 1983009808
    %v6261 = vunpack.c.0.s8 %v6260
    %v6262 = vlaneseq
    %v6263 = vshrl.u32 %v6262, 7
    %v6264 = vsub.s32 %v6261, %v6263
    %v6265 = vrot.slane %v6258, %v6264
    %v6266 = vcombine.low %v5657, %v5753
    %v6268 = vunpack.c.l.s4 1983009808
    %v6269 = vunpack.c.0.s8 %v6268
    %v6270 = vlaneseq
    %v6271 = vshrl.u32 %v6270, 7
    %v6272 = vsub.s32 %v6269, %v6271
    %v6273 = vrot.slane %v6266, %v6272
    %v6274 = vcombine.low %v6249, %v6257
    %v6276 = vunpack.c.l.s4 1934713408
    %v6277 = vunpack.c.0.s8 %v6276
    %v6278 = vlaneseq
    %v6279 = vshrl.u32 %v6278, 7
    %v6280 = vsub.s32 %v6277, %v6279
    %v6281 = vrot.slane %v6274, %v6280
    %v6282 = vcombine.low %v6265, %v6273
    %v6284 = vunpack.c.l.s4 1934713408
    %v6285 = vunpack.c.0.s8 %v6284
    %v6286 = vlaneseq
    %v6287 = vshrl.u32 %v6286, 7
    %v6288 = vsub.s32 %v6285, %v6287
    %v6289 = vrot.slane %v6282, %v6288
    %v6290 = vcombine.low %v6281, %v6289
    %v6291 = vcombine.high %v6281, %v6289
    %v6292 = vcombine.low %v5045, %v5131
    %v6294 = vunpack.c.l.s4 1983009808
    %v6295 = vunpack.c.0.s8 %v6294
    %v6296 = vlaneseq
    %v6297 = vshrl.u32 %v6296, 7
    %v6298 = vsub.s32 %v6295, %v6297
    %v6299 = vrot.slane %v6292, %v6298
    %v6300 = vcombine.low %v5083, %v5179
    %v6302 = vunpack.c.l.s4 1983009808
    %v6303 = vunpack.c.0.s8 %v6302
    %v6304 = vlaneseq
    %v6305 = vshrl.u32 %v6304, 7
    %v6306 = vsub.s32 %v6303, %v6305
    %v6307 = vrot.slane %v6300, %v6306
    %v6308 = vcombine.low %v5227, %v5323
    %v6310 = vunpack.c.l.s4 1983009808
    %v6311 = vunpack.c.0.s8 %v6310
    %v6312 = vlaneseq
    %v6313 = vshrl.u32 %v6312, 7
    %v6314 = vsub.s32 %v6311, %v6313
    %v6315 = vrot.slane %v6308, %v6314
    %v6316 = vcombine.low %v5275, %v5371
    %v6318 = vunpack.c.l.s4 1983009808
    %v6319 = vunpack.c.0.s8 %v6318
    %v6320 = vlaneseq
    %v6321 = vshrl.u32 %v6320, 7
    %v6322 = vsub.s32 %v6319, %v6321
    %v6323 = vrot.slane %v6316, %v6322
    %v6324 = vcombine.low %v6299, %v6307
    %v6326 = vunpack.c.l.s4 1934713408
    %v6327 = vunpack.c.0.s8 %v6326
    %v6328 = vlaneseq
    %v6329 = vshrl.u32 %v6328, 7
    %v6330 = vsub.s32 %v6327, %v6329
    %v6331 = vrot.slane %v6324, %v6330
    %v6332 = vcombine.low %v6315, %v6323
    %v6334 = vunpack.c.l.s4 1934713408
    %v6335 = vunpack.c.0.s8 %v6334
    %v6336 = vlaneseq
    %v6337 = vshrl.u32 %v6336, 7
    %v6338 = vsub.s32 %v6335, %v6337
    %v6339 = vrot.slane %v6332, %v6338
    %v6340 = vcombine.low %v6331, %v6339
    %v6341 = vcombine.high %v6331, %v6339
    %v6342 = vcombine.low %v5419, %v5515
    %v6344 = vunpack.c.l.s4 1983009808
    %v6345 = vunpack.c.0.s8 %v6344
    %v6346 = vlaneseq
    %v6347 = vshrl.u32 %v6346, 7
    %v6348 = vsub.s32 %v6345, %v6347
    %v6349 = vrot.slane %v6342, %v6348
    %v6350 = vcombine.low %v5467, %v5563
    %v6352 = vunpack.c.l.s4 1983009808
    %v6353 = vunpack.c.0.s8 %v6352
    %v6354 = vlaneseq
    %v6355 = vshrl.u32 %v6354, 7
    %v6356 = vsub.s32 %v6353, %v6355
    %v6357 = vrot.slane %v6350, %v6356
    %v6358 = vcombine.low %v5611, %v5707
    %v6360 = vunpack.c.l.s4 1983009808
    %v6361 = vunpack.c.0.s8 %v6360
    %v6362 = vlaneseq
    %v6363 = vshrl.u32 %v6362, 7
    %v6364 = vsub.s32 %v6361, %v6363
    %v6365 = vrot.slane %v6358, %v6364
    %v6366 = vcombine.low %v5659, %v5755
    %v6368 = vunpack.c.l.s4 1983009808
    %v6369 = vunpack.c.0.s8 %v6368
    %v6370 = vlaneseq
    %v6371 = vshrl.u32 %v6370, 7
    %v6372 = vsub.s32 %v6369, %v6371
    %v6373 = vrot.slane %v6366, %v6372
    %v6374 = vcombine.low %v6349, %v6357
    %v6376 = vunpack.c.l.s4 1934713408
    %v6377 = vunpack.c.0.s8 %v6376
    %v6378 = vlaneseq
    %v6379 = vshrl.u32 %v6378, 7
    %v6380 = vsub.s32 %v6377, %v6379
    %v6381 = vrot.slane %v6374, %v6380
    %v6382 = vcombine.low %v6365, %v6373
    %v6384 = vunpack.c.l.s4 1934713408
    %v6385 = vunpack.c.0.s8 %v6384
    %v6386 = vlaneseq
    %v6387 = vshrl.u32 %v6386, 7
    %v6388 = vsub.s32 %v6385, %v6387
    %v6389 = vrot.slane %v6382, %v6388
    %v6390 = vcombine.low %v6381, %v6389
    %v6391 = vcombine.high %v6381, %v6389
    %v6392 = vcombine.low %v5046, %v5133
    %v6394 = vunpack.c.l.s4 1983009808
    %v6395 = vunpack.c.0.s8 %v6394
    %v6396 = vlaneseq
    %v6397 = vshrl.u32 %v6396, 7
    %v6398 = vsub.s32 %v6395, %v6397
    %v6399 = vrot.slane %v6392, %v6398
    %v6400 = vcombine.low %v5085, %v5181
    %v6402 = vunpack.c.l.s4 1983009808
    %v6403 = vunpack.c.0.s8 %v6402
    %v6404 = vlaneseq
    %v6405 = vshrl.u32 %v6404, 7
    %v6406 = vsub.s32 %v6403, %v6405
    %v6407 = vrot.slane %v6400, %v6406
    %v6408 = vcombine.low %v5229, %v5325
    %v6410 = vunpack.c.l.s4 1983009808
    %v6411 = vunpack.c.0.s8 %v6410
    %v6412 = vlaneseq
    %v6413 = vshrl.u32 %v6412, 7
    %v6414 = vsub.s32 %v6411, %v6413
    %v6415 = vrot.slane %v6408, %v6414
    %v6416 = vcombine.low %v5277, %v5373
    %v6418 = vunpack.c.l.s4 1983009808
    %v6419 = vunpack.c.0.s8 %v6418
    %v6420 = vlaneseq
    %v6421 = vshrl.u32 %v6420, 7
    %v6422 = vsub.s32 %v6419, %v6421
    %v6423 = vrot.slane %v6416, %v6422
    %v6424 = vcombine.low %v6399, %v6407
    %v6426 = vunpack.c.l.s4 1934713408
    %v6427 = vunpack.c.0.s8 %v6426
    %v6428 = vlaneseq
    %v6429 = vshrl.u32 %v6428, 7
    %v6430 = vsub.s32 %v6427, %v6429
    %v6431 = vrot.slane %v6424, %v6430
    %v6432 = vcombine.low %v6415, %v6423
    %v6434 = vunpack.c.l.s4 1934713408
    %v6435 = vunpack.c.0.s8 %v6434
    %v6436 = vlaneseq
    %v6437 = vshrl.u32 %v6436, 7
    %v6438 = vsub.s32 %v6435, %v6437
    %v6439 = vrot.slane %v6432, %v6438
    %v6440 = vcombine.low %v6431, %v6439
    %v6441 = vcombine.high %v6431, %v6439
    %v6442 = vcombine.low %v5421, %v5517
    %v6444 = vunpack.c.l.s4 1983009808
    %v6445 = vunpack.c.0.s8 %v6444
    %v6446 = vlaneseq
    %v6447 = vshrl.u32 %v6446, 7
    %v6448 = vsub.s32 %v6445, %v6447
    %v6449 = vrot.slane %v6442, %v6448
    %v6450 = vcombine.low %v5469, %v5565
    %v6452 = vunpack.c.l.s4 1983009808
    %v6453 = vunpack.c.0.s8 %v6452
    %v6454 = vlaneseq
    %v6455 = vshrl.u32 %v6454, 7
    %v6456 = vsub.s32 %v6453, %v6455
    %v6457 = vrot.slane %v6450, %v6456
    %v6458 = vcombine.low %v5613, %v5709
    %v6460 = vunpack.c.l.s4 1983009808
    %v6461 = vunpack.c.0.s8 %v6460
    %v6462 = vlaneseq
    %v6463 = vshrl.u32 %v6462, 7
    %v6464 = vsub.s32 %v6461, %v6463
    %v6465 = vrot.slane %v6458, %v6464
    %v6466 = vcombine.low %v5661, %v5757
    %v6468 = vunpack.c.l.s4 1983009808
    %v6469 = vunpack.c.0.s8 %v6468
    %v6470 = vlaneseq
    %v6471 = vshrl.u32 %v6470, 7
    %v6472 = vsub.s32 %v6469, %v6471
    %v6473 = vrot.slane %v6466, %v6472
    %v6474 = vcombine.low %v6449, %v6457
    %v6476 = vunpack.c.l.s4 1934713408
    %v6477 = vunpack.c.0.s8 %v6476
    %v6478 = vlaneseq
    %v6479 = vshrl.u32 %v6478, 7
    %v6480 = vsub.s32 %v6477, %v6479
    %v6481 = vrot.slane %v6474, %v6480
    %v6482 = vcombine.low %v6465, %v6473
    %v6484 = vunpack.c.l.s4 1934713408
    %v6485 = vunpack.c.0.s8 %v6484
    %v6486 = vlaneseq
    %v6487 = vshrl.u32 %v6486, 7
    %v6488 = vsub.s32 %v6485, %v6487
    %v6489 = vrot.slane %v6482, %v6488
    %v6490 = vcombine.low %v6481, %v6489
    %v6491 = vcombine.high %v6481, %v6489
    %v6492 = vcombine.low %v5047, %v5135
    %v6494 = vunpack.c.l.s4 1983009808
    %v6495 = vunpack.c.0.s8 %v6494
    %v6496 = vlaneseq
    %v6497 = vshrl.u32 %v6496, 7
    %v6498 = vsub.s32 %v6495, %v6497
    %v6499 = vrot.slane %v6492, %v6498
    %v6500 = vcombine.low %v5087, %v5183
    %v6502 = vunpack.c.l.s4 1983009808
    %v6503 = vunpack.c.0.s8 %v6502
    %v6504 = vlaneseq
    %v6505 = vshrl.u32 %v6504, 7
    %v6506 = vsub.s32 %v6503, %v6505
    %v6507 = vrot.slane %v6500, %v6506
    %v6508 = vcombine.low %v5231, %v5327
    %v6510 = vunpack.c.l.s4 1983009808
    %v6511 = vunpack.c.0.s8 %v6510
    %v6512 = vlaneseq
    %v6513 = vshrl.u32 %v6512, 7
    %v6514 = vsub.s32 %v6511, %v6513
    %v6515 = vrot.slane %v6508, %v6514
    %v6516 = vcombine.low %v5279, %v5375
    %v6518 = vunpack.c.l.s4 1983009808
    %v6519 = vunpack.c.0.s8 %v6518
    %v6520 = vlaneseq
    %v6521 = vshrl.u32 %v6520, 7
    %v6522 = vsub.s32 %v6519, %v6521
    %v6523 = vrot.slane %v6516, %v6522
    %v6524 = vcombine.low %v6499, %v6507
    %v6526 = vunpack.c.l.s4 1934713408
    %v6527 = vunpack.c.0.s8 %v6526
    %v6528 = vlaneseq
    %v6529 = vshrl.u32 %v6528, 7
    %v6530 = vsub.s32 %v6527, %v6529
    %v6531 = vrot.slane %v6524, %v6530
    %v6532 = vcombine.low %v6515, %v6523
    %v6534 = vunpack.c.l.s4 1934713408
    %v6535 = vunpack.c.0.s8 %v6534
    %v6536 = vlaneseq
    %v6537 = vshrl.u32 %v6536, 7
    %v6538 = vsub.s32 %v6535, %v6537
    %v6539 = vrot.slane %v6532, %v6538
    %v6540 = vcombine.low %v6531, %v6539
    %v6541 = vcombine.high %v6531, %v6539
    %v6542 = vcombine.low %v5423, %v5519
    %v6544 = vunpack.c.l.s4 1983009808
    %v6545 = vunpack.c.0.s8 %v6544
    %v6546 = vlaneseq
    %v6547 = vshrl.u32 %v6546, 7
    %v6548 = vsub.s32 %v6545, %v6547
    %v6549 = vrot.slane %v6542, %v6548
    %v6550 = vcombine.low %v5471, %v5567
    %v6552 = vunpack.c.l.s4 1983009808
    %v6553 = vunpack.c.0.s8 %v6552
    %v6554 = vlaneseq
    %v6555 = vshrl.u32 %v6554, 7
    %v6556 = vsub.s32 %v6553, %v6555
    %v6557 = vrot.slane %v6550, %v6556
    %v6558 = vcombine.low %v5615, %v5711
    %v6560 = vunpack.c.l.s4 1983009808
    %v6561 = vunpack.c.0.s8 %v6560
    %v6562 = vlaneseq
    %v6563 = vshrl.u32 %v6562, 7
    %v6564 = vsub.s32 %v6561, %v6563
    %v6565 = vrot.slane %v6558, %v6564
    %v6566 = vcombine.low %v5663, %v5759
    %v6568 = vunpack.c.l.s4 1983009808
    %v6569 = vunpack.c.0.s8 %v6568
    %v6570 = vlaneseq
    %v6571 = vshrl.u32 %v6570, 7
    %v6572 = vsub.s32 %v6569, %v6571
    %v6573 = vrot.slane %v6566, %v6572
    %v6574 = vcombine.low %v6549, %v6557
    %v6576 = vunpack.c.l.s4 1934713408
    %v6577 = vunpack.c.0.s8 %v6576
    %v6578 = vlaneseq
    %v6579 = vshrl.u32 %v6578, 7
    %v6580 = vsub.s32 %v6577, %v6579
    %v6581 = vrot.slane %v6574, %v6580
    %v6582 = vcombine.low %v6565, %v6573
    %v6584 = vunpack.c.l.s4 1934713408
    %v6585 = vunpack.c.0.s8 %v6584
    %v6586 = vlaneseq
    %v6587 = vshrl.u32 %v6586, 7
    %v6588 = vsub.s32 %v6585, %v6587
    %v6589 = vrot.slane %v6582, %v6588
    %v6590 = vcombine.low %v6581, %v6589
    %v6591 = vcombine.high %v6581, %v6589
    %v6592 = vcombine.low %v5048, %v5137
    %v6594 = vunpack.c.l.s4 1983009808
    %v6595 = vunpack.c.0.s8 %v6594
    %v6596 = vlaneseq
    %v6597 = vshrl.u32 %v6596, 7
    %v6598 = vsub.s32 %v6595, %v6597
    %v6599 = vrot.slane %v6592, %v6598
    %v6600 = vcombine.low %v5089, %v5185
    %v6602 = vunpack.c.l.s4 1983009808
    %v6603 = vunpack.c.0.s8 %v6602
    %v6604 = vlaneseq
    %v6605 = vshrl.u32 %v6604, 7
    %v6606 = vsub.s32 %v6603, %v6605
    %v6607 = vrot.slane %v6600, %v6606
    %v6608 = vcombine.low %v5233, %v5329
    %v6610 = vunpack.c.l.s4 1983009808
    %v6611 = vunpack.c.0.s8 %v6610
    %v6612 = vlaneseq
    %v6613 = vshrl.u32 %v6612, 7
    %v6614 = vsub.s32 %v6611, %v6613
    %v6615 = vrot.slane %v6608, %v6614
    %v6616 = vcombine.low %v5281, %v5377
    %v6618 = vunpack.c.l.s4 1983009808
    %v6619 = vunpack.c.0.s8 %v6618
    %v6620 = vlaneseq
    %v6621 = vshrl.u32 %v6620, 7
    %v6622 = vsub.s32 %v6619, %v6621
    %v6623 = vrot.slane %v6616, %v6622
    %v6624 = vcombine.low %v6599, %v6607
    %v6626 = vunpack.c.l.s4 1934713408
    %v6627 = vunpack.c.0.s8 %v6626
    %v6628 = vlaneseq
    %v6629 = vshrl.u32 %v6628, 7
    %v6630 = vsub.s32 %v6627, %v6629
    %v6631 = vrot.slane %v6624, %v6630
    %v6632 = vcombine.low %v6615, %v6623
    %v6634 = vunpack.c.l.s4 1934713408
    %v6635 = vunpack.c.0.s8 %v6634
    %v6636 = vlaneseq
    %v6637 = vshrl.u32 %v6636, 7
    %v6638 = vsub.s32 %v6635, %v6637
    %v6639 = vrot.slane %v6632, %v6638
    %v6640 = vcombine.low %v6631, %v6639
    %v6641 = vcombine.high %v6631, %v6639
    %v6642 = vcombine.low %v5425, %v5521
    %v6644 = vunpack.c.l.s4 1983009808
    %v6645 = vunpack.c.0.s8 %v6644
    %v6646 = vlaneseq
    %v6647 = vshrl.u32 %v6646, 7
    %v6648 = vsub.s32 %v6645, %v6647
    %v6649 = vrot.slane %v6642, %v6648
    %v6650 = vcombine.low %v5473, %v5569
    %v6652 = vunpack.c.l.s4 1983009808
    %v6653 = vunpack.c.0.s8 %v6652
    %v6654 = vlaneseq
    %v6655 = vshrl.u32 %v6654, 7
    %v6656 = vsub.s32 %v6653, %v6655
    %v6657 = vrot.slane %v6650, %v6656
    %v6658 = vcombine.low %v5617, %v5713
    %v6660 = vunpack.c.l.s4 1983009808
    %v6661 = vunpack.c.0.s8 %v6660
    %v6662 = vlaneseq
    %v6663 = vshrl.u32 %v6662, 7
    %v6664 = vsub.s32 %v6661, %v6663
    %v6665 = vrot.slane %v6658, %v6664
    %v6666 = vcombine.low %v5665, %v5761
    %v6668 = vunpack.c.l.s4 1983009808
    %v6669 = vunpack.c.0.s8 %v6668
    %v6670 = vlaneseq
    %v6671 = vshrl.u32 %v6670, 7
    %v6672 = vsub.s32 %v6669, %v6671
    %v6673 = vrot.slane %v6666, %v6672
    %v6674 = vcombine.low %v6649, %v6657
    %v6676 = vunpack.c.l.s4 1934713408
    %v6677 = vunpack.c.0.s8 %v6676
    %v6678 = vlaneseq
    %v6679 = vshrl.u32 %v6678, 7
    %v6680 = vsub.s32 %v6677, %v6679
    %v6681 = vrot.slane %v6674, %v6680
    %v6682 = vcombine.low %v6665, %v6673
    %v6684 = vunpack.c.l.s4 1934713408
    %v6685 = vunpack.c.0.s8 %v6684
    %v6686 = vlaneseq
    %v6687 = vshrl.u32 %v6686, 7
    %v6688 = vsub.s32 %v6685, %v6687
    %v6689 = vrot.slane %v6682, %v6688
    %v6690 = vcombine.low %v6681, %v6689
    %v6691 = vcombine.high %v6681, %v6689
    %v6692 = vcombine.low %v5049, %v5139
    %v6694 = vunpack.c.l.s4 1983009808
    %v6695 = vunpack.c.0.s8 %v6694
    %v6696 = vlaneseq
    %v6697 = vshrl.u32 %v6696, 7
    %v6698 = vsub.s32 %v6695, %v6697
    %v6699 = vrot.slane %v6692, %v6698
    %v6700 = vcombine.low %v5091, %v5187
    %v6702 = vunpack.c.l.s4 1983009808
    %v6703 = vunpack.c.0.s8 %v6702
    %v6704 = vlaneseq
    %v6705 = vshrl.u32 %v6704, 7
    %v6706 = vsub.s32 %v6703, %v6705
    %v6707 = vrot.slane %v6700, %v6706
    %v6708 = vcombine.low %v5235, %v5331
    %v6710 = vunpack.c.l.s4 1983009808
    %v6711 = vunpack.c.0.s8 %v6710
    %v6712 = vlaneseq
    %v6713 = vshrl.u32 %v6712, 7
    %v6714 = vsub.s32 %v6711, %v6713
    %v6715 = vrot.slane %v6708, %v6714
    %v6716 = vcombine.low %v5283, %v5379
    %v6718 = vunpack.c.l.s4 1983009808
    %v6719 = vunpack.c.0.s8 %v6718
    %v6720 = vlaneseq
    %v6721 = vshrl.u32 %v6720, 7
    %v6722 = vsub.s32 %v6719, %v6721
    %v6723 = vrot.slane %v6716, %v6722
    %v6724 = vcombine.low %v6699, %v6707
    %v6726 = vunpack.c.l.s4 1934713408
    %v6727 = vunpack.c.0.s8 %v6726
    %v6728 = vlaneseq
    %v6729 = vshrl.u32 %v6728, 7
    %v6730 = vsub.s32 %v6727, %v6729
    %v6731 = vrot.slane %v6724, %v6730
    %v6732 = vcombine.low %v6715, %v6723
    %v6734 = vunpack.c.l.s4 1934713408
    %v6735 = vunpack.c.0.s8 %v6734
    %v6736 = vlaneseq
    %v6737 = vshrl.u32 %v6736, 7
    %v6738 = vsub.s32 %v6735, %v6737
    %v6739 = vrot.slane %v6732, %v6738
    %v6740 = vcombine.low %v6731, %v6739
    %v6741 = vcombine.high %v6731, %v6739
    %v6742 = vcombine.low %v5427, %v5523
    %v6744 = vunpack.c.l.s4 1983009808
    %v6745 = vunpack.c.0.s8 %v6744
    %v6746 = vlaneseq
    %v6747 = vshrl.u32 %v6746, 7
    %v6748 = vsub.s32 %v6745, %v6747
    %v6749 = vrot.slane %v6742, %v6748
    %v6750 = vcombine.low %v5475, %v5571
    %v6752 = vunpack.c.l.s4 1983009808
    %v6753 = vunpack.c.0.s8 %v6752
    %v6754 = vlaneseq
    %v6755 = vshrl.u32 %v6754, 7
    %v6756 = vsub.s32 %v6753, %v6755
    %v6757 = vrot.slane %v6750, %v6756
    %v6758 = vcombine.low %v5619, %v5715
    %v6760 = vunpack.c.l.s4 1983009808
    %v6761 = vunpack.c.0.s8 %v6760
    %v6762 = vlaneseq
    %v6763 = vshrl.u32 %v6762, 7
    %v6764 = vsub.s32 %v6761, %v6763
    %v6765 = vrot.slane %v6758, %v6764
    %v6766 = vcombine.low %v5667, %v5763
    %v6768 = vunpack.c.l.s4 1983009808
    %v6769 = vunpack.c.0.s8 %v6768
    %v6770 = vlaneseq
    %v6771 = vshrl.u32 %v6770, 7
    %v6772 = vsub.s32 %v6769, %v6771
    %v6773 = vrot.slane %v6766, %v6772
    %v6774 = vcombine.low %v6749, %v6757
    %v6776 = vunpack.c.l.s4 1934713408
    %v6777 = vunpack.c.0.s8 %v6776
    %v6778 = vlaneseq
    %v6779 = vshrl.u32 %v6778, 7
    %v6780 = vsub.s32 %v6777, %v6779
    %v6781 = vrot.slane %v6774, %v6780
    %v6782 = vcombine.low %v6765, %v6773
    %v6784 = vunpack.c.l.s4 1934713408
    %v6785 = vunpack.c.0.s8 %v6784
    %v6786 = vlaneseq
    %v6787 = vshrl.u32 %v6786, 7
    %v6788 = vsub.s32 %v6785, %v6787
    %v6789 = vrot.slane %v6782, %v6788
    %v6790 = vcombine.low %v6781, %v6789
    %v6791 = vcombine.high %v6781, %v6789
    %v6792 = vcombine.low %v5050, %v5141
    %v6794 = vunpack.c.l.s4 1983009808
    %v6795 = vunpack.c.0.s8 %v6794
    %v6796 = vlaneseq
    %v6797 = vshrl.u32 %v6796, 7
    %v6798 = vsub.s32 %v6795, %v6797
    %v6799 = vrot.slane %v6792, %v6798
    %v6800 = vcombine.low %v5093, %v5189
    %v6802 = vunpack.c.l.s4 1983009808
    %v6803 = vunpack.c.0.s8 %v6802
    %v6804 = vlaneseq
    %v6805 = vshrl.u32 %v6804, 7
    %v6806 = vsub.s32 %v6803, %v6805
    %v6807 = vrot.slane %v6800, %v6806
    %v6808 = vcombine.low %v5237, %v5333
    %v6810 = vunpack.c.l.s4 1983009808
    %v6811 = vunpack.c.0.s8 %v6810
    %v6812 = vlaneseq
    %v6813 = vshrl.u32 %v6812, 7
    %v6814 = vsub.s32 %v6811, %v6813
    %v6815 = vrot.slane %v6808, %v6814
    %v6816 = vcombine.low %v5285, %v5381
    %v6818 = vunpack.c.l.s4 1983009808
    %v6819 = vunpack.c.0.s8 %v6818
    %v6820 = vlaneseq
    %v6821 = vshrl.u32 %v6820, 7
    %v6822 = vsub.s32 %v6819, %v6821
    %v6823 = vrot.slane %v6816, %v6822
    %v6824 = vcombine.low %v6799, %v6807
    %v6826 = vunpack.c.l.s4 1934713408
    %v6827 = vunpack.c.0.s8 %v6826
    %v6828 = vlaneseq
    %v6829 = vshrl.u32 %v6828, 7
    %v6830 = vsub.s32 %v6827, %v6829
    %v6831 = vrot.slane %v6824, %v6830
    %v6832 = vcombine.low %v6815, %v6823
    %v6834 = vunpack.c.l.s4 1934713408
    %v6835 = vunpack.c.0.s8 %v6834
    %v6836 = vlaneseq
    %v6837 = vshrl.u32 %v6836, 7
    %v6838 = vsub.s32 %v6835, %v6837
    %v6839 = vrot.slane %v6832, %v6838
    %v6840 = vcombine.low %v6831, %v6839
    %v6841 = vcombine.high %v6831, %v6839
    %v6842 = vcombine.low %v5429, %v5525
    %v6844 = vunpack.c.l.s4 1983009808
    %v6845 = vunpack.c.0.s8 %v6844
    %v6846 = vlaneseq
    %v6847 = vshrl.u32 %v6846, 7
    %v6848 = vsub.s32 %v6845, %v6847
    %v6849 = vrot.slane %v6842, %v6848
    %v6850 = vcombine.low %v5477, %v5573
    %v6852 = vunpack.c.l.s4 1983009808
    %v6853 = vunpack.c.0.s8 %v6852
    %v6854 = vlaneseq
    %v6855 = vshrl.u32 %v6854, 7
    %v6856 = vsub.s32 %v6853, %v6855
    %v6857 = vrot.slane %v6850, %v6856
    %v6858 = vcombine.low %v5621, %v5717
    %v6860 = vunpack.c.l.s4 1983009808
    %v6861 = vunpack.c.0.s8 %v6860
    %v6862 = vlaneseq
    %v6863 = vshrl.u32 %v6862, 7
    %v6864 = vsub.s32 %v6861, %v6863
    %v6865 = vrot.slane %v6858, %v6864
    %v6866 = vcombine.low %v5669, %v5765
    %v6868 = vunpack.c.l.s4 1983009808
    %v6869 = vunpack.c.0.s8 %v6868
    %v6870 = vlaneseq
    %v6871 = vshrl.u32 %v6870, 7
    %v6872 = vsub.s32 %v6869, %v6871
    %v6873 = vrot.slane %v6866, %v6872
    %v6874 = vcombine.low %v6849, %v6857
    %v6876 = vunpack.c.l.s4 1934713408
    %v6877 = vunpack.c.0.s8 %v6876
    %v6878 = vlaneseq
    %v6879 = vshrl.u32 %v6878, 7
    %v6880 = vsub.s32 %v6877, %v6879
    %v6881 = vrot.slane %v6874, %v6880
    %v6882 = vcombine.low %v6865, %v6873
    %v6884 = vunpack.c.l.s4 1934713408
    %v6885 = vunpack.c.0.s8 %v6884
    %v6886 = vlaneseq
    %v6887 = vshrl.u32 %v6886, 7
    %v6888 = vsub.s32 %v6885, %v6887
    %v6889 = vrot.slane %v6882, %v6888
    %v6890 = vcombine.low %v6881, %v6889
    %v6891 = vcombine.high %v6881, %v6889
    %v6892 = vcombine.low %v5051, %v5143
    %v6894 = vunpack.c.l.s4 1983009808
    %v6895 = vunpack.c.0.s8 %v6894
    %v6896 = vlaneseq
    %v6897 = vshrl.u32 %v6896, 7
    %v6898 = vsub.s32 %v6895, %v6897
    %v6899 = vrot.slane %v6892, %v6898
    %v6900 = vcombine.low %v5095, %v5191
    %v6902 = vunpack.c.l.s4 1983009808
    %v6903 = vunpack.c.0.s8 %v6902
    %v6904 = vlaneseq
    %v6905 = vshrl.u32 %v6904, 7
    %v6906 = vsub.s32 %v6903, %v6905
    %v6907 = vrot.slane %v6900, %v6906
    %v6908 = vcombine.low %v5239, %v5335
    %v6910 = vunpack.c.l.s4 1983009808
    %v6911 = vunpack.c.0.s8 %v6910
    %v6912 = vlaneseq
    %v6913 = vshrl.u32 %v6912, 7
    %v6914 = vsub.s32 %v6911, %v6913
    %v6915 = vrot.slane %v6908, %v6914
    %v6916 = vcombine.low %v5287, %v5383
    %v6918 = vunpack.c.l.s4 1983009808
    %v6919 = vunpack.c.0.s8 %v6918
    %v6920 = vlaneseq
    %v6921 = vshrl.u32 %v6920, 7
    %v6922 = vsub.s32 %v6919, %v6921
    %v6923 = vrot.slane %v6916, %v6922
    %v6924 = vcombine.low %v6899, %v6907
    %v6926 = vunpack.c.l.s4 1934713408
    %v6927 = vunpack.c.0.s8 %v6926
    %v6928 = vlaneseq
    %v6929 = vshrl.u32 %v6928, 7
    %v6930 = vsub.s32 %v6927, %v6929
    %v6931 = vrot.slane %v6924, %v6930
    %v6932 = vcombine.low %v6915, %v6923
    %v6934 = vunpack.c.l.s4 1934713408
    %v6935 = vunpack.c.0.s8 %v6934
    %v6936 = vlaneseq
    %v6937 = vshrl.u32 %v6936, 7
    %v6938 = vsub.s32 %v6935, %v6937
    %v6939 = vrot.slane %v6932, %v6938
    %v6940 = vcombine.low %v6931, %v6939
    %v6941 = vcombine.high %v6931, %v6939
    %v6942 = vcombine.low %v5431, %v5527
    %v6944 = vunpack.c.l.s4 1983009808
    %v6945 = vunpack.c.0.s8 %v6944
    %v6946 = vlaneseq
    %v6947 = vshrl.u32 %v6946, 7
    %v6948 = vsub.s32 %v6945, %v6947
    %v6949 = vrot.slane %v6942, %v6948
    %v6950 = vcombine.low %v5479, %v5575
    %v6952 = vunpack.c.l.s4 1983009808
    %v6953 = vunpack.c.0.s8 %v6952
    %v6954 = vlaneseq
    %v6955 = vshrl.u32 %v6954, 7
    %v6956 = vsub.s32 %v6953, %v6955
    %v6957 = vrot.slane %v6950, %v6956
    %v6958 = vcombine.low %v5623, %v5719
    %v6960 = vunpack.c.l.s4 1983009808
    %v6961 = vunpack.c.0.s8 %v6960
    %v6962 = vlaneseq
    %v6963 = vshrl.u32 %v6962, 7
    %v6964 = vsub.s32 %v6961, %v6963
    %v6965 = vrot.slane %v6958, %v6964
    %v6966 = vcombine.low %v5671, %v5767
    %v6968 = vunpack.c.l.s4 1983009808
    %v6969 = vunpack.c.0.s8 %v6968
    %v6970 = vlaneseq
    %v6971 = vshrl.u32 %v6970, 7
    %v6972 = vsub.s32 %v6969, %v6971
    %v6973 = vrot.slane %v6966, %v6972
    %v6974 = vcombine.low %v6949, %v6957
    %v6976 = vunpack.c.l.s4 1934713408
    %v6977 = vunpack.c.0.s8 %v6976
    %v6978 = vlaneseq
    %v6979 = vshrl.u32 %v6978, 7
    %v6980 = vsub.s32 %v6977, %v6979
    %v6981 = vrot.slane %v6974, %v6980
    %v6982 = vcombine.low %v6965, %v6973
    %v6984 = vunpack.c.l.s4 1934713408
    %v6985 = vunpack.c.0.s8 %v6984
    %v6986 = vlaneseq
    %v6987 = vshrl.u32 %v6986, 7
    %v6988 = vsub.s32 %v6985, %v6987
    %v6989 = vrot.slane %v6982, %v6988
    %v6990 = vcombine.low %v6981, %v6989
    %v6991 = vcombine.high %v6981, %v6989
    %v6992 = vcombine.low %v5052, %v5145
    %v6994 = vunpack.c.l.s4 1983009808
    %v6995 = vunpack.c.0.s8 %v6994
    %v6996 = vlaneseq
    %v6997 = vshrl.u32 %v6996, 7
    %v6998 = vsub.s32 %v6995, %v6997
    %v6999 = vrot.slane %v6992, %v6998
    %v7000 = vcombine.low %v5097, %v5193
    %v7002 = vunpack.c.l.s4 1983009808
    %v7003 = vunpack.c.0.s8 %v7002
    %v7004 = vlaneseq
    %v7005 = vshrl.u32 %v7004, 7
    %v7006 = vsub.s32 %v7003, %v7005
    %v7007 = vrot.slane %v7000, %v7006
    %v7008 = vcombine.low %v5241, %v5337
    %v7010 = vunpack.c.l.s4 1983009808
    %v7011 = vunpack.c.0.s8 %v7010
    %v7012 = vlaneseq
    %v7013 = vshrl.u32 %v7012, 7
    %v7014 = vsub.s32 %v7011, %v7013
    %v7015 = vrot.slane %v7008, %v7014
    %v7016 = vcombine.low %v5289, %v5385
    %v7018 = vunpack.c.l.s4 1983009808
    %v7019 = vunpack.c.0.s8 %v7018
    %v7020 = vlaneseq
    %v7021 = vshrl.u32 %v7020, 7
    %v7022 = vsub.s32 %v7019, %v7021
    %v7023 = vrot.slane %v7016, %v7022
    %v7024 = vcombine.low %v6999, %v7007
    %v7026 = vunpack.c.l.s4 1934713408
    %v7027 = vunpack.c.0.s8 %v7026
    %v7028 = vlaneseq
    %v7029 = vshrl.u32 %v7028, 7
    %v7030 = vsub.s32 %v7027, %v7029
    %v7031 = vrot.slane %v7024, %v7030
    %v7032 = vcombine.low %v7015, %v7023
    %v7034 = vunpack.c.l.s4 1934713408
    %v7035 = vunpack.c.0.s8 %v7034
    %v7036 = vlaneseq
    %v7037 = vshrl.u32 %v7036, 7
    %v7038 = vsub.s32 %v7035, %v7037
    %v7039 = vrot.slane %v7032, %v7038
    %v7040 = vcombine.low %v7031, %v7039
    %v7041 = vcombine.high %v7031, %v7039
    %v7042 = vcombine.low %v5433, %v5529
    %v7044 = vunpack.c.l.s4 1983009808
    %v7045 = vunpack.c.0.s8 %v7044
    %v7046 = vlaneseq
    %v7047 = vshrl.u32 %v7046, 7
    %v7048 = vsub.s32 %v7045, %v7047
    %v7049 = vrot.slane %v7042, %v7048
    %v7050 = vcombine.low %v5481, %v5577
    %v7052 = vunpack.c.l.s4 1983009808
    %v7053 = vunpack.c.0.s8 %v7052
    %v7054 = vlaneseq
    %v7055 = vshrl.u32 %v7054, 7
    %v7056 = vsub.s32 %v7053, %v7055
    %v7057 = vrot.slane %v7050, %v7056
    %v7058 = vcombine.low %v5625, %v5721
    %v7060 = vunpack.c.l.s4 1983009808
    %v7061 = vunpack.c.0.s8 %v7060
    %v7062 = vlaneseq
    %v7063 = vshrl.u32 %v7062, 7
    %v7064 = vsub.s32 %v7061, %v7063
    %v7065 = vrot.slane %v7058, %v7064
    %v7066 = vcombine.low %v5673, %v5769
    %v7068 = vunpack.c.l.s4 1983009808
    %v7069 = vunpack.c.0.s8 %v7068
    %v7070 = vlaneseq
    %v7071 = vshrl.u32 %v7070, 7
    %v7072 = vsub.s32 %v7069, %v7071
    %v7073 = vrot.slane %v7066, %v7072
    %v7074 = vcombine.low %v7049, %v7057
    %v7076 = vunpack.c.l.s4 1934713408
    %v7077 = vunpack.c.0.s8 %v7076
    %v7078 = vlaneseq
    %v7079 = vshrl.u32 %v7078, 7
    %v7080 = vsub.s32 %v7077, %v7079
    %v7081 = vrot.slane %v7074, %v7080
    %v7082 = vcombine.low %v7065, %v7073
    %v7084 = vunpack.c.l.s4 1934713408
    %v7085 = vunpack.c.0.s8 %v7084
    %v7086 = vlaneseq
    %v7087 = vshrl.u32 %v7086, 7
    %v7088 = vsub.s32 %v7085, %v7087
    %v7089 = vrot.slane %v7082, %v7088
    %v7090 = vcombine.low %v7081, %v7089
    %v7091 = vcombine.high %v7081, %v7089
    %v7092 = vcombine.low %v5053, %v5147
    %v7094 = vunpack.c.l.s4 1983009808
    %v7095 = vunpack.c.0.s8 %v7094
    %v7096 = vlaneseq
    %v7097 = vshrl.u32 %v7096, 7
    %v7098 = vsub.s32 %v7095, %v7097
    %v7099 = vrot.slane %v7092, %v7098
    %v7100 = vcombine.low %v5099, %v5195
    %v7102 = vunpack.c.l.s4 1983009808
    %v7103 = vunpack.c.0.s8 %v7102
    %v7104 = vlaneseq
    %v7105 = vshrl.u32 %v7104, 7
    %v7106 = vsub.s32 %v7103, %v7105
    %v7107 = vrot.slane %v7100, %v7106
    %v7108 = vcombine.low %v5243, %v5339
    %v7110 = vunpack.c.l.s4 1983009808
    %v7111 = vunpack.c.0.s8 %v7110
    %v7112 = vlaneseq
    %v7113 = vshrl.u32 %v7112, 7
    %v7114 = vsub.s32 %v7111, %v7113
    %v7115 = vrot.slane %v7108, %v7114
    %v7116 = vcombine.low %v5291, %v5387
    %v7118 = vunpack.c.l.s4 1983009808
    %v7119 = vunpack.c.0.s8 %v7118
    %v7120 = vlaneseq
    %v7121 = vshrl.u32 %v7120, 7
    %v7122 = vsub.s32 %v7119, %v7121
    %v7123 = vrot.slane %v7116, %v7122
    %v7124 = vcombine.low %v7099, %v7107
    %v7126 = vunpack.c.l.s4 1934713408
    %v7127 = vunpack.c.0.s8 %v7126
    %v7128 = vlaneseq
    %v7129 = vshrl.u32 %v7128, 7
    %v7130 = vsub.s32 %v7127, %v7129
    %v7131 = vrot.slane %v7124, %v7130
    %v7132 = vcombine.low %v7115, %v7123
    %v7134 = vunpack.c.l.s4 1934713408
    %v7135 = vunpack.c.0.s8 %v7134
    %v7136 = vlaneseq
    %v7137 = vshrl.u32 %v7136, 7
    %v7138 = vsub.s32 %v7135, %v7137
    %v7139 = vrot.slane %v7132, %v7138
    %v7140 = vcombine.low %v7131, %v7139
    %v7141 = vcombine.high %v7131, %v7139
    %v7142 = vcombine.low %v5435, %v5531
    %v7144 = vunpack.c.l.s4 1983009808
    %v7145 = vunpack.c.0.s8 %v7144
    %v7146 = vlaneseq
    %v7147 = vshrl.u32 %v7146, 7
    %v7148 = vsub.s32 %v7145, %v7147
    %v7149 = vrot.slane %v7142, %v7148
    %v7150 = vcombine.low %v5483, %v5579
    %v7152 = vunpack.c.l.s4 1983009808
    %v7153 = vunpack.c.0.s8 %v7152
    %v7154 = vlaneseq
    %v7155 = vshrl.u32 %v7154, 7
    %v7156 = vsub.s32 %v7153, %v7155
    %v7157 = vrot.slane %v7150, %v7156
    %v7158 = vcombine.low %v5627, %v5723
    %v7160 = vunpack.c.l.s4 1983009808
    %v7161 = vunpack.c.0.s8 %v7160
    %v7162 = vlaneseq
    %v7163 = vshrl.u32 %v7162, 7
    %v7164 = vsub.s32 %v7161, %v7163
    %v7165 = vrot.slane %v7158, %v7164
    %v7166 = vcombine.low %v5675, %v5771
    %v7168 = vunpack.c.l.s4 1983009808
    %v7169 = vunpack.c.0.s8 %v7168
    %v7170 = vlaneseq
    %v7171 = vshrl.u32 %v7170, 7
    %v7172 = vsub.s32 %v7169, %v7171
    %v7173 = vrot.slane %v7166, %v7172
    %v7174 = vcombine.low %v7149, %v7157
    %v7176 = vunpack.c.l.s4 1934713408
    %v7177 = vunpack.c.0.s8 %v7176
    %v7178 = vlaneseq
    %v7179 = vshrl.u32 %v7178, 7
    %v7180 = vsub.s32 %v7177, %v7179
    %v7181 = vrot.slane %v7174, %v7180
    %v7182 = vcombine.low %v7165, %v7173
    %v7184 = vunpack.c.l.s4 1934713408
    %v7185 = vunpack.c.0.s8 %v7184
    %v7186 = vlaneseq
    %v7187 = vshrl.u32 %v7186, 7
    %v7188 = vsub.s32 %v7185, %v7187
    %v7189 = vrot.slane %v7182, %v7188
    %v7190 = vcombine.low %v7181, %v7189
    %v7191 = vcombine.high %v7181, %v7189
    %v7192 = vcombine.low %v5054, %v5149
    %v7194 = vunpack.c.l.s4 1983009808
    %v7195 = vunpack.c.0.s8 %v7194
    %v7196 = vlaneseq
    %v7197 = vshrl.u32 %v7196, 7
    %v7198 = vsub.s32 %v7195, %v7197
    %v7199 = vrot.slane %v7192, %v7198
    %v7200 = vcombine.low %v5101, %v5197
    %v7202 = vunpack.c.l.s4 1983009808
    %v7203 = vunpack.c.0.s8 %v7202
    %v7204 = vlaneseq
    %v7205 = vshrl.u32 %v7204, 7
    %v7206 = vsub.s32 %v7203, %v7205
    %v7207 = vrot.slane %v7200, %v7206
    %v7208 = vcombine.low %v5245, %v5341
    %v7210 = vunpack.c.l.s4 1983009808
    %v7211 = vunpack.c.0.s8 %v7210
    %v7212 = vlaneseq
    %v7213 = vshrl.u32 %v7212, 7
    %v7214 = vsub.s32 %v7211, %v7213
    %v7215 = vrot.slane %v7208, %v7214
    %v7216 = vcombine.low %v5293, %v5389
    %v7218 = vunpack.c.l.s4 1983009808
    %v7219 = vunpack.c.0.s8 %v7218
    %v7220 = vlaneseq
    %v7221 = vshrl.u32 %v7220, 7
    %v7222 = vsub.s32 %v7219, %v7221
    %v7223 = vrot.slane %v7216, %v7222
    %v7224 = vcombine.low %v7199, %v7207
    %v7226 = vunpack.c.l.s4 1934713408
    %v7227 = vunpack.c.0.s8 %v7226
    %v7228 = vlaneseq
    %v7229 = vshrl.u32 %v7228, 7
    %v7230 = vsub.s32 %v7227, %v7229
    %v7231 = vrot.slane %v7224, %v7230
    %v7232 = vcombine.low %v7215, %v7223
    %v7234 = vunpack.c.l.s4 1934713408
    %v7235 = vunpack.c.0.s8 %v7234
    %v7236 = vlaneseq
    %v7237 = vshrl.u32 %v7236, 7
    %v7238 = vsub.s32 %v7235, %v7237
    %v7239 = vrot.slane %v7232, %v7238
    %v7240 = vcombine.low %v7231, %v7239
    %v7241 = vcombine.high %v7231, %v7239
    %v7242 = vcombine.low %v5437, %v5533
    %v7244 = vunpack.c.l.s4 1983009808
    %v7245 = vunpack.c.0.s8 %v7244
    %v7246 = vlaneseq
    %v7247 = vshrl.u32 %v7246, 7
    %v7248 = vsub.s32 %v7245, %v7247
    %v7249 = vrot.slane %v7242, %v7248
    %v7250 = vcombine.low %v5485, %v5581
    %v7252 = vunpack.c.l.s4 1983009808
    %v7253 = vunpack.c.0.s8 %v7252
    %v7254 = vlaneseq
    %v7255 = vshrl.u32 %v7254, 7
    %v7256 = vsub.s32 %v7253, %v7255
    %v7257 = vrot.slane %v7250, %v7256
    %v7258 = vcombine.low %v5629, %v5725
    %v7260 = vunpack.c.l.s4 1983009808
    %v7261 = vunpack.c.0.s8 %v7260
    %v7262 = vlaneseq
    %v7263 = vshrl.u32 %v7262, 7
    %v7264 = vsub.s32 %v7261, %v7263
    %v7265 = vrot.slane %v7258, %v7264
    %v7266 = vcombine.low %v5677, %v5773
    %v7268 = vunpack.c.l.s4 1983009808
    %v7269 = vunpack.c.0.s8 %v7268
    %v7270 = vlaneseq
    %v7271 = vshrl.u32 %v7270, 7
    %v7272 = vsub.s32 %v7269, %v7271
    %v7273 = vrot.slane %v7266, %v7272
    %v7274 = vcombine.low %v7249, %v7257
    %v7276 = vunpack.c.l.s4 1934713408
    %v7277 = vunpack.c.0.s8 %v7276
    %v7278 = vlaneseq
    %v7279 = vshrl.u32 %v7278, 7
    %v7280 = vsub.s32 %v7277, %v7279
    %v7281 = vrot.slane %v7274, %v7280
    %v7282 = vcombine.low %v7265, %v7273
    %v7284 = vunpack.c.l.s4 1934713408
    %v7285 = vunpack.c.0.s8 %v7284
    %v7286 = vlaneseq
    %v7287 = vshrl.u32 %v7286, 7
    %v7288 = vsub.s32 %v7285, %v7287
    %v7289 = vrot.slane %v7282, %v7288
    %v7290 = vcombine.low %v7281, %v7289
    %v7291 = vcombine.high %v7281, %v7289
    %v7292 = vcombine.low %v5055, %v5151
    %v7294 = vunpack.c.l.s4 1983009808
    %v7295 = vunpack.c.0.s8 %v7294
    %v7296 = vlaneseq
    %v7297 = vshrl.u32 %v7296, 7
    %v7298 = vsub.s32 %v7295, %v7297
    %v7299 = vrot.slane %v7292, %v7298
    %v7300 = vcombine.low %v5103, %v5199
    %v7302 = vunpack.c.l.s4 1983009808
    %v7303 = vunpack.c.0.s8 %v7302
    %v7304 = vlaneseq
    %v7305 = vshrl.u32 %v7304, 7
    %v7306 = vsub.s32 %v7303, %v7305
    %v7307 = vrot.slane %v7300, %v7306
    %v7308 = vcombine.low %v5247, %v5343
    %v7310 = vunpack.c.l.s4 1983009808
    %v7311 = vunpack.c.0.s8 %v7310
    %v7312 = vlaneseq
    %v7313 = vshrl.u32 %v7312, 7
    %v7314 = vsub.s32 %v7311, %v7313
    %v7315 = vrot.slane %v7308, %v7314
    %v7316 = vcombine.low %v5295, %v5391
    %v7318 = vunpack.c.l.s4 1983009808
    %v7319 = vunpack.c.0.s8 %v7318
    %v7320 = vlaneseq
    %v7321 = vshrl.u32 %v7320, 7
    %v7322 = vsub.s32 %v7319, %v7321
    %v7323 = vrot.slane %v7316, %v7322
    %v7324 = vcombine.low %v7299, %v7307
    %v7326 = vunpack.c.l.s4 1934713408
    %v7327 = vunpack.c.0.s8 %v7326
    %v7328 = vlaneseq
    %v7329 = vshrl.u32 %v7328, 7
    %v7330 = vsub.s32 %v7327, %v7329
    %v7331 = vrot.slane %v7324, %v7330
    %v7332 = vcombine.low %v7315, %v7323
    %v7334 = vunpack.c.l.s4 1934713408
    %v7335 = vunpack.c.0.s8 %v7334
    %v7336 = vlaneseq
    %v7337 = vshrl.u32 %v7336, 7
    %v7338 = vsub.s32 %v7335, %v7337
    %v7339 = vrot.slane %v7332, %v7338
    %v7340 = vcombine.low %v7331, %v7339
    %v7341 = vcombine.high %v7331, %v7339
    %v7342 = vcombine.low %v5439, %v5535
    %v7344 = vunpack.c.l.s4 1983009808
    %v7345 = vunpack.c.0.s8 %v7344
    %v7346 = vlaneseq
    %v7347 = vshrl.u32 %v7346, 7
    %v7348 = vsub.s32 %v7345, %v7347
    %v7349 = vrot.slane %v7342, %v7348
    %v7350 = vcombine.low %v5487, %v5583
    %v7352 = vunpack.c.l.s4 1983009808
    %v7353 = vunpack.c.0.s8 %v7352
    %v7354 = vlaneseq
    %v7355 = vshrl.u32 %v7354, 7
    %v7356 = vsub.s32 %v7353, %v7355
    %v7357 = vrot.slane %v7350, %v7356
    %v7358 = vcombine.low %v5631, %v5727
    %v7360 = vunpack.c.l.s4 1983009808
    %v7361 = vunpack.c.0.s8 %v7360
    %v7362 = vlaneseq
    %v7363 = vshrl.u32 %v7362, 7
    %v7364 = vsub.s32 %v7361, %v7363
    %v7365 = vrot.slane %v7358, %v7364
    %v7366 = vcombine.low %v5679, %v5775
    %v7368 = vunpack.c.l.s4 1983009808
    %v7369 = vunpack.c.0.s8 %v7368
    %v7370 = vlaneseq
    %v7371 = vshrl.u32 %v7370, 7
    %v7372 = vsub.s32 %v7369, %v7371
    %v7373 = vrot.slane %v7366, %v7372
    %v7374 = vcombine.low %v7349, %v7357
    %v7376 = vunpack.c.l.s4 1934713408
    %v7377 = vunpack.c.0.s8 %v7376
    %v7378 = vlaneseq
    %v7379 = vshrl.u32 %v7378, 7
    %v7380 = vsub.s32 %v7377, %v7379
    %v7381 = vrot.slane %v7374, %v7380
    %v7382 = vcombine.low %v7365, %v7373
    %v7384 = vunpack.c.l.s4 1934713408
    %v7385 = vunpack.c.0.s8 %v7384
    %v7386 = vlaneseq
    %v7387 = vshrl.u32 %v7386, 7
    %v7388 = vsub.s32 %v7385, %v7387
    %v7389 = vrot.slane %v7382, %v7388
    %v7390 = vcombine.low %v7381, %v7389
    %v7391 = vcombine.high %v7381, %v7389
    %v7392 = vsel %vm2896, %v5840, -inf
    %7393 = vmax.xlane.f32.xlu0 %v7392
    %v7394 = vpop.xlane.xlu0 %7393
    %v7395 = vsel %vm2896, %v5890, -inf
    %7396 = vmax.xlane.f32.xlu0 %v7395
    %v7397 = vpop.xlane.xlu0 %7396
    %v7398 = vsel %vm2896, %v5841, -inf
    %7399 = vmax.xlane.f32.xlu0 %v7398
    %v7400 = vpop.xlane.xlu0 %7399
    %v7401 = vsel %vm2896, %v5891, -inf
    %7402 = vmax.xlane.f32.xlu0 %v7401
    %v7403 = vpop.xlane.xlu0 %7402
    %v7404 = vsel %vm2896, %v5940, -inf
    %7405 = vmax.xlane.f32.xlu0 %v7404
    %v7406 = vpop.xlane.xlu0 %7405
    %v7407 = vsel %vm2896, %v5990, -inf
    %7408 = vmax.xlane.f32.xlu0 %v7407
    %v7409 = vpop.xlane.xlu0 %7408
    %v7410 = vsel %vm2896, %v5941, -inf
    %7411 = vmax.xlane.f32.xlu0 %v7410
    %v7412 = vpop.xlane.xlu0 %7411
    %v7413 = vsel %vm2896, %v5991, -inf
    %7414 = vmax.xlane.f32.xlu0 %v7413
    %v7415 = vpop.xlane.xlu0 %7414
    %v7416 = vsel %vm2896, %v6040, -inf
    %7417 = vmax.xlane.f32.xlu0 %v7416
    %v7418 = vpop.xlane.xlu0 %7417
    %v7419 = vsel %vm2896, %v6090, -inf
    %7420 = vmax.xlane.f32.xlu0 %v7419
    %v7421 = vpop.xlane.xlu0 %7420
    %v7422 = vsel %vm2896, %v6041, -inf
    %7423 = vmax.xlane.f32.xlu0 %v7422
    %v7424 = vpop.xlane.xlu0 %7423
    %v7425 = vsel %vm2896, %v6091, -inf
    %7426 = vmax.xlane.f32.xlu0 %v7425
    %v7427 = vpop.xlane.xlu0 %7426
    %v7428 = vsel %vm2896, %v6140, -inf
    %7429 = vmax.xlane.f32.xlu0 %v7428
    %v7430 = vpop.xlane.xlu0 %7429
    %v7431 = vsel %vm2896, %v6190, -inf
    %7432 = vmax.xlane.f32.xlu0 %v7431
    %v7433 = vpop.xlane.xlu0 %7432
    %v7434 = vsel %vm2896, %v6141, -inf
    %7435 = vmax.xlane.f32.xlu0 %v7434
    %v7436 = vpop.xlane.xlu0 %7435
    %v7437 = vsel %vm2896, %v6191, -inf
    %7438 = vmax.xlane.f32.xlu0 %v7437
    %v7439 = vpop.xlane.xlu0 %7438
    %v7440 = vsel %vm2896, %v6240, -inf
    %7441 = vmax.xlane.f32.xlu0 %v7440
    %v7442 = vpop.xlane.xlu0 %7441
    %v7443 = vsel %vm2896, %v6290, -inf
    %7444 = vmax.xlane.f32.xlu0 %v7443
    %v7445 = vpop.xlane.xlu0 %7444
    %v7446 = vsel %vm2896, %v6241, -inf
    %7447 = vmax.xlane.f32.xlu0 %v7446
    %v7448 = vpop.xlane.xlu0 %7447
    %v7449 = vsel %vm2896, %v6291, -inf
    %7450 = vmax.xlane.f32.xlu0 %v7449
    %v7451 = vpop.xlane.xlu0 %7450
    %v7452 = vsel %vm2896, %v6340, -inf
    %7453 = vmax.xlane.f32.xlu0 %v7452
    %v7454 = vpop.xlane.xlu0 %7453
    %v7455 = vsel %vm2896, %v6390, -inf
    %7456 = vmax.xlane.f32.xlu0 %v7455
    %v7457 = vpop.xlane.xlu0 %7456
    %v7458 = vsel %vm2896, %v6341, -inf
    %7459 = vmax.xlane.f32.xlu0 %v7458
    %v7460 = vpop.xlane.xlu0 %7459
    %v7461 = vsel %vm2896, %v6391, -inf
    %7462 = vmax.xlane.f32.xlu0 %v7461
    %v7463 = vpop.xlane.xlu0 %7462
    %v7464 = vsel %vm2896, %v6440, -inf
    %7465 = vmax.xlane.f32.xlu0 %v7464
    %v7466 = vpop.xlane.xlu0 %7465
    %v7467 = vsel %vm2896, %v6490, -inf
    %7468 = vmax.xlane.f32.xlu0 %v7467
    %v7469 = vpop.xlane.xlu0 %7468
    %v7470 = vsel %vm2896, %v6441, -inf
    %7471 = vmax.xlane.f32.xlu0 %v7470
    %v7472 = vpop.xlane.xlu0 %7471
    %v7473 = vsel %vm2896, %v6491, -inf
    %7474 = vmax.xlane.f32.xlu0 %v7473
    %v7475 = vpop.xlane.xlu0 %7474
    %v7476 = vsel %vm2896, %v6540, -inf
    %7477 = vmax.xlane.f32.xlu0 %v7476
    %v7478 = vpop.xlane.xlu0 %7477
    %v7479 = vsel %vm2896, %v6590, -inf
    %7480 = vmax.xlane.f32.xlu0 %v7479
    %v7481 = vpop.xlane.xlu0 %7480
    %v7482 = vsel %vm2896, %v6541, -inf
    %7483 = vmax.xlane.f32.xlu0 %v7482
    %v7484 = vpop.xlane.xlu0 %7483
    %v7485 = vsel %vm2896, %v6591, -inf
    %7486 = vmax.xlane.f32.xlu0 %v7485
    %v7487 = vpop.xlane.xlu0 %7486
    %v7488 = vsel %vm2896, %v6640, -inf
    %7489 = vmax.xlane.f32.xlu0 %v7488
    %v7490 = vpop.xlane.xlu0 %7489
    %v7491 = vsel %vm2896, %v6690, -inf
    %7492 = vmax.xlane.f32.xlu0 %v7491
    %v7493 = vpop.xlane.xlu0 %7492
    %v7494 = vsel %vm2896, %v6641, -inf
    %7495 = vmax.xlane.f32.xlu0 %v7494
    %v7496 = vpop.xlane.xlu0 %7495
    %v7497 = vsel %vm2896, %v6691, -inf
    %7498 = vmax.xlane.f32.xlu0 %v7497
    %v7499 = vpop.xlane.xlu0 %7498
    %v7500 = vsel %vm2896, %v6740, -inf
    %7501 = vmax.xlane.f32.xlu0 %v7500
    %v7502 = vpop.xlane.xlu0 %7501
    %v7503 = vsel %vm2896, %v6790, -inf
    %7504 = vmax.xlane.f32.xlu0 %v7503
    %v7505 = vpop.xlane.xlu0 %7504
    %v7506 = vsel %vm2896, %v6741, -inf
    %7507 = vmax.xlane.f32.xlu0 %v7506
    %v7508 = vpop.xlane.xlu0 %7507
    %v7509 = vsel %vm2896, %v6791, -inf
    %7510 = vmax.xlane.f32.xlu0 %v7509
    %v7511 = vpop.xlane.xlu0 %7510
    %v7512 = vsel %vm2896, %v6840, -inf
    %7513 = vmax.xlane.f32.xlu0 %v7512
    %v7514 = vpop.xlane.xlu0 %7513
    %v7515 = vsel %vm2896, %v6890, -inf
    %7516 = vmax.xlane.f32.xlu0 %v7515
    %v7517 = vpop.xlane.xlu0 %7516
    %v7518 = vsel %vm2896, %v6841, -inf
    %7519 = vmax.xlane.f32.xlu0 %v7518
    %v7520 = vpop.xlane.xlu0 %7519
    %v7521 = vsel %vm2896, %v6891, -inf
    %7522 = vmax.xlane.f32.xlu0 %v7521
    %v7523 = vpop.xlane.xlu0 %7522
    %v7524 = vsel %vm2896, %v6940, -inf
    %7525 = vmax.xlane.f32.xlu0 %v7524
    %v7526 = vpop.xlane.xlu0 %7525
    %v7527 = vsel %vm2896, %v6990, -inf
    %7528 = vmax.xlane.f32.xlu0 %v7527
    %v7529 = vpop.xlane.xlu0 %7528
    %v7530 = vsel %vm2896, %v6941, -inf
    %7531 = vmax.xlane.f32.xlu0 %v7530
    %v7532 = vpop.xlane.xlu0 %7531
    %v7533 = vsel %vm2896, %v6991, -inf
    %7534 = vmax.xlane.f32.xlu0 %v7533
    %v7535 = vpop.xlane.xlu0 %7534
    %v7536 = vsel %vm2896, %v7040, -inf
    %7537 = vmax.xlane.f32.xlu0 %v7536
    %v7538 = vpop.xlane.xlu0 %7537
    %v7539 = vsel %vm2896, %v7090, -inf
    %7540 = vmax.xlane.f32.xlu0 %v7539
    %v7541 = vpop.xlane.xlu0 %7540
    %v7542 = vsel %vm2896, %v7041, -inf
    %7543 = vmax.xlane.f32.xlu0 %v7542
    %v7544 = vpop.xlane.xlu0 %7543
    %v7545 = vsel %vm2896, %v7091, -inf
    %7546 = vmax.xlane.f32.xlu0 %v7545
    %v7547 = vpop.xlane.xlu0 %7546
    %v7548 = vsel %vm2896, %v7140, -inf
    %7549 = vmax.xlane.f32.xlu0 %v7548
    %v7550 = vpop.xlane.xlu0 %7549
    %v7551 = vsel %vm2896, %v7190, -inf
    %7552 = vmax.xlane.f32.xlu0 %v7551
    %v7553 = vpop.xlane.xlu0 %7552
    %v7554 = vsel %vm2896, %v7141, -inf
    %7555 = vmax.xlane.f32.xlu0 %v7554
    %v7556 = vpop.xlane.xlu0 %7555
    %v7557 = vsel %vm2896, %v7191, -inf
    %7558 = vmax.xlane.f32.xlu0 %v7557
    %v7559 = vpop.xlane.xlu0 %7558
    %v7560 = vsel %vm2896, %v7240, -inf
    %7561 = vmax.xlane.f32.xlu0 %v7560
    %v7562 = vpop.xlane.xlu0 %7561
    %v7563 = vsel %vm2896, %v7290, -inf
    %7564 = vmax.xlane.f32.xlu0 %v7563
    %v7565 = vpop.xlane.xlu0 %7564
    %v7566 = vsel %vm2896, %v7241, -inf
    %7567 = vmax.xlane.f32.xlu0 %v7566
    %v7568 = vpop.xlane.xlu0 %7567
    %v7569 = vsel %vm2896, %v7291, -inf
    %7570 = vmax.xlane.f32.xlu0 %v7569
    %v7571 = vpop.xlane.xlu0 %7570
    %v7572 = vsel %vm2896, %v7340, -inf
    %7573 = vmax.xlane.f32.xlu0 %v7572
    %v7574 = vpop.xlane.xlu0 %7573
    %v7575 = vsel %vm2896, %v7390, -inf
    %7576 = vmax.xlane.f32.xlu0 %v7575
    %v7577 = vpop.xlane.xlu0 %7576
    %v7578 = vsel %vm2896, %v7341, -inf
    %7579 = vmax.xlane.f32.xlu0 %v7578
    %v7580 = vpop.xlane.xlu0 %7579
    %v7581 = vsel %vm2896, %v7391, -inf
    %7582 = vmax.xlane.f32.xlu0 %v7581
    %v7583 = vpop.xlane.xlu0 %7582
    %v7584 = vmax.f32 %v7394, %v7406
    %v7585 = vmax.f32 %v7397, %v7409
    %v7586 = vmax.f32 %v7400, %v7412
    %v7587 = vmax.f32 %v7403, %v7415
    %v7588 = vmax.f32 %v7418, %v7430
    %v7589 = vmax.f32 %v7421, %v7433
    %v7590 = vmax.f32 %v7424, %v7436
    %v7591 = vmax.f32 %v7427, %v7439
    %v7592 = vmax.f32 %v7442, %v7454
    %v7593 = vmax.f32 %v7445, %v7457
    %v7594 = vmax.f32 %v7448, %v7460
    %v7595 = vmax.f32 %v7451, %v7463
    %v7596 = vmax.f32 %v7466, %v7478
    %v7597 = vmax.f32 %v7469, %v7481
    %v7598 = vmax.f32 %v7472, %v7484
    %v7599 = vmax.f32 %v7475, %v7487
    %v7600 = vmax.f32 %v7490, %v7502
    %v7601 = vmax.f32 %v7493, %v7505
    %v7602 = vmax.f32 %v7496, %v7508
    %v7603 = vmax.f32 %v7499, %v7511
    %v7604 = vmax.f32 %v7514, %v7526
    %v7605 = vmax.f32 %v7517, %v7529
    %v7606 = vmax.f32 %v7520, %v7532
    %v7607 = vmax.f32 %v7523, %v7535
    %v7608 = vmax.f32 %v7538, %v7550
    %v7609 = vmax.f32 %v7541, %v7553
    %v7610 = vmax.f32 %v7544, %v7556
    %v7611 = vmax.f32 %v7547, %v7559
    %v7612 = vmax.f32 %v7562, %v7574
    %v7613 = vmax.f32 %v7565, %v7577
    %v7614 = vmax.f32 %v7568, %v7580
    %v7615 = vmax.f32 %v7571, %v7583
    %v7648 = vlaneseq
    %v7649 = vshrl.u32 %v7648, 7
    %v7650 = vsub.s32 %v3154, %v7649
    %v7651 = vrot.slane %v7584, %v7650
    %v7652 = vlaneseq
    %v7653 = vshrl.u32 %v7652, 7
    %v7654 = vsub.s32 %v3159, %v7653
    %v7655 = vrot.slane %v7585, %v7654
    %v7656 = vsel %vm3164, %v7655, %v7651
    %v7657 = vlaneseq
    %v7658 = vshrl.u32 %v7657, 7
    %v7659 = vsub.s32 %v3154, %v7658
    %v7660 = vrot.slane %v7586, %v7659
    %v7661 = vlaneseq
    %v7662 = vshrl.u32 %v7661, 7
    %v7663 = vsub.s32 %v3159, %v7662
    %v7664 = vrot.slane %v7587, %v7663
    %v7665 = vsel %vm3164, %v7664, %v7660
    %v7666 = vlaneseq
    %v7667 = vshrl.u32 %v7666, 7
    %v7668 = vsub.s32 %v3154, %v7667
    %v7669 = vrot.slane %v7588, %v7668
    %v7670 = vlaneseq
    %v7671 = vshrl.u32 %v7670, 7
    %v7672 = vsub.s32 %v3159, %v7671
    %v7673 = vrot.slane %v7589, %v7672
    %v7674 = vsel %vm3164, %v7673, %v7669
    %v7675 = vlaneseq
    %v7676 = vshrl.u32 %v7675, 7
    %v7677 = vsub.s32 %v3154, %v7676
    %v7678 = vrot.slane %v7590, %v7677
    %v7679 = vlaneseq
    %v7680 = vshrl.u32 %v7679, 7
    %v7681 = vsub.s32 %v3159, %v7680
    %v7682 = vrot.slane %v7591, %v7681
    %v7683 = vsel %vm3164, %v7682, %v7678
    %v7684 = vlaneseq
    %v7685 = vshrl.u32 %v7684, 7
    %v7686 = vsub.s32 %v3154, %v7685
    %v7687 = vrot.slane %v7592, %v7686
    %v7688 = vlaneseq
    %v7689 = vshrl.u32 %v7688, 7
    %v7690 = vsub.s32 %v3159, %v7689
    %v7691 = vrot.slane %v7593, %v7690
    %v7692 = vsel %vm3164, %v7691, %v7687
    %v7693 = vlaneseq
    %v7694 = vshrl.u32 %v7693, 7
    %v7695 = vsub.s32 %v3154, %v7694
    %v7696 = vrot.slane %v7594, %v7695
    %v7697 = vlaneseq
    %v7698 = vshrl.u32 %v7697, 7
    %v7699 = vsub.s32 %v3159, %v7698
    %v7700 = vrot.slane %v7595, %v7699
    %v7701 = vsel %vm3164, %v7700, %v7696
    %v7702 = vlaneseq
    %v7703 = vshrl.u32 %v7702, 7
    %v7704 = vsub.s32 %v3154, %v7703
    %v7705 = vrot.slane %v7596, %v7704
    %v7706 = vlaneseq
    %v7707 = vshrl.u32 %v7706, 7
    %v7708 = vsub.s32 %v3159, %v7707
    %v7709 = vrot.slane %v7597, %v7708
    %v7710 = vsel %vm3164, %v7709, %v7705
    %v7711 = vlaneseq
    %v7712 = vshrl.u32 %v7711, 7
    %v7713 = vsub.s32 %v3154, %v7712
    %v7714 = vrot.slane %v7598, %v7713
    %v7715 = vlaneseq
    %v7716 = vshrl.u32 %v7715, 7
    %v7717 = vsub.s32 %v3159, %v7716
    %v7718 = vrot.slane %v7599, %v7717
    %v7719 = vsel %vm3164, %v7718, %v7714
    %v7720 = vlaneseq
    %v7721 = vshrl.u32 %v7720, 7
    %v7722 = vsub.s32 %v3154, %v7721
    %v7723 = vrot.slane %v7600, %v7722
    %v7724 = vlaneseq
    %v7725 = vshrl.u32 %v7724, 7
    %v7726 = vsub.s32 %v3159, %v7725
    %v7727 = vrot.slane %v7601, %v7726
    %v7728 = vsel %vm3164, %v7727, %v7723
    %v7729 = vlaneseq
    %v7730 = vshrl.u32 %v7729, 7
    %v7731 = vsub.s32 %v3154, %v7730
    %v7732 = vrot.slane %v7602, %v7731
    %v7733 = vlaneseq
    %v7734 = vshrl.u32 %v7733, 7
    %v7735 = vsub.s32 %v3159, %v7734
    %v7736 = vrot.slane %v7603, %v7735
    %v7737 = vsel %vm3164, %v7736, %v7732
    %v7738 = vlaneseq
    %v7739 = vshrl.u32 %v7738, 7
    %v7740 = vsub.s32 %v3154, %v7739
    %v7741 = vrot.slane %v7604, %v7740
    %v7742 = vlaneseq
    %v7743 = vshrl.u32 %v7742, 7
    %v7744 = vsub.s32 %v3159, %v7743
    %v7745 = vrot.slane %v7605, %v7744
    %v7746 = vsel %vm3164, %v7745, %v7741
    %v7747 = vlaneseq
    %v7748 = vshrl.u32 %v7747, 7
    %v7749 = vsub.s32 %v3154, %v7748
    %v7750 = vrot.slane %v7606, %v7749
    %v7751 = vlaneseq
    %v7752 = vshrl.u32 %v7751, 7
    %v7753 = vsub.s32 %v3159, %v7752
    %v7754 = vrot.slane %v7607, %v7753
    %v7755 = vsel %vm3164, %v7754, %v7750
    %v7756 = vlaneseq
    %v7757 = vshrl.u32 %v7756, 7
    %v7758 = vsub.s32 %v3154, %v7757
    %v7759 = vrot.slane %v7608, %v7758
    %v7760 = vlaneseq
    %v7761 = vshrl.u32 %v7760, 7
    %v7762 = vsub.s32 %v3159, %v7761
    %v7763 = vrot.slane %v7609, %v7762
    %v7764 = vsel %vm3164, %v7763, %v7759
    %v7765 = vlaneseq
    %v7766 = vshrl.u32 %v7765, 7
    %v7767 = vsub.s32 %v3154, %v7766
    %v7768 = vrot.slane %v7610, %v7767
    %v7769 = vlaneseq
    %v7770 = vshrl.u32 %v7769, 7
    %v7771 = vsub.s32 %v3159, %v7770
    %v7772 = vrot.slane %v7611, %v7771
    %v7773 = vsel %vm3164, %v7772, %v7768
    %v7774 = vlaneseq
    %v7775 = vshrl.u32 %v7774, 7
    %v7776 = vsub.s32 %v3154, %v7775
    %v7777 = vrot.slane %v7612, %v7776
    %v7778 = vlaneseq
    %v7779 = vshrl.u32 %v7778, 7
    %v7780 = vsub.s32 %v3159, %v7779
    %v7781 = vrot.slane %v7613, %v7780
    %v7782 = vsel %vm3164, %v7781, %v7777
    %v7783 = vlaneseq
    %v7784 = vshrl.u32 %v7783, 7
    %v7785 = vsub.s32 %v3154, %v7784
    %v7786 = vrot.slane %v7614, %v7785
    %v7787 = vlaneseq
    %v7788 = vshrl.u32 %v7787, 7
    %v7789 = vsub.s32 %v3159, %v7788
    %v7790 = vrot.slane %v7615, %v7789
    %v7791 = vsel %vm3164, %v7790, %v7786
    %v7792 = vsel %vm3301, %v7665, %v7656
    %v7793 = vsel %vm3301, %v7683, %v7674
    %v7794 = vsel %vm3301, %v7701, %v7692
    %v7795 = vsel %vm3301, %v7719, %v7710
    %v7796 = vsel %vm3301, %v7737, %v7728
    %v7797 = vsel %vm3301, %v7755, %v7746
    %v7798 = vsel %vm3301, %v7773, %v7764
    %v7799 = vsel %vm3301, %v7791, %v7782
    %v7808 = vcombine.low %v7792, %v7794
    %v7810 = vunpack.c.l.s4 1983009808
    %v7811 = vunpack.c.0.s8 %v7810
    %v7812 = vlaneseq
    %v7813 = vshrl.u32 %v7812, 7
    %v7814 = vsub.s32 %v7811, %v7813
    %v7815 = vrot.slane %v7808, %v7814
    %v7816 = vcombine.low %v7793, %v7795
    %v7818 = vunpack.c.l.s4 1983009808
    %v7819 = vunpack.c.0.s8 %v7818
    %v7820 = vlaneseq
    %v7821 = vshrl.u32 %v7820, 7
    %v7822 = vsub.s32 %v7819, %v7821
    %v7823 = vrot.slane %v7816, %v7822
    %v7824 = vcombine.low %v7796, %v7798
    %v7826 = vunpack.c.l.s4 1983009808
    %v7827 = vunpack.c.0.s8 %v7826
    %v7828 = vlaneseq
    %v7829 = vshrl.u32 %v7828, 7
    %v7830 = vsub.s32 %v7827, %v7829
    %v7831 = vrot.slane %v7824, %v7830
    %v7832 = vcombine.low %v7797, %v7799
    %v7834 = vunpack.c.l.s4 1983009808
    %v7835 = vunpack.c.0.s8 %v7834
    %v7836 = vlaneseq
    %v7837 = vshrl.u32 %v7836, 7
    %v7838 = vsub.s32 %v7835, %v7837
    %v7839 = vrot.slane %v7832, %v7838
    %v7840 = vcombine.low %v7815, %v7823
    %v7842 = vunpack.c.l.s4 1934713408
    %v7843 = vunpack.c.0.s8 %v7842
    %v7844 = vlaneseq
    %v7845 = vshrl.u32 %v7844, 7
    %v7846 = vsub.s32 %v7843, %v7845
    %v7847 = vrot.slane %v7840, %v7846
    %v7848 = vcombine.low %v7831, %v7839
    %v7850 = vunpack.c.l.s4 1934713408
    %v7851 = vunpack.c.0.s8 %v7850
    %v7852 = vlaneseq
    %v7853 = vshrl.u32 %v7852, 7
    %v7854 = vsub.s32 %v7851, %v7853
    %v7855 = vrot.slane %v7848, %v7854
    %v7856 = vcombine.low %v7847, %v7855
    %v7857 = vcombine.high %v7847, %v7855
    %7859 = vrot.lane.b32.xlu0 %v7857, 16
    %v7860 = vpop.permute.xlu0 %7859
    %v7862 = vsel %vm3372, %v7856, %v7860
    %v7863 = vld [vmem:[%s1 + $0x120] sm:$0xff]
    %v7864 = vld [vmem:[%s1 + $0x128] sm:$0x3]
    %v7865 = vld [vmem:[%s1 + $0x130] sm:$0xff]
    %v7866 = vld [vmem:[%s1 + $0x138] sm:$0x3]
    %v7867 = vld [vmem:[%s1 + $0x140] sm:$0x1]
    %v7868 = vld [vmem:[%s1 + $0x148] sm:$0x1]
    %7870 = vrot.lane.b32.xlu0 %v7862, 1
    %v7871 = vpop.permute.xlu0 %7870
    %vm7873 = vcmask 130056
    %7874 = vst.msk [vmem:[#allocation2] sm:$0xff] %vm7873, %v7871
    %7875 = vst.msk [vmem:[#allocation2] sm:$0xff] %vm29, 0.0
    %vm7876 = vcmask 261256
    %7877 = vst.msk [vmem:[#allocation2] sm:$0xff] %vm7876, %v7871
    %vm7878 = vcmask 138368
    %7879 = vst.msk [vmem:[#allocation2] sm:$0xff] %vm7878, 0.0
    %7880 = vst.msk [vmem:[#allocation2 + $0x8] sm:$0xff] %vm3372, %v7862
    %7881 = vst.msk [vmem:[#allocation2 + $0x8] sm:$0xff] %vm3396, %v7862
    %7882 = vrot.lane.b32.xlu0 %v7862, 127
    %v7883 = vpop.permute.xlu0 %7882
    %vm7885 = vcmask 121856
    %7886 = vst.msk [vmem:[#allocation2 + $0x10] sm:$0xff] %vm7885, %v7883
    %vm7887 = vcmask 130168
    %7888 = vst.msk [vmem:[#allocation2 + $0x10] sm:$0xff] %vm7887, 0.0
    %vm7889 = vcmask 253056
    %7890 = vst.msk [vmem:[#allocation2 + $0x10] sm:$0xff] %vm7889, %v7883
    %7891 = vst.msk [vmem:[#allocation2 + $0x10] sm:$0xff] %vm51, 0.0
    %v7892 = vld [vmem:[#allocation2] sm:$0xff]
    %v7893 = vld [vmem:[#allocation2 + $0x8] sm:$0xff]
    %v7894 = vld [vmem:[#allocation2 + $0x10] sm:$0xff]
    %7896 = vset.pattern.permute.xlu0 0
    %7897 = vperm.xlu0 %7896, %v7865
    %v7898 = vpop.permute.xlu0 %7897
    %7901 = vset.pattern.permute.xlu0 0
    %7902 = vperm.xlu0 %7901, %v7866
    %v7903 = vpop.permute.xlu0 %7902
    %v7906 = vsel %vm73, %v7863, 0
    %v7909 = vsel %vm73, %v7864, 0
    %7911 = vmatprep.subr.mxu0 0.0
    %7912 = vmatpush1.msra.mxu0 0.0
    %7913 = vmatprep.subr.mxu0 0.0
    %7914 = vmatpush1.msra.mxu0 0.0
    %7915 = vmatprep.subr.mxu0 0.0
    %7916 = vmatpush1.msra.mxu0 0.0
    %7917 = vmatprep.subr.mxu0 0.0
    %7918 = vmatpush1.msra.mxu0 0.0
    %7919 = vmatprep.subr.mxu0 0.0
    %7920 = vmatpush1.msra.mxu0 0.0
    %7921 = vmatprep.subr.mxu0 0.0
    %7922 = vmatpush1.msra.mxu0 0.0
    %7923 = vmatprep.subr.mxu0 0.0
    %7924 = vmatpush1.msra.mxu0 0.0
    %7925 = vmatprep.subr.mxu0 0.0
    %7926 = vmatpush1.msra.mxu0 0.0
    %7927 = vmatprep.subr.mxu0 0.0
    %7928 = vmatpush1.msra.mxu0 0.0
    %7929 = vmatprep.subr.mxu0 0.0
    %7930 = vmatpush1.msra.mxu0 0.0
    %7931 = vmatprep.subr.mxu0 0.0
    %7932 = vmatpush1.msra.mxu0 0.0
    %7933 = vmatprep.subr.mxu0 0.0
    %7934 = vmatpush1.msra.mxu0 0.0
    %7935 = vmatprep.subr.mxu0 0.0
    %7936 = vmatpush1.msra.mxu0 0.0
    %7937 = vmatprep.subr.mxu0 0.0
    %7938 = vmatpush1.msra.mxu0 %v7894
    %7939 = vmatprep.subr.mxu0 0.0
    %7940 = vmatpush1.msra.mxu0 %v7893
    %7941 = vmatprep.subr.mxu0 0.0
    %7942 = vmatpush1.msra.mxu0 %v7892
    %7943 = vmatprep.subr.mxu0 0.0
    %7944 = vmatpush2.msra.mxu0 0.0
    %7945 = vmatprep.subr.mxu0 0.0
    %7946 = vmatpush2.msra.mxu0 0.0
    %7947 = vmatprep.subr.mxu0 0.0
    %7948 = vmatpush2.msra.mxu0 0.0
    %7949 = vmatprep.subr.mxu0 0.0
    %7950 = vmatpush2.msra.mxu0 0.0
    %7951 = vmatprep.subr.mxu0 0.0
    %7952 = vmatpush2.msra.mxu0 0.0
    %7953 = vmatprep.subr.mxu0 0.0
    %7954 = vmatpush2.msra.mxu0 0.0
    %7955 = vmatprep.subr.mxu0 0.0
    %7956 = vmatpush2.msra.mxu0 0.0
    %7957 = vmatprep.subr.mxu0 0.0
    %7958 = vmatpush2.msra.mxu0 0.0
    %7959 = vmatprep.subr.mxu0 0.0
    %7960 = vmatpush2.msra.mxu0 0.0
    %7961 = vmatprep.subr.mxu0 0.0
    %7962 = vmatpush2.msra.mxu0 0.0
    %7963 = vmatprep.subr.mxu0 0.0
    %7964 = vmatpush2.msra.mxu0 0.0
    %7965 = vmatprep.subr.mxu0 0.0
    %7966 = vmatpush2.msra.mxu0 0.0
    %7967 = vmatprep.subr.mxu0 0.0
    %7968 = vmatpush2.msra.mxu0 0.0
    %7969 = vmatprep.subr.mxu0 0.0
    %7970 = vmatpush2.msra.mxu0 0.0
    %7971 = vmatprep.subr.mxu0 0.0
    %7972 = vmatpush2.msra.mxu0 0.0
    %7973 = vmatprep.subr.mxu0 0.0
    %7974 = vmatpush2.msra.mxu0 0.0
    %7975 = vmatprep.mubr.f32.mxu0 0.0
    %7976 = vmatmul.mubr.f32.gmra.mxu0 %v7906
    %v7977 = vpop.f32.mrf.mxu0
    %v7978 = vadd.f32 %v7898, %v7977
    %v7979 = vpop.f32.mrf.mxu0
    %7980 = vmatprep.mubr.f32.mxu0 0.0
    %7981 = vmatmul.mubr.f32.gmra.mxu0 %v7909
    %v7982 = vpop.f32.mrf.mxu0
    %v7983 = vadd.f32 %v7903, %v7982
    %v7984 = vpop.f32.mrf.mxu0
    %7985 = vdwg.mxu0
    %7988 = vrot.lane.b32.xlu0 %v7978, 112
    %v7989 = vpop.permute.xlu0 %7988
    %7990 = vrot.lane.b32.xlu0 %v7983, 112
    %v7991 = vpop.permute.xlu0 %7990
    %v7993 = vcombine.high %v7978, 0.0
    %v7995 = vunpack.c.l.s4 1983009808
    %v7996 = vunpack.c.0.s8 %v7995
    %v7997 = vlaneseq
    %v7998 = vshrl.u32 %v7997, 7
    %v7999 = vsub.s32 %v7996, %v7998
    %v8000 = vrot.slane %v7978, %v7999
    %v8002 = vunpack.c.l.s4 1983009808
    %v8003 = vunpack.c.0.s8 %v8002
    %v8004 = vlaneseq
    %v8005 = vshrl.u32 %v8004, 7
    %v8006 = vsub.s32 %v8003, %v8005
    %v8007 = vrot.slane %v7993, %v8006
    %v8008 = vcombine.high %v7989, 0.0
    %v8010 = vunpack.c.l.s4 1983009808
    %v8011 = vunpack.c.0.s8 %v8010
    %v8012 = vlaneseq
    %v8013 = vshrl.u32 %v8012, 7
    %v8014 = vsub.s32 %v8011, %v8013
    %v8015 = vrot.slane %v7989, %v8014
    %v8017 = vunpack.c.l.s4 1983009808
    %v8018 = vunpack.c.0.s8 %v8017
    %v8019 = vlaneseq
    %v8020 = vshrl.u32 %v8019, 7
    %v8021 = vsub.s32 %v8018, %v8020
    %v8022 = vrot.slane %v8008, %v8021
    %v8023 = vcombine.low %v8000, %v8015
    %v8024 = vcombine.high %v8000, %v8015
    %v8026 = vunpack.c.l.s4 1934713408
    %v8027 = vunpack.c.0.s8 %v8026
    %v8028 = vlaneseq
    %v8029 = vshrl.u32 %v8028, 7
    %v8030 = vsub.s32 %v8027, %v8029
    %v8031 = vrot.slane %v8023, %v8030
    %v8033 = vunpack.c.l.s4 1934713408
    %v8034 = vunpack.c.0.s8 %v8033
    %v8035 = vlaneseq
    %v8036 = vshrl.u32 %v8035, 7
    %v8037 = vsub.s32 %v8034, %v8036
    %v8038 = vrot.slane %v8024, %v8037
    %v8039 = vcombine.low %v8007, %v8022
    %v8040 = vcombine.high %v8007, %v8022
    %v8042 = vunpack.c.l.s4 1934713408
    %v8043 = vunpack.c.0.s8 %v8042
    %v8044 = vlaneseq
    %v8045 = vshrl.u32 %v8044, 7
    %v8046 = vsub.s32 %v8043, %v8045
    %v8047 = vrot.slane %v8039, %v8046
    %v8049 = vunpack.c.l.s4 1934713408
    %v8050 = vunpack.c.0.s8 %v8049
    %v8051 = vlaneseq
    %v8052 = vshrl.u32 %v8051, 7
    %v8053 = vsub.s32 %v8050, %v8052
    %v8054 = vrot.slane %v8040, %v8053
    %v8055 = vcombine.high %v8031, 0.0
    %v8056 = vcombine.high %v8038, 0.0
    %v8057 = vcombine.high %v8047, 0.0
    %v8058 = vcombine.high %v8054, 0.0
    %v8060 = vcombine.low %v7983, %v7991
    %v8062 = vunpack.c.l.s4 1934713408
    %v8063 = vunpack.c.0.s8 %v8062
    %v8064 = vlaneseq
    %v8065 = vshrl.u32 %v8064, 7
    %v8066 = vsub.s32 %v8063, %v8065
    %v8067 = vrot.slane %v8060, %v8066
    %v8068 = vcombine.high %v8067, 0.0
    %vm8069 = vcmask 123904
    %v8070 = vsel %vm8069, %v8031, 0.0
    %8071 = vadd.xlane.f32.xlu0 %v8070
    %v8072 = vpop.xlane.xlu0 %8071
    %v8073 = vsel %vm8069, %v8055, 0.0
    %8074 = vadd.xlane.f32.xlu0 %v8073
    %v8075 = vpop.xlane.xlu0 %8074
    %v8076 = vsel %vm8069, %v8038, 0.0
    %8077 = vadd.xlane.f32.xlu0 %v8076
    %v8078 = vpop.xlane.xlu0 %8077
    %v8079 = vsel %vm8069, %v8056, 0.0
    %8080 = vadd.xlane.f32.xlu0 %v8079
    %v8081 = vpop.xlane.xlu0 %8080
    %v8082 = vsel %vm8069, %v8047, 0.0
    %8083 = vadd.xlane.f32.xlu0 %v8082
    %v8084 = vpop.xlane.xlu0 %8083
    %v8085 = vsel %vm8069, %v8057, 0.0
    %8086 = vadd.xlane.f32.xlu0 %v8085
    %v8087 = vpop.xlane.xlu0 %8086
    %v8088 = vsel %vm8069, %v8054, 0.0
    %8089 = vadd.xlane.f32.xlu0 %v8088
    %v8090 = vpop.xlane.xlu0 %8089
    %v8091 = vsel %vm8069, %v8058, 0.0
    %8092 = vadd.xlane.f32.xlu0 %v8091
    %v8093 = vpop.xlane.xlu0 %8092
    %v8094 = vsel %vm8069, %v8067, 0.0
    %8095 = vadd.xlane.f32.xlu0 %v8094
    %v8096 = vpop.xlane.xlu0 %8095
    %v8097 = vsel %vm8069, %v8068, 0.0
    %8098 = vadd.xlane.f32.xlu0 %v8097
    %v8099 = vpop.xlane.xlu0 %8098
    %v8100 = vmul.f32 %v8072, 0.0625
    %v8101 = vmul.f32 %v8075, 0.0625
    %v8102 = vmul.f32 %v8078, 0.0625
    %v8103 = vmul.f32 %v8081, 0.0625
    %v8104 = vmul.f32 %v8084, 0.0625
    %v8105 = vmul.f32 %v8087, 0.0625
    %v8106 = vmul.f32 %v8090, 0.0625
    %v8107 = vmul.f32 %v8093, 0.0625
    %v8108 = vmul.f32 %v8096, 0.0625
    %v8109 = vmul.f32 %v8099, 0.0625
    %v8110 = vsub.f32 %v8031, %v8100
    %v8111 = vsub.f32 %v8055, %v8101
    %v8112 = vsub.f32 %v8038, %v8102
    %v8113 = vsub.f32 %v8056, %v8103
    %v8114 = vsub.f32 %v8047, %v8104
    %v8115 = vsub.f32 %v8057, %v8105
    %v8116 = vsub.f32 %v8054, %v8106
    %v8117 = vsub.f32 %v8058, %v8107
    %v8118 = vsub.f32 %v8067, %v8108
    %v8119 = vsub.f32 %v8068, %v8109
    %v8120 = vmul.f32 %v8110, %v8110
    %v8121 = vmul.f32 %v8111, %v8111
    %v8122 = vmul.f32 %v8112, %v8112
    %v8123 = vmul.f32 %v8113, %v8113
    %v8124 = vmul.f32 %v8114, %v8114
    %v8125 = vmul.f32 %v8115, %v8115
    %v8126 = vmul.f32 %v8116, %v8116
    %v8127 = vmul.f32 %v8117, %v8117
    %v8128 = vmul.f32 %v8118, %v8118
    %v8129 = vmul.f32 %v8119, %v8119
    %v8130 = vsel %vm8069, %v8120, 0.0
    %8131 = vadd.xlane.f32.xlu0 %v8130
    %v8132 = vpop.xlane.xlu0 %8131
    %v8133 = vsel %vm8069, %v8121, 0.0
    %8134 = vadd.xlane.f32.xlu0 %v8133
    %v8135 = vpop.xlane.xlu0 %8134
    %v8136 = vsel %vm8069, %v8122, 0.0
    %8137 = vadd.xlane.f32.xlu0 %v8136
    %v8138 = vpop.xlane.xlu0 %8137
    %v8139 = vsel %vm8069, %v8123, 0.0
    %8140 = vadd.xlane.f32.xlu0 %v8139
    %v8141 = vpop.xlane.xlu0 %8140
    %v8142 = vsel %vm8069, %v8124, 0.0
    %8143 = vadd.xlane.f32.xlu0 %v8142
    %v8144 = vpop.xlane.xlu0 %8143
    %v8145 = vsel %vm8069, %v8125, 0.0
    %8146 = vadd.xlane.f32.xlu0 %v8145
    %v8147 = vpop.xlane.xlu0 %8146
    %v8148 = vsel %vm8069, %v8126, 0.0
    %8149 = vadd.xlane.f32.xlu0 %v8148
    %v8150 = vpop.xlane.xlu0 %8149
    %v8151 = vsel %vm8069, %v8127, 0.0
    %8152 = vadd.xlane.f32.xlu0 %v8151
    %v8153 = vpop.xlane.xlu0 %8152
    %v8154 = vsel %vm8069, %v8128, 0.0
    %8155 = vadd.xlane.f32.xlu0 %v8154
    %v8156 = vpop.xlane.xlu0 %8155
    %v8157 = vsel %vm8069, %v8129, 0.0
    %8158 = vadd.xlane.f32.xlu0 %v8157
    %v8159 = vpop.xlane.xlu0 %8158
    %v8160 = vmul.f32 %v8132, 0.0625
    %v8161 = vmul.f32 %v8135, 0.0625
    %v8162 = vmul.f32 %v8138, 0.0625
    %v8163 = vmul.f32 %v8141, 0.0625
    %v8164 = vmul.f32 %v8144, 0.0625
    %v8165 = vmul.f32 %v8147, 0.0625
    %v8166 = vmul.f32 %v8150, 0.0625
    %v8167 = vmul.f32 %v8153, 0.0625
    %v8168 = vmul.f32 %v8156, 0.0625
    %v8169 = vmul.f32 %v8159, 0.0625
    %v8170 = vadd.f32 %v8160, 1e-05
    %v8171 = vadd.f32 %v8161, 1e-05
    %v8172 = vadd.f32 %v8162, 1e-05
    %v8173 = vadd.f32 %v8163, 1e-05
    %v8174 = vadd.f32 %v8164, 1e-05
    %v8175 = vadd.f32 %v8165, 1e-05
    %v8176 = vadd.f32 %v8166, 1e-05
    %v8177 = vadd.f32 %v8167, 1e-05
    %v8178 = vadd.f32 %v8168, 1e-05
    %v8179 = vadd.f32 %v8169, 1e-05
    %v8180 = vrsqrt.pop %v8170
    %v8181 = vrsqrt.pop %v8171
    %v8182 = vrsqrt.pop %v8172
    %v8183 = vrsqrt.pop %v8173
    %v8184 = vrsqrt.pop %v8174
    %v8185 = vrsqrt.pop %v8175
    %v8186 = vrsqrt.pop %v8176
    %v8187 = vrsqrt.pop %v8177
    %v8188 = vrsqrt.pop %v8178
    %v8189 = vrsqrt.pop %v8179
    %v8190 = vmul.f32 %v8110, %v8180
    %v8191 = vmul.f32 %v8111, %v8181
    %v8192 = vmul.f32 %v8112, %v8182
    %v8193 = vmul.f32 %v8113, %v8183
    %v8194 = vmul.f32 %v8114, %v8184
    %v8195 = vmul.f32 %v8115, %v8185
    %v8196 = vmul.f32 %v8116, %v8186
    %v8197 = vmul.f32 %v8117, %v8187
    %v8198 = vmul.f32 %v8118, %v8188
    %v8199 = vmul.f32 %v8119, %v8189
    %v8200 = vlaneseq
    %v8201 = vshrl.u32 %v8200, 7
    %v8202 = vsub.s32 0, %v8201
    %v8203 = vrot.slane %v7867, %v8202
    %v8204 = vmul.f32 %v8190, %v8203
    %v8205 = vmul.f32 %v8191, %v8203
    %v8206 = vmul.f32 %v8192, %v8203
    %v8207 = vmul.f32 %v8193, %v8203
    %v8208 = vmul.f32 %v8194, %v8203
    %v8209 = vmul.f32 %v8195, %v8203
    %v8210 = vmul.f32 %v8196, %v8203
    %v8211 = vmul.f32 %v8197, %v8203
    %v8212 = vmul.f32 %v8198, %v8203
    %v8213 = vmul.f32 %v8199, %v8203
    %v8214 = vlaneseq
    %v8215 = vshrl.u32 %v8214, 7
    %v8216 = vsub.s32 0, %v8215
    %v8217 = vrot.slane %v7868, %v8216
    %v8218 = vadd.f32 %v8204, %v8217
    %v8219 = vadd.f32 %v8205, %v8217
    %v8220 = vadd.f32 %v8206, %v8217
    %v8221 = vadd.f32 %v8207, %v8217
    %v8222 = vadd.f32 %v8208, %v8217
    %v8223 = vadd.f32 %v8209, %v8217
    %v8224 = vadd.f32 %v8210, %v8217
    %v8225 = vadd.f32 %v8211, %v8217
    %v8226 = vadd.f32 %v8212, %v8217
    %v8227 = vadd.f32 %v8213, %v8217
    %v8228 = vmax.f32 %v8218, 0.0
    %v8229 = vmax.f32 %v8219, 0.0
    %v8230 = vmax.f32 %v8220, 0.0
    %v8231 = vmax.f32 %v8221, 0.0
    %v8232 = vmax.f32 %v8222, 0.0
    %v8233 = vmax.f32 %v8223, 0.0
    %v8234 = vmax.f32 %v8224, 0.0
    %v8235 = vmax.f32 %v8225, 0.0
    %v8236 = vmax.f32 %v8226, 0.0
    %v8237 = vmax.f32 %v8227, 0.0
    %8248 = vrot.lane.b32.xlu0 %v8228, 126
    %v8249 = vpop.permute.xlu0 %8248
    %8250 = vrot.lane.b32.xlu0 %v8229, 126
    %v8251 = vpop.permute.xlu0 %8250
    %8252 = vrot.lane.b32.xlu0 %v8230, 126
    %v8253 = vpop.permute.xlu0 %8252
    %8254 = vrot.lane.b32.xlu0 %v8231, 126
    %v8255 = vpop.permute.xlu0 %8254
    %8256 = vrot.lane.b32.xlu0 %v8232, 126
    %v8257 = vpop.permute.xlu0 %8256
    %8258 = vrot.lane.b32.xlu0 %v8233, 126
    %v8259 = vpop.permute.xlu0 %8258
    %8260 = vrot.lane.b32.xlu0 %v8234, 126
    %v8261 = vpop.permute.xlu0 %8260
    %8262 = vrot.lane.b32.xlu0 %v8235, 126
    %v8263 = vpop.permute.xlu0 %8262
    %8264 = vrot.lane.b32.xlu0 %v8236, 126
    %v8265 = vpop.permute.xlu0 %8264
    %8266 = vrot.lane.b32.xlu0 %v8237, 126
    %v8267 = vpop.permute.xlu0 %8266
    %8278 = vrot.lane.b32.xlu0 %v8228, 124
    %v8279 = vpop.permute.xlu0 %8278
    %8280 = vrot.lane.b32.xlu0 %v8229, 124
    %v8281 = vpop.permute.xlu0 %8280
    %8282 = vrot.lane.b32.xlu0 %v8230, 124
    %v8283 = vpop.permute.xlu0 %8282
    %8284 = vrot.lane.b32.xlu0 %v8231, 124
    %v8285 = vpop.permute.xlu0 %8284
    %8286 = vrot.lane.b32.xlu0 %v8232, 124
    %v8287 = vpop.permute.xlu0 %8286
    %8288 = vrot.lane.b32.xlu0 %v8233, 124
    %v8289 = vpop.permute.xlu0 %8288
    %8290 = vrot.lane.b32.xlu0 %v8234, 124
    %v8291 = vpop.permute.xlu0 %8290
    %8292 = vrot.lane.b32.xlu0 %v8235, 124
    %v8293 = vpop.permute.xlu0 %8292
    %8294 = vrot.lane.b32.xlu0 %v8236, 124
    %v8295 = vpop.permute.xlu0 %8294
    %8296 = vrot.lane.b32.xlu0 %v8237, 124
    %v8297 = vpop.permute.xlu0 %8296
    %8308 = vrot.lane.b32.xlu0 %v8228, 122
    %v8309 = vpop.permute.xlu0 %8308
    %8310 = vrot.lane.b32.xlu0 %v8229, 122
    %v8311 = vpop.permute.xlu0 %8310
    %8312 = vrot.lane.b32.xlu0 %v8230, 122
    %v8313 = vpop.permute.xlu0 %8312
    %8314 = vrot.lane.b32.xlu0 %v8231, 122
    %v8315 = vpop.permute.xlu0 %8314
    %8316 = vrot.lane.b32.xlu0 %v8232, 122
    %v8317 = vpop.permute.xlu0 %8316
    %8318 = vrot.lane.b32.xlu0 %v8233, 122
    %v8319 = vpop.permute.xlu0 %8318
    %8320 = vrot.lane.b32.xlu0 %v8234, 122
    %v8321 = vpop.permute.xlu0 %8320
    %8322 = vrot.lane.b32.xlu0 %v8235, 122
    %v8323 = vpop.permute.xlu0 %8322
    %8324 = vrot.lane.b32.xlu0 %v8236, 122
    %v8325 = vpop.permute.xlu0 %8324
    %8326 = vrot.lane.b32.xlu0 %v8237, 122
    %v8327 = vpop.permute.xlu0 %8326
    %8338 = vrot.lane.b32.xlu0 %v8228, 120
    %v8339 = vpop.permute.xlu0 %8338
    %8340 = vrot.lane.b32.xlu0 %v8229, 120
    %v8341 = vpop.permute.xlu0 %8340
    %8342 = vrot.lane.b32.xlu0 %v8230, 120
    %v8343 = vpop.permute.xlu0 %8342
    %8344 = vrot.lane.b32.xlu0 %v8231, 120
    %v8345 = vpop.permute.xlu0 %8344
    %8346 = vrot.lane.b32.xlu0 %v8232, 120
    %v8347 = vpop.permute.xlu0 %8346
    %8348 = vrot.lane.b32.xlu0 %v8233, 120
    %v8349 = vpop.permute.xlu0 %8348
    %8350 = vrot.lane.b32.xlu0 %v8234, 120
    %v8351 = vpop.permute.xlu0 %8350
    %8352 = vrot.lane.b32.xlu0 %v8235, 120
    %v8353 = vpop.permute.xlu0 %8352
    %8354 = vrot.lane.b32.xlu0 %v8236, 120
    %v8355 = vpop.permute.xlu0 %8354
    %8356 = vrot.lane.b32.xlu0 %v8237, 120
    %v8357 = vpop.permute.xlu0 %8356
    %8368 = vrot.lane.b32.xlu0 %v8228, 118
    %v8369 = vpop.permute.xlu0 %8368
    %8370 = vrot.lane.b32.xlu0 %v8229, 118
    %v8371 = vpop.permute.xlu0 %8370
    %8372 = vrot.lane.b32.xlu0 %v8230, 118
    %v8373 = vpop.permute.xlu0 %8372
    %8374 = vrot.lane.b32.xlu0 %v8231, 118
    %v8375 = vpop.permute.xlu0 %8374
    %8376 = vrot.lane.b32.xlu0 %v8232, 118
    %v8377 = vpop.permute.xlu0 %8376
    %8378 = vrot.lane.b32.xlu0 %v8233, 118
    %v8379 = vpop.permute.xlu0 %8378
    %8380 = vrot.lane.b32.xlu0 %v8234, 118
    %v8381 = vpop.permute.xlu0 %8380
    %8382 = vrot.lane.b32.xlu0 %v8235, 118
    %v8383 = vpop.permute.xlu0 %8382
    %8384 = vrot.lane.b32.xlu0 %v8236, 118
    %v8385 = vpop.permute.xlu0 %8384
    %8386 = vrot.lane.b32.xlu0 %v8237, 118
    %v8387 = vpop.permute.xlu0 %8386
    %8398 = vrot.lane.b32.xlu0 %v8228, 116
    %v8399 = vpop.permute.xlu0 %8398
    %8400 = vrot.lane.b32.xlu0 %v8229, 116
    %v8401 = vpop.permute.xlu0 %8400
    %8402 = vrot.lane.b32.xlu0 %v8230, 116
    %v8403 = vpop.permute.xlu0 %8402
    %8404 = vrot.lane.b32.xlu0 %v8231, 116
    %v8405 = vpop.permute.xlu0 %8404
    %8406 = vrot.lane.b32.xlu0 %v8232, 116
    %v8407 = vpop.permute.xlu0 %8406
    %8408 = vrot.lane.b32.xlu0 %v8233, 116
    %v8409 = vpop.permute.xlu0 %8408
    %8410 = vrot.lane.b32.xlu0 %v8234, 116
    %v8411 = vpop.permute.xlu0 %8410
    %8412 = vrot.lane.b32.xlu0 %v8235, 116
    %v8413 = vpop.permute.xlu0 %8412
    %8414 = vrot.lane.b32.xlu0 %v8236, 116
    %v8415 = vpop.permute.xlu0 %8414
    %8416 = vrot.lane.b32.xlu0 %v8237, 116
    %v8417 = vpop.permute.xlu0 %8416
    %8428 = vrot.lane.b32.xlu0 %v8228, 114
    %v8429 = vpop.permute.xlu0 %8428
    %8430 = vrot.lane.b32.xlu0 %v8229, 114
    %v8431 = vpop.permute.xlu0 %8430
    %8432 = vrot.lane.b32.xlu0 %v8230, 114
    %v8433 = vpop.permute.xlu0 %8432
    %8434 = vrot.lane.b32.xlu0 %v8231, 114
    %v8435 = vpop.permute.xlu0 %8434
    %8436 = vrot.lane.b32.xlu0 %v8232, 114
    %v8437 = vpop.permute.xlu0 %8436
    %8438 = vrot.lane.b32.xlu0 %v8233, 114
    %v8439 = vpop.permute.xlu0 %8438
    %8440 = vrot.lane.b32.xlu0 %v8234, 114
    %v8441 = vpop.permute.xlu0 %8440
    %8442 = vrot.lane.b32.xlu0 %v8235, 114
    %v8443 = vpop.permute.xlu0 %8442
    %8444 = vrot.lane.b32.xlu0 %v8236, 114
    %v8445 = vpop.permute.xlu0 %8444
    %8446 = vrot.lane.b32.xlu0 %v8237, 114
    %v8447 = vpop.permute.xlu0 %8446
    %v8458 = vcombine.low %v8228, %v8279
    %v8460 = vunpack.c.l.s4 1983009808
    %v8461 = vunpack.c.0.s8 %v8460
    %v8462 = vlaneseq
    %v8463 = vshrl.u32 %v8462, 7
    %v8464 = vsub.s32 %v8461, %v8463
    %v8465 = vrot.slane %v8458, %v8464
    %v8466 = vcombine.low %v8249, %v8309
    %v8468 = vunpack.c.l.s4 1983009808
    %v8469 = vunpack.c.0.s8 %v8468
    %v8470 = vlaneseq
    %v8471 = vshrl.u32 %v8470, 7
    %v8472 = vsub.s32 %v8469, %v8471
    %v8473 = vrot.slane %v8466, %v8472
    %v8474 = vcombine.low %v8339, %v8399
    %v8476 = vunpack.c.l.s4 1983009808
    %v8477 = vunpack.c.0.s8 %v8476
    %v8478 = vlaneseq
    %v8479 = vshrl.u32 %v8478, 7
    %v8480 = vsub.s32 %v8477, %v8479
    %v8481 = vrot.slane %v8474, %v8480
    %v8482 = vcombine.low %v8369, %v8429
    %v8484 = vunpack.c.l.s4 1983009808
    %v8485 = vunpack.c.0.s8 %v8484
    %v8486 = vlaneseq
    %v8487 = vshrl.u32 %v8486, 7
    %v8488 = vsub.s32 %v8485, %v8487
    %v8489 = vrot.slane %v8482, %v8488
    %v8490 = vcombine.low %v8465, %v8473
    %v8492 = vunpack.c.l.s4 1934713408
    %v8493 = vunpack.c.0.s8 %v8492
    %v8494 = vlaneseq
    %v8495 = vshrl.u32 %v8494, 7
    %v8496 = vsub.s32 %v8493, %v8495
    %v8497 = vrot.slane %v8490, %v8496
    %v8498 = vcombine.low %v8481, %v8489
    %v8500 = vunpack.c.l.s4 1934713408
    %v8501 = vunpack.c.0.s8 %v8500
    %v8502 = vlaneseq
    %v8503 = vshrl.u32 %v8502, 7
    %v8504 = vsub.s32 %v8501, %v8503
    %v8505 = vrot.slane %v8498, %v8504
    %v8506 = vcombine.low %v8497, %v8505
    %v8507 = vcombine.high %v8497, %v8505
    %v8508 = vcombine.low %v8229, %v8281
    %v8510 = vunpack.c.l.s4 1983009808
    %v8511 = vunpack.c.0.s8 %v8510
    %v8512 = vlaneseq
    %v8513 = vshrl.u32 %v8512, 7
    %v8514 = vsub.s32 %v8511, %v8513
    %v8515 = vrot.slane %v8508, %v8514
    %v8516 = vcombine.low %v8251, %v8311
    %v8518 = vunpack.c.l.s4 1983009808
    %v8519 = vunpack.c.0.s8 %v8518
    %v8520 = vlaneseq
    %v8521 = vshrl.u32 %v8520, 7
    %v8522 = vsub.s32 %v8519, %v8521
    %v8523 = vrot.slane %v8516, %v8522
    %v8524 = vcombine.low %v8341, %v8401
    %v8526 = vunpack.c.l.s4 1983009808
    %v8527 = vunpack.c.0.s8 %v8526
    %v8528 = vlaneseq
    %v8529 = vshrl.u32 %v8528, 7
    %v8530 = vsub.s32 %v8527, %v8529
    %v8531 = vrot.slane %v8524, %v8530
    %v8532 = vcombine.low %v8371, %v8431
    %v8534 = vunpack.c.l.s4 1983009808
    %v8535 = vunpack.c.0.s8 %v8534
    %v8536 = vlaneseq
    %v8537 = vshrl.u32 %v8536, 7
    %v8538 = vsub.s32 %v8535, %v8537
    %v8539 = vrot.slane %v8532, %v8538
    %v8540 = vcombine.low %v8515, %v8523
    %v8542 = vunpack.c.l.s4 1934713408
    %v8543 = vunpack.c.0.s8 %v8542
    %v8544 = vlaneseq
    %v8545 = vshrl.u32 %v8544, 7
    %v8546 = vsub.s32 %v8543, %v8545
    %v8547 = vrot.slane %v8540, %v8546
    %v8548 = vcombine.low %v8531, %v8539
    %v8550 = vunpack.c.l.s4 1934713408
    %v8551 = vunpack.c.0.s8 %v8550
    %v8552 = vlaneseq
    %v8553 = vshrl.u32 %v8552, 7
    %v8554 = vsub.s32 %v8551, %v8553
    %v8555 = vrot.slane %v8548, %v8554
    %v8556 = vcombine.low %v8547, %v8555
    %v8557 = vcombine.high %v8547, %v8555
    %v8558 = vcombine.low %v8230, %v8283
    %v8560 = vunpack.c.l.s4 1983009808
    %v8561 = vunpack.c.0.s8 %v8560
    %v8562 = vlaneseq
    %v8563 = vshrl.u32 %v8562, 7
    %v8564 = vsub.s32 %v8561, %v8563
    %v8565 = vrot.slane %v8558, %v8564
    %v8566 = vcombine.low %v8253, %v8313
    %v8568 = vunpack.c.l.s4 1983009808
    %v8569 = vunpack.c.0.s8 %v8568
    %v8570 = vlaneseq
    %v8571 = vshrl.u32 %v8570, 7
    %v8572 = vsub.s32 %v8569, %v8571
    %v8573 = vrot.slane %v8566, %v8572
    %v8574 = vcombine.low %v8343, %v8403
    %v8576 = vunpack.c.l.s4 1983009808
    %v8577 = vunpack.c.0.s8 %v8576
    %v8578 = vlaneseq
    %v8579 = vshrl.u32 %v8578, 7
    %v8580 = vsub.s32 %v8577, %v8579
    %v8581 = vrot.slane %v8574, %v8580
    %v8582 = vcombine.low %v8373, %v8433
    %v8584 = vunpack.c.l.s4 1983009808
    %v8585 = vunpack.c.0.s8 %v8584
    %v8586 = vlaneseq
    %v8587 = vshrl.u32 %v8586, 7
    %v8588 = vsub.s32 %v8585, %v8587
    %v8589 = vrot.slane %v8582, %v8588
    %v8590 = vcombine.low %v8565, %v8573
    %v8592 = vunpack.c.l.s4 1934713408
    %v8593 = vunpack.c.0.s8 %v8592
    %v8594 = vlaneseq
    %v8595 = vshrl.u32 %v8594, 7
    %v8596 = vsub.s32 %v8593, %v8595
    %v8597 = vrot.slane %v8590, %v8596
    %v8598 = vcombine.low %v8581, %v8589
    %v8600 = vunpack.c.l.s4 1934713408
    %v8601 = vunpack.c.0.s8 %v8600
    %v8602 = vlaneseq
    %v8603 = vshrl.u32 %v8602, 7
    %v8604 = vsub.s32 %v8601, %v8603
    %v8605 = vrot.slane %v8598, %v8604
    %v8606 = vcombine.low %v8597, %v8605
    %v8607 = vcombine.high %v8597, %v8605
    %v8608 = vcombine.low %v8231, %v8285
    %v8610 = vunpack.c.l.s4 1983009808
    %v8611 = vunpack.c.0.s8 %v8610
    %v8612 = vlaneseq
    %v8613 = vshrl.u32 %v8612, 7
    %v8614 = vsub.s32 %v8611, %v8613
    %v8615 = vrot.slane %v8608, %v8614
    %v8616 = vcombine.low %v8255, %v8315
    %v8618 = vunpack.c.l.s4 1983009808
    %v8619 = vunpack.c.0.s8 %v8618
    %v8620 = vlaneseq
    %v8621 = vshrl.u32 %v8620, 7
    %v8622 = vsub.s32 %v8619, %v8621
    %v8623 = vrot.slane %v8616, %v8622
    %v8624 = vcombine.low %v8345, %v8405
    %v8626 = vunpack.c.l.s4 1983009808
    %v8627 = vunpack.c.0.s8 %v8626
    %v8628 = vlaneseq
    %v8629 = vshrl.u32 %v8628, 7
    %v8630 = vsub.s32 %v8627, %v8629
    %v8631 = vrot.slane %v8624, %v8630
    %v8632 = vcombine.low %v8375, %v8435
    %v8634 = vunpack.c.l.s4 1983009808
    %v8635 = vunpack.c.0.s8 %v8634
    %v8636 = vlaneseq
    %v8637 = vshrl.u32 %v8636, 7
    %v8638 = vsub.s32 %v8635, %v8637
    %v8639 = vrot.slane %v8632, %v8638
    %v8640 = vcombine.low %v8615, %v8623
    %v8642 = vunpack.c.l.s4 1934713408
    %v8643 = vunpack.c.0.s8 %v8642
    %v8644 = vlaneseq
    %v8645 = vshrl.u32 %v8644, 7
    %v8646 = vsub.s32 %v8643, %v8645
    %v8647 = vrot.slane %v8640, %v8646
    %v8648 = vcombine.low %v8631, %v8639
    %v8650 = vunpack.c.l.s4 1934713408
    %v8651 = vunpack.c.0.s8 %v8650
    %v8652 = vlaneseq
    %v8653 = vshrl.u32 %v8652, 7
    %v8654 = vsub.s32 %v8651, %v8653
    %v8655 = vrot.slane %v8648, %v8654
    %v8656 = vcombine.low %v8647, %v8655
    %v8657 = vcombine.high %v8647, %v8655
    %v8658 = vcombine.low %v8232, %v8287
    %v8660 = vunpack.c.l.s4 1983009808
    %v8661 = vunpack.c.0.s8 %v8660
    %v8662 = vlaneseq
    %v8663 = vshrl.u32 %v8662, 7
    %v8664 = vsub.s32 %v8661, %v8663
    %v8665 = vrot.slane %v8658, %v8664
    %v8666 = vcombine.low %v8257, %v8317
    %v8668 = vunpack.c.l.s4 1983009808
    %v8669 = vunpack.c.0.s8 %v8668
    %v8670 = vlaneseq
    %v8671 = vshrl.u32 %v8670, 7
    %v8672 = vsub.s32 %v8669, %v8671
    %v8673 = vrot.slane %v8666, %v8672
    %v8674 = vcombine.low %v8347, %v8407
    %v8676 = vunpack.c.l.s4 1983009808
    %v8677 = vunpack.c.0.s8 %v8676
    %v8678 = vlaneseq
    %v8679 = vshrl.u32 %v8678, 7
    %v8680 = vsub.s32 %v8677, %v8679
    %v8681 = vrot.slane %v8674, %v8680
    %v8682 = vcombine.low %v8377, %v8437
    %v8684 = vunpack.c.l.s4 1983009808
    %v8685 = vunpack.c.0.s8 %v8684
    %v8686 = vlaneseq
    %v8687 = vshrl.u32 %v8686, 7
    %v8688 = vsub.s32 %v8685, %v8687
    %v8689 = vrot.slane %v8682, %v8688
    %v8690 = vcombine.low %v8665, %v8673
    %v8692 = vunpack.c.l.s4 1934713408
    %v8693 = vunpack.c.0.s8 %v8692
    %v8694 = vlaneseq
    %v8695 = vshrl.u32 %v8694, 7
    %v8696 = vsub.s32 %v8693, %v8695
    %v8697 = vrot.slane %v8690, %v8696
    %v8698 = vcombine.low %v8681, %v8689
    %v8700 = vunpack.c.l.s4 1934713408
    %v8701 = vunpack.c.0.s8 %v8700
    %v8702 = vlaneseq
    %v8703 = vshrl.u32 %v8702, 7
    %v8704 = vsub.s32 %v8701, %v8703
    %v8705 = vrot.slane %v8698, %v8704
    %v8706 = vcombine.low %v8697, %v8705
    %v8707 = vcombine.high %v8697, %v8705
    %v8708 = vcombine.low %v8233, %v8289
    %v8710 = vunpack.c.l.s4 1983009808
    %v8711 = vunpack.c.0.s8 %v8710
    %v8712 = vlaneseq
    %v8713 = vshrl.u32 %v8712, 7
    %v8714 = vsub.s32 %v8711, %v8713
    %v8715 = vrot.slane %v8708, %v8714
    %v8716 = vcombine.low %v8259, %v8319
    %v8718 = vunpack.c.l.s4 1983009808
    %v8719 = vunpack.c.0.s8 %v8718
    %v8720 = vlaneseq
    %v8721 = vshrl.u32 %v8720, 7
    %v8722 = vsub.s32 %v8719, %v8721
    %v8723 = vrot.slane %v8716, %v8722
    %v8724 = vcombine.low %v8349, %v8409
    %v8726 = vunpack.c.l.s4 1983009808
    %v8727 = vunpack.c.0.s8 %v8726
    %v8728 = vlaneseq
    %v8729 = vshrl.u32 %v8728, 7
    %v8730 = vsub.s32 %v8727, %v8729
    %v8731 = vrot.slane %v8724, %v8730
    %v8732 = vcombine.low %v8379, %v8439
    %v8734 = vunpack.c.l.s4 1983009808
    %v8735 = vunpack.c.0.s8 %v8734
    %v8736 = vlaneseq
    %v8737 = vshrl.u32 %v8736, 7
    %v8738 = vsub.s32 %v8735, %v8737
    %v8739 = vrot.slane %v8732, %v8738
    %v8740 = vcombine.low %v8715, %v8723
    %v8742 = vunpack.c.l.s4 1934713408
    %v8743 = vunpack.c.0.s8 %v8742
    %v8744 = vlaneseq
    %v8745 = vshrl.u32 %v8744, 7
    %v8746 = vsub.s32 %v8743, %v8745
    %v8747 = vrot.slane %v8740, %v8746
    %v8748 = vcombine.low %v8731, %v8739
    %v8750 = vunpack.c.l.s4 1934713408
    %v8751 = vunpack.c.0.s8 %v8750
    %v8752 = vlaneseq
    %v8753 = vshrl.u32 %v8752, 7
    %v8754 = vsub.s32 %v8751, %v8753
    %v8755 = vrot.slane %v8748, %v8754
    %v8756 = vcombine.low %v8747, %v8755
    %v8757 = vcombine.high %v8747, %v8755
    %v8758 = vcombine.low %v8234, %v8291
    %v8760 = vunpack.c.l.s4 1983009808
    %v8761 = vunpack.c.0.s8 %v8760
    %v8762 = vlaneseq
    %v8763 = vshrl.u32 %v8762, 7
    %v8764 = vsub.s32 %v8761, %v8763
    %v8765 = vrot.slane %v8758, %v8764
    %v8766 = vcombine.low %v8261, %v8321
    %v8768 = vunpack.c.l.s4 1983009808
    %v8769 = vunpack.c.0.s8 %v8768
    %v8770 = vlaneseq
    %v8771 = vshrl.u32 %v8770, 7
    %v8772 = vsub.s32 %v8769, %v8771
    %v8773 = vrot.slane %v8766, %v8772
    %v8774 = vcombine.low %v8351, %v8411
    %v8776 = vunpack.c.l.s4 1983009808
    %v8777 = vunpack.c.0.s8 %v8776
    %v8778 = vlaneseq
    %v8779 = vshrl.u32 %v8778, 7
    %v8780 = vsub.s32 %v8777, %v8779
    %v8781 = vrot.slane %v8774, %v8780
    %v8782 = vcombine.low %v8381, %v8441
    %v8784 = vunpack.c.l.s4 1983009808
    %v8785 = vunpack.c.0.s8 %v8784
    %v8786 = vlaneseq
    %v8787 = vshrl.u32 %v8786, 7
    %v8788 = vsub.s32 %v8785, %v8787
    %v8789 = vrot.slane %v8782, %v8788
    %v8790 = vcombine.low %v8765, %v8773
    %v8792 = vunpack.c.l.s4 1934713408
    %v8793 = vunpack.c.0.s8 %v8792
    %v8794 = vlaneseq
    %v8795 = vshrl.u32 %v8794, 7
    %v8796 = vsub.s32 %v8793, %v8795
    %v8797 = vrot.slane %v8790, %v8796
    %v8798 = vcombine.low %v8781, %v8789
    %v8800 = vunpack.c.l.s4 1934713408
    %v8801 = vunpack.c.0.s8 %v8800
    %v8802 = vlaneseq
    %v8803 = vshrl.u32 %v8802, 7
    %v8804 = vsub.s32 %v8801, %v8803
    %v8805 = vrot.slane %v8798, %v8804
    %v8806 = vcombine.low %v8797, %v8805
    %v8807 = vcombine.high %v8797, %v8805
    %v8808 = vcombine.low %v8235, %v8293
    %v8810 = vunpack.c.l.s4 1983009808
    %v8811 = vunpack.c.0.s8 %v8810
    %v8812 = vlaneseq
    %v8813 = vshrl.u32 %v8812, 7
    %v8814 = vsub.s32 %v8811, %v8813
    %v8815 = vrot.slane %v8808, %v8814
    %v8816 = vcombine.low %v8263, %v8323
    %v8818 = vunpack.c.l.s4 1983009808
    %v8819 = vunpack.c.0.s8 %v8818
    %v8820 = vlaneseq
    %v8821 = vshrl.u32 %v8820, 7
    %v8822 = vsub.s32 %v8819, %v8821
    %v8823 = vrot.slane %v8816, %v8822
    %v8824 = vcombine.low %v8353, %v8413
    %v8826 = vunpack.c.l.s4 1983009808
    %v8827 = vunpack.c.0.s8 %v8826
    %v8828 = vlaneseq
    %v8829 = vshrl.u32 %v8828, 7
    %v8830 = vsub.s32 %v8827, %v8829
    %v8831 = vrot.slane %v8824, %v8830
    %v8832 = vcombine.low %v8383, %v8443
    %v8834 = vunpack.c.l.s4 1983009808
    %v8835 = vunpack.c.0.s8 %v8834
    %v8836 = vlaneseq
    %v8837 = vshrl.u32 %v8836, 7
    %v8838 = vsub.s32 %v8835, %v8837
    %v8839 = vrot.slane %v8832, %v8838
    %v8840 = vcombine.low %v8815, %v8823
    %v8842 = vunpack.c.l.s4 1934713408
    %v8843 = vunpack.c.0.s8 %v8842
    %v8844 = vlaneseq
    %v8845 = vshrl.u32 %v8844, 7
    %v8846 = vsub.s32 %v8843, %v8845
    %v8847 = vrot.slane %v8840, %v8846
    %v8848 = vcombine.low %v8831, %v8839
    %v8850 = vunpack.c.l.s4 1934713408
    %v8851 = vunpack.c.0.s8 %v8850
    %v8852 = vlaneseq
    %v8853 = vshrl.u32 %v8852, 7
    %v8854 = vsub.s32 %v8851, %v8853
    %v8855 = vrot.slane %v8848, %v8854
    %v8856 = vcombine.low %v8847, %v8855
    %v8857 = vcombine.high %v8847, %v8855
    %v8858 = vcombine.low %v8236, %v8295
    %v8860 = vunpack.c.l.s4 1983009808
    %v8861 = vunpack.c.0.s8 %v8860
    %v8862 = vlaneseq
    %v8863 = vshrl.u32 %v8862, 7
    %v8864 = vsub.s32 %v8861, %v8863
    %v8865 = vrot.slane %v8858, %v8864
    %v8866 = vcombine.low %v8265, %v8325
    %v8868 = vunpack.c.l.s4 1983009808
    %v8869 = vunpack.c.0.s8 %v8868
    %v8870 = vlaneseq
    %v8871 = vshrl.u32 %v8870, 7
    %v8872 = vsub.s32 %v8869, %v8871
    %v8873 = vrot.slane %v8866, %v8872
    %v8874 = vcombine.low %v8355, %v8415
    %v8876 = vunpack.c.l.s4 1983009808
    %v8877 = vunpack.c.0.s8 %v8876
    %v8878 = vlaneseq
    %v8879 = vshrl.u32 %v8878, 7
    %v8880 = vsub.s32 %v8877, %v8879
    %v8881 = vrot.slane %v8874, %v8880
    %v8882 = vcombine.low %v8385, %v8445
    %v8884 = vunpack.c.l.s4 1983009808
    %v8885 = vunpack.c.0.s8 %v8884
    %v8886 = vlaneseq
    %v8887 = vshrl.u32 %v8886, 7
    %v8888 = vsub.s32 %v8885, %v8887
    %v8889 = vrot.slane %v8882, %v8888
    %v8890 = vcombine.low %v8865, %v8873
    %v8892 = vunpack.c.l.s4 1934713408
    %v8893 = vunpack.c.0.s8 %v8892
    %v8894 = vlaneseq
    %v8895 = vshrl.u32 %v8894, 7
    %v8896 = vsub.s32 %v8893, %v8895
    %v8897 = vrot.slane %v8890, %v8896
    %v8898 = vcombine.low %v8881, %v8889
    %v8900 = vunpack.c.l.s4 1934713408
    %v8901 = vunpack.c.0.s8 %v8900
    %v8902 = vlaneseq
    %v8903 = vshrl.u32 %v8902, 7
    %v8904 = vsub.s32 %v8901, %v8903
    %v8905 = vrot.slane %v8898, %v8904
    %v8906 = vcombine.low %v8897, %v8905
    %v8907 = vcombine.high %v8897, %v8905
    %v8908 = vcombine.low %v8237, %v8297
    %v8910 = vunpack.c.l.s4 1983009808
    %v8911 = vunpack.c.0.s8 %v8910
    %v8912 = vlaneseq
    %v8913 = vshrl.u32 %v8912, 7
    %v8914 = vsub.s32 %v8911, %v8913
    %v8915 = vrot.slane %v8908, %v8914
    %v8916 = vcombine.low %v8267, %v8327
    %v8918 = vunpack.c.l.s4 1983009808
    %v8919 = vunpack.c.0.s8 %v8918
    %v8920 = vlaneseq
    %v8921 = vshrl.u32 %v8920, 7
    %v8922 = vsub.s32 %v8919, %v8921
    %v8923 = vrot.slane %v8916, %v8922
    %v8924 = vcombine.low %v8357, %v8417
    %v8926 = vunpack.c.l.s4 1983009808
    %v8927 = vunpack.c.0.s8 %v8926
    %v8928 = vlaneseq
    %v8929 = vshrl.u32 %v8928, 7
    %v8930 = vsub.s32 %v8927, %v8929
    %v8931 = vrot.slane %v8924, %v8930
    %v8932 = vcombine.low %v8387, %v8447
    %v8934 = vunpack.c.l.s4 1983009808
    %v8935 = vunpack.c.0.s8 %v8934
    %v8936 = vlaneseq
    %v8937 = vshrl.u32 %v8936, 7
    %v8938 = vsub.s32 %v8935, %v8937
    %v8939 = vrot.slane %v8932, %v8938
    %v8940 = vcombine.low %v8915, %v8923
    %v8942 = vunpack.c.l.s4 1934713408
    %v8943 = vunpack.c.0.s8 %v8942
    %v8944 = vlaneseq
    %v8945 = vshrl.u32 %v8944, 7
    %v8946 = vsub.s32 %v8943, %v8945
    %v8947 = vrot.slane %v8940, %v8946
    %v8948 = vcombine.low %v8931, %v8939
    %v8950 = vunpack.c.l.s4 1934713408
    %v8951 = vunpack.c.0.s8 %v8950
    %v8952 = vlaneseq
    %v8953 = vshrl.u32 %v8952, 7
    %v8954 = vsub.s32 %v8951, %v8953
    %v8955 = vrot.slane %v8948, %v8954
    %v8956 = vcombine.low %v8947, %v8955
    %v8957 = vcombine.high %v8947, %v8955
    %v8958 = vsel %vm2896, %v8506, -inf
    %8959 = vmax.xlane.f32.xlu0 %v8958
    %v8960 = vpop.xlane.xlu0 %8959
    %v8961 = vsel %vm2896, %v8507, -inf
    %8962 = vmax.xlane.f32.xlu0 %v8961
    %v8963 = vpop.xlane.xlu0 %8962
    %v8964 = vsel %vm2896, %v8556, -inf
    %8965 = vmax.xlane.f32.xlu0 %v8964
    %v8966 = vpop.xlane.xlu0 %8965
    %v8967 = vsel %vm2896, %v8557, -inf
    %8968 = vmax.xlane.f32.xlu0 %v8967
    %v8969 = vpop.xlane.xlu0 %8968
    %v8970 = vsel %vm2896, %v8606, -inf
    %8971 = vmax.xlane.f32.xlu0 %v8970
    %v8972 = vpop.xlane.xlu0 %8971
    %v8973 = vsel %vm2896, %v8607, -inf
    %8974 = vmax.xlane.f32.xlu0 %v8973
    %v8975 = vpop.xlane.xlu0 %8974
    %v8976 = vsel %vm2896, %v8656, -inf
    %8977 = vmax.xlane.f32.xlu0 %v8976
    %v8978 = vpop.xlane.xlu0 %8977
    %v8979 = vsel %vm2896, %v8657, -inf
    %8980 = vmax.xlane.f32.xlu0 %v8979
    %v8981 = vpop.xlane.xlu0 %8980
    %v8982 = vsel %vm2896, %v8706, -inf
    %8983 = vmax.xlane.f32.xlu0 %v8982
    %v8984 = vpop.xlane.xlu0 %8983
    %v8985 = vsel %vm2896, %v8707, -inf
    %8986 = vmax.xlane.f32.xlu0 %v8985
    %v8987 = vpop.xlane.xlu0 %8986
    %v8988 = vsel %vm2896, %v8756, -inf
    %8989 = vmax.xlane.f32.xlu0 %v8988
    %v8990 = vpop.xlane.xlu0 %8989
    %v8991 = vsel %vm2896, %v8757, -inf
    %8992 = vmax.xlane.f32.xlu0 %v8991
    %v8993 = vpop.xlane.xlu0 %8992
    %v8994 = vsel %vm2896, %v8806, -inf
    %8995 = vmax.xlane.f32.xlu0 %v8994
    %v8996 = vpop.xlane.xlu0 %8995
    %v8997 = vsel %vm2896, %v8807, -inf
    %8998 = vmax.xlane.f32.xlu0 %v8997
    %v8999 = vpop.xlane.xlu0 %8998
    %v9000 = vsel %vm2896, %v8856, -inf
    %9001 = vmax.xlane.f32.xlu0 %v9000
    %v9002 = vpop.xlane.xlu0 %9001
    %v9003 = vsel %vm2896, %v8857, -inf
    %9004 = vmax.xlane.f32.xlu0 %v9003
    %v9005 = vpop.xlane.xlu0 %9004
    %v9006 = vsel %vm2896, %v8906, -inf
    %9007 = vmax.xlane.f32.xlu0 %v9006
    %v9008 = vpop.xlane.xlu0 %9007
    %v9009 = vsel %vm2896, %v8907, -inf
    %9010 = vmax.xlane.f32.xlu0 %v9009
    %v9011 = vpop.xlane.xlu0 %9010
    %v9012 = vsel %vm2896, %v8956, -inf
    %9013 = vmax.xlane.f32.xlu0 %v9012
    %v9014 = vpop.xlane.xlu0 %9013
    %v9015 = vsel %vm2896, %v8957, -inf
    %9016 = vmax.xlane.f32.xlu0 %v9015
    %v9017 = vpop.xlane.xlu0 %9016
    %v9018 = vmax.f32 %v8960, %v8966
    %v9019 = vmax.f32 %v8963, %v8969
    %v9020 = vmax.f32 %v8972, %v8978
    %v9021 = vmax.f32 %v8975, %v8981
    %v9022 = vmax.f32 %v8984, %v8990
    %v9023 = vmax.f32 %v8987, %v8993
    %v9024 = vmax.f32 %v8996, %v9002
    %v9025 = vmax.f32 %v8999, %v9005
    %v9026 = vmax.f32 %v9008, %v9014
    %v9027 = vmax.f32 %v9011, %v9017
    %v9038 = vlaneseq
    %v9039 = vshrl.u32 %v9038, 7
    %v9040 = vsub.s32 %v3154, %v9039
    %v9041 = vrot.slane %v9018, %v9040
    %v9042 = vlaneseq
    %v9043 = vshrl.u32 %v9042, 7
    %v9044 = vsub.s32 %v3154, %v9043
    %v9045 = vrot.slane %v9019, %v9044
    %v9046 = vlaneseq
    %v9047 = vshrl.u32 %v9046, 7
    %v9048 = vsub.s32 %v3154, %v9047
    %v9049 = vrot.slane %v9020, %v9048
    %v9050 = vlaneseq
    %v9051 = vshrl.u32 %v9050, 7
    %v9052 = vsub.s32 %v3154, %v9051
    %v9053 = vrot.slane %v9021, %v9052
    %v9054 = vlaneseq
    %v9055 = vshrl.u32 %v9054, 7
    %v9056 = vsub.s32 %v3154, %v9055
    %v9057 = vrot.slane %v9022, %v9056
    %v9058 = vlaneseq
    %v9059 = vshrl.u32 %v9058, 7
    %v9060 = vsub.s32 %v3154, %v9059
    %v9061 = vrot.slane %v9023, %v9060
    %v9062 = vlaneseq
    %v9063 = vshrl.u32 %v9062, 7
    %v9064 = vsub.s32 %v3154, %v9063
    %v9065 = vrot.slane %v9024, %v9064
    %v9066 = vlaneseq
    %v9067 = vshrl.u32 %v9066, 7
    %v9068 = vsub.s32 %v3154, %v9067
    %v9069 = vrot.slane %v9025, %v9068
    %v9070 = vlaneseq
    %v9071 = vshrl.u32 %v9070, 7
    %v9072 = vsub.s32 %v3154, %v9071
    %v9073 = vrot.slane %v9026, %v9072
    %v9074 = vlaneseq
    %v9075 = vshrl.u32 %v9074, 7
    %v9076 = vsub.s32 %v3154, %v9075
    %v9077 = vrot.slane %v9027, %v9076
    %v9078 = vsel %vm3301, %v9045, %v9041
    %v9079 = vsel %vm3301, %v9053, %v9049
    %v9080 = vsel %vm3301, %v9061, %v9057
    %v9081 = vsel %vm3301, %v9069, %v9065
    %v9082 = vsel %vm3301, %v9077, %v9073
    %v9087 = vcombine.low %v9078, %v9080
    %v9089 = vunpack.c.l.s4 1983009808
    %v9090 = vunpack.c.0.s8 %v9089
    %v9091 = vlaneseq
    %v9092 = vshrl.u32 %v9091, 7
    %v9093 = vsub.s32 %v9090, %v9092
    %v9094 = vrot.slane %v9087, %v9093
    %v9095 = vcombine.low %v9079, %v9081
    %v9097 = vunpack.c.l.s4 1983009808
    %v9098 = vunpack.c.0.s8 %v9097
    %v9099 = vlaneseq
    %v9100 = vshrl.u32 %v9099, 7
    %v9101 = vsub.s32 %v9098, %v9100
    %v9102 = vrot.slane %v9095, %v9101
    %v9103 = vcombine.low %v9094, %v9102
    %v9105 = vunpack.c.l.s4 1934713408
    %v9106 = vunpack.c.0.s8 %v9105
    %v9107 = vlaneseq
    %v9108 = vshrl.u32 %v9107, 7
    %v9109 = vsub.s32 %v9106, %v9108
    %v9110 = vrot.slane %v9103, %v9109
    %v9113 = vunpack.c.l.s4 1934713408
    %v9114 = vunpack.c.0.s8 %v9113
    %v9115 = vlaneseq
    %v9116 = vshrl.u32 %v9115, 7
    %v9117 = vsub.s32 %v9114, %v9116
    %v9118 = vrot.slane %v9082, %v9117
    %v9119 = vcombine.low %v9110, %v9118
    %v9120 = vcombine.high %v9110, %v9118
    %9122 = vrot.lane.b32.xlu0 %v9120, 8
    %v9123 = vpop.permute.xlu0 %9122
    %v9125 = vsel %vm4540, %v9119, %v9123
    %vm9126 = vcmask 126976
    %9127 = vst.msk [vmem:[%s4] sm:$0x1f] %vm9126, %v9125
    // Predicated region
    $region10: #{tpu_custom_call.1} parent=1 // pred_check
      _
    $region11: #{tpu_custom_call.1} parent=1 // pred_check_branch
      %9129 = sbr.rel (0) target = $region13
    $region12: #{tpu_custom_call.1} parent=1 // pred_region
      _
    $region13: #{tpu_custom_call.1} parent=1 // pred_fallthru
      _
    // Predicated region
    $region14: #{tpu_custom_call.1} parent=1 // pred_check
      _
    $region15: #{tpu_custom_call.1} parent=1 // pred_check_branch
      %9131 = sbr.rel (0) target = $region17
    $region16: #{tpu_custom_call.1} parent=1 // pred_region
      %s9133 = ssub.s32 128, 128
      %9134 = vsyncadd [#allocation4], %s9133
      %s9136 = sshll.u32 [#allocation3], 4
      %s9137 = int_to_ptr.vmem [resolvable:$true] %s9136
      %9139 = dma.vmem_to_hbm [thread:$0]  %s9137, 128, %s3, [#allocation4]
    $region17: #{tpu_custom_call.1} parent=1 // pred_fallthru
      _
    // Predicated region
    $region18: #{tpu_custom_call.1} parent=1 // pred_check
      _
    $region19: #{tpu_custom_call.1} parent=1 // pred_check_branch
      %9141 = sbr.rel (0) target = $region21
    $region20: #{tpu_custom_call.1} parent=1 // pred_region
      _
    $region21: #{tpu_custom_call.1} parent=1 // pred_fallthru
      _
    // Predicated region
    $region22: #{tpu_custom_call.1} parent=1 // pred_check
      _
    $region23: #{tpu_custom_call.1} parent=1 // pred_check_branch
      %9143 = sbr.rel (0) target = $region25
    $region24: #{tpu_custom_call.1} parent=1 // pred_region
      _
    $region25: #{tpu_custom_call.1} parent=1 // pred_fallthru
      _
    // Predicated region
    $region26: #{tpu_custom_call.1} parent=1 // pred_check
      _
    $region27: #{tpu_custom_call.1} parent=1 // pred_check_branch
      %9145 = sbr.rel (0) target = $region29
    $region28: #{tpu_custom_call.1} parent=1 // pred_region
      %9146 = dma.done [#allocation4], 128
    $region29: #{tpu_custom_call.1} parent=1 // pred_fallthru
      _
    // Predicated region
    $region30: #{tpu_custom_call.1} parent=1 // pred_check
      _
    $region31: #{tpu_custom_call.1} parent=1 // pred_check_branch
      %9148 = sbr.rel (0) target = $region33
    $region32: #{tpu_custom_call.1} parent=1 // pred_region
      _
    $region33: #{tpu_custom_call.1} parent=1 // pred_fallthru
      _
    %9149 = vsyncpa [#allocation4], 1

</llo_original>
